<compile_context>
chip_gen: v7x
topology: tpu7x:2x2x1
jax: 0.10.0
libtpu: 0.0.40
codegen_flags: <defaults>
</compile_context>

<pallas_src>
import functools

import jax
import jax.numpy as jnp
from jax import lax
from jax.experimental import pallas as pl
from jax.experimental.pallas import tpu as pltpu

EPS = 1e-5
VMEM_LIMIT = 48 * 1024 * 1024          # <= v7x's 64 MiB physical VMEM per TensorCore
_VMEM = pl.BlockSpec(memory_space=pltpu.MemorySpace.VMEM)


# ----------------------------- Pallas kernels ------------------------------

def _conv_kernel(x_ref, w_ref, b_ref, o_ref, *, relu):
    """bf16 matmul on the MXU, f32 accumulate, f32 bias (+ optional ReLU) epilogue."""
    acc = jnp.dot(x_ref[...], w_ref[...], preferred_element_type=jnp.float32)
    acc = acc + b_ref[...]
    if relu:
        acc = jnp.maximum(acc, 0.0)
    o_ref[...] = acc.astype(o_ref.dtype)


def _conv_res_kernel(x_ref, w_ref, b_ref, id_ref, o_ref):
    """conv2 matmul + bias + residual add + ReLU fused in one kernel."""
    acc = jnp.dot(x_ref[...], w_ref[...], preferred_element_type=jnp.float32)
    acc = acc + b_ref[...] + id_ref[...].astype(jnp.float32)
    o_ref[...] = jnp.maximum(acc, 0.0).astype(o_ref.dtype)


def _conv_res_down_kernel(x_ref, w_ref, b_ref, dx_ref, dw_ref, db_ref, o_ref):
    """conv2 matmul + 1x1 downsample matmul + bias + residual add + ReLU, fused."""
    acc = jnp.dot(x_ref[...], w_ref[...], preferred_element_type=jnp.float32)
    acc = acc + b_ref[...]
    ident = jnp.dot(dx_ref[...], dw_ref[...], preferred_element_type=jnp.float32)
    ident = ident + db_ref[...]
    o_ref[...] = jnp.maximum(acc + ident, 0.0).astype(o_ref.dtype)


def _head_kernel(f_ref, w_ref, b_ref, o_ref):
    # adaptive-avgpool(1,1) + temporal mean == one uniform mean over (T*H'*W'),
    # then the final FC (f32 — tiny).
    m = jnp.mean(f_ref[...], axis=1)                                   # (B, 512)
    o_ref[...] = jnp.dot(m, w_ref[...], preferred_element_type=jnp.float32) + b_ref[...]


# ------------------------------ launch helper -------------------------------

def _row_tile(m):
    return 128 if (m > 128 and m % 128 == 0) else m


def _launch_matmul(kernel, inputs, m, n, out_dtype=jnp.bfloat16):
    """Row-tiled launch (grid over M, 'parallel' -> v7x shards over both TensorCores).

    `inputs`: list of (array, row_tiled) pairs in kernel-argument order; row-tiled
    arrays have leading dim M, the rest (weights / biases) are broadcast per grid step.
    """
    tm = _row_tile(m)
    in_specs = []
    for arr, tiled in inputs:
        if tiled:
            in_specs.append(
                pl.BlockSpec((tm,) + arr.shape[1:],
                             lambda i, nd=arr.ndim: (i,) + (0,) * (nd - 1)))
        else:
            in_specs.append(
                pl.BlockSpec(arr.shape, lambda i, nd=arr.ndim: (0,) * nd))
    return pl.pallas_call(
        kernel,
        out_shape=jax.ShapeDtypeStruct((m, n), out_dtype),
        grid=(m // tm,),
        in_specs=in_specs,
        out_specs=pl.BlockSpec((tm, n), lambda i: (i, 0)),
        compiler_params=pltpu.CompilerParams(
            dimension_semantics=("parallel",),
            vmem_limit_bytes=VMEM_LIMIT),
    )(*[a for a, _ in inputs])


# ------------------------------- JAX glue ----------------------------------

def _kept_taps(h, w, kh, kw, stride, pad):
    """Static list of (i, j) kernel taps that can touch real (non-padding) data."""
    oh = (h + 2 * pad - kh) // stride + 1
    ow = (w + 2 * pad - kw) // stride + 1
    kept = []
    for i in range(kh):
        rows = [i + stride * o for o in range(oh)]
        row_all_pad = all(r < pad or r >= pad + h for r in rows)
        for j in range(kw):
            cols = [j + stride * o for o in range(ow)]
            col_all_pad = all(c < pad or c >= pad + w for c in cols)
            if not (row_all_pad or col_all_pad):
                kept.append((i, j))
    return kept, oh, ow


def im2col(x, kh, kw, stride, pad):
    """x: (N,H,W,C) -> (N*OH*OW, len(kept)*C).  Taps that are guaranteed all zero
    padding are dropped (bit-identical: they would only multiply zeros)."""
    n, h, w, c = x.shape
    kept, oh, ow = _kept_taps(h, w, kh, kw, stride, pad)
    xp = jnp.pad(x, ((0, 0), (pad, pad), (pad, pad), (0, 0)))
    cols = [xp[:, i:i + stride * oh:stride, j:j + stride * ow:stride, :]
            for (i, j) in kept]
    patches = jnp.stack(cols, axis=3).reshape(n * oh * ow, len(kept) * c)
    return patches, kept, (n, oh, ow)


def _weight_slab(w_hwio, kept):
    """(KH,KW,IC,OC) -> (len(kept)*IC, OC) matching the im2col column order."""
    return jnp.concatenate([w_hwio[i, j] for (i, j) in kept], axis=0)


def _pad_k(patches, w2d):
    """Zero-pad the contraction dim to a multiple of 128 (lane-aligned MXU loads)."""
    pk = (-patches.shape[1]) % 128
    if pk:
        patches = jnp.pad(patches, ((0, 0), (0, pk)))
        w2d = jnp.pad(w2d, ((0, pk), (0, 0)))
    return patches, w2d


def conv_bn(x, w_hwio, bias, stride, pad, relu):
    """Conv (no bias) with eval-mode BN folded into bf16 weights + f32 bias."""
    kh, kw, ic, oc = w_hwio.shape
    patches, kept, (n, oh, ow) = im2col(x, kh, kw, stride, pad)
    w2d = _weight_slab(w_hwio, kept)
    patches, w2d = _pad_k(patches, w2d)
    out = _launch_matmul(functools.partial(_conv_kernel, relu=relu),
                         [(patches, True), (w2d, False), (bias, False)],
                         n * oh * ow, oc)
    return out.reshape(n, oh, ow, oc)


def maxpool3x3_s2_p1(x):
    # TODO(synk): maxpool left in plain JAX (reduce_window); negligible vs. the convs.
    return lax.reduce_window(
        x, jnp.array(-jnp.inf, dtype=x.dtype), lax.max,
        window_dimensions=(1, 3, 3, 1),
        window_strides=(1, 2, 2, 1),
        padding=[(0, 0), (1, 1), (1, 1), (0, 0)])


def basic_block(x, blk):
    stride = blk['stride']
    w1, b1 = blk['conv1']
    w2, b2 = blk['conv2']
    oc = w2.shape[-1]

    out1 = conv_bn(x, w1, b1, stride=stride, pad=1, relu=True)        # pallas call 1
    n, oh, ow, _ = out1.shape
    m = n * oh * ow

    p2, kept2, _ = im2col(out1, 3, 3, 1, 1)
    w2d = _weight_slab(w2, kept2)
    p2, w2d = _pad_k(p2, w2d)

    if 'down' in blk:                                                 # pallas call 2
        wd, bd = blk['down']
        dsp, keptd, _ = im2col(x, 1, 1, stride, 0)
        wdd = _weight_slab(wd, keptd)
        dsp, wdd = _pad_k(dsp, wdd)
        y = _launch_matmul(_conv_res_down_kernel,
                           [(p2, True), (w2d, False), (b2, False),
                            (dsp, True), (wdd, False), (bd, False)],
                           m, oc)
    else:
        identity = x.reshape(m, oc)
        y = _launch_matmul(_conv_res_kernel,
                           [(p2, True), (w2d, False), (b2, False), (identity, True)],
                           m, oc)
    return y.reshape(n, oh, ow, oc)


def head(feats, w, b):
    B = feats.shape[0]
    nc = w.shape[1]
    return pl.pallas_call(
        _head_kernel,
        out_shape=jax.ShapeDtypeStruct((B, nc), jnp.float32),
        in_specs=[_VMEM, _VMEM, _VMEM],
        out_specs=_VMEM,
        compiler_params=pltpu.CompilerParams(vmem_limit_bytes=VMEM_LIMIT),
    )(feats, w, b)


# --------------------------- parameter creation -----------------------------

def make_conv_bn_params(key, kh, kw, ic, oc):
    """Deterministic conv weight + BN params, with eval-mode BN folded in.
    Weights stored bf16 (MXU operand), bias stored f32 (epilogue)."""
    k1, k2, k3, k4, k5 = jax.random.split(key, 5)
    w = jax.random.normal(k1, (kh, kw, ic, oc), jnp.float32) * 0.05
    gamma = 1.0 + 0.1 * jax.random.normal(k2, (oc,), jnp.float32)
    beta = 0.1 * jax.random.normal(k3, (oc,), jnp.float32)
    r_mean = 0.1 * jax.random.normal(k4, (oc,), jnp.float32)
    r_var = jnp.abs(1.0 + 0.1 * jax.random.normal(k5, (oc,), jnp.float32))
    scale = gamma / jnp.sqrt(r_var + EPS)
    w_folded = (w * scale).astype(jnp.bfloat16)
    bias = (beta - r_mean * scale).reshape(1, oc)
    return w_folded, bias


def init_params(key, num_classes):
    keys = jax.random.split(key, 40)
    ki = iter(keys)
    params = {'conv1': make_conv_bn_params(next(ki), 7, 7, 10, 64)}
    cfgs = [(64, 64, 1), (64, 128, 2), (128, 256, 2), (256, 512, 2)]
    layers = []
    for (cin, cout, stride) in cfgs:
        blocks = []
        for b in range(2):
            s = stride if b == 0 else 1
            inc = cin if b == 0 else cout
            blk = {
                'stride': s,
                'conv1': make_conv_bn_params(next(ki), 3, 3, inc, cout),
                'conv2': make_conv_bn_params(next(ki), 3, 3, cout, cout),
            }
            if b == 0 and (s != 1 or inc != cout):
                blk['down'] = make_conv_bn_params(next(ki), 1, 1, inc, cout)
            blocks.append(blk)
        layers.append(blocks)
    params['layers'] = layers
    kf1, kf2 = jax.random.split(next(ki))
    params['fc_w'] = jax.random.normal(kf1, (512, num_classes), jnp.float32) * 0.05
    params['fc_b'] = (jax.random.normal(kf2, (num_classes,), jnp.float32) * 0.05
                      ).reshape(1, num_classes)
    return params


# -------------------------------- forward -----------------------------------

def tsn_op_flow_forward(params, x):
    """x: (B, T, C=10, H, W) f32 (PyTorch NCHW convention) -> (B, num_classes) f32."""
    B, T, C, H, W = x.shape
    x = x.reshape(B * T, C, H, W).transpose(0, 2, 3, 1).astype(jnp.bfloat16)  # NHWC bf16
    w1, b1 = params['conv1']
    x = conv_bn(x, w1, b1, stride=7, pad=2, relu=True)        # conv1 + bn1 + relu
    x = maxpool3x3_s2_p1(x)
    for blocks in params['layers']:
        for blk in blocks:
            x = basic_block(x, blk)
    n, hh, ww, c = x.shape                                    # (B*T, H', W', 512)
    feats = x.reshape(B, T * hh * ww, c).astype(jnp.float32)
    return head(feats, params['fc_w'], params['fc_b'])        # avgpool + temporal mean + fc


if __name__ == "__main__":
    num_classes = 5
    num_segments = 3
    B, T, C, H, W = 2, num_segments, 10, 56, 56

    key = jax.random.PRNGKey(0)
    k_params, k_x = jax.random.split(key)
    params = init_params(k_params, num_classes)
    x = jax.random.normal(k_x, (B, T, C, H, W), jnp.float32)

    fwd = jax.jit(lambda inp: tsn_op_flow_forward(params, inp))
    out = jax.block_until_ready(fwd(x))
    assert out.shape == (B, num_classes), out.shape
    assert out.dtype == jnp.float32
    print("KERNEL_OK")
</pallas_src>

<mosaic_0001>
module attributes {stable_mosaic.version = 11 : i64} {
  func.func @_conv_kernel(%arg0: i32, %arg1: memref<128x512xbf16, #tpu.memory_space<vmem>>, %arg2: memref<512x64xbf16, #tpu.memory_space<vmem>>, %arg3: memref<1x64xf32, #tpu.memory_space<vmem>>, %arg4: memref<128x64xbf16, #tpu.memory_space<vmem>>) attributes {dimension_semantics = [#tpu.dimension_semantics<parallel>], iteration_bounds = array<i64: 3>, scalar_prefetch = 0 : i64, scratch_operands = 0 : i64, tpu.core_type = #tpu.core_type<tc>, window_params = [{transform_indices = @transform_0, window_bounds = array<i64: 128, 512>}, {pipeline_mode = #tpu.pipeline_mode<synchronous>, transform_indices = @transform_1, window_bounds = array<i64: 512, 64>}, {pipeline_mode = #tpu.pipeline_mode<synchronous>, transform_indices = @transform_2, window_bounds = array<i64: 1, 64>}, {transform_indices = @transform_3, window_bounds = array<i64: 128, 64>}]} {
    %c0 = arith.constant 0 : index
    %c0_0 = arith.constant 0 : index
    %0 = vector.load %arg1[%c0, %c0_0] : memref<128x512xbf16, #tpu.memory_space<vmem>>, vector<128x512xbf16>
    %c0_1 = arith.constant 0 : index
    %c0_2 = arith.constant 0 : index
    %1 = vector.load %arg2[%c0_1, %c0_2] : memref<512x64xbf16, #tpu.memory_space<vmem>>, vector<512x64xbf16>
    %cst = arith.constant dense<0.000000e+00> : vector<128x64xf32>
    %2 = tpu.matmul %0, %1, %cst {dimension_numbers = #tpu.dot_dimension_numbers<[1], [0], [0], [1], [0, 0, 1, 1], [], []>} : vector<128x512xbf16>, vector<512x64xbf16>, vector<128x64xf32> -> vector<128x64xf32>
    %c0_3 = arith.constant 0 : index
    %c0_4 = arith.constant 0 : index
    %3 = vector.load %arg3[%c0_3, %c0_4] : memref<1x64xf32, #tpu.memory_space<vmem>>, vector<1x64xf32>
    %4 = vector.broadcast %3 : vector<1x64xf32> to vector<128x64xf32>
    %5 = arith.addf %2, %4 : vector<128x64xf32>
    %cst_5 = arith.constant 0.000000e+00 : f32
    %6 = vector.broadcast %cst_5 : f32 to vector<128x64xf32>
    %7 = arith.maximumf %5, %6 : vector<128x64xf32>
    %8 = arith.truncf %7 : vector<128x64xf32> to vector<128x64xbf16>
    %c0_6 = arith.constant 0 : index
    %c0_7 = arith.constant 0 : index
    %9 = vector.load %arg4[%c0_6, %c0_7] : memref<128x64xbf16, #tpu.memory_space<vmem>>, vector<128x64xbf16>
    tpu.vector_store %arg4[%c0_6, %c0_7], %8 {strides = array<i32>} : memref<128x64xbf16, #tpu.memory_space<vmem>>, vector<128x64xbf16>,
    return
  }
  func.func @transform_0(%arg0: i32) -> (i32, i32) {
    %c0_i32 = arith.constant 0 : i32
    %c0_i32_0 = arith.constant 0 : i32
    return %arg0, %c0_i32 : i32, i32
  }
  func.func @transform_1(%arg0: i32) -> (i32, i32) {
    %c0_i32 = arith.constant 0 : i32
    %c0_i32_0 = arith.constant 0 : i32
    %c0_i32_1 = arith.constant 0 : i32
    return %c0_i32, %c0_i32_0 : i32, i32
  }
  func.func @transform_2(%arg0: i32) -> (i32, i32) {
    %c0_i32 = arith.constant 0 : i32
    %c0_i32_0 = arith.constant 0 : i32
    %c0_i32_1 = arith.constant 0 : i32
    return %c0_i32, %c0_i32_0 : i32, i32
  }
  func.func @transform_3(%arg0: i32) -> (i32, i32) {
    %c0_i32 = arith.constant 0 : i32
    %c0_i32_0 = arith.constant 0 : i32
    return %arg0, %c0_i32 : i32, i32
  }
}

module attributes {stable_mosaic.version = 11 : i64} {
  func.func @_conv_kernel(%arg0: i32, %arg1: memref<96x640xbf16, #tpu.memory_space<vmem>>, %arg2: memref<640x64xbf16, #tpu.memory_space<vmem>>, %arg3: memref<1x64xf32, #tpu.memory_space<vmem>>, %arg4: memref<96x64xbf16, #tpu.memory_space<vmem>>) attributes {dimension_semantics = [#tpu.dimension_semantics<parallel>], iteration_bounds = array<i64: 1>, scalar_prefetch = 0 : i64, scratch_operands = 0 : i64, tpu.core_type = #tpu.core_type<tc>, window_params = [{transform_indices = @transform_0, window_bounds = array<i64: 96, 640>}, {pipeline_mode = #tpu.pipeline_mode<synchronous>, transform_indices = @transform_1, window_bounds = array<i64: 640, 64>}, {pipeline_mode = #tpu.pipeline_mode<synchronous>, transform_indices = @transform_2, window_bounds = array<i64: 1, 64>}, {transform_indices = @transform_3, window_bounds = array<i64: 96, 64>}]} {
    %c0 = arith.constant 0 : index
    %c0_0 = arith.constant 0 : index
    %0 = vector.load %arg1[%c0, %c0_0] : memref<96x640xbf16, #tpu.memory_space<vmem>>, vector<96x640xbf16>
    %c0_1 = arith.constant 0 : index
    %c0_2 = arith.constant 0 : index
    %1 = vector.load %arg2[%c0_1, %c0_2] : memref<640x64xbf16, #tpu.memory_space<vmem>>, vector<640x64xbf16>
    %cst = arith.constant dense<0.000000e+00> : vector<96x64xf32>
    %2 = tpu.matmul %0, %1, %cst {dimension_numbers = #tpu.dot_dimension_numbers<[1], [0], [0], [1], [0, 0, 1, 1], [], []>} : vector<96x640xbf16>, vector<640x64xbf16>, vector<96x64xf32> -> vector<96x64xf32>
    %c0_3 = arith.constant 0 : index
    %c0_4 = arith.constant 0 : index
    %3 = vector.load %arg3[%c0_3, %c0_4] : memref<1x64xf32, #tpu.memory_space<vmem>>, vector<1x64xf32>
    %4 = vector.broadcast %3 : vector<1x64xf32> to vector<96x64xf32>
    %5 = arith.addf %2, %4 : vector<96x64xf32>
    %cst_5 = arith.constant 0.000000e+00 : f32
    %6 = vector.broadcast %cst_5 : f32 to vector<96x64xf32>
    %7 = arith.maximumf %5, %6 : vector<96x64xf32>
    %8 = arith.truncf %7 : vector<96x64xf32> to vector<96x64xbf16>
    %c0_6 = arith.constant 0 : index
    %c0_7 = arith.constant 0 : index
    %9 = vector.load %arg4[%c0_6, %c0_7] : memref<96x64xbf16, #tpu.memory_space<vmem>>, vector<96x64xbf16>
    tpu.vector_store %arg4[%c0_6, %c0_7], %8 {strides = array<i32>} : memref<96x64xbf16, #tpu.memory_space<vmem>>, vector<96x64xbf16>,
    return
  }
  func.func @transform_0(%arg0: i32) -> (i32, i32) {
    %c0_i32 = arith.constant 0 : i32
    %c0_i32_0 = arith.constant 0 : i32
    return %arg0, %c0_i32 : i32, i32
  }
  func.func @transform_1(%arg0: i32) -> (i32, i32) {
    %c0_i32 = arith.constant 0 : i32
    %c0_i32_0 = arith.constant 0 : i32
    %c0_i32_1 = arith.constant 0 : i32
    return %c0_i32, %c0_i32_0 : i32, i32
  }
  func.func @transform_2(%arg0: i32) -> (i32, i32) {
    %c0_i32 = arith.constant 0 : i32
    %c0_i32_0 = arith.constant 0 : i32
    %c0_i32_1 = arith.constant 0 : i32
    return %c0_i32, %c0_i32_0 : i32, i32
  }
  func.func @transform_3(%arg0: i32) -> (i32, i32) {
    %c0_i32 = arith.constant 0 : i32
    %c0_i32_0 = arith.constant 0 : i32
    return %arg0, %c0_i32 : i32, i32
  }
}

module attributes {stable_mosaic.version = 11 : i64} {
  func.func @_conv_res_kernel(%arg0: i32, %arg1: memref<96x640xbf16, #tpu.memory_space<vmem>>, %arg2: memref<640x64xbf16, #tpu.memory_space<vmem>>, %arg3: memref<1x64xf32, #tpu.memory_space<vmem>>, %arg4: memref<96x64xbf16, #tpu.memory_space<vmem>>, %arg5: memref<96x64xbf16, #tpu.memory_space<vmem>>) attributes {dimension_semantics = [#tpu.dimension_semantics<parallel>], iteration_bounds = array<i64: 1>, scalar_prefetch = 0 : i64, scratch_operands = 0 : i64, tpu.core_type = #tpu.core_type<tc>, window_params = [{transform_indices = @transform_0, window_bounds = array<i64: 96, 640>}, {pipeline_mode = #tpu.pipeline_mode<synchronous>, transform_indices = @transform_1, window_bounds = array<i64: 640, 64>}, {pipeline_mode = #tpu.pipeline_mode<synchronous>, transform_indices = @transform_2, window_bounds = array<i64: 1, 64>}, {transform_indices = @transform_3, window_bounds = array<i64: 96, 64>}, {transform_indices = @transform_4, window_bounds = array<i64: 96, 64>}]} {
    %c0 = arith.constant 0 : index
    %c0_0 = arith.constant 0 : index
    %0 = vector.load %arg1[%c0, %c0_0] : memref<96x640xbf16, #tpu.memory_space<vmem>>, vector<96x640xbf16>
    %c0_1 = arith.constant 0 : index
    %c0_2 = arith.constant 0 : index
    %1 = vector.load %arg2[%c0_1, %c0_2] : memref<640x64xbf16, #tpu.memory_space<vmem>>, vector<640x64xbf16>
    %cst = arith.constant dense<0.000000e+00> : vector<96x64xf32>
    %2 = tpu.matmul %0, %1, %cst {dimension_numbers = #tpu.dot_dimension_numbers<[1], [0], [0], [1], [0, 0, 1, 1], [], []>} : vector<96x640xbf16>, vector<640x64xbf16>, vector<96x64xf32> -> vector<96x64xf32>
    %c0_3 = arith.constant 0 : index
    %c0_4 = arith.constant 0 : index
    %3 = vector.load %arg3[%c0_3, %c0_4] : memref<1x64xf32, #tpu.memory_space<vmem>>, vector<1x64xf32>
    %4 = vector.broadcast %3 : vector<1x64xf32> to vector<96x64xf32>
    %5 = arith.addf %2, %4 : vector<96x64xf32>
    %c0_5 = arith.constant 0 : index
    %c0_6 = arith.constant 0 : index
    %6 = vector.load %arg4[%c0_5, %c0_6] : memref<96x64xbf16, #tpu.memory_space<vmem>>, vector<96x64xbf16>
    %7 = arith.extf %6 : vector<96x64xbf16> to vector<96x64xf32>
    %8 = arith.addf %5, %7 : vector<96x64xf32>
    %cst_7 = arith.constant 0.000000e+00 : f32
    %9 = vector.broadcast %cst_7 : f32 to vector<96x64xf32>
    %10 = arith.maximumf %8, %9 : vector<96x64xf32>
    %11 = arith.truncf %10 : vector<96x64xf32> to vector<96x64xbf16>
    %c0_8 = arith.constant 0 : index
    %c0_9 = arith.constant 0 : index
    %12 = vector.load %arg5[%c0_8, %c0_9] : memref<96x64xbf16, #tpu.memory_space<vmem>>, vector<96x64xbf16>
    tpu.vector_store %arg5[%c0_8, %c0_9], %11 {strides = array<i32>} : memref<96x64xbf16, #tpu.memory_space<vmem>>, vector<96x64xbf16>,
    return
  }
  func.func @transform_0(%arg0: i32) -> (i32, i32) {
    %c0_i32 = arith.constant 0 : i32
    %c0_i32_0 = arith.constant 0 : i32
    return %arg0, %c0_i32 : i32, i32
  }
  func.func @transform_1(%arg0: i32) -> (i32, i32) {
    %c0_i32 = arith.constant 0 : i32
    %c0_i32_0 = arith.constant 0 : i32
    %c0_i32_1 = arith.constant 0 : i32
    return %c0_i32, %c0_i32_0 : i32, i32
  }
  func.func @transform_2(%arg0: i32) -> (i32, i32) {
    %c0_i32 = arith.constant 0 : i32
    %c0_i32_0 = arith.constant 0 : i32
    %c0_i32_1 = arith.constant 0 : i32
    return %c0_i32, %c0_i32_0 : i32, i32
  }
  func.func @transform_3(%arg0: i32) -> (i32, i32) {
    %c0_i32 = arith.constant 0 : i32
    %c0_i32_0 = arith.constant 0 : i32
    return %arg0, %c0_i32 : i32, i32
  }
  func.func @transform_4(%arg0: i32) -> (i32, i32) {
    %c0_i32 = arith.constant 0 : i32
    %c0_i32_0 = arith.constant 0 : i32
    return %arg0, %c0_i32 : i32, i32
  }
}

module attributes {stable_mosaic.version = 11 : i64} {
  func.func @_conv_kernel(%arg0: i32, %arg1: memref<24x640xbf16, #tpu.memory_space<vmem>>, %arg2: memref<640x128xbf16, #tpu.memory_space<vmem>>, %arg3: memref<1x128xf32, #tpu.memory_space<vmem>>, %arg4: memref<24x128xbf16, #tpu.memory_space<vmem>>) attributes {dimension_semantics = [#tpu.dimension_semantics<parallel>], iteration_bounds = array<i64: 1>, scalar_prefetch = 0 : i64, scratch_operands = 0 : i64, tpu.core_type = #tpu.core_type<tc>, window_params = [{transform_indices = @transform_0, window_bounds = array<i64: 24, 640>}, {pipeline_mode = #tpu.pipeline_mode<synchronous>, transform_indices = @transform_1, window_bounds = array<i64: 640, 128>}, {pipeline_mode = #tpu.pipeline_mode<synchronous>, transform_indices = @transform_2, window_bounds = array<i64: 1, 128>}, {transform_indices = @transform_3, window_bounds = array<i64: 24, 128>}]} {
    %c0 = arith.constant 0 : index
    %c0_0 = arith.constant 0 : index
    %0 = vector.load %arg1[%c0, %c0_0] : memref<24x640xbf16, #tpu.memory_space<vmem>>, vector<24x640xbf16>
    %c0_1 = arith.constant 0 : index
    %c0_2 = arith.constant 0 : index
    %1 = vector.load %arg2[%c0_1, %c0_2] : memref<640x128xbf16, #tpu.memory_space<vmem>>, vector<640x128xbf16>
    %cst = arith.constant dense<0.000000e+00> : vector<24x128xf32>
    %2 = tpu.matmul %0, %1, %cst {dimension_numbers = #tpu.dot_dimension_numbers<[1], [0], [0], [1], [0, 0, 1, 1], [], []>} : vector<24x640xbf16>, vector<640x128xbf16>, vector<24x128xf32> -> vector<24x128xf32>
    %c0_3 = arith.constant 0 : index
    %c0_4 = arith.constant 0 : index
    %3 = vector.load %arg3[%c0_3, %c0_4] : memref<1x128xf32, #tpu.memory_space<vmem>>, vector<1x128xf32>
    %4 = vector.broadcast %3 : vector<1x128xf32> to vector<24x128xf32>
    %5 = arith.addf %2, %4 : vector<24x128xf32>
    %cst_5 = arith.constant 0.000000e+00 : f32
    %6 = vector.broadcast %cst_5 : f32 to vector<24x128xf32>
    %7 = arith.maximumf %5, %6 : vector<24x128xf32>
    %8 = arith.truncf %7 : vector<24x128xf32> to vector<24x128xbf16>
    %c0_6 = arith.constant 0 : index
    %c0_7 = arith.constant 0 : index
    %9 = vector.load %arg4[%c0_6, %c0_7] : memref<24x128xbf16, #tpu.memory_space<vmem>>, vector<24x128xbf16>
    tpu.vector_store %arg4[%c0_6, %c0_7], %8 {strides = array<i32>} : memref<24x128xbf16, #tpu.memory_space<vmem>>, vector<24x128xbf16>,
    return
  }
  func.func @transform_0(%arg0: i32) -> (i32, i32) {
    %c0_i32 = arith.constant 0 : i32
    %c0_i32_0 = arith.constant 0 : i32
    return %arg0, %c0_i32 : i32, i32
  }
  func.func @transform_1(%arg0: i32) -> (i32, i32) {
    %c0_i32 = arith.constant 0 : i32
    %c0_i32_0 = arith.constant 0 : i32
    %c0_i32_1 = arith.constant 0 : i32
    return %c0_i32, %c0_i32_0 : i32, i32
  }
  func.func @transform_2(%arg0: i32) -> (i32, i32) {
    %c0_i32 = arith.constant 0 : i32
    %c0_i32_0 = arith.constant 0 : i32
    %c0_i32_1 = arith.constant 0 : i32
    return %c0_i32, %c0_i32_0 : i32, i32
  }
  func.func @transform_3(%arg0: i32) -> (i32, i32) {
    %c0_i32 = arith.constant 0 : i32
    %c0_i32_0 = arith.constant 0 : i32
    return %arg0, %c0_i32 : i32, i32
  }
}

module attributes {stable_mosaic.version = 11 : i64} {
  func.func @_conv_kernel(%arg0: i32, %arg1: memref<24x1152xbf16, #tpu.memory_space<vmem>>, %arg2: memref<1152x128xbf16, #tpu.memory_space<vmem>>, %arg3: memref<1x128xf32, #tpu.memory_space<vmem>>, %arg4: memref<24x128xbf16, #tpu.memory_space<vmem>>) attributes {dimension_semantics = [#tpu.dimension_semantics<parallel>], iteration_bounds = array<i64: 1>, scalar_prefetch = 0 : i64, scratch_operands = 0 : i64, tpu.core_type = #tpu.core_type<tc>, window_params = [{transform_indices = @transform_0, window_bounds = array<i64: 24, 1152>}, {pipeline_mode = #tpu.pipeline_mode<synchronous>, transform_indices = @transform_1, window_bounds = array<i64: 1152, 128>}, {pipeline_mode = #tpu.pipeline_mode<synchronous>, transform_indices = @transform_2, window_bounds = array<i64: 1, 128>}, {transform_indices = @transform_3, window_bounds = array<i64: 24, 128>}]} {
    %c0 = arith.constant 0 : index
    %c0_0 = arith.constant 0 : index
    %0 = vector.load %arg1[%c0, %c0_0] : memref<24x1152xbf16, #tpu.memory_space<vmem>>, vector<24x1152xbf16>
    %c0_1 = arith.constant 0 : index
    %c0_2 = arith.constant 0 : index
    %1 = vector.load %arg2[%c0_1, %c0_2] : memref<1152x128xbf16, #tpu.memory_space<vmem>>, vector<1152x128xbf16>
    %cst = arith.constant dense<0.000000e+00> : vector<24x128xf32>
    %2 = tpu.matmul %0, %1, %cst {dimension_numbers = #tpu.dot_dimension_numbers<[1], [0], [0], [1], [0, 0, 1, 1], [], []>} : vector<24x1152xbf16>, vector<1152x128xbf16>, vector<24x128xf32> -> vector<24x128xf32>
    %c0_3 = arith.constant 0 : index
    %c0_4 = arith.constant 0 : index
    %3 = vector.load %arg3[%c0_3, %c0_4] : memref<1x128xf32, #tpu.memory_space<vmem>>, vector<1x128xf32>
    %4 = vector.broadcast %3 : vector<1x128xf32> to vector<24x128xf32>
    %5 = arith.addf %2, %4 : vector<24x128xf32>
    %cst_5 = arith.constant 0.000000e+00 : f32
    %6 = vector.broadcast %cst_5 : f32 to vector<24x128xf32>
    %7 = arith.maximumf %5, %6 : vector<24x128xf32>
    %8 = arith.truncf %7 : vector<24x128xf32> to vector<24x128xbf16>
    %c0_6 = arith.constant 0 : index
    %c0_7 = arith.constant 0 : index
    %9 = vector.load %arg4[%c0_6, %c0_7] : memref<24x128xbf16, #tpu.memory_space<vmem>>, vector<24x128xbf16>
    tpu.vector_store %arg4[%c0_6, %c0_7], %8 {strides = array<i32>} : memref<24x128xbf16, #tpu.memory_space<vmem>>, vector<24x128xbf16>,
    return
  }
  func.func @transform_0(%arg0: i32) -> (i32, i32) {
    %c0_i32 = arith.constant 0 : i32
    %c0_i32_0 = arith.constant 0 : i32
    return %arg0, %c0_i32 : i32, i32
  }
  func.func @transform_1(%arg0: i32) -> (i32, i32) {
    %c0_i32 = arith.constant 0 : i32
    %c0_i32_0 = arith.constant 0 : i32
    %c0_i32_1 = arith.constant 0 : i32
    return %c0_i32, %c0_i32_0 : i32, i32
  }
  func.func @transform_2(%arg0: i32) -> (i32, i32) {
    %c0_i32 = arith.constant 0 : i32
    %c0_i32_0 = arith.constant 0 : i32
    %c0_i32_1 = arith.constant 0 : i32
    return %c0_i32, %c0_i32_0 : i32, i32
  }
  func.func @transform_3(%arg0: i32) -> (i32, i32) {
    %c0_i32 = arith.constant 0 : i32
    %c0_i32_0 = arith.constant 0 : i32
    return %arg0, %c0_i32 : i32, i32
  }
}

module attributes {stable_mosaic.version = 11 : i64} {
  func.func @_conv_res_down_kernel(%arg0: i32, %arg1: memref<24x1152xbf16, #tpu.memory_space<vmem>>, %arg2: memref<1152x128xbf16, #tpu.memory_space<vmem>>, %arg3: memref<1x128xf32, #tpu.memory_space<vmem>>, %arg4: memref<24x128xbf16, #tpu.memory_space<vmem>>, %arg5: memref<128x128xbf16, #tpu.memory_space<vmem>>, %arg6: memref<1x128xf32, #tpu.memory_space<vmem>>, %arg7: memref<24x128xbf16, #tpu.memory_space<vmem>>) attributes {dimension_semantics = [#tpu.dimension_semantics<parallel>], iteration_bounds = array<i64: 1>, scalar_prefetch = 0 : i64, scratch_operands = 0 : i64, tpu.core_type = #tpu.core_type<tc>, window_params = [{transform_indices = @transform_0, window_bounds = array<i64: 24, 1152>}, {pipeline_mode = #tpu.pipeline_mode<synchronous>, transform_indices = @transform_1, window_bounds = array<i64: 1152, 128>}, {pipeline_mode = #tpu.pipeline_mode<synchronous>, transform_indices = @transform_2, window_bounds = array<i64: 1, 128>}, {transform_indices = @transform_3, window_bounds = array<i64: 24, 128>}, {pipeline_mode = #tpu.pipeline_mode<synchronous>, transform_indices = @transform_4, window_bounds = array<i64: 128, 128>}, {pipeline_mode = #tpu.pipeline_mode<synchronous>, transform_indices = @transform_5, window_bounds = array<i64: 1, 128>}, {transform_indices = @transform_6, window_bounds = array<i64: 24, 128>}]} {
    %c0 = arith.constant 0 : index
    %c0_0 = arith.constant 0 : index
    %0 = vector.load %arg1[%c0, %c0_0] : memref<24x1152xbf16, #tpu.memory_space<vmem>>, vector<24x1152xbf16>
    %c0_1 = arith.constant 0 : index
    %c0_2 = arith.constant 0 : index
    %1 = vector.load %arg2[%c0_1, %c0_2] : memref<1152x128xbf16, #tpu.memory_space<vmem>>, vector<1152x128xbf16>
    %cst = arith.constant dense<0.000000e+00> : vector<24x128xf32>
    %2 = tpu.matmul %0, %1, %cst {dimension_numbers = #tpu.dot_dimension_numbers<[1], [0], [0], [1], [0, 0, 1, 1], [], []>} : vector<24x1152xbf16>, vector<1152x128xbf16>, vector<24x128xf32> -> vector<24x128xf32>
    %c0_3 = arith.constant 0 : index
    %c0_4 = arith.constant 0 : index
    %3 = vector.load %arg3[%c0_3, %c0_4] : memref<1x128xf32, #tpu.memory_space<vmem>>, vector<1x128xf32>
    %4 = vector.broadcast %3 : vector<1x128xf32> to vector<24x128xf32>
    %5 = arith.addf %2, %4 : vector<24x128xf32>
    %c0_5 = arith.constant 0 : index
    %c0_6 = arith.constant 0 : index
    %6 = vector.load %arg4[%c0_5, %c0_6] : memref<24x128xbf16, #tpu.memory_space<vmem>>, vector<24x128xbf16>
    %c0_7 = arith.constant 0 : index
    %c0_8 = arith.constant 0 : index
    %7 = vector.load %arg5[%c0_7, %c0_8] : memref<128x128xbf16, #tpu.memory_space<vmem>>, vector<128x128xbf16>
    %cst_9 = arith.constant dense<0.000000e+00> : vector<24x128xf32>
    %8 = tpu.matmul %6, %7, %cst_9 {dimension_numbers = #tpu.dot_dimension_numbers<[1], [0], [0], [1], [0, 0, 1, 1], [], []>} : vector<24x128xbf16>, vector<128x128xbf16>, vector<24x128xf32> -> vector<24x128xf32>
    %c0_10 = arith.constant 0 : index
    %c0_11 = arith.constant 0 : index
    %9 = vector.load %arg6[%c0_10, %c0_11] : memref<1x128xf32, #tpu.memory_space<vmem>>, vector<1x128xf32>
    %10 = vector.broadcast %9 : vector<1x128xf32> to vector<24x128xf32>
    %11 = arith.addf %8, %10 : vector<24x128xf32>
    %12 = arith.addf %5, %11 : vector<24x128xf32>
    %cst_12 = arith.constant 0.000000e+00 : f32
    %13 = vector.broadcast %cst_12 : f32 to vector<24x128xf32>
    %14 = arith.maximumf %12, %13 : vector<24x128xf32>
    %15 = arith.truncf %14 : vector<24x128xf32> to vector<24x128xbf16>
    %c0_13 = arith.constant 0 : index
    %c0_14 = arith.constant 0 : index
    %16 = vector.load %arg7[%c0_13, %c0_14] : memref<24x128xbf16, #tpu.memory_space<vmem>>, vector<24x128xbf16>
    tpu.vector_store %arg7[%c0_13, %c0_14], %15 {strides = array<i32>} : memref<24x128xbf16, #tpu.memory_space<vmem>>, vector<24x128xbf16>,
    return
  }
  func.func @transform_0(%arg0: i32) -> (i32, i32) {
    %c0_i32 = arith.constant 0 : i32
    %c0_i32_0 = arith.constant 0 : i32
    return %arg0, %c0_i32 : i32, i32
  }
  func.func @transform_1(%arg0: i32) -> (i32, i32) {
    %c0_i32 = arith.constant 0 : i32
    %c0_i32_0 = arith.constant 0 : i32
    %c0_i32_1 = arith.constant 0 : i32
    return %c0_i32, %c0_i32_0 : i32, i32
  }
  func.func @transform_2(%arg0: i32) -> (i32, i32) {
    %c0_i32 = arith.constant 0 : i32
    %c0_i32_0 = arith.constant 0 : i32
    %c0_i32_1 = arith.constant 0 : i32
    return %c0_i32, %c0_i32_0 : i32, i32
  }
  func.func @transform_3(%arg0: i32) -> (i32, i32) {
    %c0_i32 = arith.constant 0 : i32
    %c0_i32_0 = arith.constant 0 : i32
    return %arg0, %c0_i32 : i32, i32
  }
  func.func @transform_4(%arg0: i32) -> (i32, i32) {
    %c0_i32 = arith.constant 0 : i32
    %c0_i32_0 = arith.constant 0 : i32
    %c0_i32_1 = arith.constant 0 : i32
    return %c0_i32, %c0_i32_0 : i32, i32
  }
  func.func @transform_5(%arg0: i32) -> (i32, i32) {
    %c0_i32 = arith.constant 0 : i32
    %c0_i32_0 = arith.constant 0 : i32
    %c0_i32_1 = arith.constant 0 : i32
    return %c0_i32, %c0_i32_0 : i32, i32
  }
  func.func @transform_6(%arg0: i32) -> (i32, i32) {
    %c0_i32 = arith.constant 0 : i32
    %c0_i32_0 = arith.constant 0 : i32
    return %arg0, %c0_i32 : i32, i32
  }
}

module attributes {stable_mosaic.version = 11 : i64} {
  func.func @_conv_res_kernel(%arg0: i32, %arg1: memref<24x1152xbf16, #tpu.memory_space<vmem>>, %arg2: memref<1152x128xbf16, #tpu.memory_space<vmem>>, %arg3: memref<1x128xf32, #tpu.memory_space<vmem>>, %arg4: memref<24x128xbf16, #tpu.memory_space<vmem>>, %arg5: memref<24x128xbf16, #tpu.memory_space<vmem>>) attributes {dimension_semantics = [#tpu.dimension_semantics<parallel>], iteration_bounds = array<i64: 1>, scalar_prefetch = 0 : i64, scratch_operands = 0 : i64, tpu.core_type = #tpu.core_type<tc>, window_params = [{transform_indices = @transform_0, window_bounds = array<i64: 24, 1152>}, {pipeline_mode = #tpu.pipeline_mode<synchronous>, transform_indices = @transform_1, window_bounds = array<i64: 1152, 128>}, {pipeline_mode = #tpu.pipeline_mode<synchronous>, transform_indices = @transform_2, window_bounds = array<i64: 1, 128>}, {transform_indices = @transform_3, window_bounds = array<i64: 24, 128>}, {transform_indices = @transform_4, window_bounds = array<i64: 24, 128>}]} {
    %c0 = arith.constant 0 : index
    %c0_0 = arith.constant 0 : index
    %0 = vector.load %arg1[%c0, %c0_0] : memref<24x1152xbf16, #tpu.memory_space<vmem>>, vector<24x1152xbf16>
    %c0_1 = arith.constant 0 : index
    %c0_2 = arith.constant 0 : index
    %1 = vector.load %arg2[%c0_1, %c0_2] : memref<1152x128xbf16, #tpu.memory_space<vmem>>, vector<1152x128xbf16>
    %cst = arith.constant dense<0.000000e+00> : vector<24x128xf32>
    %2 = tpu.matmul %0, %1, %cst {dimension_numbers = #tpu.dot_dimension_numbers<[1], [0], [0], [1], [0, 0, 1, 1], [], []>} : vector<24x1152xbf16>, vector<1152x128xbf16>, vector<24x128xf32> -> vector<24x128xf32>
    %c0_3 = arith.constant 0 : index
    %c0_4 = arith.constant 0 : index
    %3 = vector.load %arg3[%c0_3, %c0_4] : memref<1x128xf32, #tpu.memory_space<vmem>>, vector<1x128xf32>
    %4 = vector.broadcast %3 : vector<1x128xf32> to vector<24x128xf32>
    %5 = arith.addf %2, %4 : vector<24x128xf32>
    %c0_5 = arith.constant 0 : index
    %c0_6 = arith.constant 0 : index
    %6 = vector.load %arg4[%c0_5, %c0_6] : memref<24x128xbf16, #tpu.memory_space<vmem>>, vector<24x128xbf16>
    %7 = arith.extf %6 : vector<24x128xbf16> to vector<24x128xf32>
    %8 = arith.addf %5, %7 : vector<24x128xf32>
    %cst_7 = arith.constant 0.000000e+00 : f32
    %9 = vector.broadcast %cst_7 : f32 to vector<24x128xf32>
    %10 = arith.maximumf %8, %9 : vector<24x128xf32>
    %11 = arith.truncf %10 : vector<24x128xf32> to vector<24x128xbf16>
    %c0_8 = arith.constant 0 : index
    %c0_9 = arith.constant 0 : index
    %12 = vector.load %arg5[%c0_8, %c0_9] : memref<24x128xbf16, #tpu.memory_space<vmem>>, vector<24x128xbf16>
    tpu.vector_store %arg5[%c0_8, %c0_9], %11 {strides = array<i32>} : memref<24x128xbf16, #tpu.memory_space<vmem>>, vector<24x128xbf16>,
    return
  }
  func.func @transform_0(%arg0: i32) -> (i32, i32) {
    %c0_i32 = arith.constant 0 : i32
    %c0_i32_0 = arith.constant 0 : i32
    return %arg0, %c0_i32 : i32, i32
  }
  func.func @transform_1(%arg0: i32) -> (i32, i32) {
    %c0_i32 = arith.constant 0 : i32
    %c0_i32_0 = arith.constant 0 : i32
    %c0_i32_1 = arith.constant 0 : i32
    return %c0_i32, %c0_i32_0 : i32, i32
  }
  func.func @transform_2(%arg0: i32) -> (i32, i32) {
    %c0_i32 = arith.constant 0 : i32
    %c0_i32_0 = arith.constant 0 : i32
    %c0_i32_1 = arith.constant 0 : i32
    return %c0_i32, %c0_i32_0 : i32, i32
  }
  func.func @transform_3(%arg0: i32) -> (i32, i32) {
    %c0_i32 = arith.constant 0 : i32
    %c0_i32_0 = arith.constant 0 : i32
    return %arg0, %c0_i32 : i32, i32
  }
  func.func @transform_4(%arg0: i32) -> (i32, i32) {
    %c0_i32 = arith.constant 0 : i32
    %c0_i32_0 = arith.constant 0 : i32
    return %arg0, %c0_i32 : i32, i32
  }
}

module attributes {stable_mosaic.version = 11 : i64} {
  func.func @_conv_kernel(%arg0: i32, %arg1: memref<6x512xbf16, #tpu.memory_space<vmem>>, %arg2: memref<512x256xbf16, #tpu.memory_space<vmem>>, %arg3: memref<1x256xf32, #tpu.memory_space<vmem>>, %arg4: memref<6x256xbf16, #tpu.memory_space<vmem>>) attributes {dimension_semantics = [#tpu.dimension_semantics<parallel>], iteration_bounds = array<i64: 1>, scalar_prefetch = 0 : i64, scratch_operands = 0 : i64, tpu.core_type = #tpu.core_type<tc>, window_params = [{transform_indices = @transform_0, window_bounds = array<i64: 6, 512>}, {pipeline_mode = #tpu.pipeline_mode<synchronous>, transform_indices = @transform_1, window_bounds = array<i64: 512, 256>}, {pipeline_mode = #tpu.pipeline_mode<synchronous>, transform_indices = @transform_2, window_bounds = array<i64: 1, 256>}, {transform_indices = @transform_3, window_bounds = array<i64: 6, 256>}]} {
    %c0 = arith.constant 0 : index
    %c0_0 = arith.constant 0 : index
    %0 = vector.load %arg1[%c0, %c0_0] : memref<6x512xbf16, #tpu.memory_space<vmem>>, vector<6x512xbf16>
    %c0_1 = arith.constant 0 : index
    %c0_2 = arith.constant 0 : index
    %1 = vector.load %arg2[%c0_1, %c0_2] : memref<512x256xbf16, #tpu.memory_space<vmem>>, vector<512x256xbf16>
    %cst = arith.constant dense<0.000000e+00> : vector<6x256xf32>
    %2 = tpu.matmul %0, %1, %cst {dimension_numbers = #tpu.dot_dimension_numbers<[1], [0], [0], [1], [0, 0, 1, 1], [], []>} : vector<6x512xbf16>, vector<512x256xbf16>, vector<6x256xf32> -> vector<6x256xf32>
    %c0_3 = arith.constant 0 : index
    %c0_4 = arith.constant 0 : index
    %3 = vector.load %arg3[%c0_3, %c0_4] : memref<1x256xf32, #tpu.memory_space<vmem>>, vector<1x256xf32>
    %4 = vector.broadcast %3 : vector<1x256xf32> to vector<6x256xf32>
    %5 = arith.addf %2, %4 : vector<6x256xf32>
    %cst_5 = arith.constant 0.000000e+00 : f32
    %6 = vector.broadcast %cst_5 : f32 to vector<6x256xf32>
    %7 = arith.maximumf %5, %6 : vector<6x256xf32>
    %8 = arith.truncf %7 : vector<6x256xf32> to vector<6x256xbf16>
    %c0_6 = arith.constant 0 : index
    %c0_7 = arith.constant 0 : index
    %9 = vector.load %arg4[%c0_6, %c0_7] : memref<6x256xbf16, #tpu.memory_space<vmem>>, vector<6x256xbf16>
    tpu.vector_store %arg4[%c0_6, %c0_7], %8 {strides = array<i32>} : memref<6x256xbf16, #tpu.memory_space<vmem>>, vector<6x256xbf16>,
    return
  }
  func.func @transform_0(%arg0: i32) -> (i32, i32) {
    %c0_i32 = arith.constant 0 : i32
    %c0_i32_0 = arith.constant 0 : i32
    return %arg0, %c0_i32 : i32, i32
  }
  func.func @transform_1(%arg0: i32) -> (i32, i32) {
    %c0_i32 = arith.constant 0 : i32
    %c0_i32_0 = arith.constant 0 : i32
    %c0_i32_1 = arith.constant 0 : i32
    return %c0_i32, %c0_i32_0 : i32, i32
  }
  func.func @transform_2(%arg0: i32) -> (i32, i32) {
    %c0_i32 = arith.constant 0 : i32
    %c0_i32_0 = arith.constant 0 : i32
    %c0_i32_1 = arith.constant 0 : i32
    return %c0_i32, %c0_i32_0 : i32, i32
  }
  func.func @transform_3(%arg0: i32) -> (i32, i32) {
    %c0_i32 = arith.constant 0 : i32
    %c0_i32_0 = arith.constant 0 : i32
    return %arg0, %c0_i32 : i32, i32
  }
}

module attributes {stable_mosaic.version = 11 : i64} {
  func.func @_conv_res_down_kernel(%arg0: i32, %arg1: memref<6x256xbf16, #tpu.memory_space<vmem>>, %arg2: memref<256x256xbf16, #tpu.memory_space<vmem>>, %arg3: memref<1x256xf32, #tpu.memory_space<vmem>>, %arg4: memref<6x128xbf16, #tpu.memory_space<vmem>>, %arg5: memref<128x256xbf16, #tpu.memory_space<vmem>>, %arg6: memref<1x256xf32, #tpu.memory_space<vmem>>, %arg7: memref<6x256xbf16, #tpu.memory_space<vmem>>) attributes {dimension_semantics = [#tpu.dimension_semantics<parallel>], iteration_bounds = array<i64: 1>, scalar_prefetch = 0 : i64, scratch_operands = 0 : i64, tpu.core_type = #tpu.core_type<tc>, window_params = [{transform_indices = @transform_0, window_bounds = array<i64: 6, 256>}, {pipeline_mode = #tpu.pipeline_mode<synchronous>, transform_indices = @transform_1, window_bounds = array<i64: 256, 256>}, {pipeline_mode = #tpu.pipeline_mode<synchronous>, transform_indices = @transform_2, window_bounds = array<i64: 1, 256>}, {transform_indices = @transform_3, window_bounds = array<i64: 6, 128>}, {pipeline_mode = #tpu.pipeline_mode<synchronous>, transform_indices = @transform_4, window_bounds = array<i64: 128, 256>}, {pipeline_mode = #tpu.pipeline_mode<synchronous>, transform_indices = @transform_5, window_bounds = array<i64: 1, 256>}, {transform_indices = @transform_6, window_bounds = array<i64: 6, 256>}]} {
    %c0 = arith.constant 0 : index
    %c0_0 = arith.constant 0 : index
    %0 = vector.load %arg1[%c0, %c0_0] : memref<6x256xbf16, #tpu.memory_space<vmem>>, vector<6x256xbf16>
    %c0_1 = arith.constant 0 : index
    %c0_2 = arith.constant 0 : index
    %1 = vector.load %arg2[%c0_1, %c0_2] : memref<256x256xbf16, #tpu.memory_space<vmem>>, vector<256x256xbf16>
    %cst = arith.constant dense<0.000000e+00> : vector<6x256xf32>
    %2 = tpu.matmul %0, %1, %cst {dimension_numbers = #tpu.dot_dimension_numbers<[1], [0], [0], [1], [0, 0, 1, 1], [], []>} : vector<6x256xbf16>, vector<256x256xbf16>, vector<6x256xf32> -> vector<6x256xf32>
    %c0_3 = arith.constant 0 : index
    %c0_4 = arith.constant 0 : index
    %3 = vector.load %arg3[%c0_3, %c0_4] : memref<1x256xf32, #tpu.memory_space<vmem>>, vector<1x256xf32>
    %4 = vector.broadcast %3 : vector<1x256xf32> to vector<6x256xf32>
    %5 = arith.addf %2, %4 : vector<6x256xf32>
    %c0_5 = arith.constant 0 : index
    %c0_6 = arith.constant 0 : index
    %6 = vector.load %arg4[%c0_5, %c0_6] : memref<6x128xbf16, #tpu.memory_space<vmem>>, vector<6x128xbf16>
    %c0_7 = arith.constant 0 : index
    %c0_8 = arith.constant 0 : index
    %7 = vector.load %arg5[%c0_7, %c0_8] : memref<128x256xbf16, #tpu.memory_space<vmem>>, vector<128x256xbf16>
    %cst_9 = arith.constant dense<0.000000e+00> : vector<6x256xf32>
    %8 = tpu.matmul %6, %7, %cst_9 {dimension_numbers = #tpu.dot_dimension_numbers<[1], [0], [0], [1], [0, 0, 1, 1], [], []>} : vector<6x128xbf16>, vector<128x256xbf16>, vector<6x256xf32> -> vector<6x256xf32>
    %c0_10 = arith.constant 0 : index
    %c0_11 = arith.constant 0 : index
    %9 = vector.load %arg6[%c0_10, %c0_11] : memref<1x256xf32, #tpu.memory_space<vmem>>, vector<1x256xf32>
    %10 = vector.broadcast %9 : vector<1x256xf32> to vector<6x256xf32>
    %11 = arith.addf %8, %10 : vector<6x256xf32>
    %12 = arith.addf %5, %11 : vector<6x256xf32>
    %cst_12 = arith.constant 0.000000e+00 : f32
    %13 = vector.broadcast %cst_12 : f32 to vector<6x256xf32>
    %14 = arith.maximumf %12, %13 : vector<6x256xf32>
    %15 = arith.truncf %14 : vector<6x256xf32> to vector<6x256xbf16>
    %c0_13 = arith.constant 0 : index
    %c0_14 = arith.constant 0 : index
    %16 = vector.load %arg7[%c0_13, %c0_14] : memref<6x256xbf16, #tpu.memory_space<vmem>>, vector<6x256xbf16>
    tpu.vector_store %arg7[%c0_13, %c0_14], %15 {strides = array<i32>} : memref<6x256xbf16, #tpu.memory_space<vmem>>, vector<6x256xbf16>,
    return
  }
  func.func @transform_0(%arg0: i32) -> (i32, i32) {
    %c0_i32 = arith.constant 0 : i32
    %c0_i32_0 = arith.constant 0 : i32
    return %arg0, %c0_i32 : i32, i32
  }
  func.func @transform_1(%arg0: i32) -> (i32, i32) {
    %c0_i32 = arith.constant 0 : i32
    %c0_i32_0 = arith.constant 0 : i32
    %c0_i32_1 = arith.constant 0 : i32
    return %c0_i32, %c0_i32_0 : i32, i32
  }
  func.func @transform_2(%arg0: i32) -> (i32, i32) {
    %c0_i32 = arith.constant 0 : i32
    %c0_i32_0 = arith.constant 0 : i32
    %c0_i32_1 = arith.constant 0 : i32
    return %c0_i32, %c0_i32_0 : i32, i32
  }
  func.func @transform_3(%arg0: i32) -> (i32, i32) {
    %c0_i32 = arith.constant 0 : i32
    %c0_i32_0 = arith.constant 0 : i32
    return %arg0, %c0_i32 : i32, i32
  }
  func.func @transform_4(%arg0: i32) -> (i32, i32) {
    %c0_i32 = arith.constant 0 : i32
    %c0_i32_0 = arith.constant 0 : i32
    %c0_i32_1 = arith.constant 0 : i32
    return %c0_i32, %c0_i32_0 : i32, i32
  }
  func.func @transform_5(%arg0: i32) -> (i32, i32) {
    %c0_i32 = arith.constant 0 : i32
    %c0_i32_0 = arith.constant 0 : i32
    %c0_i32_1 = arith.constant 0 : i32
    return %c0_i32, %c0_i32_0 : i32, i32
  }
  func.func @transform_6(%arg0: i32) -> (i32, i32) {
    %c0_i32 = arith.constant 0 : i32
    %c0_i32_0 = arith.constant 0 : i32
    return %arg0, %c0_i32 : i32, i32
  }
}

module attributes {stable_mosaic.version = 11 : i64} {
  func.func @_conv_kernel(%arg0: i32, %arg1: memref<6x256xbf16, #tpu.memory_space<vmem>>, %arg2: memref<256x256xbf16, #tpu.memory_space<vmem>>, %arg3: memref<1x256xf32, #tpu.memory_space<vmem>>, %arg4: memref<6x256xbf16, #tpu.memory_space<vmem>>) attributes {dimension_semantics = [#tpu.dimension_semantics<parallel>], iteration_bounds = array<i64: 1>, scalar_prefetch = 0 : i64, scratch_operands = 0 : i64, tpu.core_type = #tpu.core_type<tc>, window_params = [{transform_indices = @transform_0, window_bounds = array<i64: 6, 256>}, {pipeline_mode = #tpu.pipeline_mode<synchronous>, transform_indices = @transform_1, window_bounds = array<i64: 256, 256>}, {pipeline_mode = #tpu.pipeline_mode<synchronous>, transform_indices = @transform_2, window_bounds = array<i64: 1, 256>}, {transform_indices = @transform_3, window_bounds = array<i64: 6, 256>}]} {
    %c0 = arith.constant 0 : index
    %c0_0 = arith.constant 0 : index
    %0 = vector.load %arg1[%c0, %c0_0] : memref<6x256xbf16, #tpu.memory_space<vmem>>, vector<6x256xbf16>
    %c0_1 = arith.constant 0 : index
    %c0_2 = arith.constant 0 : index
    %1 = vector.load %arg2[%c0_1, %c0_2] : memref<256x256xbf16, #tpu.memory_space<vmem>>, vector<256x256xbf16>
    %cst = arith.constant dense<0.000000e+00> : vector<6x256xf32>
    %2 = tpu.matmul %0, %1, %cst {dimension_numbers = #tpu.dot_dimension_numbers<[1], [0], [0], [1], [0, 0, 1, 1], [], []>} : vector<6x256xbf16>, vector<256x256xbf16>, vector<6x256xf32> -> vector<6x256xf32>
    %c0_3 = arith.constant 0 : index
    %c0_4 = arith.constant 0 : index
    %3 = vector.load %arg3[%c0_3, %c0_4] : memref<1x256xf32, #tpu.memory_space<vmem>>, vector<1x256xf32>
    %4 = vector.broadcast %3 : vector<1x256xf32> to vector<6x256xf32>
    %5 = arith.addf %2, %4 : vector<6x256xf32>
    %cst_5 = arith.constant 0.000000e+00 : f32
    %6 = vector.broadcast %cst_5 : f32 to vector<6x256xf32>
    %7 = arith.maximumf %5, %6 : vector<6x256xf32>
    %8 = arith.truncf %7 : vector<6x256xf32> to vector<6x256xbf16>
    %c0_6 = arith.constant 0 : index
    %c0_7 = arith.constant 0 : index
    %9 = vector.load %arg4[%c0_6, %c0_7] : memref<6x256xbf16, #tpu.memory_space<vmem>>, vector<6x256xbf16>
    tpu.vector_store %arg4[%c0_6, %c0_7], %8 {strides = array<i32>} : memref<6x256xbf16, #tpu.memory_space<vmem>>, vector<6x256xbf16>,
    return
  }
  func.func @transform_0(%arg0: i32) -> (i32, i32) {
    %c0_i32 = arith.constant 0 : i32
    %c0_i32_0 = arith.constant 0 : i32
    return %arg0, %c0_i32 : i32, i32
  }
  func.func @transform_1(%arg0: i32) -> (i32, i32) {
    %c0_i32 = arith.constant 0 : i32
    %c0_i32_0 = arith.constant 0 : i32
    %c0_i32_1 = arith.constant 0 : i32
    return %c0_i32, %c0_i32_0 : i32, i32
  }
  func.func @transform_2(%arg0: i32) -> (i32, i32) {
    %c0_i32 = arith.constant 0 : i32
    %c0_i32_0 = arith.constant 0 : i32
    %c0_i32_1 = arith.constant 0 : i32
    return %c0_i32, %c0_i32_0 : i32, i32
  }
  func.func @transform_3(%arg0: i32) -> (i32, i32) {
    %c0_i32 = arith.constant 0 : i32
    %c0_i32_0 = arith.constant 0 : i32
    return %arg0, %c0_i32 : i32, i32
  }
}

module attributes {stable_mosaic.version = 11 : i64} {
  func.func @_conv_res_kernel(%arg0: i32, %arg1: memref<6x256xbf16, #tpu.memory_space<vmem>>, %arg2: memref<256x256xbf16, #tpu.memory_space<vmem>>, %arg3: memref<1x256xf32, #tpu.memory_space<vmem>>, %arg4: memref<6x256xbf16, #tpu.memory_space<vmem>>, %arg5: memref<6x256xbf16, #tpu.memory_space<vmem>>) attributes {dimension_semantics = [#tpu.dimension_semantics<parallel>], iteration_bounds = array<i64: 1>, scalar_prefetch = 0 : i64, scratch_operands = 0 : i64, tpu.core_type = #tpu.core_type<tc>, window_params = [{transform_indices = @transform_0, window_bounds = array<i64: 6, 256>}, {pipeline_mode = #tpu.pipeline_mode<synchronous>, transform_indices = @transform_1, window_bounds = array<i64: 256, 256>}, {pipeline_mode = #tpu.pipeline_mode<synchronous>, transform_indices = @transform_2, window_bounds = array<i64: 1, 256>}, {transform_indices = @transform_3, window_bounds = array<i64: 6, 256>}, {transform_indices = @transform_4, window_bounds = array<i64: 6, 256>}]} {
    %c0 = arith.constant 0 : index
    %c0_0 = arith.constant 0 : index
    %0 = vector.load %arg1[%c0, %c0_0] : memref<6x256xbf16, #tpu.memory_space<vmem>>, vector<6x256xbf16>
    %c0_1 = arith.constant 0 : index
    %c0_2 = arith.constant 0 : index
    %1 = vector.load %arg2[%c0_1, %c0_2] : memref<256x256xbf16, #tpu.memory_space<vmem>>, vector<256x256xbf16>
    %cst = arith.constant dense<0.000000e+00> : vector<6x256xf32>
    %2 = tpu.matmul %0, %1, %cst {dimension_numbers = #tpu.dot_dimension_numbers<[1], [0], [0], [1], [0, 0, 1, 1], [], []>} : vector<6x256xbf16>, vector<256x256xbf16>, vector<6x256xf32> -> vector<6x256xf32>
    %c0_3 = arith.constant 0 : index
    %c0_4 = arith.constant 0 : index
    %3 = vector.load %arg3[%c0_3, %c0_4] : memref<1x256xf32, #tpu.memory_space<vmem>>, vector<1x256xf32>
    %4 = vector.broadcast %3 : vector<1x256xf32> to vector<6x256xf32>
    %5 = arith.addf %2, %4 : vector<6x256xf32>
    %c0_5 = arith.constant 0 : index
    %c0_6 = arith.constant 0 : index
    %6 = vector.load %arg4[%c0_5, %c0_6] : memref<6x256xbf16, #tpu.memory_space<vmem>>, vector<6x256xbf16>
    %7 = arith.extf %6 : vector<6x256xbf16> to vector<6x256xf32>
    %8 = arith.addf %5, %7 : vector<6x256xf32>
    %cst_7 = arith.constant 0.000000e+00 : f32
    %9 = vector.broadcast %cst_7 : f32 to vector<6x256xf32>
    %10 = arith.maximumf %8, %9 : vector<6x256xf32>
    %11 = arith.truncf %10 : vector<6x256xf32> to vector<6x256xbf16>
    %c0_8 = arith.constant 0 : index
    %c0_9 = arith.constant 0 : index
    %12 = vector.load %arg5[%c0_8, %c0_9] : memref<6x256xbf16, #tpu.memory_space<vmem>>, vector<6x256xbf16>
    tpu.vector_store %arg5[%c0_8, %c0_9], %11 {strides = array<i32>} : memref<6x256xbf16, #tpu.memory_space<vmem>>, vector<6x256xbf16>,
    return
  }
  func.func @transform_0(%arg0: i32) -> (i32, i32) {
    %c0_i32 = arith.constant 0 : i32
    %c0_i32_0 = arith.constant 0 : i32
    return %arg0, %c0_i32 : i32, i32
  }
  func.func @transform_1(%arg0: i32) -> (i32, i32) {
    %c0_i32 = arith.constant 0 : i32
    %c0_i32_0 = arith.constant 0 : i32
    %c0_i32_1 = arith.constant 0 : i32
    return %c0_i32, %c0_i32_0 : i32, i32
  }
  func.func @transform_2(%arg0: i32) -> (i32, i32) {
    %c0_i32 = arith.constant 0 : i32
    %c0_i32_0 = arith.constant 0 : i32
    %c0_i32_1 = arith.constant 0 : i32
    return %c0_i32, %c0_i32_0 : i32, i32
  }
  func.func @transform_3(%arg0: i32) -> (i32, i32) {
    %c0_i32 = arith.constant 0 : i32
    %c0_i32_0 = arith.constant 0 : i32
    return %arg0, %c0_i32 : i32, i32
  }
  func.func @transform_4(%arg0: i32) -> (i32, i32) {
    %c0_i32 = arith.constant 0 : i32
    %c0_i32_0 = arith.constant 0 : i32
    return %arg0, %c0_i32 : i32, i32
  }
}

module attributes {stable_mosaic.version = 11 : i64} {
  func.func @_conv_kernel(%arg0: i32, %arg1: memref<6x256xbf16, #tpu.memory_space<vmem>>, %arg2: memref<256x512xbf16, #tpu.memory_space<vmem>>, %arg3: memref<1x512xf32, #tpu.memory_space<vmem>>, %arg4: memref<6x512xbf16, #tpu.memory_space<vmem>>) attributes {dimension_semantics = [#tpu.dimension_semantics<parallel>], iteration_bounds = array<i64: 1>, scalar_prefetch = 0 : i64, scratch_operands = 0 : i64, tpu.core_type = #tpu.core_type<tc>, window_params = [{transform_indices = @transform_0, window_bounds = array<i64: 6, 256>}, {pipeline_mode = #tpu.pipeline_mode<synchronous>, transform_indices = @transform_1, window_bounds = array<i64: 256, 512>}, {pipeline_mode = #tpu.pipeline_mode<synchronous>, transform_indices = @transform_2, window_bounds = array<i64: 1, 512>}, {transform_indices = @transform_3, window_bounds = array<i64: 6, 512>}]} {
    %c0 = arith.constant 0 : index
    %c0_0 = arith.constant 0 : index
    %0 = vector.load %arg1[%c0, %c0_0] : memref<6x256xbf16, #tpu.memory_space<vmem>>, vector<6x256xbf16>
    %c0_1 = arith.constant 0 : index
    %c0_2 = arith.constant 0 : index
    %1 = vector.load %arg2[%c0_1, %c0_2] : memref<256x512xbf16, #tpu.memory_space<vmem>>, vector<256x512xbf16>
    %cst = arith.constant dense<0.000000e+00> : vector<6x512xf32>
    %2 = tpu.matmul %0, %1, %cst {dimension_numbers = #tpu.dot_dimension_numbers<[1], [0], [0], [1], [0, 0, 1, 1], [], []>} : vector<6x256xbf16>, vector<256x512xbf16>, vector<6x512xf32> -> vector<6x512xf32>
    %c0_3 = arith.constant 0 : index
    %c0_4 = arith.constant 0 : index
    %3 = vector.load %arg3[%c0_3, %c0_4] : memref<1x512xf32, #tpu.memory_space<vmem>>, vector<1x512xf32>
    %4 = vector.broadcast %3 : vector<1x512xf32> to vector<6x512xf32>
    %5 = arith.addf %2, %4 : vector<6x512xf32>
    %cst_5 = arith.constant 0.000000e+00 : f32
    %6 = vector.broadcast %cst_5 : f32 to vector<6x512xf32>
    %7 = arith.maximumf %5, %6 : vector<6x512xf32>
    %8 = arith.truncf %7 : vector<6x512xf32> to vector<6x512xbf16>
    %c0_6 = arith.constant 0 : index
    %c0_7 = arith.constant 0 : index
    %9 = vector.load %arg4[%c0_6, %c0_7] : memref<6x512xbf16, #tpu.memory_space<vmem>>, vector<6x512xbf16>
    tpu.vector_store %arg4[%c0_6, %c0_7], %8 {strides = array<i32>} : memref<6x512xbf16, #tpu.memory_space<vmem>>, vector<6x512xbf16>,
    return
  }
  func.func @transform_0(%arg0: i32) -> (i32, i32) {
    %c0_i32 = arith.constant 0 : i32
    %c0_i32_0 = arith.constant 0 : i32
    return %arg0, %c0_i32 : i32, i32
  }
  func.func @transform_1(%arg0: i32) -> (i32, i32) {
    %c0_i32 = arith.constant 0 : i32
    %c0_i32_0 = arith.constant 0 : i32
    %c0_i32_1 = arith.constant 0 : i32
    return %c0_i32, %c0_i32_0 : i32, i32
  }
  func.func @transform_2(%arg0: i32) -> (i32, i32) {
    %c0_i32 = arith.constant 0 : i32
    %c0_i32_0 = arith.constant 0 : i32
    %c0_i32_1 = arith.constant 0 : i32
    return %c0_i32, %c0_i32_0 : i32, i32
  }
  func.func @transform_3(%arg0: i32) -> (i32, i32) {
    %c0_i32 = arith.constant 0 : i32
    %c0_i32_0 = arith.constant 0 : i32
    return %arg0, %c0_i32 : i32, i32
  }
}

module attributes {stable_mosaic.version = 11 : i64} {
  func.func @_conv_res_down_kernel(%arg0: i32, %arg1: memref<6x512xbf16, #tpu.memory_space<vmem>>, %arg2: memref<512x512xbf16, #tpu.memory_space<vmem>>, %arg3: memref<1x512xf32, #tpu.memory_space<vmem>>, %arg4: memref<6x256xbf16, #tpu.memory_space<vmem>>, %arg5: memref<256x512xbf16, #tpu.memory_space<vmem>>, %arg6: memref<1x512xf32, #tpu.memory_space<vmem>>, %arg7: memref<6x512xbf16, #tpu.memory_space<vmem>>) attributes {dimension_semantics = [#tpu.dimension_semantics<parallel>], iteration_bounds = array<i64: 1>, scalar_prefetch = 0 : i64, scratch_operands = 0 : i64, tpu.core_type = #tpu.core_type<tc>, window_params = [{transform_indices = @transform_0, window_bounds = array<i64: 6, 512>}, {pipeline_mode = #tpu.pipeline_mode<synchronous>, transform_indices = @transform_1, window_bounds = array<i64: 512, 512>}, {pipeline_mode = #tpu.pipeline_mode<synchronous>, transform_indices = @transform_2, window_bounds = array<i64: 1, 512>}, {transform_indices = @transform_3, window_bounds = array<i64: 6, 256>}, {pipeline_mode = #tpu.pipeline_mode<synchronous>, transform_indices = @transform_4, window_bounds = array<i64: 256, 512>}, {pipeline_mode = #tpu.pipeline_mode<synchronous>, transform_indices = @transform_5, window_bounds = array<i64: 1, 512>}, {transform_indices = @transform_6, window_bounds = array<i64: 6, 512>}]} {
    %c0 = arith.constant 0 : index
    %c0_0 = arith.constant 0 : index
    %0 = vector.load %arg1[%c0, %c0_0] : memref<6x512xbf16, #tpu.memory_space<vmem>>, vector<6x512xbf16>
    %c0_1 = arith.constant 0 : index
    %c0_2 = arith.constant 0 : index
    %1 = vector.load %arg2[%c0_1, %c0_2] : memref<512x512xbf16, #tpu.memory_space<vmem>>, vector<512x512xbf16>
    %cst = arith.constant dense<0.000000e+00> : vector<6x512xf32>
    %2 = tpu.matmul %0, %1, %cst {dimension_numbers = #tpu.dot_dimension_numbers<[1], [0], [0], [1], [0, 0, 1, 1], [], []>} : vector<6x512xbf16>, vector<512x512xbf16>, vector<6x512xf32> -> vector<6x512xf32>
    %c0_3 = arith.constant 0 : index
    %c0_4 = arith.constant 0 : index
    %3 = vector.load %arg3[%c0_3, %c0_4] : memref<1x512xf32, #tpu.memory_space<vmem>>, vector<1x512xf32>
    %4 = vector.broadcast %3 : vector<1x512xf32> to vector<6x512xf32>
    %5 = arith.addf %2, %4 : vector<6x512xf32>
    %c0_5 = arith.constant 0 : index
    %c0_6 = arith.constant 0 : index
    %6 = vector.load %arg4[%c0_5, %c0_6] : memref<6x256xbf16, #tpu.memory_space<vmem>>, vector<6x256xbf16>
    %c0_7 = arith.constant 0 : index
    %c0_8 = arith.constant 0 : index
    %7 = vector.load %arg5[%c0_7, %c0_8] : memref<256x512xbf16, #tpu.memory_space<vmem>>, vector<256x512xbf16>
    %cst_9 = arith.constant dense<0.000000e+00> : vector<6x512xf32>
    %8 = tpu.matmul %6, %7, %cst_9 {dimension_numbers = #tpu.dot_dimension_numbers<[1], [0], [0], [1], [0, 0, 1, 1], [], []>} : vector<6x256xbf16>, vector<256x512xbf16>, vector<6x512xf32> -> vector<6x512xf32>
    %c0_10 = arith.constant 0 : index
    %c0_11 = arith.constant 0 : index
    %9 = vector.load %arg6[%c0_10, %c0_11] : memref<1x512xf32, #tpu.memory_space<vmem>>, vector<1x512xf32>
    %10 = vector.broadcast %9 : vector<1x512xf32> to vector<6x512xf32>
    %11 = arith.addf %8, %10 : vector<6x512xf32>
    %12 = arith.addf %5, %11 : vector<6x512xf32>
    %cst_12 = arith.constant 0.000000e+00 : f32
    %13 = vector.broadcast %cst_12 : f32 to vector<6x512xf32>
    %14 = arith.maximumf %12, %13 : vector<6x512xf32>
    %15 = arith.truncf %14 : vector<6x512xf32> to vector<6x512xbf16>
    %c0_13 = arith.constant 0 : index
    %c0_14 = arith.constant 0 : index
    %16 = vector.load %arg7[%c0_13, %c0_14] : memref<6x512xbf16, #tpu.memory_space<vmem>>, vector<6x512xbf16>
    tpu.vector_store %arg7[%c0_13, %c0_14], %15 {strides = array<i32>} : memref<6x512xbf16, #tpu.memory_space<vmem>>, vector<6x512xbf16>,
    return
  }
  func.func @transform_0(%arg0: i32) -> (i32, i32) {
    %c0_i32 = arith.constant 0 : i32
    %c0_i32_0 = arith.constant 0 : i32
    return %arg0, %c0_i32 : i32, i32
  }
  func.func @transform_1(%arg0: i32) -> (i32, i32) {
    %c0_i32 = arith.constant 0 : i32
    %c0_i32_0 = arith.constant 0 : i32
    %c0_i32_1 = arith.constant 0 : i32
    return %c0_i32, %c0_i32_0 : i32, i32
  }
  func.func @transform_2(%arg0: i32) -> (i32, i32) {
    %c0_i32 = arith.constant 0 : i32
    %c0_i32_0 = arith.constant 0 : i32
    %c0_i32_1 = arith.constant 0 : i32
    return %c0_i32, %c0_i32_0 : i32, i32
  }
  func.func @transform_3(%arg0: i32) -> (i32, i32) {
    %c0_i32 = arith.constant 0 : i32
    %c0_i32_0 = arith.constant 0 : i32
    return %arg0, %c0_i32 : i32, i32
  }
  func.func @transform_4(%arg0: i32) -> (i32, i32) {
    %c0_i32 = arith.constant 0 : i32
    %c0_i32_0 = arith.constant 0 : i32
    %c0_i32_1 = arith.constant 0 : i32
    return %c0_i32, %c0_i32_0 : i32, i32
  }
  func.func @transform_5(%arg0: i32) -> (i32, i32) {
    %c0_i32 = arith.constant 0 : i32
    %c0_i32_0 = arith.constant 0 : i32
    %c0_i32_1 = arith.constant 0 : i32
    return %c0_i32, %c0_i32_0 : i32, i32
  }
  func.func @transform_6(%arg0: i32) -> (i32, i32) {
    %c0_i32 = arith.constant 0 : i32
    %c0_i32_0 = arith.constant 0 : i32
    return %arg0, %c0_i32 : i32, i32
  }
}

module attributes {stable_mosaic.version = 11 : i64} {
  func.func @_conv_kernel(%arg0: i32, %arg1: memref<6x512xbf16, #tpu.memory_space<vmem>>, %arg2: memref<512x512xbf16, #tpu.memory_space<vmem>>, %arg3: memref<1x512xf32, #tpu.memory_space<vmem>>, %arg4: memref<6x512xbf16, #tpu.memory_space<vmem>>) attributes {dimension_semantics = [#tpu.dimension_semantics<parallel>], iteration_bounds = array<i64: 1>, scalar_prefetch = 0 : i64, scratch_operands = 0 : i64, tpu.core_type = #tpu.core_type<tc>, window_params = [{transform_indices = @transform_0, window_bounds = array<i64: 6, 512>}, {pipeline_mode = #tpu.pipeline_mode<synchronous>, transform_indices = @transform_1, window_bounds = array<i64: 512, 512>}, {pipeline_mode = #tpu.pipeline_mode<synchronous>, transform_indices = @transform_2, window_bounds = array<i64: 1, 512>}, {transform_indices = @transform_3, window_bounds = array<i64: 6, 512>}]} {
    %c0 = arith.constant 0 : index
    %c0_0 = arith.constant 0 : index
    %0 = vector.load %arg1[%c0, %c0_0] : memref<6x512xbf16, #tpu.memory_space<vmem>>, vector<6x512xbf16>
    %c0_1 = arith.constant 0 : index
    %c0_2 = arith.constant 0 : index
    %1 = vector.load %arg2[%c0_1, %c0_2] : memref<512x512xbf16, #tpu.memory_space<vmem>>, vector<512x512xbf16>
    %cst = arith.constant dense<0.000000e+00> : vector<6x512xf32>
    %2 = tpu.matmul %0, %1, %cst {dimension_numbers = #tpu.dot_dimension_numbers<[1], [0], [0], [1], [0, 0, 1, 1], [], []>} : vector<6x512xbf16>, vector<512x512xbf16>, vector<6x512xf32> -> vector<6x512xf32>
    %c0_3 = arith.constant 0 : index
    %c0_4 = arith.constant 0 : index
    %3 = vector.load %arg3[%c0_3, %c0_4] : memref<1x512xf32, #tpu.memory_space<vmem>>, vector<1x512xf32>
    %4 = vector.broadcast %3 : vector<1x512xf32> to vector<6x512xf32>
    %5 = arith.addf %2, %4 : vector<6x512xf32>
    %cst_5 = arith.constant 0.000000e+00 : f32
    %6 = vector.broadcast %cst_5 : f32 to vector<6x512xf32>
    %7 = arith.maximumf %5, %6 : vector<6x512xf32>
    %8 = arith.truncf %7 : vector<6x512xf32> to vector<6x512xbf16>
    %c0_6 = arith.constant 0 : index
    %c0_7 = arith.constant 0 : index
    %9 = vector.load %arg4[%c0_6, %c0_7] : memref<6x512xbf16, #tpu.memory_space<vmem>>, vector<6x512xbf16>
    tpu.vector_store %arg4[%c0_6, %c0_7], %8 {strides = array<i32>} : memref<6x512xbf16, #tpu.memory_space<vmem>>, vector<6x512xbf16>,
    return
  }
  func.func @transform_0(%arg0: i32) -> (i32, i32) {
    %c0_i32 = arith.constant 0 : i32
    %c0_i32_0 = arith.constant 0 : i32
    return %arg0, %c0_i32 : i32, i32
  }
  func.func @transform_1(%arg0: i32) -> (i32, i32) {
    %c0_i32 = arith.constant 0 : i32
    %c0_i32_0 = arith.constant 0 : i32
    %c0_i32_1 = arith.constant 0 : i32
    return %c0_i32, %c0_i32_0 : i32, i32
  }
  func.func @transform_2(%arg0: i32) -> (i32, i32) {
    %c0_i32 = arith.constant 0 : i32
    %c0_i32_0 = arith.constant 0 : i32
    %c0_i32_1 = arith.constant 0 : i32
    return %c0_i32, %c0_i32_0 : i32, i32
  }
  func.func @transform_3(%arg0: i32) -> (i32, i32) {
    %c0_i32 = arith.constant 0 : i32
    %c0_i32_0 = arith.constant 0 : i32
    return %arg0, %c0_i32 : i32, i32
  }
}

module attributes {stable_mosaic.version = 11 : i64} {
  func.func @_conv_res_kernel(%arg0: i32, %arg1: memref<6x512xbf16, #tpu.memory_space<vmem>>, %arg2: memref<512x512xbf16, #tpu.memory_space<vmem>>, %arg3: memref<1x512xf32, #tpu.memory_space<vmem>>, %arg4: memref<6x512xbf16, #tpu.memory_space<vmem>>, %arg5: memref<6x512xbf16, #tpu.memory_space<vmem>>) attributes {dimension_semantics = [#tpu.dimension_semantics<parallel>], iteration_bounds = array<i64: 1>, scalar_prefetch = 0 : i64, scratch_operands = 0 : i64, tpu.core_type = #tpu.core_type<tc>, window_params = [{transform_indices = @transform_0, window_bounds = array<i64: 6, 512>}, {pipeline_mode = #tpu.pipeline_mode<synchronous>, transform_indices = @transform_1, window_bounds = array<i64: 512, 512>}, {pipeline_mode = #tpu.pipeline_mode<synchronous>, transform_indices = @transform_2, window_bounds = array<i64: 1, 512>}, {transform_indices = @transform_3, window_bounds = array<i64: 6, 512>}, {transform_indices = @transform_4, window_bounds = array<i64: 6, 512>}]} {
    %c0 = arith.constant 0 : index
    %c0_0 = arith.constant 0 : index
    %0 = vector.load %arg1[%c0, %c0_0] : memref<6x512xbf16, #tpu.memory_space<vmem>>, vector<6x512xbf16>
    %c0_1 = arith.constant 0 : index
    %c0_2 = arith.constant 0 : index
    %1 = vector.load %arg2[%c0_1, %c0_2] : memref<512x512xbf16, #tpu.memory_space<vmem>>, vector<512x512xbf16>
    %cst = arith.constant dense<0.000000e+00> : vector<6x512xf32>
    %2 = tpu.matmul %0, %1, %cst {dimension_numbers = #tpu.dot_dimension_numbers<[1], [0], [0], [1], [0, 0, 1, 1], [], []>} : vector<6x512xbf16>, vector<512x512xbf16>, vector<6x512xf32> -> vector<6x512xf32>
    %c0_3 = arith.constant 0 : index
    %c0_4 = arith.constant 0 : index
    %3 = vector.load %arg3[%c0_3, %c0_4] : memref<1x512xf32, #tpu.memory_space<vmem>>, vector<1x512xf32>
    %4 = vector.broadcast %3 : vector<1x512xf32> to vector<6x512xf32>
    %5 = arith.addf %2, %4 : vector<6x512xf32>
    %c0_5 = arith.constant 0 : index
    %c0_6 = arith.constant 0 : index
    %6 = vector.load %arg4[%c0_5, %c0_6] : memref<6x512xbf16, #tpu.memory_space<vmem>>, vector<6x512xbf16>
    %7 = arith.extf %6 : vector<6x512xbf16> to vector<6x512xf32>
    %8 = arith.addf %5, %7 : vector<6x512xf32>
    %cst_7 = arith.constant 0.000000e+00 : f32
    %9 = vector.broadcast %cst_7 : f32 to vector<6x512xf32>
    %10 = arith.maximumf %8, %9 : vector<6x512xf32>
    %11 = arith.truncf %10 : vector<6x512xf32> to vector<6x512xbf16>
    %c0_8 = arith.constant 0 : index
    %c0_9 = arith.constant 0 : index
    %12 = vector.load %arg5[%c0_8, %c0_9] : memref<6x512xbf16, #tpu.memory_space<vmem>>, vector<6x512xbf16>
    tpu.vector_store %arg5[%c0_8, %c0_9], %11 {strides = array<i32>} : memref<6x512xbf16, #tpu.memory_space<vmem>>, vector<6x512xbf16>,
    return
  }
  func.func @transform_0(%arg0: i32) -> (i32, i32) {
    %c0_i32 = arith.constant 0 : i32
    %c0_i32_0 = arith.constant 0 : i32
    return %arg0, %c0_i32 : i32, i32
  }
  func.func @transform_1(%arg0: i32) -> (i32, i32) {
    %c0_i32 = arith.constant 0 : i32
    %c0_i32_0 = arith.constant 0 : i32
    %c0_i32_1 = arith.constant 0 : i32
    return %c0_i32, %c0_i32_0 : i32, i32
  }
  func.func @transform_2(%arg0: i32) -> (i32, i32) {
    %c0_i32 = arith.constant 0 : i32
    %c0_i32_0 = arith.constant 0 : i32
    %c0_i32_1 = arith.constant 0 : i32
    return %c0_i32, %c0_i32_0 : i32, i32
  }
  func.func @transform_3(%arg0: i32) -> (i32, i32) {
    %c0_i32 = arith.constant 0 : i32
    %c0_i32_0 = arith.constant 0 : i32
    return %arg0, %c0_i32 : i32, i32
  }
  func.func @transform_4(%arg0: i32) -> (i32, i32) {
    %c0_i32 = arith.constant 0 : i32
    %c0_i32_0 = arith.constant 0 : i32
    return %arg0, %c0_i32 : i32, i32
  }
}

module attributes {stable_mosaic.version = 11 : i64} {
  func.func @_head_kernel(%arg0: memref<2x3x512xf32, #tpu.memory_space<vmem>>, %arg1: memref<512x5xf32, #tpu.memory_space<vmem>>, %arg2: memref<1x5xf32, #tpu.memory_space<vmem>>, %arg3: memref<2x5xf32, #tpu.memory_space<vmem>>) attributes {dimension_semantics = [], scalar_prefetch = 0 : i64, scratch_operands = 0 : i64, tpu.core_type = #tpu.core_type<tc>} {
    %c0 = arith.constant 0 : index
    %c0_0 = arith.constant 0 : index
    %c0_1 = arith.constant 0 : index
    %0 = vector.load %arg0[%c0, %c0_0, %c0_1] : memref<2x3x512xf32, #tpu.memory_space<vmem>>, vector<2x3x512xf32>
    %cst = arith.constant dense<0.000000e+00> : vector<2x512xf32>
    %1 = vector.multi_reduction <add>, %0, %cst [1] : vector<2x3x512xf32> to vector<2x512xf32>
    %cst_2 = arith.constant 3.000000e+00 : f32
    %2 = vector.broadcast %cst_2 : f32 to vector<2x512xf32>
    %3 = arith.divf %1, %2 : vector<2x512xf32>
    %c0_3 = arith.constant 0 : index
    %c0_4 = arith.constant 0 : index
    %4 = vector.load %arg1[%c0_3, %c0_4] : memref<512x5xf32, #tpu.memory_space<vmem>>, vector<512x5xf32>
    %cst_5 = arith.constant dense<0.000000e+00> : vector<2x5xf32>
    %5 = tpu.matmul %3, %4, %cst_5 {dimension_numbers = #tpu.dot_dimension_numbers<[1], [0], [0], [1], [0, 0, 1, 1], [], []>} : vector<2x512xf32>, vector<512x5xf32>, vector<2x5xf32> -> vector<2x5xf32>
    %c0_6 = arith.constant 0 : index
    %c0_7 = arith.constant 0 : index
    %6 = vector.load %arg2[%c0_6, %c0_7] : memref<1x5xf32, #tpu.memory_space<vmem>>, vector<1x5xf32>
    %7 = vector.broadcast %6 : vector<1x5xf32> to vector<2x5xf32>
    %8 = arith.addf %5, %7 : vector<2x5xf32>
    %c0_8 = arith.constant 0 : index
    %c0_9 = arith.constant 0 : index
    %9 = vector.load %arg3[%c0_8, %c0_9] : memref<2x5xf32, #tpu.memory_space<vmem>>, vector<2x5xf32>
    tpu.vector_store %arg3[%c0_8, %c0_9], %8 {strides = array<i32>} : memref<2x5xf32, #tpu.memory_space<vmem>>, vector<2x5xf32>,
    return
  }
}

</mosaic_0001>

<llo_original>
// kernel: _lambda_.18
$region0: #{_lambda_.18}
  #allocation0 [shape = 'u32[]', space=smem, size = 0x4, offset = 0x4, fixed_abs, tag = 'smem constant byte address 0x4 - core index']
  #allocation1 [shape = 'u32[144,128]{1,0:T(1,128)}', space=vmem, size = 0x12000, scoped, tag = 'internal scratch']
  %s0 = inlined_call_operand.vmem [shape: bf16[384,512], index: 0, kind: input, shape index: {}]
  %s1 = inlined_call_operand.vmem [shape: bf16[512,64], index: 1, kind: input, shape index: {}]
  %s2 = inlined_call_operand.vmem [shape: f32[1,64], index: 2, kind: input, shape index: {}]
  %s3 = inlined_call_operand.vmem [shape: bf16[384,64], index: 3, kind: output, shape index: {}]
  %s4 = sld [smem:[#allocation0]]
  $region45: #{_lambda_.18} parent=0
    _
  %s6 = ssub.s32 1, %s4
  %s7 = scalar_select 0, %s6, %s4
  loop: start=0, step=1, limit=5
  $region2: #{_lambda_.18} parent=0 // loop_pre_header
    _
  $region3: #{_lambda_.18} parent=0 // loop_header
    %s9 = sphi 0, %s13
    %p10 = scmp.ge.s32.totalorder %s9, 5
    %s19 = sphi 0, %s21
    %s22 = sphi 0, %s19
    %s23 = sphi 0, %s22
    %s39 = sphi 0, %s23
    %s43 = sphi 0, %s43
    %s45 = sphi 0, %s43
    %s46 = sphi 0, %s45
    %s60 = sphi 0, %s46
    %s64 = sphi 0, %s64
    %s66 = sphi 0, %s64
    %s67 = sphi 0, %s66
    %s81 = sphi 0, %s67
    %s87 = sphi 0, %s89
    %s90 = sphi 0, %s87
    %s91 = sphi 0, %s90
    %s107 = sphi 0, %s91
  $region4: #{_lambda_.18} parent=0 // loop_header_branch
    %12 = sbr.rel (%p10) target = $region8
  $region5: #{_lambda_.18} parent=0 // loop_body
    %s14 = ssub.s32 %s9, 1
    %s15 = ssub.s32 %s9, 2
    %s16 = sadd.s32 %s9, 1
    %s17 = ssub.s32 %s9, %s16
    %p18 = scmp.eq.s32.totalorder %s17, 0
    %s20 = sadd.s32 %s19, 1
    %s21 = scalar_select %p18, %s19, %s20
    %p24 = pneg %p18
    %p25 = scmp.eq.s32.totalorder %s9, 2
    %p26 = por %p24, %p25
    %p27 = scmp.ne.s32.totalorder %s19, %s22
    %p28 = scmp.eq.s32.totalorder %s9, 0
    %p29 = por %p27, %p28
    %p30 = scmp.ne.s32.totalorder %s19, %s22
    %p31 = scmp.eq.s32.totalorder %s14, 2
    %p32 = por %p30, %p31
    %p33 = scmp.ne.s32.totalorder %s22, %s23
    %p34 = scmp.eq.s32.totalorder %s14, 0
    %p35 = por %p33, %p34
    %p36 = scmp.ne.s32.totalorder %s22, %s23
    %p37 = scmp.eq.s32.totalorder %s15, 2
    %p38 = por %p36, %p37
    %p40 = scmp.ne.s32.totalorder %s23, %s39
    %p41 = scmp.eq.s32.totalorder %s15, 0
    %p42 = por %p40, %p41
    %s44 = sadd.s32 %s43, 1
    %p47 = scmp.eq.s32.totalorder %s9, 2
    %p48 = scmp.ne.s32.totalorder %s43, %s45
    %p49 = scmp.eq.s32.totalorder %s9, 0
    %p50 = por %p48, %p49
    %p51 = scmp.ne.s32.totalorder %s43, %s45
    %p52 = scmp.eq.s32.totalorder %s14, 2
    %p53 = por %p51, %p52
    %p54 = scmp.ne.s32.totalorder %s45, %s46
    %p55 = scmp.eq.s32.totalorder %s14, 0
    %p56 = por %p54, %p55
    %p57 = scmp.ne.s32.totalorder %s45, %s46
    %p58 = scmp.eq.s32.totalorder %s15, 2
    %p59 = por %p57, %p58
    %p61 = scmp.ne.s32.totalorder %s46, %s60
    %p62 = scmp.eq.s32.totalorder %s15, 0
    %p63 = por %p61, %p62
    %s65 = sadd.s32 %s64, 1
    %p68 = scmp.eq.s32.totalorder %s9, 2
    %p69 = scmp.ne.s32.totalorder %s64, %s66
    %p70 = scmp.eq.s32.totalorder %s9, 0
    %p71 = por %p69, %p70
    %p72 = scmp.ne.s32.totalorder %s64, %s66
    %p73 = scmp.eq.s32.totalorder %s14, 2
    %p74 = por %p72, %p73
    %p75 = scmp.ne.s32.totalorder %s66, %s67
    %p76 = scmp.eq.s32.totalorder %s14, 0
    %p77 = por %p75, %p76
    %p78 = scmp.ne.s32.totalorder %s66, %s67
    %p79 = scmp.eq.s32.totalorder %s15, 2
    %p80 = por %p78, %p79
    %p82 = scmp.ne.s32.totalorder %s67, %s81
    %p83 = scmp.eq.s32.totalorder %s15, 0
    %p84 = por %p82, %p83
    %s85 = ssub.s32 %s9, %s16
    %p86 = scmp.eq.s32.totalorder %s85, 0
    %s88 = sadd.s32 %s87, 1
    %s89 = scalar_select %p86, %s87, %s88
    %p92 = pneg %p86
    %p93 = scmp.eq.s32.totalorder %s9, 2
    %p94 = por %p92, %p93
    %p95 = scmp.ne.s32.totalorder %s87, %s90
    %p96 = scmp.eq.s32.totalorder %s9, 0
    %p97 = por %p95, %p96
    %p98 = scmp.ne.s32.totalorder %s87, %s90
    %p99 = scmp.eq.s32.totalorder %s14, 2
    %p100 = por %p98, %p99
    %p101 = scmp.ne.s32.totalorder %s90, %s91
    %p102 = scmp.eq.s32.totalorder %s14, 0
    %p103 = por %p101, %p102
    %p104 = scmp.ne.s32.totalorder %s90, %s91
    %p105 = scmp.eq.s32.totalorder %s15, 2
    %p106 = por %p104, %p105
    %p108 = scmp.ne.s32.totalorder %s91, %s107
    %p109 = scmp.eq.s32.totalorder %s15, 0
    %p110 = por %p108, %p109
    %p111 = scmp.le.s32.totalorder 1, %s9
    %p112 = scmp.lt.s32.totalorder %s9, 4
    %p113 = pnand %p111, %p112
    %p114 = pneg %p113
    // Predicated region
    $region9: #{_lambda_.18} parent=5 // pred_check
      _
    $region10: #{_lambda_.18} parent=5 // pred_check_branch
      %116 = sbr.rel (%p113) target = $region12
    $region11: #{_lambda_.18} parent=5 // pred_region
      %s117 = ssub.s32 %s9, 1
      // Predicated region
      $region13: #{_lambda_.18} parent=11 // pred_check
        %p118 = pneg %p56
      $region14: #{_lambda_.18} parent=11 // pred_check_branch
        %120 = sbr.rel (%p118) target = $region16
      $region15: #{_lambda_.18} parent=11 // pred_region
        _
      $region16: #{_lambda_.18} parent=11 // pred_fallthru
        _
      // Predicated region
      $region17: #{_lambda_.18} parent=11 // pred_check
        %p121 = pneg %p77
      $region18: #{_lambda_.18} parent=11 // pred_check_branch
        %123 = sbr.rel (%p121) target = $region20
      $region19: #{_lambda_.18} parent=11 // pred_region
        _
      $region20: #{_lambda_.18} parent=11 // pred_fallthru
        _
    $region12: #{_lambda_.18} parent=5 // pred_fallthru
      _
    %p124 = scmp.lt.s32.totalorder %s9, 3
    // Predicated region
    $region21: #{_lambda_.18} parent=5 // pred_check
      %p125 = pneg %p124
    $region22: #{_lambda_.18} parent=5 // pred_check_branch
      %127 = sbr.rel (%p125) target = $region24
    $region23: #{_lambda_.18} parent=5 // pred_region
      // Predicated region
      $region25: #{_lambda_.18} parent=23 // pred_check
        %p128 = pneg %p29
      $region26: #{_lambda_.18} parent=23 // pred_check_branch
        %130 = sbr.rel (%p128) target = $region28
      $region27: #{_lambda_.18} parent=23 // pred_region
        %s131 = smul.u32 16, %s9
        %p132 = scmp.lt.s32.totalorder %s131, 47
        %s133 = scalar_select %p132, %s131, 47
        %s134 = smul.addr %s133, 4
        %s135 = smul.addr %s134, 4
        %s136 = scalar_lea.vmem %s0, %s135
        %s137 = smul.u32 16, %s9
      $region28: #{_lambda_.18} parent=23 // pred_fallthru
        _
    $region24: #{_lambda_.18} parent=5 // pred_fallthru
      _
    %p138 = scmp.le.s32.totalorder 1, %s9
    %p139 = scmp.lt.s32.totalorder %s9, 4
    %p140 = pnand %p138, %p139
    %p141 = pneg %p140
    // Predicated region
    $region29: #{_lambda_.18} parent=5 // pred_check
      _
    $region30: #{_lambda_.18} parent=5 // pred_check_branch
      %143 = sbr.rel (%p140) target = $region32
    $region31: #{_lambda_.18} parent=5 // pred_region
      %s144 = ssub.s32 %s9, 1
      %s145 = smul.u32 16, %s14
      %p146 = scmp.lt.s32.totalorder %s145, 47
      %s147 = scalar_select %p146, %s145, 47
      %s148 = smul.addr %s147, 4
      %s149 = smul.addr %s148, 4
      %s150 = scalar_lea.vmem %s0, %s149
      %p151 = pneg %p35
      %p152 = pneg %p32
      %p153 = pneg %p56
      %p154 = pneg %p53
      %p155 = pneg %p77
      %p156 = pneg %p74
      %p157 = pneg %p103
      %p158 = pneg %p100
      %s159 = smul.u32 16, %s14
      %p160 = scmp.lt.s32.totalorder %s159, 47
      %s161 = scalar_select %p160, %s159, 47
      %s162 = smul.addr %s161, 4
      %s163 = scalar_lea.vmem %s3, %s162
      %s164 = smul.u32 16, %s14
      %p165 = scmp.lt.s32.totalorder %s164, 47
      %s166 = scalar_select %p165, %s164, 47
      %s167 = smul.addr %s166, 4
      %s168 = smul.addr %s167, 4
      %s169 = scalar_lea.vmem %s0, %s168
      %s170 = smul.u32 16, %s14
      %s171 = smul.u32 16, %s14
      %p172 = scmp.lt.s32.totalorder %s171, 47
      %s173 = scalar_select %p172, %s171, 47
      %s174 = smul.addr %s173, 4
      %s175 = scalar_lea.vmem %s3, %s174
      %s176 = smul.u32 16, %s14
      %v178 = vld [vmem:[%s169] sm:$0xff]
      %v179 = vld [vmem:[%s169 + $0x8] sm:$0xff]
      %v180 = vld [vmem:[%s169 + $0x10] sm:$0xff]
      %v181 = vld [vmem:[%s169 + $0x18] sm:$0xff]
      %v182 = vld [vmem:[%s169 + $0x20] sm:$0xff]
      %v183 = vld [vmem:[%s169 + $0x28] sm:$0xff]
      %v184 = vld [vmem:[%s169 + $0x30] sm:$0xff]
      %v185 = vld [vmem:[%s169 + $0x38] sm:$0xff]
      %v186 = vld [vmem:[%s169 + $0x40] sm:$0xff]
      %v187 = vld [vmem:[%s169 + $0x48] sm:$0xff]
      %v188 = vld [vmem:[%s169 + $0x50] sm:$0xff]
      %v189 = vld [vmem:[%s169 + $0x58] sm:$0xff]
      %v190 = vld [vmem:[%s169 + $0x60] sm:$0xff]
      %v191 = vld [vmem:[%s169 + $0x68] sm:$0xff]
      %v192 = vld [vmem:[%s169 + $0x70] sm:$0xff]
      %v193 = vld [vmem:[%s169 + $0x78] sm:$0xff]
      %v194 = vld [vmem:[%s169 + $0x80] sm:$0xff]
      %v195 = vld [vmem:[%s169 + $0x88] sm:$0xff]
      %v196 = vld [vmem:[%s169 + $0x90] sm:$0xff]
      %v197 = vld [vmem:[%s169 + $0x98] sm:$0xff]
      %v198 = vld [vmem:[%s169 + $0xa0] sm:$0xff]
      %v199 = vld [vmem:[%s169 + $0xa8] sm:$0xff]
      %v200 = vld [vmem:[%s169 + $0xb0] sm:$0xff]
      %v201 = vld [vmem:[%s169 + $0xb8] sm:$0xff]
      %v202 = vld [vmem:[%s169 + $0xc0] sm:$0xff]
      %v203 = vld [vmem:[%s169 + $0xc8] sm:$0xff]
      %v204 = vld [vmem:[%s169 + $0xd0] sm:$0xff]
      %v205 = vld [vmem:[%s169 + $0xd8] sm:$0xff]
      %v206 = vld [vmem:[%s169 + $0xe0] sm:$0xff]
      %v207 = vld [vmem:[%s169 + $0xe8] sm:$0xff]
      %v208 = vld [vmem:[%s169 + $0xf0] sm:$0xff]
      %v209 = vld [vmem:[%s169 + $0xf8] sm:$0xff]
      %v210 = vld [vmem:[%s1] sm:$0xf]
      %v211 = vld [vmem:[%s1 + $0x4] sm:$0xf]
      %v212 = vld [vmem:[%s1 + $0x8] sm:$0xf]
      %v213 = vld [vmem:[%s1 + $0xc] sm:$0xf]
      %v214 = vld [vmem:[%s1 + $0x10] sm:$0xf]
      %v215 = vld [vmem:[%s1 + $0x14] sm:$0xf]
      %v216 = vld [vmem:[%s1 + $0x18] sm:$0xf]
      %v217 = vld [vmem:[%s1 + $0x1c] sm:$0xf]
      %v218 = vld [vmem:[%s1 + $0x20] sm:$0xf]
      %v219 = vld [vmem:[%s1 + $0x24] sm:$0xf]
      %v220 = vld [vmem:[%s1 + $0x28] sm:$0xf]
      %v221 = vld [vmem:[%s1 + $0x2c] sm:$0xf]
      %v222 = vld [vmem:[%s1 + $0x30] sm:$0xf]
      %v223 = vld [vmem:[%s1 + $0x34] sm:$0xf]
      %v224 = vld [vmem:[%s1 + $0x38] sm:$0xf]
      %v225 = vld [vmem:[%s1 + $0x3c] sm:$0xf]
      %v226 = vld [vmem:[%s1 + $0x40] sm:$0xf]
      %v227 = vld [vmem:[%s1 + $0x44] sm:$0xf]
      %v228 = vld [vmem:[%s1 + $0x48] sm:$0xf]
      %v229 = vld [vmem:[%s1 + $0x4c] sm:$0xf]
      %v230 = vld [vmem:[%s1 + $0x50] sm:$0xf]
      %v231 = vld [vmem:[%s1 + $0x54] sm:$0xf]
      %v232 = vld [vmem:[%s1 + $0x58] sm:$0xf]
      %v233 = vld [vmem:[%s1 + $0x5c] sm:$0xf]
      %v234 = vld [vmem:[%s1 + $0x60] sm:$0xf]
      %v235 = vld [vmem:[%s1 + $0x64] sm:$0xf]
      %v236 = vld [vmem:[%s1 + $0x68] sm:$0xf]
      %v237 = vld [vmem:[%s1 + $0x6c] sm:$0xf]
      %v238 = vld [vmem:[%s1 + $0x70] sm:$0xf]
      %v239 = vld [vmem:[%s1 + $0x74] sm:$0xf]
      %v240 = vld [vmem:[%s1 + $0x78] sm:$0xf]
      %v241 = vld [vmem:[%s1 + $0x7c] sm:$0xf]
      %v242 = vld [vmem:[%s1 + $0x80] sm:$0xf]
      %v243 = vld [vmem:[%s1 + $0x84] sm:$0xf]
      %v244 = vld [vmem:[%s1 + $0x88] sm:$0xf]
      %v245 = vld [vmem:[%s1 + $0x8c] sm:$0xf]
      %v246 = vld [vmem:[%s1 + $0x90] sm:$0xf]
      %v247 = vld [vmem:[%s1 + $0x94] sm:$0xf]
      %v248 = vld [vmem:[%s1 + $0x98] sm:$0xf]
      %v249 = vld [vmem:[%s1 + $0x9c] sm:$0xf]
      %v250 = vld [vmem:[%s1 + $0xa0] sm:$0xf]
      %v251 = vld [vmem:[%s1 + $0xa4] sm:$0xf]
      %v252 = vld [vmem:[%s1 + $0xa8] sm:$0xf]
      %v253 = vld [vmem:[%s1 + $0xac] sm:$0xf]
      %v254 = vld [vmem:[%s1 + $0xb0] sm:$0xf]
      %v255 = vld [vmem:[%s1 + $0xb4] sm:$0xf]
      %v256 = vld [vmem:[%s1 + $0xb8] sm:$0xf]
      %v257 = vld [vmem:[%s1 + $0xbc] sm:$0xf]
      %v258 = vld [vmem:[%s1 + $0xc0] sm:$0xf]
      %v259 = vld [vmem:[%s1 + $0xc4] sm:$0xf]
      %v260 = vld [vmem:[%s1 + $0xc8] sm:$0xf]
      %v261 = vld [vmem:[%s1 + $0xcc] sm:$0xf]
      %v262 = vld [vmem:[%s1 + $0xd0] sm:$0xf]
      %v263 = vld [vmem:[%s1 + $0xd4] sm:$0xf]
      %v264 = vld [vmem:[%s1 + $0xd8] sm:$0xf]
      %v265 = vld [vmem:[%s1 + $0xdc] sm:$0xf]
      %v266 = vld [vmem:[%s1 + $0xe0] sm:$0xf]
      %v267 = vld [vmem:[%s1 + $0xe4] sm:$0xf]
      %v268 = vld [vmem:[%s1 + $0xe8] sm:$0xf]
      %v269 = vld [vmem:[%s1 + $0xec] sm:$0xf]
      %v270 = vld [vmem:[%s1 + $0xf0] sm:$0xf]
      %v271 = vld [vmem:[%s1 + $0xf4] sm:$0xf]
      %v272 = vld [vmem:[%s1 + $0xf8] sm:$0xf]
      %v273 = vld [vmem:[%s1 + $0xfc] sm:$0xf]
      %v274 = vld [vmem:[%s2] sm:$0x1]
      %v276 = vlaneseq
      %v277 = vshrl.u32 %v276, 7
      %v278 = vsub.s32 0, %v277
      %v279 = vrot.slane %v274, %v278
      %v313 = vunpack.c.l.b16 %v178
      %v314 = vunpack.c.h.b16 %v178
      %v315 = vunpack.c.l.b16 %v179
      %v316 = vunpack.c.h.b16 %v179
      %v317 = vunpack.c.l.b16 %v180
      %v318 = vunpack.c.h.b16 %v180
      %v319 = vunpack.c.l.b16 %v181
      %v320 = vunpack.c.h.b16 %v181
      %v321 = vunpack.c.l.b16 %v182
      %v322 = vunpack.c.h.b16 %v182
      %v323 = vunpack.c.l.b16 %v183
      %v324 = vunpack.c.h.b16 %v183
      %v325 = vunpack.c.l.b16 %v184
      %v326 = vunpack.c.h.b16 %v184
      %v327 = vunpack.c.l.b16 %v185
      %v328 = vunpack.c.h.b16 %v185
      %v329 = vunpack.c.l.b16 %v186
      %v330 = vunpack.c.h.b16 %v186
      %v331 = vunpack.c.l.b16 %v187
      %v332 = vunpack.c.h.b16 %v187
      %v333 = vunpack.c.l.b16 %v188
      %v334 = vunpack.c.h.b16 %v188
      %v335 = vunpack.c.l.b16 %v189
      %v336 = vunpack.c.h.b16 %v189
      %v337 = vunpack.c.l.b16 %v190
      %v338 = vunpack.c.h.b16 %v190
      %v339 = vunpack.c.l.b16 %v191
      %v340 = vunpack.c.h.b16 %v191
      %v341 = vunpack.c.l.b16 %v192
      %v342 = vunpack.c.h.b16 %v192
      %v343 = vunpack.c.l.b16 %v193
      %v344 = vunpack.c.h.b16 %v193
      %v345 = vunpack.c.l.b16 %v194
      %v346 = vunpack.c.h.b16 %v194
      %v347 = vunpack.c.l.b16 %v195
      %v348 = vunpack.c.h.b16 %v195
      %v349 = vunpack.c.l.b16 %v196
      %v350 = vunpack.c.h.b16 %v196
      %v351 = vunpack.c.l.b16 %v197
      %v352 = vunpack.c.h.b16 %v197
      %v353 = vunpack.c.l.b16 %v198
      %v354 = vunpack.c.h.b16 %v198
      %v355 = vunpack.c.l.b16 %v199
      %v356 = vunpack.c.h.b16 %v199
      %v357 = vunpack.c.l.b16 %v200
      %v358 = vunpack.c.h.b16 %v200
      %v359 = vunpack.c.l.b16 %v201
      %v360 = vunpack.c.h.b16 %v201
      %v361 = vunpack.c.l.b16 %v202
      %v362 = vunpack.c.h.b16 %v202
      %v363 = vunpack.c.l.b16 %v203
      %v364 = vunpack.c.h.b16 %v203
      %v365 = vunpack.c.l.b16 %v204
      %v366 = vunpack.c.h.b16 %v204
      %v367 = vunpack.c.l.b16 %v205
      %v368 = vunpack.c.h.b16 %v205
      %v369 = vunpack.c.l.b16 %v206
      %v370 = vunpack.c.h.b16 %v206
      %v371 = vunpack.c.l.b16 %v207
      %v372 = vunpack.c.h.b16 %v207
      %v373 = vunpack.c.l.b16 %v208
      %v374 = vunpack.c.h.b16 %v208
      %v375 = vunpack.c.l.b16 %v209
      %v376 = vunpack.c.h.b16 %v209
      %v377 = vpack.c.b16 %v317, %v313
      %v378 = vpack.c.b16 %v318, %v314
      %v379 = vpack.c.b16 %v319, %v315
      %v380 = vpack.c.b16 %v320, %v316
      %v381 = vpack.c.b16 %v325, %v321
      %v382 = vpack.c.b16 %v326, %v322
      %v383 = vpack.c.b16 %v327, %v323
      %v384 = vpack.c.b16 %v328, %v324
      %v385 = vpack.c.b16 %v333, %v329
      %v386 = vpack.c.b16 %v334, %v330
      %v387 = vpack.c.b16 %v335, %v331
      %v388 = vpack.c.b16 %v336, %v332
      %v389 = vpack.c.b16 %v341, %v337
      %v390 = vpack.c.b16 %v342, %v338
      %v391 = vpack.c.b16 %v343, %v339
      %v392 = vpack.c.b16 %v344, %v340
      %v393 = vpack.c.b16 %v349, %v345
      %v394 = vpack.c.b16 %v350, %v346
      %v395 = vpack.c.b16 %v351, %v347
      %v396 = vpack.c.b16 %v352, %v348
      %v397 = vpack.c.b16 %v357, %v353
      %v398 = vpack.c.b16 %v358, %v354
      %v399 = vpack.c.b16 %v359, %v355
      %v400 = vpack.c.b16 %v360, %v356
      %v401 = vpack.c.b16 %v365, %v361
      %v402 = vpack.c.b16 %v366, %v362
      %v403 = vpack.c.b16 %v367, %v363
      %v404 = vpack.c.b16 %v368, %v364
      %v405 = vpack.c.b16 %v373, %v369
      %v406 = vpack.c.b16 %v374, %v370
      %v407 = vpack.c.b16 %v375, %v371
      %v408 = vpack.c.b16 %v376, %v372
      %v505 = vunpack.c.l.b16 %v210
      %v506 = vunpack.c.l.b16 %v211
      %v507 = vunpack.c.l.b16 %v212
      %v508 = vunpack.c.l.b16 %v213
      %v509 = vunpack.c.l.b16 %v214
      %v510 = vunpack.c.l.b16 %v215
      %v511 = vunpack.c.l.b16 %v216
      %v512 = vunpack.c.l.b16 %v217
      %v513 = vunpack.c.l.b16 %v218
      %v514 = vunpack.c.l.b16 %v219
      %v515 = vunpack.c.l.b16 %v220
      %v516 = vunpack.c.l.b16 %v221
      %v517 = vunpack.c.l.b16 %v222
      %v518 = vunpack.c.l.b16 %v223
      %v519 = vunpack.c.l.b16 %v224
      %v520 = vunpack.c.l.b16 %v225
      %v521 = vunpack.c.l.b16 %v226
      %v522 = vunpack.c.l.b16 %v227
      %v523 = vunpack.c.l.b16 %v228
      %v524 = vunpack.c.l.b16 %v229
      %v525 = vunpack.c.l.b16 %v230
      %v526 = vunpack.c.l.b16 %v231
      %v527 = vunpack.c.l.b16 %v232
      %v528 = vunpack.c.l.b16 %v233
      %v529 = vunpack.c.l.b16 %v234
      %v530 = vunpack.c.l.b16 %v235
      %v531 = vunpack.c.l.b16 %v236
      %v532 = vunpack.c.l.b16 %v237
      %v533 = vunpack.c.l.b16 %v238
      %v534 = vunpack.c.l.b16 %v239
      %v535 = vunpack.c.l.b16 %v240
      %v536 = vunpack.c.l.b16 %v241
      %v537 = vunpack.c.l.b16 %v242
      %v538 = vunpack.c.l.b16 %v243
      %v539 = vunpack.c.l.b16 %v244
      %v540 = vunpack.c.l.b16 %v245
      %v541 = vunpack.c.l.b16 %v246
      %v542 = vunpack.c.l.b16 %v247
      %v543 = vunpack.c.l.b16 %v248
      %v544 = vunpack.c.l.b16 %v249
      %v545 = vunpack.c.l.b16 %v250
      %v546 = vunpack.c.l.b16 %v251
      %v547 = vunpack.c.l.b16 %v252
      %v548 = vunpack.c.l.b16 %v253
      %v549 = vunpack.c.l.b16 %v254
      %v550 = vunpack.c.l.b16 %v255
      %v551 = vunpack.c.l.b16 %v256
      %v552 = vunpack.c.l.b16 %v257
      %v553 = vunpack.c.l.b16 %v258
      %v554 = vunpack.c.l.b16 %v259
      %v555 = vunpack.c.l.b16 %v260
      %v556 = vunpack.c.l.b16 %v261
      %v557 = vunpack.c.l.b16 %v262
      %v558 = vunpack.c.l.b16 %v263
      %v559 = vunpack.c.l.b16 %v264
      %v560 = vunpack.c.l.b16 %v265
      %v561 = vunpack.c.l.b16 %v266
      %v562 = vunpack.c.l.b16 %v267
      %v563 = vunpack.c.l.b16 %v268
      %v564 = vunpack.c.l.b16 %v269
      %v565 = vunpack.c.l.b16 %v270
      %v566 = vunpack.c.l.b16 %v271
      %v567 = vunpack.c.l.b16 %v272
      %v568 = vunpack.c.l.b16 %v273
      %v569 = vpack.c.b16 %v506, %v505
      %v570 = vpack.c.b16 %v508, %v507
      %v571 = vpack.c.b16 %v510, %v509
      %v572 = vpack.c.b16 %v512, %v511
      %v573 = vpack.c.b16 %v514, %v513
      %v574 = vpack.c.b16 %v516, %v515
      %v575 = vpack.c.b16 %v518, %v517
      %v576 = vpack.c.b16 %v520, %v519
      %v577 = vpack.c.b16 %v522, %v521
      %v578 = vpack.c.b16 %v524, %v523
      %v579 = vpack.c.b16 %v526, %v525
      %v580 = vpack.c.b16 %v528, %v527
      %v581 = vpack.c.b16 %v530, %v529
      %v582 = vpack.c.b16 %v532, %v531
      %v583 = vpack.c.b16 %v534, %v533
      %v584 = vpack.c.b16 %v536, %v535
      %v585 = vpack.c.b16 %v538, %v537
      %v586 = vpack.c.b16 %v540, %v539
      %v587 = vpack.c.b16 %v542, %v541
      %v588 = vpack.c.b16 %v544, %v543
      %v589 = vpack.c.b16 %v546, %v545
      %v590 = vpack.c.b16 %v548, %v547
      %v591 = vpack.c.b16 %v550, %v549
      %v592 = vpack.c.b16 %v552, %v551
      %v593 = vpack.c.b16 %v554, %v553
      %v594 = vpack.c.b16 %v556, %v555
      %v595 = vpack.c.b16 %v558, %v557
      %v596 = vpack.c.b16 %v560, %v559
      %v597 = vpack.c.b16 %v562, %v561
      %v598 = vpack.c.b16 %v564, %v563
      %v599 = vpack.c.b16 %v566, %v565
      %v600 = vpack.c.b16 %v568, %v567
      %633 = vmatprep.subr.bf16.mxu0 0
      %634 = vmatpush1.bf16.msra.mxu0 %v569
      %635 = vmatprep.subr.bf16.mxu0 0
      %636 = vmatpush1.bf16.msra.mxu0 %v570
      %637 = vmatprep.subr.bf16.mxu0 0
      %638 = vmatpush1.bf16.msra.mxu0 %v571
      %639 = vmatprep.subr.bf16.mxu0 0
      %640 = vmatpush1.bf16.msra.mxu0 %v572
      %641 = vmatprep.subr.bf16.mxu0 0
      %642 = vmatpush1.bf16.msra.mxu0 %v573
      %643 = vmatprep.subr.bf16.mxu0 0
      %644 = vmatpush1.bf16.msra.mxu0 %v574
      %645 = vmatprep.subr.bf16.mxu0 0
      %646 = vmatpush1.bf16.msra.mxu0 %v575
      %647 = vmatprep.subr.bf16.mxu0 0
      %648 = vmatpush1.bf16.msra.mxu0 %v576
      %649 = vmatprep.subr.bf16.mxu0 0
      %650 = vmatpush1.bf16.msra.mxu0 %v577
      %651 = vmatprep.subr.bf16.mxu0 0
      %652 = vmatpush1.bf16.msra.mxu0 %v578
      %653 = vmatprep.subr.bf16.mxu0 0
      %654 = vmatpush1.bf16.msra.mxu0 %v579
      %655 = vmatprep.subr.bf16.mxu0 0
      %656 = vmatpush1.bf16.msra.mxu0 %v580
      %657 = vmatprep.subr.bf16.mxu0 0
      %658 = vmatpush1.bf16.msra.mxu0 %v581
      %659 = vmatprep.subr.bf16.mxu0 0
      %660 = vmatpush1.bf16.msra.mxu0 %v582
      %661 = vmatprep.subr.bf16.mxu0 0
      %662 = vmatpush1.bf16.msra.mxu0 %v583
      %663 = vmatprep.subr.bf16.mxu0 0
      %664 = vmatpush1.bf16.msra.mxu0 %v584
      %665 = vmatprep.mubr.bf16.mxu0 %v378
      %666 = vmatmul.mubr.bf16.gmra.mrb[0].mxu0 %v377
      %v667 = vpop.f32.mrb[0].mxu0
      %v668 = vadd.f32 %v279, %v667
      %v669 = vpop.f32.mrb[0].mxu0
      %v670 = vpop.f32.mrb[0].mxu0
      %v671 = vadd.f32 %v279, %v670
      %v672 = vpop.f32.mrb[0].mxu0
      %673 = vmatprep.mubr.bf16.mxu0 %v382
      %674 = vmatmul.mubr.bf16.gmra.mrb[0].mxu0 %v381
      %v675 = vpop.f32.mrb[0].mxu0
      %v676 = vadd.f32 %v279, %v675
      %v677 = vpop.f32.mrb[0].mxu0
      %v678 = vpop.f32.mrb[0].mxu0
      %v679 = vadd.f32 %v279, %v678
      %v680 = vpop.f32.mrb[0].mxu0
      %681 = vmatprep.mubr.bf16.mxu0 %v386
      %682 = vmatmul.mubr.bf16.gmra.mrb[0].mxu0 %v385
      %v683 = vpop.f32.mrb[0].mxu0
      %v684 = vadd.f32 %v279, %v683
      %v685 = vpop.f32.mrb[0].mxu0
      %v686 = vpop.f32.mrb[0].mxu0
      %v687 = vadd.f32 %v279, %v686
      %v688 = vpop.f32.mrb[0].mxu0
      %689 = vmatprep.mubr.bf16.mxu0 %v390
      %690 = vmatmul.mubr.bf16.gmra.mrb[0].mxu0 %v389
      %v691 = vpop.f32.mrb[0].mxu0
      %v692 = vadd.f32 %v279, %v691
      %v693 = vpop.f32.mrb[0].mxu0
      %v694 = vpop.f32.mrb[0].mxu0
      %v695 = vadd.f32 %v279, %v694
      %v696 = vpop.f32.mrb[0].mxu0
      %697 = vmatprep.mubr.bf16.mxu0 %v394
      %698 = vmatmul.mubr.bf16.gmra.mrb[0].mxu0 %v393
      %v699 = vpop.f32.mrb[0].mxu0
      %v700 = vadd.f32 %v279, %v699
      %v701 = vpop.f32.mrb[0].mxu0
      %v702 = vpop.f32.mrb[0].mxu0
      %v703 = vadd.f32 %v279, %v702
      %v704 = vpop.f32.mrb[0].mxu0
      %705 = vmatprep.mubr.bf16.mxu0 %v398
      %706 = vmatmul.mubr.bf16.gmra.mrb[0].mxu0 %v397
      %v707 = vpop.f32.mrb[0].mxu0
      %v708 = vadd.f32 %v279, %v707
      %v709 = vpop.f32.mrb[0].mxu0
      %v710 = vpop.f32.mrb[0].mxu0
      %v711 = vadd.f32 %v279, %v710
      %v712 = vpop.f32.mrb[0].mxu0
      %713 = vmatprep.mubr.bf16.mxu0 %v402
      %714 = vmatmul.mubr.bf16.gmra.mrb[0].mxu0 %v401
      %v715 = vpop.f32.mrb[0].mxu0
      %v716 = vadd.f32 %v279, %v715
      %v717 = vpop.f32.mrb[0].mxu0
      %v718 = vpop.f32.mrb[0].mxu0
      %v719 = vadd.f32 %v279, %v718
      %v720 = vpop.f32.mrb[0].mxu0
      %721 = vmatprep.mubr.bf16.mxu0 %v406
      %722 = vmatmul.mubr.bf16.gmra.mrb[0].mxu0 %v405
      %v723 = vpop.f32.mrb[0].mxu0
      %v724 = vadd.f32 %v279, %v723
      %v725 = vpop.f32.mrb[0].mxu0
      %v726 = vpop.f32.mrb[0].mxu0
      %v727 = vadd.f32 %v279, %v726
      %v728 = vpop.f32.mrb[0].mxu0
      %729 = vdwg.mxu0
      %730 = vmatprep.subr.bf16.mxu0 0
      %731 = vmatpush1.bf16.msra.mxu0 %v585
      %732 = vmatprep.subr.bf16.mxu0 0
      %733 = vmatpush1.bf16.msra.mxu0 %v586
      %734 = vmatprep.subr.bf16.mxu0 0
      %735 = vmatpush1.bf16.msra.mxu0 %v587
      %736 = vmatprep.subr.bf16.mxu0 0
      %737 = vmatpush1.bf16.msra.mxu0 %v588
      %738 = vmatprep.subr.bf16.mxu0 0
      %739 = vmatpush1.bf16.msra.mxu0 %v589
      %740 = vmatprep.subr.bf16.mxu0 0
      %741 = vmatpush1.bf16.msra.mxu0 %v590
      %742 = vmatprep.subr.bf16.mxu0 0
      %743 = vmatpush1.bf16.msra.mxu0 %v591
      %744 = vmatprep.subr.bf16.mxu0 0
      %745 = vmatpush1.bf16.msra.mxu0 %v592
      %746 = vmatprep.subr.bf16.mxu0 0
      %747 = vmatpush1.bf16.msra.mxu0 %v593
      %748 = vmatprep.subr.bf16.mxu0 0
      %749 = vmatpush1.bf16.msra.mxu0 %v594
      %750 = vmatprep.subr.bf16.mxu0 0
      %751 = vmatpush1.bf16.msra.mxu0 %v595
      %752 = vmatprep.subr.bf16.mxu0 0
      %753 = vmatpush1.bf16.msra.mxu0 %v596
      %754 = vmatprep.subr.bf16.mxu0 0
      %755 = vmatpush1.bf16.msra.mxu0 %v597
      %756 = vmatprep.subr.bf16.mxu0 0
      %757 = vmatpush1.bf16.msra.mxu0 %v598
      %758 = vmatprep.subr.bf16.mxu0 0
      %759 = vmatpush1.bf16.msra.mxu0 %v599
      %760 = vmatprep.subr.bf16.mxu0 0
      %761 = vmatpush1.bf16.msra.mxu0 %v600
      %762 = vmatprep.mubr.bf16.mxu0 %v380
      %763 = vmatmul.mubr.bf16.gmra.mrb[0].mxu0 %v379
      %v764 = vpop.f32.mrb[0].mxu0
      %v765 = vadd.f32 %v668, %v764
      %v766 = vpop.f32.mrb[0].mxu0
      %v767 = vpop.f32.mrb[0].mxu0
      %v768 = vadd.f32 %v671, %v767
      %v769 = vpop.f32.mrb[0].mxu0
      %770 = vmatprep.mubr.bf16.mxu0 %v384
      %771 = vmatmul.mubr.bf16.gmra.mrb[0].mxu0 %v383
      %v772 = vpop.f32.mrb[0].mxu0
      %v773 = vadd.f32 %v676, %v772
      %v774 = vpop.f32.mrb[0].mxu0
      %v775 = vpop.f32.mrb[0].mxu0
      %v776 = vadd.f32 %v679, %v775
      %v777 = vpop.f32.mrb[0].mxu0
      %778 = vmatprep.mubr.bf16.mxu0 %v388
      %779 = vmatmul.mubr.bf16.gmra.mrb[0].mxu0 %v387
      %v780 = vpop.f32.mrb[0].mxu0
      %v781 = vadd.f32 %v684, %v780
      %v782 = vpop.f32.mrb[0].mxu0
      %v783 = vpop.f32.mrb[0].mxu0
      %v784 = vadd.f32 %v687, %v783
      %v785 = vpop.f32.mrb[0].mxu0
      %786 = vmatprep.mubr.bf16.mxu0 %v392
      %787 = vmatmul.mubr.bf16.gmra.mrb[0].mxu0 %v391
      %v788 = vpop.f32.mrb[0].mxu0
      %v789 = vadd.f32 %v692, %v788
      %v790 = vpop.f32.mrb[0].mxu0
      %v791 = vpop.f32.mrb[0].mxu0
      %v792 = vadd.f32 %v695, %v791
      %v793 = vpop.f32.mrb[0].mxu0
      %794 = vmatprep.mubr.bf16.mxu0 %v396
      %795 = vmatmul.mubr.bf16.gmra.mrb[0].mxu0 %v395
      %v796 = vpop.f32.mrb[0].mxu0
      %v797 = vadd.f32 %v700, %v796
      %v798 = vpop.f32.mrb[0].mxu0
      %v799 = vpop.f32.mrb[0].mxu0
      %v800 = vadd.f32 %v703, %v799
      %v801 = vpop.f32.mrb[0].mxu0
      %802 = vmatprep.mubr.bf16.mxu0 %v400
      %803 = vmatmul.mubr.bf16.gmra.mrb[0].mxu0 %v399
      %v804 = vpop.f32.mrb[0].mxu0
      %v805 = vadd.f32 %v708, %v804
      %v806 = vpop.f32.mrb[0].mxu0
      %v807 = vpop.f32.mrb[0].mxu0
      %v808 = vadd.f32 %v711, %v807
      %v809 = vpop.f32.mrb[0].mxu0
      %810 = vmatprep.mubr.bf16.mxu0 %v404
      %811 = vmatmul.mubr.bf16.gmra.mrb[0].mxu0 %v403
      %v812 = vpop.f32.mrb[0].mxu0
      %v813 = vadd.f32 %v716, %v812
      %v814 = vpop.f32.mrb[0].mxu0
      %v815 = vpop.f32.mrb[0].mxu0
      %v816 = vadd.f32 %v719, %v815
      %v817 = vpop.f32.mrb[0].mxu0
      %818 = vmatprep.mubr.bf16.mxu0 %v408
      %819 = vmatmul.mubr.bf16.gmra.mrb[0].mxu0 %v407
      %v820 = vpop.f32.mrb[0].mxu0
      %v821 = vadd.f32 %v724, %v820
      %v822 = vpop.f32.mrb[0].mxu0
      %v823 = vpop.f32.mrb[0].mxu0
      %v824 = vadd.f32 %v727, %v823
      %v825 = vpop.f32.mrb[0].mxu0
      %826 = vdwg.mxu0
      %v827 = vmax.f32 %v765, 0.0
      %v828 = vmax.f32 %v768, 0.0
      %v829 = vmax.f32 %v773, 0.0
      %v830 = vmax.f32 %v776, 0.0
      %v831 = vmax.f32 %v781, 0.0
      %v832 = vmax.f32 %v784, 0.0
      %v833 = vmax.f32 %v789, 0.0
      %v834 = vmax.f32 %v792, 0.0
      %v835 = vmax.f32 %v797, 0.0
      %v836 = vmax.f32 %v800, 0.0
      %v837 = vmax.f32 %v805, 0.0
      %v838 = vmax.f32 %v808, 0.0
      %v839 = vmax.f32 %v813, 0.0
      %v840 = vmax.f32 %v816, 0.0
      %v841 = vmax.f32 %v821, 0.0
      %v842 = vmax.f32 %v824, 0.0
      %v843 = vpack.c.bf16 %v828, %v827
      %v844 = vpack.c.bf16 %v830, %v829
      %v845 = vpack.c.bf16 %v832, %v831
      %v846 = vpack.c.bf16 %v834, %v833
      %v847 = vpack.c.bf16 %v836, %v835
      %v848 = vpack.c.bf16 %v838, %v837
      %v849 = vpack.c.bf16 %v840, %v839
      %v850 = vpack.c.bf16 %v842, %v841
      %v859 = vunpack.c.l.b16 %v843
      %v860 = vunpack.c.h.b16 %v843
      %v861 = vunpack.c.l.b16 %v844
      %v862 = vunpack.c.h.b16 %v844
      %v863 = vunpack.c.l.b16 %v845
      %v864 = vunpack.c.h.b16 %v845
      %v865 = vunpack.c.l.b16 %v846
      %v866 = vunpack.c.h.b16 %v846
      %v867 = vunpack.c.l.b16 %v847
      %v868 = vunpack.c.h.b16 %v847
      %v869 = vunpack.c.l.b16 %v848
      %v870 = vunpack.c.h.b16 %v848
      %v871 = vunpack.c.l.b16 %v849
      %v872 = vunpack.c.h.b16 %v849
      %v873 = vunpack.c.l.b16 %v850
      %v874 = vunpack.c.h.b16 %v850
      %v875 = vpack.c.b16 %v859, %v859
      %v876 = vpack.c.b16 %v860, %v860
      %v877 = vpack.c.b16 %v861, %v861
      %v878 = vpack.c.b16 %v862, %v862
      %v879 = vpack.c.b16 %v863, %v863
      %v880 = vpack.c.b16 %v864, %v864
      %v881 = vpack.c.b16 %v865, %v865
      %v882 = vpack.c.b16 %v866, %v866
      %v883 = vpack.c.b16 %v867, %v867
      %v884 = vpack.c.b16 %v868, %v868
      %v885 = vpack.c.b16 %v869, %v869
      %v886 = vpack.c.b16 %v870, %v870
      %v887 = vpack.c.b16 %v871, %v871
      %v888 = vpack.c.b16 %v872, %v872
      %v889 = vpack.c.b16 %v873, %v873
      %v890 = vpack.c.b16 %v874, %v874
      %vm907 = vcmask 519168
      %908 = vst.msk [vmem:[%s175] sm:$0xf] %vm907, %v875
      %909 = vst.msk [vmem:[%s175 + $0x4] sm:$0xf] %vm907, %v876
      %910 = vst.msk [vmem:[%s175 + $0x8] sm:$0xf] %vm907, %v877
      %911 = vst.msk [vmem:[%s175 + $0xc] sm:$0xf] %vm907, %v878
      %912 = vst.msk [vmem:[%s175 + $0x10] sm:$0xf] %vm907, %v879
      %913 = vst.msk [vmem:[%s175 + $0x14] sm:$0xf] %vm907, %v880
      %914 = vst.msk [vmem:[%s175 + $0x18] sm:$0xf] %vm907, %v881
      %915 = vst.msk [vmem:[%s175 + $0x1c] sm:$0xf] %vm907, %v882
      %916 = vst.msk [vmem:[%s175 + $0x20] sm:$0xf] %vm907, %v883
      %917 = vst.msk [vmem:[%s175 + $0x24] sm:$0xf] %vm907, %v884
      %918 = vst.msk [vmem:[%s175 + $0x28] sm:$0xf] %vm907, %v885
      %919 = vst.msk [vmem:[%s175 + $0x2c] sm:$0xf] %vm907, %v886
      %920 = vst.msk [vmem:[%s175 + $0x30] sm:$0xf] %vm907, %v887
      %921 = vst.msk [vmem:[%s175 + $0x34] sm:$0xf] %vm907, %v888
      %922 = vst.msk [vmem:[%s175 + $0x38] sm:$0xf] %vm907, %v889
      %923 = vst.msk [vmem:[%s175 + $0x3c] sm:$0xf] %vm907, %v890
      %s924 = smul.u32 16, %s14
      %p925 = scmp.lt.s32.totalorder %s924, 47
      %s926 = scalar_select %p925, %s924, 47
      %s927 = smul.addr %s926, 4
      %s928 = scalar_lea.vmem %s3, %s927
      // Predicated region
      $region33: #{_lambda_.18} parent=31 // pred_check
        %p929 = pneg %p100
      $region34: #{_lambda_.18} parent=31 // pred_check_branch
        %931 = sbr.rel (%p929) target = $region36
      $region35: #{_lambda_.18} parent=31 // pred_region
        %s932 = smul.u32 16, %s14
      $region36: #{_lambda_.18} parent=31 // pred_fallthru
        _
    $region32: #{_lambda_.18} parent=5 // pred_fallthru
      _
    %p933 = scmp.le.s32.totalorder 2, %s9
    // Predicated region
    $region37: #{_lambda_.18} parent=5 // pred_check
      %p934 = pneg %p933
    $region38: #{_lambda_.18} parent=5 // pred_check_branch
      %936 = sbr.rel (%p934) target = $region40
    $region39: #{_lambda_.18} parent=5 // pred_region
      %s937 = ssub.s32 %s9, 2
      // Predicated region
      $region41: #{_lambda_.18} parent=39 // pred_check
        %p938 = pneg %p106
      $region42: #{_lambda_.18} parent=39 // pred_check_branch
        %940 = sbr.rel (%p938) target = $region44
      $region43: #{_lambda_.18} parent=39 // pred_region
        %s941 = smul.u32 16, %s15
        %p942 = scmp.lt.s32.totalorder %s941, 47
        %s943 = scalar_select %p942, %s941, 47
        %s944 = smul.addr %s943, 4
        %s945 = scalar_lea.vmem %s3, %s944
      $region44: #{_lambda_.18} parent=39 // pred_fallthru
        _
    $region40: #{_lambda_.18} parent=5 // pred_fallthru
      _
  $region6: #{_lambda_.18} parent=0 // loop_footer
    %s13 = sadd.s32 1, %s9
  $region7: #{_lambda_.18} parent=0 // loop_footer_branch
    %8 = sbr.rel target = $region3
  $region8: #{_lambda_.18} parent=0 // loop_exit
    _

// kernel: _lambda_.19
$region0: #{_lambda_.19}
  #allocation0 [shape = 'u32[]', space=smem, size = 0x4, offset = 0x4, fixed_abs, tag = 'smem constant byte address 0x4 - core index']
  #allocation1 [shape = 'u32[144,128]{1,0:T(1,128)}', space=vmem, size = 0x12000, scoped, tag = 'internal scratch']
  %s0 = inlined_call_operand.vmem [shape: bf16[96,640], index: 0, kind: input, shape index: {}]
  %s1 = inlined_call_operand.vmem [shape: bf16[640,64], index: 1, kind: input, shape index: {}]
  %s2 = inlined_call_operand.vmem [shape: f32[1,64], index: 2, kind: input, shape index: {}]
  %s3 = inlined_call_operand.vmem [shape: bf16[96,64], index: 3, kind: output, shape index: {}]
  %s4 = sld [smem:[#allocation0]]
  $region22: #{_lambda_.19} parent=0
    _
  %s6 = ssub.s32 1, %s4
  %s7 = scalar_select 0, %s6, %s4
  // Predicated region
  $region2: #{_lambda_.19} parent=0 // pred_check
    _
  $region3: #{_lambda_.19} parent=0 // pred_check_branch
    %9 = sbr.rel (0) target = $region5
  $region4: #{_lambda_.19} parent=0 // pred_region
    _
  $region5: #{_lambda_.19} parent=0 // pred_fallthru
    _
  // Predicated region
  $region6: #{_lambda_.19} parent=0 // pred_check
    _
  $region7: #{_lambda_.19} parent=0 // pred_check_branch
    %11 = sbr.rel (0) target = $region9
  $region8: #{_lambda_.19} parent=0 // pred_region
    _
  $region9: #{_lambda_.19} parent=0 // pred_fallthru
    _
  // Predicated region
  $region10: #{_lambda_.19} parent=0 // pred_check
    _
  $region11: #{_lambda_.19} parent=0 // pred_check_branch
    %13 = sbr.rel (0) target = $region13
  $region12: #{_lambda_.19} parent=0 // pred_region
    _
  $region13: #{_lambda_.19} parent=0 // pred_fallthru
    _
  %v15 = vld [vmem:[%s0] sm:$0xff]
  %v16 = vld [vmem:[%s0 + $0x8] sm:$0xff]
  %v17 = vld [vmem:[%s0 + $0x10] sm:$0xf]
  %v18 = vld [vmem:[%s0 + $0x14] sm:$0xff]
  %v19 = vld [vmem:[%s0 + $0x1c] sm:$0xff]
  %v20 = vld [vmem:[%s0 + $0x24] sm:$0xf]
  %v21 = vld [vmem:[%s0 + $0x28] sm:$0xff]
  %v22 = vld [vmem:[%s0 + $0x30] sm:$0xff]
  %v23 = vld [vmem:[%s0 + $0x38] sm:$0xf]
  %v24 = vld [vmem:[%s0 + $0x3c] sm:$0xff]
  %v25 = vld [vmem:[%s0 + $0x44] sm:$0xff]
  %v26 = vld [vmem:[%s0 + $0x4c] sm:$0xf]
  %v27 = vld [vmem:[%s0 + $0x50] sm:$0xff]
  %v28 = vld [vmem:[%s0 + $0x58] sm:$0xff]
  %v29 = vld [vmem:[%s0 + $0x60] sm:$0xf]
  %v30 = vld [vmem:[%s0 + $0x64] sm:$0xff]
  %v31 = vld [vmem:[%s0 + $0x6c] sm:$0xff]
  %v32 = vld [vmem:[%s0 + $0x74] sm:$0xf]
  %v33 = vld [vmem:[%s0 + $0x78] sm:$0xff]
  %v34 = vld [vmem:[%s0 + $0x80] sm:$0xff]
  %v35 = vld [vmem:[%s0 + $0x88] sm:$0xf]
  %v36 = vld [vmem:[%s0 + $0x8c] sm:$0xff]
  %v37 = vld [vmem:[%s0 + $0x94] sm:$0xff]
  %v38 = vld [vmem:[%s0 + $0x9c] sm:$0xf]
  %v39 = vld [vmem:[%s0 + $0xa0] sm:$0xff]
  %v40 = vld [vmem:[%s0 + $0xa8] sm:$0xff]
  %v41 = vld [vmem:[%s0 + $0xb0] sm:$0xf]
  %v42 = vld [vmem:[%s0 + $0xb4] sm:$0xff]
  %v43 = vld [vmem:[%s0 + $0xbc] sm:$0xff]
  %v44 = vld [vmem:[%s0 + $0xc4] sm:$0xf]
  %v45 = vld [vmem:[%s0 + $0xc8] sm:$0xff]
  %v46 = vld [vmem:[%s0 + $0xd0] sm:$0xff]
  %v47 = vld [vmem:[%s0 + $0xd8] sm:$0xf]
  %v48 = vld [vmem:[%s0 + $0xdc] sm:$0xff]
  %v49 = vld [vmem:[%s0 + $0xe4] sm:$0xff]
  %v50 = vld [vmem:[%s0 + $0xec] sm:$0xf]
  %v51 = vld [vmem:[%s1] sm:$0xf]
  %v52 = vld [vmem:[%s1 + $0x4] sm:$0xf]
  %v53 = vld [vmem:[%s1 + $0x8] sm:$0xf]
  %v54 = vld [vmem:[%s1 + $0xc] sm:$0xf]
  %v55 = vld [vmem:[%s1 + $0x10] sm:$0xf]
  %v56 = vld [vmem:[%s1 + $0x14] sm:$0xf]
  %v57 = vld [vmem:[%s1 + $0x18] sm:$0xf]
  %v58 = vld [vmem:[%s1 + $0x1c] sm:$0xf]
  %v59 = vld [vmem:[%s1 + $0x20] sm:$0xf]
  %v60 = vld [vmem:[%s1 + $0x24] sm:$0xf]
  %v61 = vld [vmem:[%s1 + $0x28] sm:$0xf]
  %v62 = vld [vmem:[%s1 + $0x2c] sm:$0xf]
  %v63 = vld [vmem:[%s1 + $0x30] sm:$0xf]
  %v64 = vld [vmem:[%s1 + $0x34] sm:$0xf]
  %v65 = vld [vmem:[%s1 + $0x38] sm:$0xf]
  %v66 = vld [vmem:[%s1 + $0x3c] sm:$0xf]
  %v67 = vld [vmem:[%s1 + $0x40] sm:$0xf]
  %v68 = vld [vmem:[%s1 + $0x44] sm:$0xf]
  %v69 = vld [vmem:[%s1 + $0x48] sm:$0xf]
  %v70 = vld [vmem:[%s1 + $0x4c] sm:$0xf]
  %v71 = vld [vmem:[%s1 + $0x50] sm:$0xf]
  %v72 = vld [vmem:[%s1 + $0x54] sm:$0xf]
  %v73 = vld [vmem:[%s1 + $0x58] sm:$0xf]
  %v74 = vld [vmem:[%s1 + $0x5c] sm:$0xf]
  %v75 = vld [vmem:[%s1 + $0x60] sm:$0xf]
  %v76 = vld [vmem:[%s1 + $0x64] sm:$0xf]
  %v77 = vld [vmem:[%s1 + $0x68] sm:$0xf]
  %v78 = vld [vmem:[%s1 + $0x6c] sm:$0xf]
  %v79 = vld [vmem:[%s1 + $0x70] sm:$0xf]
  %v80 = vld [vmem:[%s1 + $0x74] sm:$0xf]
  %v81 = vld [vmem:[%s1 + $0x78] sm:$0xf]
  %v82 = vld [vmem:[%s1 + $0x7c] sm:$0xf]
  %v83 = vld [vmem:[%s1 + $0x80] sm:$0xf]
  %v84 = vld [vmem:[%s1 + $0x84] sm:$0xf]
  %v85 = vld [vmem:[%s1 + $0x88] sm:$0xf]
  %v86 = vld [vmem:[%s1 + $0x8c] sm:$0xf]
  %v87 = vld [vmem:[%s1 + $0x90] sm:$0xf]
  %v88 = vld [vmem:[%s1 + $0x94] sm:$0xf]
  %v89 = vld [vmem:[%s1 + $0x98] sm:$0xf]
  %v90 = vld [vmem:[%s1 + $0x9c] sm:$0xf]
  %v91 = vld [vmem:[%s1 + $0xa0] sm:$0xf]
  %v92 = vld [vmem:[%s1 + $0xa4] sm:$0xf]
  %v93 = vld [vmem:[%s1 + $0xa8] sm:$0xf]
  %v94 = vld [vmem:[%s1 + $0xac] sm:$0xf]
  %v95 = vld [vmem:[%s1 + $0xb0] sm:$0xf]
  %v96 = vld [vmem:[%s1 + $0xb4] sm:$0xf]
  %v97 = vld [vmem:[%s1 + $0xb8] sm:$0xf]
  %v98 = vld [vmem:[%s1 + $0xbc] sm:$0xf]
  %v99 = vld [vmem:[%s1 + $0xc0] sm:$0xf]
  %v100 = vld [vmem:[%s1 + $0xc4] sm:$0xf]
  %v101 = vld [vmem:[%s1 + $0xc8] sm:$0xf]
  %v102 = vld [vmem:[%s1 + $0xcc] sm:$0xf]
  %v103 = vld [vmem:[%s1 + $0xd0] sm:$0xf]
  %v104 = vld [vmem:[%s1 + $0xd4] sm:$0xf]
  %v105 = vld [vmem:[%s1 + $0xd8] sm:$0xf]
  %v106 = vld [vmem:[%s1 + $0xdc] sm:$0xf]
  %v107 = vld [vmem:[%s1 + $0xe0] sm:$0xf]
  %v108 = vld [vmem:[%s1 + $0xe4] sm:$0xf]
  %v109 = vld [vmem:[%s1 + $0xe8] sm:$0xf]
  %v110 = vld [vmem:[%s1 + $0xec] sm:$0xf]
  %v111 = vld [vmem:[%s1 + $0xf0] sm:$0xf]
  %v112 = vld [vmem:[%s1 + $0xf4] sm:$0xf]
  %v113 = vld [vmem:[%s1 + $0xf8] sm:$0xf]
  %v114 = vld [vmem:[%s1 + $0xfc] sm:$0xf]
  %v115 = vld [vmem:[%s1 + $0x100] sm:$0xf]
  %v116 = vld [vmem:[%s1 + $0x104] sm:$0xf]
  %v117 = vld [vmem:[%s1 + $0x108] sm:$0xf]
  %v118 = vld [vmem:[%s1 + $0x10c] sm:$0xf]
  %v119 = vld [vmem:[%s1 + $0x110] sm:$0xf]
  %v120 = vld [vmem:[%s1 + $0x114] sm:$0xf]
  %v121 = vld [vmem:[%s1 + $0x118] sm:$0xf]
  %v122 = vld [vmem:[%s1 + $0x11c] sm:$0xf]
  %v123 = vld [vmem:[%s1 + $0x120] sm:$0xf]
  %v124 = vld [vmem:[%s1 + $0x124] sm:$0xf]
  %v125 = vld [vmem:[%s1 + $0x128] sm:$0xf]
  %v126 = vld [vmem:[%s1 + $0x12c] sm:$0xf]
  %v127 = vld [vmem:[%s1 + $0x130] sm:$0xf]
  %v128 = vld [vmem:[%s1 + $0x134] sm:$0xf]
  %v129 = vld [vmem:[%s1 + $0x138] sm:$0xf]
  %v130 = vld [vmem:[%s1 + $0x13c] sm:$0xf]
  %v131 = vld [vmem:[%s2] sm:$0x1]
  %v133 = vlaneseq
  %v134 = vshrl.u32 %v133, 7
  %v135 = vsub.s32 0, %v134
  %v136 = vrot.slane %v131, %v135
  %v174 = vunpack.c.l.b16 %v15
  %v175 = vunpack.c.h.b16 %v15
  %v176 = vunpack.c.l.b16 %v16
  %v177 = vunpack.c.h.b16 %v16
  %v178 = vunpack.c.l.b16 %v17
  %v179 = vunpack.c.l.b16 %v18
  %v180 = vunpack.c.h.b16 %v18
  %v181 = vunpack.c.l.b16 %v19
  %v182 = vunpack.c.h.b16 %v19
  %v183 = vunpack.c.l.b16 %v20
  %v184 = vunpack.c.l.b16 %v21
  %v185 = vunpack.c.h.b16 %v21
  %v186 = vunpack.c.l.b16 %v22
  %v187 = vunpack.c.h.b16 %v22
  %v188 = vunpack.c.l.b16 %v23
  %v189 = vunpack.c.l.b16 %v24
  %v190 = vunpack.c.h.b16 %v24
  %v191 = vunpack.c.l.b16 %v25
  %v192 = vunpack.c.h.b16 %v25
  %v193 = vunpack.c.l.b16 %v26
  %v194 = vunpack.c.l.b16 %v27
  %v195 = vunpack.c.h.b16 %v27
  %v196 = vunpack.c.l.b16 %v28
  %v197 = vunpack.c.h.b16 %v28
  %v198 = vunpack.c.l.b16 %v29
  %v199 = vunpack.c.l.b16 %v30
  %v200 = vunpack.c.h.b16 %v30
  %v201 = vunpack.c.l.b16 %v31
  %v202 = vunpack.c.h.b16 %v31
  %v203 = vunpack.c.l.b16 %v32
  %v204 = vunpack.c.l.b16 %v33
  %v205 = vunpack.c.h.b16 %v33
  %v206 = vunpack.c.l.b16 %v34
  %v207 = vunpack.c.h.b16 %v34
  %v208 = vunpack.c.l.b16 %v35
  %v209 = vunpack.c.l.b16 %v36
  %v210 = vunpack.c.h.b16 %v36
  %v211 = vunpack.c.l.b16 %v37
  %v212 = vunpack.c.h.b16 %v37
  %v213 = vunpack.c.l.b16 %v38
  %v214 = vunpack.c.l.b16 %v39
  %v215 = vunpack.c.h.b16 %v39
  %v216 = vunpack.c.l.b16 %v40
  %v217 = vunpack.c.h.b16 %v40
  %v218 = vunpack.c.l.b16 %v41
  %v219 = vunpack.c.l.b16 %v42
  %v220 = vunpack.c.h.b16 %v42
  %v221 = vunpack.c.l.b16 %v43
  %v222 = vunpack.c.h.b16 %v43
  %v223 = vunpack.c.l.b16 %v44
  %v224 = vunpack.c.l.b16 %v45
  %v225 = vunpack.c.h.b16 %v45
  %v226 = vunpack.c.l.b16 %v46
  %v227 = vunpack.c.h.b16 %v46
  %v228 = vunpack.c.l.b16 %v47
  %v229 = vunpack.c.l.b16 %v48
  %v230 = vunpack.c.h.b16 %v48
  %v231 = vunpack.c.l.b16 %v49
  %v232 = vunpack.c.h.b16 %v49
  %v233 = vunpack.c.l.b16 %v50
  %v234 = vpack.c.b16 %v179, %v174
  %v235 = vpack.c.b16 %v180, %v175
  %v236 = vpack.c.b16 %v181, %v176
  %v237 = vpack.c.b16 %v182, %v177
  %v238 = vpack.c.b16 %v183, %v178
  %v239 = vpack.c.b16 %v189, %v184
  %v240 = vpack.c.b16 %v190, %v185
  %v241 = vpack.c.b16 %v191, %v186
  %v242 = vpack.c.b16 %v192, %v187
  %v243 = vpack.c.b16 %v193, %v188
  %v244 = vpack.c.b16 %v199, %v194
  %v245 = vpack.c.b16 %v200, %v195
  %v246 = vpack.c.b16 %v201, %v196
  %v247 = vpack.c.b16 %v202, %v197
  %v248 = vpack.c.b16 %v203, %v198
  %v249 = vpack.c.b16 %v209, %v204
  %v250 = vpack.c.b16 %v210, %v205
  %v251 = vpack.c.b16 %v211, %v206
  %v252 = vpack.c.b16 %v212, %v207
  %v253 = vpack.c.b16 %v213, %v208
  %v254 = vpack.c.b16 %v219, %v214
  %v255 = vpack.c.b16 %v220, %v215
  %v256 = vpack.c.b16 %v221, %v216
  %v257 = vpack.c.b16 %v222, %v217
  %v258 = vpack.c.b16 %v223, %v218
  %v259 = vpack.c.b16 %v229, %v224
  %v260 = vpack.c.b16 %v230, %v225
  %v261 = vpack.c.b16 %v231, %v226
  %v262 = vpack.c.b16 %v232, %v227
  %v263 = vpack.c.b16 %v233, %v228
  %v374 = vunpack.c.l.b16 %v51
  %v375 = vunpack.c.l.b16 %v52
  %v376 = vunpack.c.l.b16 %v53
  %v377 = vunpack.c.l.b16 %v54
  %v378 = vunpack.c.l.b16 %v55
  %v379 = vunpack.c.l.b16 %v56
  %v380 = vunpack.c.l.b16 %v57
  %v381 = vunpack.c.l.b16 %v58
  %v382 = vunpack.c.l.b16 %v59
  %v383 = vunpack.c.l.b16 %v60
  %v384 = vunpack.c.l.b16 %v61
  %v385 = vunpack.c.l.b16 %v62
  %v386 = vunpack.c.l.b16 %v63
  %v387 = vunpack.c.l.b16 %v64
  %v388 = vunpack.c.l.b16 %v65
  %v389 = vunpack.c.l.b16 %v66
  %v390 = vunpack.c.l.b16 %v67
  %v391 = vunpack.c.l.b16 %v68
  %v392 = vunpack.c.l.b16 %v69
  %v393 = vunpack.c.l.b16 %v70
  %v394 = vunpack.c.l.b16 %v71
  %v395 = vunpack.c.l.b16 %v72
  %v396 = vunpack.c.l.b16 %v73
  %v397 = vunpack.c.l.b16 %v74
  %v398 = vunpack.c.l.b16 %v75
  %v399 = vunpack.c.l.b16 %v76
  %v400 = vunpack.c.l.b16 %v77
  %v401 = vunpack.c.l.b16 %v78
  %v402 = vunpack.c.l.b16 %v79
  %v403 = vunpack.c.l.b16 %v80
  %v404 = vunpack.c.l.b16 %v81
  %v405 = vunpack.c.l.b16 %v82
  %v406 = vunpack.c.l.b16 %v83
  %v407 = vunpack.c.l.b16 %v84
  %v408 = vunpack.c.l.b16 %v85
  %v409 = vunpack.c.l.b16 %v86
  %v410 = vunpack.c.l.b16 %v87
  %v411 = vunpack.c.l.b16 %v88
  %v412 = vunpack.c.l.b16 %v89
  %v413 = vunpack.c.l.b16 %v90
  %v414 = vunpack.c.l.b16 %v91
  %v415 = vunpack.c.l.b16 %v92
  %v416 = vunpack.c.l.b16 %v93
  %v417 = vunpack.c.l.b16 %v94
  %v418 = vunpack.c.l.b16 %v95
  %v419 = vunpack.c.l.b16 %v96
  %v420 = vunpack.c.l.b16 %v97
  %v421 = vunpack.c.l.b16 %v98
  %v422 = vunpack.c.l.b16 %v99
  %v423 = vunpack.c.l.b16 %v100
  %v424 = vunpack.c.l.b16 %v101
  %v425 = vunpack.c.l.b16 %v102
  %v426 = vunpack.c.l.b16 %v103
  %v427 = vunpack.c.l.b16 %v104
  %v428 = vunpack.c.l.b16 %v105
  %v429 = vunpack.c.l.b16 %v106
  %v430 = vunpack.c.l.b16 %v107
  %v431 = vunpack.c.l.b16 %v108
  %v432 = vunpack.c.l.b16 %v109
  %v433 = vunpack.c.l.b16 %v110
  %v434 = vunpack.c.l.b16 %v111
  %v435 = vunpack.c.l.b16 %v112
  %v436 = vunpack.c.l.b16 %v113
  %v437 = vunpack.c.l.b16 %v114
  %v438 = vunpack.c.l.b16 %v115
  %v439 = vunpack.c.l.b16 %v116
  %v440 = vunpack.c.l.b16 %v117
  %v441 = vunpack.c.l.b16 %v118
  %v442 = vunpack.c.l.b16 %v119
  %v443 = vunpack.c.l.b16 %v120
  %v444 = vunpack.c.l.b16 %v121
  %v445 = vunpack.c.l.b16 %v122
  %v446 = vunpack.c.l.b16 %v123
  %v447 = vunpack.c.l.b16 %v124
  %v448 = vunpack.c.l.b16 %v125
  %v449 = vunpack.c.l.b16 %v126
  %v450 = vunpack.c.l.b16 %v127
  %v451 = vunpack.c.l.b16 %v128
  %v452 = vunpack.c.l.b16 %v129
  %v453 = vunpack.c.l.b16 %v130
  %v454 = vpack.c.b16 %v375, %v374
  %v455 = vpack.c.b16 %v377, %v376
  %v456 = vpack.c.b16 %v379, %v378
  %v457 = vpack.c.b16 %v381, %v380
  %v458 = vpack.c.b16 %v383, %v382
  %v459 = vpack.c.b16 %v385, %v384
  %v460 = vpack.c.b16 %v387, %v386
  %v461 = vpack.c.b16 %v389, %v388
  %v462 = vpack.c.b16 %v391, %v390
  %v463 = vpack.c.b16 %v393, %v392
  %v464 = vpack.c.b16 %v395, %v394
  %v465 = vpack.c.b16 %v397, %v396
  %v466 = vpack.c.b16 %v399, %v398
  %v467 = vpack.c.b16 %v401, %v400
  %v468 = vpack.c.b16 %v403, %v402
  %v469 = vpack.c.b16 %v405, %v404
  %v470 = vpack.c.b16 %v407, %v406
  %v471 = vpack.c.b16 %v409, %v408
  %v472 = vpack.c.b16 %v411, %v410
  %v473 = vpack.c.b16 %v413, %v412
  %v474 = vpack.c.b16 %v415, %v414
  %v475 = vpack.c.b16 %v417, %v416
  %v476 = vpack.c.b16 %v419, %v418
  %v477 = vpack.c.b16 %v421, %v420
  %v478 = vpack.c.b16 %v423, %v422
  %v479 = vpack.c.b16 %v425, %v424
  %v480 = vpack.c.b16 %v427, %v426
  %v481 = vpack.c.b16 %v429, %v428
  %v482 = vpack.c.b16 %v431, %v430
  %v483 = vpack.c.b16 %v433, %v432
  %v484 = vpack.c.b16 %v435, %v434
  %v485 = vpack.c.b16 %v437, %v436
  %v486 = vpack.c.b16 %v439, %v438
  %v487 = vpack.c.b16 %v441, %v440
  %v488 = vpack.c.b16 %v443, %v442
  %v489 = vpack.c.b16 %v445, %v444
  %v490 = vpack.c.b16 %v447, %v446
  %v491 = vpack.c.b16 %v449, %v448
  %v492 = vpack.c.b16 %v451, %v450
  %v493 = vpack.c.b16 %v453, %v452
  %534 = vmatprep.subr.bf16.mxu0 0
  %535 = vmatpush1.bf16.msra.mxu0 %v454
  %536 = vmatprep.subr.bf16.mxu0 0
  %537 = vmatpush1.bf16.msra.mxu0 %v455
  %538 = vmatprep.subr.bf16.mxu0 0
  %539 = vmatpush1.bf16.msra.mxu0 %v456
  %540 = vmatprep.subr.bf16.mxu0 0
  %541 = vmatpush1.bf16.msra.mxu0 %v457
  %542 = vmatprep.subr.bf16.mxu0 0
  %543 = vmatpush1.bf16.msra.mxu0 %v458
  %544 = vmatprep.subr.bf16.mxu0 0
  %545 = vmatpush1.bf16.msra.mxu0 %v459
  %546 = vmatprep.subr.bf16.mxu0 0
  %547 = vmatpush1.bf16.msra.mxu0 %v460
  %548 = vmatprep.subr.bf16.mxu0 0
  %549 = vmatpush1.bf16.msra.mxu0 %v461
  %550 = vmatprep.subr.bf16.mxu0 0
  %551 = vmatpush1.bf16.msra.mxu0 %v462
  %552 = vmatprep.subr.bf16.mxu0 0
  %553 = vmatpush1.bf16.msra.mxu0 %v463
  %554 = vmatprep.subr.bf16.mxu0 0
  %555 = vmatpush1.bf16.msra.mxu0 %v464
  %556 = vmatprep.subr.bf16.mxu0 0
  %557 = vmatpush1.bf16.msra.mxu0 %v465
  %558 = vmatprep.subr.bf16.mxu0 0
  %559 = vmatpush1.bf16.msra.mxu0 %v466
  %560 = vmatprep.subr.bf16.mxu0 0
  %561 = vmatpush1.bf16.msra.mxu0 %v467
  %562 = vmatprep.subr.bf16.mxu0 0
  %563 = vmatpush1.bf16.msra.mxu0 %v468
  %564 = vmatprep.subr.bf16.mxu0 0
  %565 = vmatpush1.bf16.msra.mxu0 %v469
  %566 = vmatprep.mubr.bf16.mxu0 %v235
  %567 = vmatmul.mubr.bf16.gmra.mrb[0].mxu0 %v234
  %v568 = vpop.f32.mrb[0].mxu0
  %v569 = vadd.f32 %v136, %v568
  %v570 = vpop.f32.mrb[0].mxu0
  %v571 = vpop.f32.mrb[0].mxu0
  %v572 = vadd.f32 %v136, %v571
  %v573 = vpop.f32.mrb[0].mxu0
  %574 = vmatprep.mubr.bf16.mxu0 %v240
  %575 = vmatmul.mubr.bf16.gmra.mrb[0].mxu0 %v239
  %v576 = vpop.f32.mrb[0].mxu0
  %v577 = vadd.f32 %v136, %v576
  %v578 = vpop.f32.mrb[0].mxu0
  %v579 = vpop.f32.mrb[0].mxu0
  %v580 = vadd.f32 %v136, %v579
  %v581 = vpop.f32.mrb[0].mxu0
  %582 = vmatprep.mubr.bf16.mxu0 %v245
  %583 = vmatmul.mubr.bf16.gmra.mrb[0].mxu0 %v244
  %v584 = vpop.f32.mrb[0].mxu0
  %v585 = vadd.f32 %v136, %v584
  %v586 = vpop.f32.mrb[0].mxu0
  %v587 = vpop.f32.mrb[0].mxu0
  %v588 = vadd.f32 %v136, %v587
  %v589 = vpop.f32.mrb[0].mxu0
  %590 = vmatprep.mubr.bf16.mxu0 %v250
  %591 = vmatmul.mubr.bf16.gmra.mrb[0].mxu0 %v249
  %v592 = vpop.f32.mrb[0].mxu0
  %v593 = vadd.f32 %v136, %v592
  %v594 = vpop.f32.mrb[0].mxu0
  %v595 = vpop.f32.mrb[0].mxu0
  %v596 = vadd.f32 %v136, %v595
  %v597 = vpop.f32.mrb[0].mxu0
  %598 = vmatprep.mubr.bf16.mxu0 %v255
  %599 = vmatmul.mubr.bf16.gmra.mrb[0].mxu0 %v254
  %v600 = vpop.f32.mrb[0].mxu0
  %v601 = vadd.f32 %v136, %v600
  %v602 = vpop.f32.mrb[0].mxu0
  %v603 = vpop.f32.mrb[0].mxu0
  %v604 = vadd.f32 %v136, %v603
  %v605 = vpop.f32.mrb[0].mxu0
  %606 = vmatprep.mubr.bf16.mxu0 %v260
  %607 = vmatmul.mubr.bf16.gmra.mrb[0].mxu0 %v259
  %v608 = vpop.f32.mrb[0].mxu0
  %v609 = vadd.f32 %v136, %v608
  %v610 = vpop.f32.mrb[0].mxu0
  %v611 = vpop.f32.mrb[0].mxu0
  %v612 = vadd.f32 %v136, %v611
  %v613 = vpop.f32.mrb[0].mxu0
  %614 = vdwg.mxu0
  %615 = vmatprep.subr.bf16.mxu0 0
  %616 = vmatpush1.bf16.msra.mxu0 %v470
  %617 = vmatprep.subr.bf16.mxu0 0
  %618 = vmatpush1.bf16.msra.mxu0 %v471
  %619 = vmatprep.subr.bf16.mxu0 0
  %620 = vmatpush1.bf16.msra.mxu0 %v472
  %621 = vmatprep.subr.bf16.mxu0 0
  %622 = vmatpush1.bf16.msra.mxu0 %v473
  %623 = vmatprep.subr.bf16.mxu0 0
  %624 = vmatpush1.bf16.msra.mxu0 %v474
  %625 = vmatprep.subr.bf16.mxu0 0
  %626 = vmatpush1.bf16.msra.mxu0 %v475
  %627 = vmatprep.subr.bf16.mxu0 0
  %628 = vmatpush1.bf16.msra.mxu0 %v476
  %629 = vmatprep.subr.bf16.mxu0 0
  %630 = vmatpush1.bf16.msra.mxu0 %v477
  %631 = vmatprep.subr.bf16.mxu0 0
  %632 = vmatpush1.bf16.msra.mxu0 %v478
  %633 = vmatprep.subr.bf16.mxu0 0
  %634 = vmatpush1.bf16.msra.mxu0 %v479
  %635 = vmatprep.subr.bf16.mxu0 0
  %636 = vmatpush1.bf16.msra.mxu0 %v480
  %637 = vmatprep.subr.bf16.mxu0 0
  %638 = vmatpush1.bf16.msra.mxu0 %v481
  %639 = vmatprep.subr.bf16.mxu0 0
  %640 = vmatpush1.bf16.msra.mxu0 %v482
  %641 = vmatprep.subr.bf16.mxu0 0
  %642 = vmatpush1.bf16.msra.mxu0 %v483
  %643 = vmatprep.subr.bf16.mxu0 0
  %644 = vmatpush1.bf16.msra.mxu0 %v484
  %645 = vmatprep.subr.bf16.mxu0 0
  %646 = vmatpush1.bf16.msra.mxu0 %v485
  %647 = vmatprep.mubr.bf16.mxu0 %v237
  %648 = vmatmul.mubr.bf16.gmra.mrb[0].mxu0 %v236
  %v649 = vpop.f32.mrb[0].mxu0
  %v650 = vadd.f32 %v569, %v649
  %v651 = vpop.f32.mrb[0].mxu0
  %v652 = vpop.f32.mrb[0].mxu0
  %v653 = vadd.f32 %v572, %v652
  %v654 = vpop.f32.mrb[0].mxu0
  %655 = vmatprep.mubr.bf16.mxu0 %v242
  %656 = vmatmul.mubr.bf16.gmra.mrb[0].mxu0 %v241
  %v657 = vpop.f32.mrb[0].mxu0
  %v658 = vadd.f32 %v577, %v657
  %v659 = vpop.f32.mrb[0].mxu0
  %v660 = vpop.f32.mrb[0].mxu0
  %v661 = vadd.f32 %v580, %v660
  %v662 = vpop.f32.mrb[0].mxu0
  %663 = vmatprep.mubr.bf16.mxu0 %v247
  %664 = vmatmul.mubr.bf16.gmra.mrb[0].mxu0 %v246
  %v665 = vpop.f32.mrb[0].mxu0
  %v666 = vadd.f32 %v585, %v665
  %v667 = vpop.f32.mrb[0].mxu0
  %v668 = vpop.f32.mrb[0].mxu0
  %v669 = vadd.f32 %v588, %v668
  %v670 = vpop.f32.mrb[0].mxu0
  %671 = vmatprep.mubr.bf16.mxu0 %v252
  %672 = vmatmul.mubr.bf16.gmra.mrb[0].mxu0 %v251
  %v673 = vpop.f32.mrb[0].mxu0
  %v674 = vadd.f32 %v593, %v673
  %v675 = vpop.f32.mrb[0].mxu0
  %v676 = vpop.f32.mrb[0].mxu0
  %v677 = vadd.f32 %v596, %v676
  %v678 = vpop.f32.mrb[0].mxu0
  %679 = vmatprep.mubr.bf16.mxu0 %v257
  %680 = vmatmul.mubr.bf16.gmra.mrb[0].mxu0 %v256
  %v681 = vpop.f32.mrb[0].mxu0
  %v682 = vadd.f32 %v601, %v681
  %v683 = vpop.f32.mrb[0].mxu0
  %v684 = vpop.f32.mrb[0].mxu0
  %v685 = vadd.f32 %v604, %v684
  %v686 = vpop.f32.mrb[0].mxu0
  %687 = vmatprep.mubr.bf16.mxu0 %v262
  %688 = vmatmul.mubr.bf16.gmra.mrb[0].mxu0 %v261
  %v689 = vpop.f32.mrb[0].mxu0
  %v690 = vadd.f32 %v609, %v689
  %v691 = vpop.f32.mrb[0].mxu0
  %v692 = vpop.f32.mrb[0].mxu0
  %v693 = vadd.f32 %v612, %v692
  %v694 = vpop.f32.mrb[0].mxu0
  %695 = vdwg.mxu0
  %696 = vmatprep.subr.bf16.mxu0 0
  %697 = vmatpush1.bf16.msra.mxu0 %v486
  %698 = vmatprep.subr.bf16.mxu0 0
  %699 = vmatpush1.bf16.msra.mxu0 %v487
  %700 = vmatprep.subr.bf16.mxu0 0
  %701 = vmatpush1.bf16.msra.mxu0 %v488
  %702 = vmatprep.subr.bf16.mxu0 0
  %703 = vmatpush1.bf16.msra.mxu0 %v489
  %704 = vmatprep.subr.bf16.mxu0 0
  %705 = vmatpush1.bf16.msra.mxu0 %v490
  %706 = vmatprep.subr.bf16.mxu0 0
  %707 = vmatpush1.bf16.msra.mxu0 %v491
  %708 = vmatprep.subr.bf16.mxu0 0
  %709 = vmatpush1.bf16.msra.mxu0 %v492
  %710 = vmatprep.subr.bf16.mxu0 0
  %711 = vmatpush1.bf16.msra.mxu0 %v493
  %712 = vmatprep.subr.bf16.mxu0 0
  %713 = vmatpush1.bf16.msra.mxu0 0
  %714 = vmatprep.subr.bf16.mxu0 0
  %715 = vmatpush1.bf16.msra.mxu0 0
  %716 = vmatprep.subr.bf16.mxu0 0
  %717 = vmatpush1.bf16.msra.mxu0 0
  %718 = vmatprep.subr.bf16.mxu0 0
  %719 = vmatpush1.bf16.msra.mxu0 0
  %720 = vmatprep.subr.bf16.mxu0 0
  %721 = vmatpush1.bf16.msra.mxu0 0
  %722 = vmatprep.subr.bf16.mxu0 0
  %723 = vmatpush1.bf16.msra.mxu0 0
  %724 = vmatprep.subr.bf16.mxu0 0
  %725 = vmatpush1.bf16.msra.mxu0 0
  %726 = vmatprep.subr.bf16.mxu0 0
  %727 = vmatpush1.bf16.msra.mxu0 0
  %728 = vmatprep.mubr.bf16.mxu0 0
  %729 = vmatmul.mubr.bf16.gmra.mrb[0].mxu0 %v238
  %v730 = vpop.f32.mrb[0].mxu0
  %v731 = vadd.f32 %v650, %v730
  %v732 = vpop.f32.mrb[0].mxu0
  %v733 = vpop.f32.mrb[0].mxu0
  %v734 = vadd.f32 %v653, %v733
  %v735 = vpop.f32.mrb[0].mxu0
  %736 = vmatprep.mubr.bf16.mxu0 0
  %737 = vmatmul.mubr.bf16.gmra.mrb[0].mxu0 %v243
  %v738 = vpop.f32.mrb[0].mxu0
  %v739 = vadd.f32 %v658, %v738
  %v740 = vpop.f32.mrb[0].mxu0
  %v741 = vpop.f32.mrb[0].mxu0
  %v742 = vadd.f32 %v661, %v741
  %v743 = vpop.f32.mrb[0].mxu0
  %744 = vmatprep.mubr.bf16.mxu0 0
  %745 = vmatmul.mubr.bf16.gmra.mrb[0].mxu0 %v248
  %v746 = vpop.f32.mrb[0].mxu0
  %v747 = vadd.f32 %v666, %v746
  %v748 = vpop.f32.mrb[0].mxu0
  %v749 = vpop.f32.mrb[0].mxu0
  %v750 = vadd.f32 %v669, %v749
  %v751 = vpop.f32.mrb[0].mxu0
  %752 = vmatprep.mubr.bf16.mxu0 0
  %753 = vmatmul.mubr.bf16.gmra.mrb[0].mxu0 %v253
  %v754 = vpop.f32.mrb[0].mxu0
  %v755 = vadd.f32 %v674, %v754
  %v756 = vpop.f32.mrb[0].mxu0
  %v757 = vpop.f32.mrb[0].mxu0
  %v758 = vadd.f32 %v677, %v757
  %v759 = vpop.f32.mrb[0].mxu0
  %760 = vmatprep.mubr.bf16.mxu0 0
  %761 = vmatmul.mubr.bf16.gmra.mrb[0].mxu0 %v258
  %v762 = vpop.f32.mrb[0].mxu0
  %v763 = vadd.f32 %v682, %v762
  %v764 = vpop.f32.mrb[0].mxu0
  %v765 = vpop.f32.mrb[0].mxu0
  %v766 = vadd.f32 %v685, %v765
  %v767 = vpop.f32.mrb[0].mxu0
  %768 = vmatprep.mubr.bf16.mxu0 0
  %769 = vmatmul.mubr.bf16.gmra.mrb[0].mxu0 %v263
  %v770 = vpop.f32.mrb[0].mxu0
  %v771 = vadd.f32 %v690, %v770
  %v772 = vpop.f32.mrb[0].mxu0
  %v773 = vpop.f32.mrb[0].mxu0
  %v774 = vadd.f32 %v693, %v773
  %v775 = vpop.f32.mrb[0].mxu0
  %776 = vdwg.mxu0
  %v777 = vmax.f32 %v731, 0.0
  %v778 = vmax.f32 %v734, 0.0
  %v779 = vmax.f32 %v739, 0.0
  %v780 = vmax.f32 %v742, 0.0
  %v781 = vmax.f32 %v747, 0.0
  %v782 = vmax.f32 %v750, 0.0
  %v783 = vmax.f32 %v755, 0.0
  %v784 = vmax.f32 %v758, 0.0
  %v785 = vmax.f32 %v763, 0.0
  %v786 = vmax.f32 %v766, 0.0
  %v787 = vmax.f32 %v771, 0.0
  %v788 = vmax.f32 %v774, 0.0
  %v789 = vpack.c.bf16 %v778, %v777
  %v790 = vpack.c.bf16 %v780, %v779
  %v791 = vpack.c.bf16 %v782, %v781
  %v792 = vpack.c.bf16 %v784, %v783
  %v793 = vpack.c.bf16 %v786, %v785
  %v794 = vpack.c.bf16 %v788, %v787
  %v801 = vunpack.c.l.b16 %v789
  %v802 = vunpack.c.h.b16 %v789
  %v803 = vunpack.c.l.b16 %v790
  %v804 = vunpack.c.h.b16 %v790
  %v805 = vunpack.c.l.b16 %v791
  %v806 = vunpack.c.h.b16 %v791
  %v807 = vunpack.c.l.b16 %v792
  %v808 = vunpack.c.h.b16 %v792
  %v809 = vunpack.c.l.b16 %v793
  %v810 = vunpack.c.h.b16 %v793
  %v811 = vunpack.c.l.b16 %v794
  %v812 = vunpack.c.h.b16 %v794
  %v813 = vpack.c.b16 %v801, %v801
  %v814 = vpack.c.b16 %v802, %v802
  %v815 = vpack.c.b16 %v803, %v803
  %v816 = vpack.c.b16 %v804, %v804
  %v817 = vpack.c.b16 %v805, %v805
  %v818 = vpack.c.b16 %v806, %v806
  %v819 = vpack.c.b16 %v807, %v807
  %v820 = vpack.c.b16 %v808, %v808
  %v821 = vpack.c.b16 %v809, %v809
  %v822 = vpack.c.b16 %v810, %v810
  %v823 = vpack.c.b16 %v811, %v811
  %v824 = vpack.c.b16 %v812, %v812
  %vm837 = vcmask 519168
  %838 = vst.msk [vmem:[%s3] sm:$0xf] %vm837, %v813
  %839 = vst.msk [vmem:[%s3 + $0x4] sm:$0xf] %vm837, %v814
  %840 = vst.msk [vmem:[%s3 + $0x8] sm:$0xf] %vm837, %v815
  %841 = vst.msk [vmem:[%s3 + $0xc] sm:$0xf] %vm837, %v816
  %842 = vst.msk [vmem:[%s3 + $0x10] sm:$0xf] %vm837, %v817
  %843 = vst.msk [vmem:[%s3 + $0x14] sm:$0xf] %vm837, %v818
  %844 = vst.msk [vmem:[%s3 + $0x18] sm:$0xf] %vm837, %v819
  %845 = vst.msk [vmem:[%s3 + $0x1c] sm:$0xf] %vm837, %v820
  %846 = vst.msk [vmem:[%s3 + $0x20] sm:$0xf] %vm837, %v821
  %847 = vst.msk [vmem:[%s3 + $0x24] sm:$0xf] %vm837, %v822
  %848 = vst.msk [vmem:[%s3 + $0x28] sm:$0xf] %vm837, %v823
  %849 = vst.msk [vmem:[%s3 + $0x2c] sm:$0xf] %vm837, %v824
  // Predicated region
  $region14: #{_lambda_.19} parent=0 // pred_check
    _
  $region15: #{_lambda_.19} parent=0 // pred_check_branch
    %851 = sbr.rel (0) target = $region17
  $region16: #{_lambda_.19} parent=0 // pred_region
    _
  $region17: #{_lambda_.19} parent=0 // pred_fallthru
    _
  // Predicated region
  $region18: #{_lambda_.19} parent=0 // pred_check
    _
  $region19: #{_lambda_.19} parent=0 // pred_check_branch
    %853 = sbr.rel (0) target = $region21
  $region20: #{_lambda_.19} parent=0 // pred_region
    _
  $region21: #{_lambda_.19} parent=0 // pred_fallthru
    _

// kernel: _lambda_.20
$region0: #{_lambda_.20}
  #allocation0 [shape = 'u32[]', space=smem, size = 0x4, offset = 0x4, fixed_abs, tag = 'smem constant byte address 0x4 - core index']
  #allocation1 [shape = 'u32[144,128]{1,0:T(1,128)}', space=vmem, size = 0x12000, scoped, tag = 'internal scratch']
  %s0 = inlined_call_operand.vmem [shape: bf16[96,640], index: 0, kind: input, shape index: {}]
  %s1 = inlined_call_operand.vmem [shape: bf16[640,64], index: 1, kind: input, shape index: {}]
  %s2 = inlined_call_operand.vmem [shape: f32[1,64], index: 2, kind: input, shape index: {}]
  %s3 = inlined_call_operand.vmem [shape: bf16[96,64], index: 3, kind: input, shape index: {}]
  %s4 = inlined_call_operand.vmem [shape: bf16[96,64], index: 4, kind: output, shape index: {}]
  %s5 = sld [smem:[#allocation0]]
  $region26: #{_lambda_.20} parent=0
    _
  %s7 = ssub.s32 1, %s5
  %s8 = scalar_select 0, %s7, %s5
  // Predicated region
  $region2: #{_lambda_.20} parent=0 // pred_check
    _
  $region3: #{_lambda_.20} parent=0 // pred_check_branch
    %10 = sbr.rel (0) target = $region5
  $region4: #{_lambda_.20} parent=0 // pred_region
    _
  $region5: #{_lambda_.20} parent=0 // pred_fallthru
    _
  // Predicated region
  $region6: #{_lambda_.20} parent=0 // pred_check
    _
  $region7: #{_lambda_.20} parent=0 // pred_check_branch
    %12 = sbr.rel (0) target = $region9
  $region8: #{_lambda_.20} parent=0 // pred_region
    _
  $region9: #{_lambda_.20} parent=0 // pred_fallthru
    _
  // Predicated region
  $region10: #{_lambda_.20} parent=0 // pred_check
    _
  $region11: #{_lambda_.20} parent=0 // pred_check_branch
    %14 = sbr.rel (0) target = $region13
  $region12: #{_lambda_.20} parent=0 // pred_region
    _
  $region13: #{_lambda_.20} parent=0 // pred_fallthru
    _
  // Predicated region
  $region14: #{_lambda_.20} parent=0 // pred_check
    _
  $region15: #{_lambda_.20} parent=0 // pred_check_branch
    %16 = sbr.rel (0) target = $region17
  $region16: #{_lambda_.20} parent=0 // pred_region
    _
  $region17: #{_lambda_.20} parent=0 // pred_fallthru
    _
  %v18 = vld [vmem:[%s0] sm:$0xff]
  %v19 = vld [vmem:[%s0 + $0x8] sm:$0xff]
  %v20 = vld [vmem:[%s0 + $0x10] sm:$0xf]
  %v21 = vld [vmem:[%s0 + $0x14] sm:$0xff]
  %v22 = vld [vmem:[%s0 + $0x1c] sm:$0xff]
  %v23 = vld [vmem:[%s0 + $0x24] sm:$0xf]
  %v24 = vld [vmem:[%s0 + $0x28] sm:$0xff]
  %v25 = vld [vmem:[%s0 + $0x30] sm:$0xff]
  %v26 = vld [vmem:[%s0 + $0x38] sm:$0xf]
  %v27 = vld [vmem:[%s0 + $0x3c] sm:$0xff]
  %v28 = vld [vmem:[%s0 + $0x44] sm:$0xff]
  %v29 = vld [vmem:[%s0 + $0x4c] sm:$0xf]
  %v30 = vld [vmem:[%s0 + $0x50] sm:$0xff]
  %v31 = vld [vmem:[%s0 + $0x58] sm:$0xff]
  %v32 = vld [vmem:[%s0 + $0x60] sm:$0xf]
  %v33 = vld [vmem:[%s0 + $0x64] sm:$0xff]
  %v34 = vld [vmem:[%s0 + $0x6c] sm:$0xff]
  %v35 = vld [vmem:[%s0 + $0x74] sm:$0xf]
  %v36 = vld [vmem:[%s0 + $0x78] sm:$0xff]
  %v37 = vld [vmem:[%s0 + $0x80] sm:$0xff]
  %v38 = vld [vmem:[%s0 + $0x88] sm:$0xf]
  %v39 = vld [vmem:[%s0 + $0x8c] sm:$0xff]
  %v40 = vld [vmem:[%s0 + $0x94] sm:$0xff]
  %v41 = vld [vmem:[%s0 + $0x9c] sm:$0xf]
  %v42 = vld [vmem:[%s0 + $0xa0] sm:$0xff]
  %v43 = vld [vmem:[%s0 + $0xa8] sm:$0xff]
  %v44 = vld [vmem:[%s0 + $0xb0] sm:$0xf]
  %v45 = vld [vmem:[%s0 + $0xb4] sm:$0xff]
  %v46 = vld [vmem:[%s0 + $0xbc] sm:$0xff]
  %v47 = vld [vmem:[%s0 + $0xc4] sm:$0xf]
  %v48 = vld [vmem:[%s0 + $0xc8] sm:$0xff]
  %v49 = vld [vmem:[%s0 + $0xd0] sm:$0xff]
  %v50 = vld [vmem:[%s0 + $0xd8] sm:$0xf]
  %v51 = vld [vmem:[%s0 + $0xdc] sm:$0xff]
  %v52 = vld [vmem:[%s0 + $0xe4] sm:$0xff]
  %v53 = vld [vmem:[%s0 + $0xec] sm:$0xf]
  %v54 = vld [vmem:[%s1] sm:$0xf]
  %v55 = vld [vmem:[%s1 + $0x4] sm:$0xf]
  %v56 = vld [vmem:[%s1 + $0x8] sm:$0xf]
  %v57 = vld [vmem:[%s1 + $0xc] sm:$0xf]
  %v58 = vld [vmem:[%s1 + $0x10] sm:$0xf]
  %v59 = vld [vmem:[%s1 + $0x14] sm:$0xf]
  %v60 = vld [vmem:[%s1 + $0x18] sm:$0xf]
  %v61 = vld [vmem:[%s1 + $0x1c] sm:$0xf]
  %v62 = vld [vmem:[%s1 + $0x20] sm:$0xf]
  %v63 = vld [vmem:[%s1 + $0x24] sm:$0xf]
  %v64 = vld [vmem:[%s1 + $0x28] sm:$0xf]
  %v65 = vld [vmem:[%s1 + $0x2c] sm:$0xf]
  %v66 = vld [vmem:[%s1 + $0x30] sm:$0xf]
  %v67 = vld [vmem:[%s1 + $0x34] sm:$0xf]
  %v68 = vld [vmem:[%s1 + $0x38] sm:$0xf]
  %v69 = vld [vmem:[%s1 + $0x3c] sm:$0xf]
  %v70 = vld [vmem:[%s1 + $0x40] sm:$0xf]
  %v71 = vld [vmem:[%s1 + $0x44] sm:$0xf]
  %v72 = vld [vmem:[%s1 + $0x48] sm:$0xf]
  %v73 = vld [vmem:[%s1 + $0x4c] sm:$0xf]
  %v74 = vld [vmem:[%s1 + $0x50] sm:$0xf]
  %v75 = vld [vmem:[%s1 + $0x54] sm:$0xf]
  %v76 = vld [vmem:[%s1 + $0x58] sm:$0xf]
  %v77 = vld [vmem:[%s1 + $0x5c] sm:$0xf]
  %v78 = vld [vmem:[%s1 + $0x60] sm:$0xf]
  %v79 = vld [vmem:[%s1 + $0x64] sm:$0xf]
  %v80 = vld [vmem:[%s1 + $0x68] sm:$0xf]
  %v81 = vld [vmem:[%s1 + $0x6c] sm:$0xf]
  %v82 = vld [vmem:[%s1 + $0x70] sm:$0xf]
  %v83 = vld [vmem:[%s1 + $0x74] sm:$0xf]
  %v84 = vld [vmem:[%s1 + $0x78] sm:$0xf]
  %v85 = vld [vmem:[%s1 + $0x7c] sm:$0xf]
  %v86 = vld [vmem:[%s1 + $0x80] sm:$0xf]
  %v87 = vld [vmem:[%s1 + $0x84] sm:$0xf]
  %v88 = vld [vmem:[%s1 + $0x88] sm:$0xf]
  %v89 = vld [vmem:[%s1 + $0x8c] sm:$0xf]
  %v90 = vld [vmem:[%s1 + $0x90] sm:$0xf]
  %v91 = vld [vmem:[%s1 + $0x94] sm:$0xf]
  %v92 = vld [vmem:[%s1 + $0x98] sm:$0xf]
  %v93 = vld [vmem:[%s1 + $0x9c] sm:$0xf]
  %v94 = vld [vmem:[%s1 + $0xa0] sm:$0xf]
  %v95 = vld [vmem:[%s1 + $0xa4] sm:$0xf]
  %v96 = vld [vmem:[%s1 + $0xa8] sm:$0xf]
  %v97 = vld [vmem:[%s1 + $0xac] sm:$0xf]
  %v98 = vld [vmem:[%s1 + $0xb0] sm:$0xf]
  %v99 = vld [vmem:[%s1 + $0xb4] sm:$0xf]
  %v100 = vld [vmem:[%s1 + $0xb8] sm:$0xf]
  %v101 = vld [vmem:[%s1 + $0xbc] sm:$0xf]
  %v102 = vld [vmem:[%s1 + $0xc0] sm:$0xf]
  %v103 = vld [vmem:[%s1 + $0xc4] sm:$0xf]
  %v104 = vld [vmem:[%s1 + $0xc8] sm:$0xf]
  %v105 = vld [vmem:[%s1 + $0xcc] sm:$0xf]
  %v106 = vld [vmem:[%s1 + $0xd0] sm:$0xf]
  %v107 = vld [vmem:[%s1 + $0xd4] sm:$0xf]
  %v108 = vld [vmem:[%s1 + $0xd8] sm:$0xf]
  %v109 = vld [vmem:[%s1 + $0xdc] sm:$0xf]
  %v110 = vld [vmem:[%s1 + $0xe0] sm:$0xf]
  %v111 = vld [vmem:[%s1 + $0xe4] sm:$0xf]
  %v112 = vld [vmem:[%s1 + $0xe8] sm:$0xf]
  %v113 = vld [vmem:[%s1 + $0xec] sm:$0xf]
  %v114 = vld [vmem:[%s1 + $0xf0] sm:$0xf]
  %v115 = vld [vmem:[%s1 + $0xf4] sm:$0xf]
  %v116 = vld [vmem:[%s1 + $0xf8] sm:$0xf]
  %v117 = vld [vmem:[%s1 + $0xfc] sm:$0xf]
  %v118 = vld [vmem:[%s1 + $0x100] sm:$0xf]
  %v119 = vld [vmem:[%s1 + $0x104] sm:$0xf]
  %v120 = vld [vmem:[%s1 + $0x108] sm:$0xf]
  %v121 = vld [vmem:[%s1 + $0x10c] sm:$0xf]
  %v122 = vld [vmem:[%s1 + $0x110] sm:$0xf]
  %v123 = vld [vmem:[%s1 + $0x114] sm:$0xf]
  %v124 = vld [vmem:[%s1 + $0x118] sm:$0xf]
  %v125 = vld [vmem:[%s1 + $0x11c] sm:$0xf]
  %v126 = vld [vmem:[%s1 + $0x120] sm:$0xf]
  %v127 = vld [vmem:[%s1 + $0x124] sm:$0xf]
  %v128 = vld [vmem:[%s1 + $0x128] sm:$0xf]
  %v129 = vld [vmem:[%s1 + $0x12c] sm:$0xf]
  %v130 = vld [vmem:[%s1 + $0x130] sm:$0xf]
  %v131 = vld [vmem:[%s1 + $0x134] sm:$0xf]
  %v132 = vld [vmem:[%s1 + $0x138] sm:$0xf]
  %v133 = vld [vmem:[%s1 + $0x13c] sm:$0xf]
  %v134 = vld [vmem:[%s2] sm:$0x1]
  %v136 = vlaneseq
  %v137 = vshrl.u32 %v136, 7
  %v138 = vsub.s32 0, %v137
  %v139 = vrot.slane %v134, %v138
  %v177 = vunpack.c.l.b16 %v18
  %v178 = vunpack.c.h.b16 %v18
  %v179 = vunpack.c.l.b16 %v19
  %v180 = vunpack.c.h.b16 %v19
  %v181 = vunpack.c.l.b16 %v20
  %v182 = vunpack.c.l.b16 %v21
  %v183 = vunpack.c.h.b16 %v21
  %v184 = vunpack.c.l.b16 %v22
  %v185 = vunpack.c.h.b16 %v22
  %v186 = vunpack.c.l.b16 %v23
  %v187 = vunpack.c.l.b16 %v24
  %v188 = vunpack.c.h.b16 %v24
  %v189 = vunpack.c.l.b16 %v25
  %v190 = vunpack.c.h.b16 %v25
  %v191 = vunpack.c.l.b16 %v26
  %v192 = vunpack.c.l.b16 %v27
  %v193 = vunpack.c.h.b16 %v27
  %v194 = vunpack.c.l.b16 %v28
  %v195 = vunpack.c.h.b16 %v28
  %v196 = vunpack.c.l.b16 %v29
  %v197 = vunpack.c.l.b16 %v30
  %v198 = vunpack.c.h.b16 %v30
  %v199 = vunpack.c.l.b16 %v31
  %v200 = vunpack.c.h.b16 %v31
  %v201 = vunpack.c.l.b16 %v32
  %v202 = vunpack.c.l.b16 %v33
  %v203 = vunpack.c.h.b16 %v33
  %v204 = vunpack.c.l.b16 %v34
  %v205 = vunpack.c.h.b16 %v34
  %v206 = vunpack.c.l.b16 %v35
  %v207 = vunpack.c.l.b16 %v36
  %v208 = vunpack.c.h.b16 %v36
  %v209 = vunpack.c.l.b16 %v37
  %v210 = vunpack.c.h.b16 %v37
  %v211 = vunpack.c.l.b16 %v38
  %v212 = vunpack.c.l.b16 %v39
  %v213 = vunpack.c.h.b16 %v39
  %v214 = vunpack.c.l.b16 %v40
  %v215 = vunpack.c.h.b16 %v40
  %v216 = vunpack.c.l.b16 %v41
  %v217 = vunpack.c.l.b16 %v42
  %v218 = vunpack.c.h.b16 %v42
  %v219 = vunpack.c.l.b16 %v43
  %v220 = vunpack.c.h.b16 %v43
  %v221 = vunpack.c.l.b16 %v44
  %v222 = vunpack.c.l.b16 %v45
  %v223 = vunpack.c.h.b16 %v45
  %v224 = vunpack.c.l.b16 %v46
  %v225 = vunpack.c.h.b16 %v46
  %v226 = vunpack.c.l.b16 %v47
  %v227 = vunpack.c.l.b16 %v48
  %v228 = vunpack.c.h.b16 %v48
  %v229 = vunpack.c.l.b16 %v49
  %v230 = vunpack.c.h.b16 %v49
  %v231 = vunpack.c.l.b16 %v50
  %v232 = vunpack.c.l.b16 %v51
  %v233 = vunpack.c.h.b16 %v51
  %v234 = vunpack.c.l.b16 %v52
  %v235 = vunpack.c.h.b16 %v52
  %v236 = vunpack.c.l.b16 %v53
  %v237 = vpack.c.b16 %v182, %v177
  %v238 = vpack.c.b16 %v183, %v178
  %v239 = vpack.c.b16 %v184, %v179
  %v240 = vpack.c.b16 %v185, %v180
  %v241 = vpack.c.b16 %v186, %v181
  %v242 = vpack.c.b16 %v192, %v187
  %v243 = vpack.c.b16 %v193, %v188
  %v244 = vpack.c.b16 %v194, %v189
  %v245 = vpack.c.b16 %v195, %v190
  %v246 = vpack.c.b16 %v196, %v191
  %v247 = vpack.c.b16 %v202, %v197
  %v248 = vpack.c.b16 %v203, %v198
  %v249 = vpack.c.b16 %v204, %v199
  %v250 = vpack.c.b16 %v205, %v200
  %v251 = vpack.c.b16 %v206, %v201
  %v252 = vpack.c.b16 %v212, %v207
  %v253 = vpack.c.b16 %v213, %v208
  %v254 = vpack.c.b16 %v214, %v209
  %v255 = vpack.c.b16 %v215, %v210
  %v256 = vpack.c.b16 %v216, %v211
  %v257 = vpack.c.b16 %v222, %v217
  %v258 = vpack.c.b16 %v223, %v218
  %v259 = vpack.c.b16 %v224, %v219
  %v260 = vpack.c.b16 %v225, %v220
  %v261 = vpack.c.b16 %v226, %v221
  %v262 = vpack.c.b16 %v232, %v227
  %v263 = vpack.c.b16 %v233, %v228
  %v264 = vpack.c.b16 %v234, %v229
  %v265 = vpack.c.b16 %v235, %v230
  %v266 = vpack.c.b16 %v236, %v231
  %v377 = vunpack.c.l.b16 %v54
  %v378 = vunpack.c.l.b16 %v55
  %v379 = vunpack.c.l.b16 %v56
  %v380 = vunpack.c.l.b16 %v57
  %v381 = vunpack.c.l.b16 %v58
  %v382 = vunpack.c.l.b16 %v59
  %v383 = vunpack.c.l.b16 %v60
  %v384 = vunpack.c.l.b16 %v61
  %v385 = vunpack.c.l.b16 %v62
  %v386 = vunpack.c.l.b16 %v63
  %v387 = vunpack.c.l.b16 %v64
  %v388 = vunpack.c.l.b16 %v65
  %v389 = vunpack.c.l.b16 %v66
  %v390 = vunpack.c.l.b16 %v67
  %v391 = vunpack.c.l.b16 %v68
  %v392 = vunpack.c.l.b16 %v69
  %v393 = vunpack.c.l.b16 %v70
  %v394 = vunpack.c.l.b16 %v71
  %v395 = vunpack.c.l.b16 %v72
  %v396 = vunpack.c.l.b16 %v73
  %v397 = vunpack.c.l.b16 %v74
  %v398 = vunpack.c.l.b16 %v75
  %v399 = vunpack.c.l.b16 %v76
  %v400 = vunpack.c.l.b16 %v77
  %v401 = vunpack.c.l.b16 %v78
  %v402 = vunpack.c.l.b16 %v79
  %v403 = vunpack.c.l.b16 %v80
  %v404 = vunpack.c.l.b16 %v81
  %v405 = vunpack.c.l.b16 %v82
  %v406 = vunpack.c.l.b16 %v83
  %v407 = vunpack.c.l.b16 %v84
  %v408 = vunpack.c.l.b16 %v85
  %v409 = vunpack.c.l.b16 %v86
  %v410 = vunpack.c.l.b16 %v87
  %v411 = vunpack.c.l.b16 %v88
  %v412 = vunpack.c.l.b16 %v89
  %v413 = vunpack.c.l.b16 %v90
  %v414 = vunpack.c.l.b16 %v91
  %v415 = vunpack.c.l.b16 %v92
  %v416 = vunpack.c.l.b16 %v93
  %v417 = vunpack.c.l.b16 %v94
  %v418 = vunpack.c.l.b16 %v95
  %v419 = vunpack.c.l.b16 %v96
  %v420 = vunpack.c.l.b16 %v97
  %v421 = vunpack.c.l.b16 %v98
  %v422 = vunpack.c.l.b16 %v99
  %v423 = vunpack.c.l.b16 %v100
  %v424 = vunpack.c.l.b16 %v101
  %v425 = vunpack.c.l.b16 %v102
  %v426 = vunpack.c.l.b16 %v103
  %v427 = vunpack.c.l.b16 %v104
  %v428 = vunpack.c.l.b16 %v105
  %v429 = vunpack.c.l.b16 %v106
  %v430 = vunpack.c.l.b16 %v107
  %v431 = vunpack.c.l.b16 %v108
  %v432 = vunpack.c.l.b16 %v109
  %v433 = vunpack.c.l.b16 %v110
  %v434 = vunpack.c.l.b16 %v111
  %v435 = vunpack.c.l.b16 %v112
  %v436 = vunpack.c.l.b16 %v113
  %v437 = vunpack.c.l.b16 %v114
  %v438 = vunpack.c.l.b16 %v115
  %v439 = vunpack.c.l.b16 %v116
  %v440 = vunpack.c.l.b16 %v117
  %v441 = vunpack.c.l.b16 %v118
  %v442 = vunpack.c.l.b16 %v119
  %v443 = vunpack.c.l.b16 %v120
  %v444 = vunpack.c.l.b16 %v121
  %v445 = vunpack.c.l.b16 %v122
  %v446 = vunpack.c.l.b16 %v123
  %v447 = vunpack.c.l.b16 %v124
  %v448 = vunpack.c.l.b16 %v125
  %v449 = vunpack.c.l.b16 %v126
  %v450 = vunpack.c.l.b16 %v127
  %v451 = vunpack.c.l.b16 %v128
  %v452 = vunpack.c.l.b16 %v129
  %v453 = vunpack.c.l.b16 %v130
  %v454 = vunpack.c.l.b16 %v131
  %v455 = vunpack.c.l.b16 %v132
  %v456 = vunpack.c.l.b16 %v133
  %v457 = vpack.c.b16 %v378, %v377
  %v458 = vpack.c.b16 %v380, %v379
  %v459 = vpack.c.b16 %v382, %v381
  %v460 = vpack.c.b16 %v384, %v383
  %v461 = vpack.c.b16 %v386, %v385
  %v462 = vpack.c.b16 %v388, %v387
  %v463 = vpack.c.b16 %v390, %v389
  %v464 = vpack.c.b16 %v392, %v391
  %v465 = vpack.c.b16 %v394, %v393
  %v466 = vpack.c.b16 %v396, %v395
  %v467 = vpack.c.b16 %v398, %v397
  %v468 = vpack.c.b16 %v400, %v399
  %v469 = vpack.c.b16 %v402, %v401
  %v470 = vpack.c.b16 %v404, %v403
  %v471 = vpack.c.b16 %v406, %v405
  %v472 = vpack.c.b16 %v408, %v407
  %v473 = vpack.c.b16 %v410, %v409
  %v474 = vpack.c.b16 %v412, %v411
  %v475 = vpack.c.b16 %v414, %v413
  %v476 = vpack.c.b16 %v416, %v415
  %v477 = vpack.c.b16 %v418, %v417
  %v478 = vpack.c.b16 %v420, %v419
  %v479 = vpack.c.b16 %v422, %v421
  %v480 = vpack.c.b16 %v424, %v423
  %v481 = vpack.c.b16 %v426, %v425
  %v482 = vpack.c.b16 %v428, %v427
  %v483 = vpack.c.b16 %v430, %v429
  %v484 = vpack.c.b16 %v432, %v431
  %v485 = vpack.c.b16 %v434, %v433
  %v486 = vpack.c.b16 %v436, %v435
  %v487 = vpack.c.b16 %v438, %v437
  %v488 = vpack.c.b16 %v440, %v439
  %v489 = vpack.c.b16 %v442, %v441
  %v490 = vpack.c.b16 %v444, %v443
  %v491 = vpack.c.b16 %v446, %v445
  %v492 = vpack.c.b16 %v448, %v447
  %v493 = vpack.c.b16 %v450, %v449
  %v494 = vpack.c.b16 %v452, %v451
  %v495 = vpack.c.b16 %v454, %v453
  %v496 = vpack.c.b16 %v456, %v455
  %537 = vmatprep.subr.bf16.mxu0 0
  %538 = vmatpush1.bf16.msra.mxu0 %v457
  %539 = vmatprep.subr.bf16.mxu0 0
  %540 = vmatpush1.bf16.msra.mxu0 %v458
  %541 = vmatprep.subr.bf16.mxu0 0
  %542 = vmatpush1.bf16.msra.mxu0 %v459
  %543 = vmatprep.subr.bf16.mxu0 0
  %544 = vmatpush1.bf16.msra.mxu0 %v460
  %545 = vmatprep.subr.bf16.mxu0 0
  %546 = vmatpush1.bf16.msra.mxu0 %v461
  %547 = vmatprep.subr.bf16.mxu0 0
  %548 = vmatpush1.bf16.msra.mxu0 %v462
  %549 = vmatprep.subr.bf16.mxu0 0
  %550 = vmatpush1.bf16.msra.mxu0 %v463
  %551 = vmatprep.subr.bf16.mxu0 0
  %552 = vmatpush1.bf16.msra.mxu0 %v464
  %553 = vmatprep.subr.bf16.mxu0 0
  %554 = vmatpush1.bf16.msra.mxu0 %v465
  %555 = vmatprep.subr.bf16.mxu0 0
  %556 = vmatpush1.bf16.msra.mxu0 %v466
  %557 = vmatprep.subr.bf16.mxu0 0
  %558 = vmatpush1.bf16.msra.mxu0 %v467
  %559 = vmatprep.subr.bf16.mxu0 0
  %560 = vmatpush1.bf16.msra.mxu0 %v468
  %561 = vmatprep.subr.bf16.mxu0 0
  %562 = vmatpush1.bf16.msra.mxu0 %v469
  %563 = vmatprep.subr.bf16.mxu0 0
  %564 = vmatpush1.bf16.msra.mxu0 %v470
  %565 = vmatprep.subr.bf16.mxu0 0
  %566 = vmatpush1.bf16.msra.mxu0 %v471
  %567 = vmatprep.subr.bf16.mxu0 0
  %568 = vmatpush1.bf16.msra.mxu0 %v472
  %569 = vmatprep.mubr.bf16.mxu0 %v238
  %570 = vmatmul.mubr.bf16.gmra.mrb[0].mxu0 %v237
  %v571 = vpop.f32.mrb[0].mxu0
  %v572 = vadd.f32 %v139, %v571
  %v573 = vpop.f32.mrb[0].mxu0
  %v574 = vpop.f32.mrb[0].mxu0
  %v575 = vadd.f32 %v139, %v574
  %v576 = vpop.f32.mrb[0].mxu0
  %577 = vmatprep.mubr.bf16.mxu0 %v243
  %578 = vmatmul.mubr.bf16.gmra.mrb[0].mxu0 %v242
  %v579 = vpop.f32.mrb[0].mxu0
  %v580 = vadd.f32 %v139, %v579
  %v581 = vpop.f32.mrb[0].mxu0
  %v582 = vpop.f32.mrb[0].mxu0
  %v583 = vadd.f32 %v139, %v582
  %v584 = vpop.f32.mrb[0].mxu0
  %585 = vmatprep.mubr.bf16.mxu0 %v248
  %586 = vmatmul.mubr.bf16.gmra.mrb[0].mxu0 %v247
  %v587 = vpop.f32.mrb[0].mxu0
  %v588 = vadd.f32 %v139, %v587
  %v589 = vpop.f32.mrb[0].mxu0
  %v590 = vpop.f32.mrb[0].mxu0
  %v591 = vadd.f32 %v139, %v590
  %v592 = vpop.f32.mrb[0].mxu0
  %593 = vmatprep.mubr.bf16.mxu0 %v253
  %594 = vmatmul.mubr.bf16.gmra.mrb[0].mxu0 %v252
  %v595 = vpop.f32.mrb[0].mxu0
  %v596 = vadd.f32 %v139, %v595
  %v597 = vpop.f32.mrb[0].mxu0
  %v598 = vpop.f32.mrb[0].mxu0
  %v599 = vadd.f32 %v139, %v598
  %v600 = vpop.f32.mrb[0].mxu0
  %601 = vmatprep.mubr.bf16.mxu0 %v258
  %602 = vmatmul.mubr.bf16.gmra.mrb[0].mxu0 %v257
  %v603 = vpop.f32.mrb[0].mxu0
  %v604 = vadd.f32 %v139, %v603
  %v605 = vpop.f32.mrb[0].mxu0
  %v606 = vpop.f32.mrb[0].mxu0
  %v607 = vadd.f32 %v139, %v606
  %v608 = vpop.f32.mrb[0].mxu0
  %609 = vmatprep.mubr.bf16.mxu0 %v263
  %610 = vmatmul.mubr.bf16.gmra.mrb[0].mxu0 %v262
  %v611 = vpop.f32.mrb[0].mxu0
  %v612 = vadd.f32 %v139, %v611
  %v613 = vpop.f32.mrb[0].mxu0
  %v614 = vpop.f32.mrb[0].mxu0
  %v615 = vadd.f32 %v139, %v614
  %v616 = vpop.f32.mrb[0].mxu0
  %617 = vdwg.mxu0
  %618 = vmatprep.subr.bf16.mxu0 0
  %619 = vmatpush1.bf16.msra.mxu0 %v473
  %620 = vmatprep.subr.bf16.mxu0 0
  %621 = vmatpush1.bf16.msra.mxu0 %v474
  %622 = vmatprep.subr.bf16.mxu0 0
  %623 = vmatpush1.bf16.msra.mxu0 %v475
  %624 = vmatprep.subr.bf16.mxu0 0
  %625 = vmatpush1.bf16.msra.mxu0 %v476
  %626 = vmatprep.subr.bf16.mxu0 0
  %627 = vmatpush1.bf16.msra.mxu0 %v477
  %628 = vmatprep.subr.bf16.mxu0 0
  %629 = vmatpush1.bf16.msra.mxu0 %v478
  %630 = vmatprep.subr.bf16.mxu0 0
  %631 = vmatpush1.bf16.msra.mxu0 %v479
  %632 = vmatprep.subr.bf16.mxu0 0
  %633 = vmatpush1.bf16.msra.mxu0 %v480
  %634 = vmatprep.subr.bf16.mxu0 0
  %635 = vmatpush1.bf16.msra.mxu0 %v481
  %636 = vmatprep.subr.bf16.mxu0 0
  %637 = vmatpush1.bf16.msra.mxu0 %v482
  %638 = vmatprep.subr.bf16.mxu0 0
  %639 = vmatpush1.bf16.msra.mxu0 %v483
  %640 = vmatprep.subr.bf16.mxu0 0
  %641 = vmatpush1.bf16.msra.mxu0 %v484
  %642 = vmatprep.subr.bf16.mxu0 0
  %643 = vmatpush1.bf16.msra.mxu0 %v485
  %644 = vmatprep.subr.bf16.mxu0 0
  %645 = vmatpush1.bf16.msra.mxu0 %v486
  %646 = vmatprep.subr.bf16.mxu0 0
  %647 = vmatpush1.bf16.msra.mxu0 %v487
  %648 = vmatprep.subr.bf16.mxu0 0
  %649 = vmatpush1.bf16.msra.mxu0 %v488
  %650 = vmatprep.mubr.bf16.mxu0 %v240
  %651 = vmatmul.mubr.bf16.gmra.mrb[0].mxu0 %v239
  %v652 = vpop.f32.mrb[0].mxu0
  %v653 = vadd.f32 %v572, %v652
  %v654 = vpop.f32.mrb[0].mxu0
  %v655 = vpop.f32.mrb[0].mxu0
  %v656 = vadd.f32 %v575, %v655
  %v657 = vpop.f32.mrb[0].mxu0
  %658 = vmatprep.mubr.bf16.mxu0 %v245
  %659 = vmatmul.mubr.bf16.gmra.mrb[0].mxu0 %v244
  %v660 = vpop.f32.mrb[0].mxu0
  %v661 = vadd.f32 %v580, %v660
  %v662 = vpop.f32.mrb[0].mxu0
  %v663 = vpop.f32.mrb[0].mxu0
  %v664 = vadd.f32 %v583, %v663
  %v665 = vpop.f32.mrb[0].mxu0
  %666 = vmatprep.mubr.bf16.mxu0 %v250
  %667 = vmatmul.mubr.bf16.gmra.mrb[0].mxu0 %v249
  %v668 = vpop.f32.mrb[0].mxu0
  %v669 = vadd.f32 %v588, %v668
  %v670 = vpop.f32.mrb[0].mxu0
  %v671 = vpop.f32.mrb[0].mxu0
  %v672 = vadd.f32 %v591, %v671
  %v673 = vpop.f32.mrb[0].mxu0
  %674 = vmatprep.mubr.bf16.mxu0 %v255
  %675 = vmatmul.mubr.bf16.gmra.mrb[0].mxu0 %v254
  %v676 = vpop.f32.mrb[0].mxu0
  %v677 = vadd.f32 %v596, %v676
  %v678 = vpop.f32.mrb[0].mxu0
  %v679 = vpop.f32.mrb[0].mxu0
  %v680 = vadd.f32 %v599, %v679
  %v681 = vpop.f32.mrb[0].mxu0
  %682 = vmatprep.mubr.bf16.mxu0 %v260
  %683 = vmatmul.mubr.bf16.gmra.mrb[0].mxu0 %v259
  %v684 = vpop.f32.mrb[0].mxu0
  %v685 = vadd.f32 %v604, %v684
  %v686 = vpop.f32.mrb[0].mxu0
  %v687 = vpop.f32.mrb[0].mxu0
  %v688 = vadd.f32 %v607, %v687
  %v689 = vpop.f32.mrb[0].mxu0
  %690 = vmatprep.mubr.bf16.mxu0 %v265
  %691 = vmatmul.mubr.bf16.gmra.mrb[0].mxu0 %v264
  %v692 = vpop.f32.mrb[0].mxu0
  %v693 = vadd.f32 %v612, %v692
  %v694 = vpop.f32.mrb[0].mxu0
  %v695 = vpop.f32.mrb[0].mxu0
  %v696 = vadd.f32 %v615, %v695
  %v697 = vpop.f32.mrb[0].mxu0
  %698 = vdwg.mxu0
  %699 = vmatprep.subr.bf16.mxu0 0
  %700 = vmatpush1.bf16.msra.mxu0 %v489
  %701 = vmatprep.subr.bf16.mxu0 0
  %702 = vmatpush1.bf16.msra.mxu0 %v490
  %703 = vmatprep.subr.bf16.mxu0 0
  %704 = vmatpush1.bf16.msra.mxu0 %v491
  %705 = vmatprep.subr.bf16.mxu0 0
  %706 = vmatpush1.bf16.msra.mxu0 %v492
  %707 = vmatprep.subr.bf16.mxu0 0
  %708 = vmatpush1.bf16.msra.mxu0 %v493
  %709 = vmatprep.subr.bf16.mxu0 0
  %710 = vmatpush1.bf16.msra.mxu0 %v494
  %711 = vmatprep.subr.bf16.mxu0 0
  %712 = vmatpush1.bf16.msra.mxu0 %v495
  %713 = vmatprep.subr.bf16.mxu0 0
  %714 = vmatpush1.bf16.msra.mxu0 %v496
  %715 = vmatprep.subr.bf16.mxu0 0
  %716 = vmatpush1.bf16.msra.mxu0 0
  %717 = vmatprep.subr.bf16.mxu0 0
  %718 = vmatpush1.bf16.msra.mxu0 0
  %719 = vmatprep.subr.bf16.mxu0 0
  %720 = vmatpush1.bf16.msra.mxu0 0
  %721 = vmatprep.subr.bf16.mxu0 0
  %722 = vmatpush1.bf16.msra.mxu0 0
  %723 = vmatprep.subr.bf16.mxu0 0
  %724 = vmatpush1.bf16.msra.mxu0 0
  %725 = vmatprep.subr.bf16.mxu0 0
  %726 = vmatpush1.bf16.msra.mxu0 0
  %727 = vmatprep.subr.bf16.mxu0 0
  %728 = vmatpush1.bf16.msra.mxu0 0
  %729 = vmatprep.subr.bf16.mxu0 0
  %730 = vmatpush1.bf16.msra.mxu0 0
  %731 = vmatprep.mubr.bf16.mxu0 0
  %732 = vmatmul.mubr.bf16.gmra.mrb[0].mxu0 %v241
  %v733 = vpop.f32.mrb[0].mxu0
  %v734 = vadd.f32 %v653, %v733
  %v735 = vpop.f32.mrb[0].mxu0
  %v736 = vpop.f32.mrb[0].mxu0
  %v737 = vadd.f32 %v656, %v736
  %v738 = vpop.f32.mrb[0].mxu0
  %739 = vmatprep.mubr.bf16.mxu0 0
  %740 = vmatmul.mubr.bf16.gmra.mrb[0].mxu0 %v246
  %v741 = vpop.f32.mrb[0].mxu0
  %v742 = vadd.f32 %v661, %v741
  %v743 = vpop.f32.mrb[0].mxu0
  %v744 = vpop.f32.mrb[0].mxu0
  %v745 = vadd.f32 %v664, %v744
  %v746 = vpop.f32.mrb[0].mxu0
  %747 = vmatprep.mubr.bf16.mxu0 0
  %748 = vmatmul.mubr.bf16.gmra.mrb[0].mxu0 %v251
  %v749 = vpop.f32.mrb[0].mxu0
  %v750 = vadd.f32 %v669, %v749
  %v751 = vpop.f32.mrb[0].mxu0
  %v752 = vpop.f32.mrb[0].mxu0
  %v753 = vadd.f32 %v672, %v752
  %v754 = vpop.f32.mrb[0].mxu0
  %755 = vmatprep.mubr.bf16.mxu0 0
  %756 = vmatmul.mubr.bf16.gmra.mrb[0].mxu0 %v256
  %v757 = vpop.f32.mrb[0].mxu0
  %v758 = vadd.f32 %v677, %v757
  %v759 = vpop.f32.mrb[0].mxu0
  %v760 = vpop.f32.mrb[0].mxu0
  %v761 = vadd.f32 %v680, %v760
  %v762 = vpop.f32.mrb[0].mxu0
  %763 = vmatprep.mubr.bf16.mxu0 0
  %764 = vmatmul.mubr.bf16.gmra.mrb[0].mxu0 %v261
  %v765 = vpop.f32.mrb[0].mxu0
  %v766 = vadd.f32 %v685, %v765
  %v767 = vpop.f32.mrb[0].mxu0
  %v768 = vpop.f32.mrb[0].mxu0
  %v769 = vadd.f32 %v688, %v768
  %v770 = vpop.f32.mrb[0].mxu0
  %771 = vmatprep.mubr.bf16.mxu0 0
  %772 = vmatmul.mubr.bf16.gmra.mrb[0].mxu0 %v266
  %v773 = vpop.f32.mrb[0].mxu0
  %v774 = vadd.f32 %v693, %v773
  %v775 = vpop.f32.mrb[0].mxu0
  %v776 = vpop.f32.mrb[0].mxu0
  %v777 = vadd.f32 %v696, %v776
  %v778 = vpop.f32.mrb[0].mxu0
  %779 = vdwg.mxu0
  %v780 = vld [vmem:[%s3] sm:$0xf]
  %v781 = vld [vmem:[%s3 + $0x4] sm:$0xf]
  %v782 = vld [vmem:[%s3 + $0x8] sm:$0xf]
  %v783 = vld [vmem:[%s3 + $0xc] sm:$0xf]
  %v784 = vld [vmem:[%s3 + $0x10] sm:$0xf]
  %v785 = vld [vmem:[%s3 + $0x14] sm:$0xf]
  %v786 = vld [vmem:[%s3 + $0x18] sm:$0xf]
  %v787 = vld [vmem:[%s3 + $0x1c] sm:$0xf]
  %v788 = vld [vmem:[%s3 + $0x20] sm:$0xf]
  %v789 = vld [vmem:[%s3 + $0x24] sm:$0xf]
  %v790 = vld [vmem:[%s3 + $0x28] sm:$0xf]
  %v791 = vld [vmem:[%s3 + $0x2c] sm:$0xf]
  %v792 = vunpack.c.l.bf16 %v780
  %v793 = vunpack.c.l.bf16 %v781
  %v794 = vunpack.c.l.bf16 %v782
  %v795 = vunpack.c.l.bf16 %v783
  %v796 = vunpack.c.l.bf16 %v784
  %v797 = vunpack.c.l.bf16 %v785
  %v798 = vunpack.c.l.bf16 %v786
  %v799 = vunpack.c.l.bf16 %v787
  %v800 = vunpack.c.l.bf16 %v788
  %v801 = vunpack.c.l.bf16 %v789
  %v802 = vunpack.c.l.bf16 %v790
  %v803 = vunpack.c.l.bf16 %v791
  %v804 = vadd.f32 %v734, %v792
  %v805 = vadd.f32 %v737, %v793
  %v806 = vadd.f32 %v742, %v794
  %v807 = vadd.f32 %v745, %v795
  %v808 = vadd.f32 %v750, %v796
  %v809 = vadd.f32 %v753, %v797
  %v810 = vadd.f32 %v758, %v798
  %v811 = vadd.f32 %v761, %v799
  %v812 = vadd.f32 %v766, %v800
  %v813 = vadd.f32 %v769, %v801
  %v814 = vadd.f32 %v774, %v802
  %v815 = vadd.f32 %v777, %v803
  %v816 = vmax.f32 %v804, 0.0
  %v817 = vmax.f32 %v805, 0.0
  %v818 = vmax.f32 %v806, 0.0
  %v819 = vmax.f32 %v807, 0.0
  %v820 = vmax.f32 %v808, 0.0
  %v821 = vmax.f32 %v809, 0.0
  %v822 = vmax.f32 %v810, 0.0
  %v823 = vmax.f32 %v811, 0.0
  %v824 = vmax.f32 %v812, 0.0
  %v825 = vmax.f32 %v813, 0.0
  %v826 = vmax.f32 %v814, 0.0
  %v827 = vmax.f32 %v815, 0.0
  %v828 = vpack.c.bf16 %v817, %v816
  %v829 = vpack.c.bf16 %v819, %v818
  %v830 = vpack.c.bf16 %v821, %v820
  %v831 = vpack.c.bf16 %v823, %v822
  %v832 = vpack.c.bf16 %v825, %v824
  %v833 = vpack.c.bf16 %v827, %v826
  %v840 = vunpack.c.l.b16 %v828
  %v841 = vunpack.c.h.b16 %v828
  %v842 = vunpack.c.l.b16 %v829
  %v843 = vunpack.c.h.b16 %v829
  %v844 = vunpack.c.l.b16 %v830
  %v845 = vunpack.c.h.b16 %v830
  %v846 = vunpack.c.l.b16 %v831
  %v847 = vunpack.c.h.b16 %v831
  %v848 = vunpack.c.l.b16 %v832
  %v849 = vunpack.c.h.b16 %v832
  %v850 = vunpack.c.l.b16 %v833
  %v851 = vunpack.c.h.b16 %v833
  %v852 = vpack.c.b16 %v840, %v840
  %v853 = vpack.c.b16 %v841, %v841
  %v854 = vpack.c.b16 %v842, %v842
  %v855 = vpack.c.b16 %v843, %v843
  %v856 = vpack.c.b16 %v844, %v844
  %v857 = vpack.c.b16 %v845, %v845
  %v858 = vpack.c.b16 %v846, %v846
  %v859 = vpack.c.b16 %v847, %v847
  %v860 = vpack.c.b16 %v848, %v848
  %v861 = vpack.c.b16 %v849, %v849
  %v862 = vpack.c.b16 %v850, %v850
  %v863 = vpack.c.b16 %v851, %v851
  %vm876 = vcmask 519168
  %877 = vst.msk [vmem:[%s4] sm:$0xf] %vm876, %v852
  %878 = vst.msk [vmem:[%s4 + $0x4] sm:$0xf] %vm876, %v853
  %879 = vst.msk [vmem:[%s4 + $0x8] sm:$0xf] %vm876, %v854
  %880 = vst.msk [vmem:[%s4 + $0xc] sm:$0xf] %vm876, %v855
  %881 = vst.msk [vmem:[%s4 + $0x10] sm:$0xf] %vm876, %v856
  %882 = vst.msk [vmem:[%s4 + $0x14] sm:$0xf] %vm876, %v857
  %883 = vst.msk [vmem:[%s4 + $0x18] sm:$0xf] %vm876, %v858
  %884 = vst.msk [vmem:[%s4 + $0x1c] sm:$0xf] %vm876, %v859
  %885 = vst.msk [vmem:[%s4 + $0x20] sm:$0xf] %vm876, %v860
  %886 = vst.msk [vmem:[%s4 + $0x24] sm:$0xf] %vm876, %v861
  %887 = vst.msk [vmem:[%s4 + $0x28] sm:$0xf] %vm876, %v862
  %888 = vst.msk [vmem:[%s4 + $0x2c] sm:$0xf] %vm876, %v863
  // Predicated region
  $region18: #{_lambda_.20} parent=0 // pred_check
    _
  $region19: #{_lambda_.20} parent=0 // pred_check_branch
    %890 = sbr.rel (0) target = $region21
  $region20: #{_lambda_.20} parent=0 // pred_region
    _
  $region21: #{_lambda_.20} parent=0 // pred_fallthru
    _
  // Predicated region
  $region22: #{_lambda_.20} parent=0 // pred_check
    _
  $region23: #{_lambda_.20} parent=0 // pred_check_branch
    %892 = sbr.rel (0) target = $region25
  $region24: #{_lambda_.20} parent=0 // pred_region
    _
  $region25: #{_lambda_.20} parent=0 // pred_fallthru
    _

// kernel: _lambda_.23
$region0: #{_lambda_.23}
  #allocation0 [shape = 'u32[]', space=smem, size = 0x4, offset = 0x4, fixed_abs, tag = 'smem constant byte address 0x4 - core index']
  #allocation1 [shape = 'u32[144,128]{1,0:T(1,128)}', space=vmem, size = 0x12000, scoped, tag = 'internal scratch']
  %s0 = inlined_call_operand.vmem [shape: bf16[24,640], index: 0, kind: input, shape index: {}]
  %s1 = inlined_call_operand.vmem [shape: bf16[640,128], index: 1, kind: input, shape index: {}]
  %s2 = inlined_call_operand.vmem [shape: f32[1,128], index: 2, kind: input, shape index: {}]
  %s3 = inlined_call_operand.vmem [shape: bf16[24,128], index: 3, kind: output, shape index: {}]
  %s4 = sld [smem:[#allocation0]]
  $region22: #{_lambda_.23} parent=0
    _
  %s6 = ssub.s32 1, %s4
  %s7 = scalar_select 0, %s6, %s4
  // Predicated region
  $region2: #{_lambda_.23} parent=0 // pred_check
    _
  $region3: #{_lambda_.23} parent=0 // pred_check_branch
    %9 = sbr.rel (0) target = $region5
  $region4: #{_lambda_.23} parent=0 // pred_region
    _
  $region5: #{_lambda_.23} parent=0 // pred_fallthru
    _
  // Predicated region
  $region6: #{_lambda_.23} parent=0 // pred_check
    _
  $region7: #{_lambda_.23} parent=0 // pred_check_branch
    %11 = sbr.rel (0) target = $region9
  $region8: #{_lambda_.23} parent=0 // pred_region
    _
  $region9: #{_lambda_.23} parent=0 // pred_fallthru
    _
  // Predicated region
  $region10: #{_lambda_.23} parent=0 // pred_check
    _
  $region11: #{_lambda_.23} parent=0 // pred_check_branch
    %13 = sbr.rel (0) target = $region13
  $region12: #{_lambda_.23} parent=0 // pred_region
    _
  $region13: #{_lambda_.23} parent=0 // pred_fallthru
    _
  %v15 = vld [vmem:[%s0] sm:$0xff]
  %v16 = vld [vmem:[%s0 + $0x8] sm:$0xff]
  %v17 = vld [vmem:[%s0 + $0x10] sm:$0xf]
  %v18 = vld [vmem:[%s0 + $0x14] sm:$0xff]
  %v19 = vld [vmem:[%s0 + $0x1c] sm:$0xff]
  %v20 = vld [vmem:[%s0 + $0x24] sm:$0xf]
  %v21 = vld [vmem:[%s0 + $0x28] sm:$0xff]
  %v22 = vld [vmem:[%s0 + $0x30] sm:$0xff]
  %v23 = vld [vmem:[%s0 + $0x38] sm:$0xf]
  %v24 = vld [vmem:[%s1] sm:$0xf]
  %v25 = vld [vmem:[%s1 + $0x4] sm:$0xf]
  %v26 = vld [vmem:[%s1 + $0x8] sm:$0xf]
  %v27 = vld [vmem:[%s1 + $0xc] sm:$0xf]
  %v28 = vld [vmem:[%s1 + $0x10] sm:$0xf]
  %v29 = vld [vmem:[%s1 + $0x14] sm:$0xf]
  %v30 = vld [vmem:[%s1 + $0x18] sm:$0xf]
  %v31 = vld [vmem:[%s1 + $0x1c] sm:$0xf]
  %v32 = vld [vmem:[%s1 + $0x20] sm:$0xf]
  %v33 = vld [vmem:[%s1 + $0x24] sm:$0xf]
  %v34 = vld [vmem:[%s1 + $0x28] sm:$0xf]
  %v35 = vld [vmem:[%s1 + $0x2c] sm:$0xf]
  %v36 = vld [vmem:[%s1 + $0x30] sm:$0xf]
  %v37 = vld [vmem:[%s1 + $0x34] sm:$0xf]
  %v38 = vld [vmem:[%s1 + $0x38] sm:$0xf]
  %v39 = vld [vmem:[%s1 + $0x3c] sm:$0xf]
  %v40 = vld [vmem:[%s1 + $0x40] sm:$0xf]
  %v41 = vld [vmem:[%s1 + $0x44] sm:$0xf]
  %v42 = vld [vmem:[%s1 + $0x48] sm:$0xf]
  %v43 = vld [vmem:[%s1 + $0x4c] sm:$0xf]
  %v44 = vld [vmem:[%s1 + $0x50] sm:$0xf]
  %v45 = vld [vmem:[%s1 + $0x54] sm:$0xf]
  %v46 = vld [vmem:[%s1 + $0x58] sm:$0xf]
  %v47 = vld [vmem:[%s1 + $0x5c] sm:$0xf]
  %v48 = vld [vmem:[%s1 + $0x60] sm:$0xf]
  %v49 = vld [vmem:[%s1 + $0x64] sm:$0xf]
  %v50 = vld [vmem:[%s1 + $0x68] sm:$0xf]
  %v51 = vld [vmem:[%s1 + $0x6c] sm:$0xf]
  %v52 = vld [vmem:[%s1 + $0x70] sm:$0xf]
  %v53 = vld [vmem:[%s1 + $0x74] sm:$0xf]
  %v54 = vld [vmem:[%s1 + $0x78] sm:$0xf]
  %v55 = vld [vmem:[%s1 + $0x7c] sm:$0xf]
  %v56 = vld [vmem:[%s1 + $0x80] sm:$0xf]
  %v57 = vld [vmem:[%s1 + $0x84] sm:$0xf]
  %v58 = vld [vmem:[%s1 + $0x88] sm:$0xf]
  %v59 = vld [vmem:[%s1 + $0x8c] sm:$0xf]
  %v60 = vld [vmem:[%s1 + $0x90] sm:$0xf]
  %v61 = vld [vmem:[%s1 + $0x94] sm:$0xf]
  %v62 = vld [vmem:[%s1 + $0x98] sm:$0xf]
  %v63 = vld [vmem:[%s1 + $0x9c] sm:$0xf]
  %v64 = vld [vmem:[%s1 + $0xa0] sm:$0xf]
  %v65 = vld [vmem:[%s1 + $0xa4] sm:$0xf]
  %v66 = vld [vmem:[%s1 + $0xa8] sm:$0xf]
  %v67 = vld [vmem:[%s1 + $0xac] sm:$0xf]
  %v68 = vld [vmem:[%s1 + $0xb0] sm:$0xf]
  %v69 = vld [vmem:[%s1 + $0xb4] sm:$0xf]
  %v70 = vld [vmem:[%s1 + $0xb8] sm:$0xf]
  %v71 = vld [vmem:[%s1 + $0xbc] sm:$0xf]
  %v72 = vld [vmem:[%s1 + $0xc0] sm:$0xf]
  %v73 = vld [vmem:[%s1 + $0xc4] sm:$0xf]
  %v74 = vld [vmem:[%s1 + $0xc8] sm:$0xf]
  %v75 = vld [vmem:[%s1 + $0xcc] sm:$0xf]
  %v76 = vld [vmem:[%s1 + $0xd0] sm:$0xf]
  %v77 = vld [vmem:[%s1 + $0xd4] sm:$0xf]
  %v78 = vld [vmem:[%s1 + $0xd8] sm:$0xf]
  %v79 = vld [vmem:[%s1 + $0xdc] sm:$0xf]
  %v80 = vld [vmem:[%s1 + $0xe0] sm:$0xf]
  %v81 = vld [vmem:[%s1 + $0xe4] sm:$0xf]
  %v82 = vld [vmem:[%s1 + $0xe8] sm:$0xf]
  %v83 = vld [vmem:[%s1 + $0xec] sm:$0xf]
  %v84 = vld [vmem:[%s1 + $0xf0] sm:$0xf]
  %v85 = vld [vmem:[%s1 + $0xf4] sm:$0xf]
  %v86 = vld [vmem:[%s1 + $0xf8] sm:$0xf]
  %v87 = vld [vmem:[%s1 + $0xfc] sm:$0xf]
  %v88 = vld [vmem:[%s1 + $0x100] sm:$0xf]
  %v89 = vld [vmem:[%s1 + $0x104] sm:$0xf]
  %v90 = vld [vmem:[%s1 + $0x108] sm:$0xf]
  %v91 = vld [vmem:[%s1 + $0x10c] sm:$0xf]
  %v92 = vld [vmem:[%s1 + $0x110] sm:$0xf]
  %v93 = vld [vmem:[%s1 + $0x114] sm:$0xf]
  %v94 = vld [vmem:[%s1 + $0x118] sm:$0xf]
  %v95 = vld [vmem:[%s1 + $0x11c] sm:$0xf]
  %v96 = vld [vmem:[%s1 + $0x120] sm:$0xf]
  %v97 = vld [vmem:[%s1 + $0x124] sm:$0xf]
  %v98 = vld [vmem:[%s1 + $0x128] sm:$0xf]
  %v99 = vld [vmem:[%s1 + $0x12c] sm:$0xf]
  %v100 = vld [vmem:[%s1 + $0x130] sm:$0xf]
  %v101 = vld [vmem:[%s1 + $0x134] sm:$0xf]
  %v102 = vld [vmem:[%s1 + $0x138] sm:$0xf]
  %v103 = vld [vmem:[%s1 + $0x13c] sm:$0xf]
  %v104 = vld [vmem:[%s2] sm:$0x1]
  %v106 = vlaneseq
  %v107 = vshrl.u32 %v106, 7
  %v108 = vsub.s32 0, %v107
  %v109 = vrot.slane %v104, %v108
  %v120 = vunpack.c.l.b16 %v15
  %v121 = vunpack.c.h.b16 %v15
  %v122 = vunpack.c.l.b16 %v16
  %v123 = vunpack.c.h.b16 %v16
  %v124 = vunpack.c.l.b16 %v17
  %v125 = vunpack.c.l.b16 %v18
  %v126 = vunpack.c.h.b16 %v18
  %v127 = vunpack.c.l.b16 %v19
  %v128 = vunpack.c.h.b16 %v19
  %v129 = vunpack.c.l.b16 %v20
  %v130 = vunpack.c.l.b16 %v21
  %v131 = vunpack.c.h.b16 %v21
  %v132 = vunpack.c.l.b16 %v22
  %v133 = vunpack.c.h.b16 %v22
  %v134 = vunpack.c.l.b16 %v23
  %v135 = vpack.c.b16 %v125, %v120
  %v136 = vpack.c.b16 %v126, %v121
  %v137 = vpack.c.b16 %v127, %v122
  %v138 = vpack.c.b16 %v128, %v123
  %v139 = vpack.c.b16 %v129, %v124
  %v140 = vpack.c.b16 %v130, %v130
  %v141 = vpack.c.b16 %v131, %v131
  %v142 = vpack.c.b16 %v132, %v132
  %v143 = vpack.c.b16 %v133, %v133
  %v144 = vpack.c.b16 %v134, %v134
  %v235 = vunpack.c.l.b16 %v24
  %v236 = vunpack.c.l.b16 %v25
  %v237 = vunpack.c.l.b16 %v26
  %v238 = vunpack.c.l.b16 %v27
  %v239 = vunpack.c.l.b16 %v28
  %v240 = vunpack.c.l.b16 %v29
  %v241 = vunpack.c.l.b16 %v30
  %v242 = vunpack.c.l.b16 %v31
  %v243 = vunpack.c.l.b16 %v32
  %v244 = vunpack.c.l.b16 %v33
  %v245 = vunpack.c.l.b16 %v34
  %v246 = vunpack.c.l.b16 %v35
  %v247 = vunpack.c.l.b16 %v36
  %v248 = vunpack.c.l.b16 %v37
  %v249 = vunpack.c.l.b16 %v38
  %v250 = vunpack.c.l.b16 %v39
  %v251 = vunpack.c.l.b16 %v40
  %v252 = vunpack.c.l.b16 %v41
  %v253 = vunpack.c.l.b16 %v42
  %v254 = vunpack.c.l.b16 %v43
  %v255 = vunpack.c.l.b16 %v44
  %v256 = vunpack.c.l.b16 %v45
  %v257 = vunpack.c.l.b16 %v46
  %v258 = vunpack.c.l.b16 %v47
  %v259 = vunpack.c.l.b16 %v48
  %v260 = vunpack.c.l.b16 %v49
  %v261 = vunpack.c.l.b16 %v50
  %v262 = vunpack.c.l.b16 %v51
  %v263 = vunpack.c.l.b16 %v52
  %v264 = vunpack.c.l.b16 %v53
  %v265 = vunpack.c.l.b16 %v54
  %v266 = vunpack.c.l.b16 %v55
  %v267 = vunpack.c.l.b16 %v56
  %v268 = vunpack.c.l.b16 %v57
  %v269 = vunpack.c.l.b16 %v58
  %v270 = vunpack.c.l.b16 %v59
  %v271 = vunpack.c.l.b16 %v60
  %v272 = vunpack.c.l.b16 %v61
  %v273 = vunpack.c.l.b16 %v62
  %v274 = vunpack.c.l.b16 %v63
  %v275 = vunpack.c.l.b16 %v64
  %v276 = vunpack.c.l.b16 %v65
  %v277 = vunpack.c.l.b16 %v66
  %v278 = vunpack.c.l.b16 %v67
  %v279 = vunpack.c.l.b16 %v68
  %v280 = vunpack.c.l.b16 %v69
  %v281 = vunpack.c.l.b16 %v70
  %v282 = vunpack.c.l.b16 %v71
  %v283 = vunpack.c.l.b16 %v72
  %v284 = vunpack.c.l.b16 %v73
  %v285 = vunpack.c.l.b16 %v74
  %v286 = vunpack.c.l.b16 %v75
  %v287 = vunpack.c.l.b16 %v76
  %v288 = vunpack.c.l.b16 %v77
  %v289 = vunpack.c.l.b16 %v78
  %v290 = vunpack.c.l.b16 %v79
  %v291 = vunpack.c.l.b16 %v80
  %v292 = vunpack.c.l.b16 %v81
  %v293 = vunpack.c.l.b16 %v82
  %v294 = vunpack.c.l.b16 %v83
  %v295 = vunpack.c.l.b16 %v84
  %v296 = vunpack.c.l.b16 %v85
  %v297 = vunpack.c.l.b16 %v86
  %v298 = vunpack.c.l.b16 %v87
  %v299 = vunpack.c.l.b16 %v88
  %v300 = vunpack.c.l.b16 %v89
  %v301 = vunpack.c.l.b16 %v90
  %v302 = vunpack.c.l.b16 %v91
  %v303 = vunpack.c.l.b16 %v92
  %v304 = vunpack.c.l.b16 %v93
  %v305 = vunpack.c.l.b16 %v94
  %v306 = vunpack.c.l.b16 %v95
  %v307 = vunpack.c.l.b16 %v96
  %v308 = vunpack.c.l.b16 %v97
  %v309 = vunpack.c.l.b16 %v98
  %v310 = vunpack.c.l.b16 %v99
  %v311 = vunpack.c.l.b16 %v100
  %v312 = vunpack.c.l.b16 %v101
  %v313 = vunpack.c.l.b16 %v102
  %v314 = vunpack.c.l.b16 %v103
  %v315 = vpack.c.b16 %v236, %v235
  %v316 = vpack.c.b16 %v238, %v237
  %v317 = vpack.c.b16 %v240, %v239
  %v318 = vpack.c.b16 %v242, %v241
  %v319 = vpack.c.b16 %v244, %v243
  %v320 = vpack.c.b16 %v246, %v245
  %v321 = vpack.c.b16 %v248, %v247
  %v322 = vpack.c.b16 %v250, %v249
  %v323 = vpack.c.b16 %v252, %v251
  %v324 = vpack.c.b16 %v254, %v253
  %v325 = vpack.c.b16 %v256, %v255
  %v326 = vpack.c.b16 %v258, %v257
  %v327 = vpack.c.b16 %v260, %v259
  %v328 = vpack.c.b16 %v262, %v261
  %v329 = vpack.c.b16 %v264, %v263
  %v330 = vpack.c.b16 %v266, %v265
  %v331 = vpack.c.b16 %v268, %v267
  %v332 = vpack.c.b16 %v270, %v269
  %v333 = vpack.c.b16 %v272, %v271
  %v334 = vpack.c.b16 %v274, %v273
  %v335 = vpack.c.b16 %v276, %v275
  %v336 = vpack.c.b16 %v278, %v277
  %v337 = vpack.c.b16 %v280, %v279
  %v338 = vpack.c.b16 %v282, %v281
  %v339 = vpack.c.b16 %v284, %v283
  %v340 = vpack.c.b16 %v286, %v285
  %v341 = vpack.c.b16 %v288, %v287
  %v342 = vpack.c.b16 %v290, %v289
  %v343 = vpack.c.b16 %v292, %v291
  %v344 = vpack.c.b16 %v294, %v293
  %v345 = vpack.c.b16 %v296, %v295
  %v346 = vpack.c.b16 %v298, %v297
  %v347 = vpack.c.b16 %v300, %v299
  %v348 = vpack.c.b16 %v302, %v301
  %v349 = vpack.c.b16 %v304, %v303
  %v350 = vpack.c.b16 %v306, %v305
  %v351 = vpack.c.b16 %v308, %v307
  %v352 = vpack.c.b16 %v310, %v309
  %v353 = vpack.c.b16 %v312, %v311
  %v354 = vpack.c.b16 %v314, %v313
  %395 = vmatprep.subr.bf16.mxu0 0
  %396 = vmatpush1.bf16.msra.mxu0 %v315
  %397 = vmatprep.subr.bf16.mxu0 0
  %398 = vmatpush1.bf16.msra.mxu0 %v316
  %399 = vmatprep.subr.bf16.mxu0 0
  %400 = vmatpush1.bf16.msra.mxu0 %v317
  %401 = vmatprep.subr.bf16.mxu0 0
  %402 = vmatpush1.bf16.msra.mxu0 %v318
  %403 = vmatprep.subr.bf16.mxu0 0
  %404 = vmatpush1.bf16.msra.mxu0 %v319
  %405 = vmatprep.subr.bf16.mxu0 0
  %406 = vmatpush1.bf16.msra.mxu0 %v320
  %407 = vmatprep.subr.bf16.mxu0 0
  %408 = vmatpush1.bf16.msra.mxu0 %v321
  %409 = vmatprep.subr.bf16.mxu0 0
  %410 = vmatpush1.bf16.msra.mxu0 %v322
  %411 = vmatprep.subr.bf16.mxu0 0
  %412 = vmatpush1.bf16.msra.mxu0 %v323
  %413 = vmatprep.subr.bf16.mxu0 0
  %414 = vmatpush1.bf16.msra.mxu0 %v324
  %415 = vmatprep.subr.bf16.mxu0 0
  %416 = vmatpush1.bf16.msra.mxu0 %v325
  %417 = vmatprep.subr.bf16.mxu0 0
  %418 = vmatpush1.bf16.msra.mxu0 %v326
  %419 = vmatprep.subr.bf16.mxu0 0
  %420 = vmatpush1.bf16.msra.mxu0 %v327
  %421 = vmatprep.subr.bf16.mxu0 0
  %422 = vmatpush1.bf16.msra.mxu0 %v328
  %423 = vmatprep.subr.bf16.mxu0 0
  %424 = vmatpush1.bf16.msra.mxu0 %v329
  %425 = vmatprep.subr.bf16.mxu0 0
  %426 = vmatpush1.bf16.msra.mxu0 %v330
  %427 = vmatprep.mubr.bf16.mxu0 %v136
  %428 = vmatmul.mubr.bf16.gmra.mrb[0].mxu0 %v135
  %v429 = vpop.f32.mrb[0].mxu0
  %v430 = vadd.f32 %v109, %v429
  %v431 = vpop.f32.mrb[0].mxu0
  %v432 = vpop.f32.mrb[0].mxu0
  %v433 = vadd.f32 %v109, %v432
  %v434 = vpop.f32.mrb[0].mxu0
  %435 = vmatprep.mubr.bf16.mxu0 %v141
  %436 = vmatmul.mubr.bf16.gmra.mrb[0].mxu0 %v140
  %v437 = vpop.f32.mrb[0].mxu0
  %v438 = vadd.f32 %v109, %v437
  %v439 = vpop.f32.mrb[0].mxu0
  %v440 = vpop.f32.mrb[0].mxu0
  %v441 = vpop.f32.mrb[0].mxu0
  %442 = vdwg.mxu0
  %443 = vmatprep.subr.bf16.mxu0 0
  %444 = vmatpush1.bf16.msra.mxu0 %v331
  %445 = vmatprep.subr.bf16.mxu0 0
  %446 = vmatpush1.bf16.msra.mxu0 %v332
  %447 = vmatprep.subr.bf16.mxu0 0
  %448 = vmatpush1.bf16.msra.mxu0 %v333
  %449 = vmatprep.subr.bf16.mxu0 0
  %450 = vmatpush1.bf16.msra.mxu0 %v334
  %451 = vmatprep.subr.bf16.mxu0 0
  %452 = vmatpush1.bf16.msra.mxu0 %v335
  %453 = vmatprep.subr.bf16.mxu0 0
  %454 = vmatpush1.bf16.msra.mxu0 %v336
  %455 = vmatprep.subr.bf16.mxu0 0
  %456 = vmatpush1.bf16.msra.mxu0 %v337
  %457 = vmatprep.subr.bf16.mxu0 0
  %458 = vmatpush1.bf16.msra.mxu0 %v338
  %459 = vmatprep.subr.bf16.mxu0 0
  %460 = vmatpush1.bf16.msra.mxu0 %v339
  %461 = vmatprep.subr.bf16.mxu0 0
  %462 = vmatpush1.bf16.msra.mxu0 %v340
  %463 = vmatprep.subr.bf16.mxu0 0
  %464 = vmatpush1.bf16.msra.mxu0 %v341
  %465 = vmatprep.subr.bf16.mxu0 0
  %466 = vmatpush1.bf16.msra.mxu0 %v342
  %467 = vmatprep.subr.bf16.mxu0 0
  %468 = vmatpush1.bf16.msra.mxu0 %v343
  %469 = vmatprep.subr.bf16.mxu0 0
  %470 = vmatpush1.bf16.msra.mxu0 %v344
  %471 = vmatprep.subr.bf16.mxu0 0
  %472 = vmatpush1.bf16.msra.mxu0 %v345
  %473 = vmatprep.subr.bf16.mxu0 0
  %474 = vmatpush1.bf16.msra.mxu0 %v346
  %475 = vmatprep.mubr.bf16.mxu0 %v138
  %476 = vmatmul.mubr.bf16.gmra.mrb[0].mxu0 %v137
  %v477 = vpop.f32.mrb[0].mxu0
  %v478 = vadd.f32 %v430, %v477
  %v479 = vpop.f32.mrb[0].mxu0
  %v480 = vpop.f32.mrb[0].mxu0
  %v481 = vadd.f32 %v433, %v480
  %v482 = vpop.f32.mrb[0].mxu0
  %483 = vmatprep.mubr.bf16.mxu0 %v143
  %484 = vmatmul.mubr.bf16.gmra.mrb[0].mxu0 %v142
  %v485 = vpop.f32.mrb[0].mxu0
  %v486 = vadd.f32 %v438, %v485
  %v487 = vpop.f32.mrb[0].mxu0
  %v488 = vpop.f32.mrb[0].mxu0
  %v489 = vpop.f32.mrb[0].mxu0
  %490 = vdwg.mxu0
  %491 = vmatprep.subr.bf16.mxu0 0
  %492 = vmatpush1.bf16.msra.mxu0 %v347
  %493 = vmatprep.subr.bf16.mxu0 0
  %494 = vmatpush1.bf16.msra.mxu0 %v348
  %495 = vmatprep.subr.bf16.mxu0 0
  %496 = vmatpush1.bf16.msra.mxu0 %v349
  %497 = vmatprep.subr.bf16.mxu0 0
  %498 = vmatpush1.bf16.msra.mxu0 %v350
  %499 = vmatprep.subr.bf16.mxu0 0
  %500 = vmatpush1.bf16.msra.mxu0 %v351
  %501 = vmatprep.subr.bf16.mxu0 0
  %502 = vmatpush1.bf16.msra.mxu0 %v352
  %503 = vmatprep.subr.bf16.mxu0 0
  %504 = vmatpush1.bf16.msra.mxu0 %v353
  %505 = vmatprep.subr.bf16.mxu0 0
  %506 = vmatpush1.bf16.msra.mxu0 %v354
  %507 = vmatprep.subr.bf16.mxu0 0
  %508 = vmatpush1.bf16.msra.mxu0 0
  %509 = vmatprep.subr.bf16.mxu0 0
  %510 = vmatpush1.bf16.msra.mxu0 0
  %511 = vmatprep.subr.bf16.mxu0 0
  %512 = vmatpush1.bf16.msra.mxu0 0
  %513 = vmatprep.subr.bf16.mxu0 0
  %514 = vmatpush1.bf16.msra.mxu0 0
  %515 = vmatprep.subr.bf16.mxu0 0
  %516 = vmatpush1.bf16.msra.mxu0 0
  %517 = vmatprep.subr.bf16.mxu0 0
  %518 = vmatpush1.bf16.msra.mxu0 0
  %519 = vmatprep.subr.bf16.mxu0 0
  %520 = vmatpush1.bf16.msra.mxu0 0
  %521 = vmatprep.subr.bf16.mxu0 0
  %522 = vmatpush1.bf16.msra.mxu0 0
  %523 = vmatprep.mubr.bf16.mxu0 0
  %524 = vmatmul.mubr.bf16.gmra.mrb[0].mxu0 %v139
  %v525 = vpop.f32.mrb[0].mxu0
  %v526 = vadd.f32 %v478, %v525
  %v527 = vpop.f32.mrb[0].mxu0
  %v528 = vpop.f32.mrb[0].mxu0
  %v529 = vadd.f32 %v481, %v528
  %v530 = vpop.f32.mrb[0].mxu0
  %531 = vmatprep.mubr.bf16.mxu0 0
  %532 = vmatmul.mubr.bf16.gmra.mrb[0].mxu0 %v144
  %v533 = vpop.f32.mrb[0].mxu0
  %v534 = vadd.f32 %v486, %v533
  %v535 = vpop.f32.mrb[0].mxu0
  %v536 = vpop.f32.mrb[0].mxu0
  %v537 = vpop.f32.mrb[0].mxu0
  %538 = vdwg.mxu0
  %v539 = vmax.f32 %v526, 0.0
  %v540 = vmax.f32 %v529, 0.0
  %v541 = vmax.f32 %v534, 0.0
  %v542 = vpack.c.bf16 %v540, %v539
  %v543 = vpack.c.bf16 %v541, %v541
  %v546 = vunpack.c.l.b16 %v542
  %v547 = vunpack.c.h.b16 %v542
  %v548 = vunpack.c.l.b16 %v543
  %v549 = vpack.c.b16 %v546, %v546
  %v550 = vpack.c.b16 %v547, %v547
  %v551 = vpack.c.b16 %v548, %v548
  %555 = vst [vmem:[%s3] sm:$0xf] %v549
  %556 = vst [vmem:[%s3 + $0x4] sm:$0xf] %v550
  %557 = vst [vmem:[%s3 + $0x8] sm:$0xf] %v551
  // Predicated region
  $region14: #{_lambda_.23} parent=0 // pred_check
    _
  $region15: #{_lambda_.23} parent=0 // pred_check_branch
    %559 = sbr.rel (0) target = $region17
  $region16: #{_lambda_.23} parent=0 // pred_region
    _
  $region17: #{_lambda_.23} parent=0 // pred_fallthru
    _
  // Predicated region
  $region18: #{_lambda_.23} parent=0 // pred_check
    _
  $region19: #{_lambda_.23} parent=0 // pred_check_branch
    %561 = sbr.rel (0) target = $region21
  $region20: #{_lambda_.23} parent=0 // pred_region
    _
  $region21: #{_lambda_.23} parent=0 // pred_fallthru
    _

// kernel: _lambda_.25
$region0: #{_lambda_.25}
  #allocation0 [shape = 'u32[]', space=smem, size = 0x4, offset = 0x4, fixed_abs, tag = 'smem constant byte address 0x4 - core index']
  #allocation1 [shape = 'u32[144,128]{1,0:T(1,128)}', space=vmem, size = 0x12000, scoped, tag = 'internal scratch']
  %s0 = inlined_call_operand.vmem [shape: bf16[24,1152], index: 0, kind: input, shape index: {}]
  %s1 = inlined_call_operand.vmem [shape: bf16[1152,128], index: 1, kind: input, shape index: {}]
  %s2 = inlined_call_operand.vmem [shape: f32[1,128], index: 2, kind: input, shape index: {}]
  %s3 = inlined_call_operand.vmem [shape: bf16[24,128], index: 3, kind: output, shape index: {}]
  %s4 = sld [smem:[#allocation0]]
  $region22: #{_lambda_.25} parent=0
    _
  %s6 = ssub.s32 1, %s4
  %s7 = scalar_select 0, %s6, %s4
  // Predicated region
  $region2: #{_lambda_.25} parent=0 // pred_check
    _
  $region3: #{_lambda_.25} parent=0 // pred_check_branch
    %9 = sbr.rel (0) target = $region5
  $region4: #{_lambda_.25} parent=0 // pred_region
    _
  $region5: #{_lambda_.25} parent=0 // pred_fallthru
    _
  // Predicated region
  $region6: #{_lambda_.25} parent=0 // pred_check
    _
  $region7: #{_lambda_.25} parent=0 // pred_check_branch
    %11 = sbr.rel (0) target = $region9
  $region8: #{_lambda_.25} parent=0 // pred_region
    _
  $region9: #{_lambda_.25} parent=0 // pred_fallthru
    _
  // Predicated region
  $region10: #{_lambda_.25} parent=0 // pred_check
    _
  $region11: #{_lambda_.25} parent=0 // pred_check_branch
    %13 = sbr.rel (0) target = $region13
  $region12: #{_lambda_.25} parent=0 // pred_region
    _
  $region13: #{_lambda_.25} parent=0 // pred_fallthru
    _
  %v15 = vld [vmem:[%s0] sm:$0xff]
  %v16 = vld [vmem:[%s0 + $0x8] sm:$0xff]
  %v17 = vld [vmem:[%s0 + $0x10] sm:$0xff]
  %v18 = vld [vmem:[%s0 + $0x18] sm:$0xff]
  %v19 = vld [vmem:[%s0 + $0x20] sm:$0xf]
  %v20 = vld [vmem:[%s0 + $0x24] sm:$0xff]
  %v21 = vld [vmem:[%s0 + $0x2c] sm:$0xff]
  %v22 = vld [vmem:[%s0 + $0x34] sm:$0xff]
  %v23 = vld [vmem:[%s0 + $0x3c] sm:$0xff]
  %v24 = vld [vmem:[%s0 + $0x44] sm:$0xf]
  %v25 = vld [vmem:[%s0 + $0x48] sm:$0xff]
  %v26 = vld [vmem:[%s0 + $0x50] sm:$0xff]
  %v27 = vld [vmem:[%s0 + $0x58] sm:$0xff]
  %v28 = vld [vmem:[%s0 + $0x60] sm:$0xff]
  %v29 = vld [vmem:[%s0 + $0x68] sm:$0xf]
  %v30 = vld [vmem:[%s1] sm:$0xf]
  %v31 = vld [vmem:[%s1 + $0x4] sm:$0xf]
  %v32 = vld [vmem:[%s1 + $0x8] sm:$0xf]
  %v33 = vld [vmem:[%s1 + $0xc] sm:$0xf]
  %v34 = vld [vmem:[%s1 + $0x10] sm:$0xf]
  %v35 = vld [vmem:[%s1 + $0x14] sm:$0xf]
  %v36 = vld [vmem:[%s1 + $0x18] sm:$0xf]
  %v37 = vld [vmem:[%s1 + $0x1c] sm:$0xf]
  %v38 = vld [vmem:[%s1 + $0x20] sm:$0xf]
  %v39 = vld [vmem:[%s1 + $0x24] sm:$0xf]
  %v40 = vld [vmem:[%s1 + $0x28] sm:$0xf]
  %v41 = vld [vmem:[%s1 + $0x2c] sm:$0xf]
  %v42 = vld [vmem:[%s1 + $0x30] sm:$0xf]
  %v43 = vld [vmem:[%s1 + $0x34] sm:$0xf]
  %v44 = vld [vmem:[%s1 + $0x38] sm:$0xf]
  %v45 = vld [vmem:[%s1 + $0x3c] sm:$0xf]
  %v46 = vld [vmem:[%s1 + $0x40] sm:$0xf]
  %v47 = vld [vmem:[%s1 + $0x44] sm:$0xf]
  %v48 = vld [vmem:[%s1 + $0x48] sm:$0xf]
  %v49 = vld [vmem:[%s1 + $0x4c] sm:$0xf]
  %v50 = vld [vmem:[%s1 + $0x50] sm:$0xf]
  %v51 = vld [vmem:[%s1 + $0x54] sm:$0xf]
  %v52 = vld [vmem:[%s1 + $0x58] sm:$0xf]
  %v53 = vld [vmem:[%s1 + $0x5c] sm:$0xf]
  %v54 = vld [vmem:[%s1 + $0x60] sm:$0xf]
  %v55 = vld [vmem:[%s1 + $0x64] sm:$0xf]
  %v56 = vld [vmem:[%s1 + $0x68] sm:$0xf]
  %v57 = vld [vmem:[%s1 + $0x6c] sm:$0xf]
  %v58 = vld [vmem:[%s1 + $0x70] sm:$0xf]
  %v59 = vld [vmem:[%s1 + $0x74] sm:$0xf]
  %v60 = vld [vmem:[%s1 + $0x78] sm:$0xf]
  %v61 = vld [vmem:[%s1 + $0x7c] sm:$0xf]
  %v62 = vld [vmem:[%s1 + $0x80] sm:$0xf]
  %v63 = vld [vmem:[%s1 + $0x84] sm:$0xf]
  %v64 = vld [vmem:[%s1 + $0x88] sm:$0xf]
  %v65 = vld [vmem:[%s1 + $0x8c] sm:$0xf]
  %v66 = vld [vmem:[%s1 + $0x90] sm:$0xf]
  %v67 = vld [vmem:[%s1 + $0x94] sm:$0xf]
  %v68 = vld [vmem:[%s1 + $0x98] sm:$0xf]
  %v69 = vld [vmem:[%s1 + $0x9c] sm:$0xf]
  %v70 = vld [vmem:[%s1 + $0xa0] sm:$0xf]
  %v71 = vld [vmem:[%s1 + $0xa4] sm:$0xf]
  %v72 = vld [vmem:[%s1 + $0xa8] sm:$0xf]
  %v73 = vld [vmem:[%s1 + $0xac] sm:$0xf]
  %v74 = vld [vmem:[%s1 + $0xb0] sm:$0xf]
  %v75 = vld [vmem:[%s1 + $0xb4] sm:$0xf]
  %v76 = vld [vmem:[%s1 + $0xb8] sm:$0xf]
  %v77 = vld [vmem:[%s1 + $0xbc] sm:$0xf]
  %v78 = vld [vmem:[%s1 + $0xc0] sm:$0xf]
  %v79 = vld [vmem:[%s1 + $0xc4] sm:$0xf]
  %v80 = vld [vmem:[%s1 + $0xc8] sm:$0xf]
  %v81 = vld [vmem:[%s1 + $0xcc] sm:$0xf]
  %v82 = vld [vmem:[%s1 + $0xd0] sm:$0xf]
  %v83 = vld [vmem:[%s1 + $0xd4] sm:$0xf]
  %v84 = vld [vmem:[%s1 + $0xd8] sm:$0xf]
  %v85 = vld [vmem:[%s1 + $0xdc] sm:$0xf]
  %v86 = vld [vmem:[%s1 + $0xe0] sm:$0xf]
  %v87 = vld [vmem:[%s1 + $0xe4] sm:$0xf]
  %v88 = vld [vmem:[%s1 + $0xe8] sm:$0xf]
  %v89 = vld [vmem:[%s1 + $0xec] sm:$0xf]
  %v90 = vld [vmem:[%s1 + $0xf0] sm:$0xf]
  %v91 = vld [vmem:[%s1 + $0xf4] sm:$0xf]
  %v92 = vld [vmem:[%s1 + $0xf8] sm:$0xf]
  %v93 = vld [vmem:[%s1 + $0xfc] sm:$0xf]
  %v94 = vld [vmem:[%s1 + $0x100] sm:$0xf]
  %v95 = vld [vmem:[%s1 + $0x104] sm:$0xf]
  %v96 = vld [vmem:[%s1 + $0x108] sm:$0xf]
  %v97 = vld [vmem:[%s1 + $0x10c] sm:$0xf]
  %v98 = vld [vmem:[%s1 + $0x110] sm:$0xf]
  %v99 = vld [vmem:[%s1 + $0x114] sm:$0xf]
  %v100 = vld [vmem:[%s1 + $0x118] sm:$0xf]
  %v101 = vld [vmem:[%s1 + $0x11c] sm:$0xf]
  %v102 = vld [vmem:[%s1 + $0x120] sm:$0xf]
  %v103 = vld [vmem:[%s1 + $0x124] sm:$0xf]
  %v104 = vld [vmem:[%s1 + $0x128] sm:$0xf]
  %v105 = vld [vmem:[%s1 + $0x12c] sm:$0xf]
  %v106 = vld [vmem:[%s1 + $0x130] sm:$0xf]
  %v107 = vld [vmem:[%s1 + $0x134] sm:$0xf]
  %v108 = vld [vmem:[%s1 + $0x138] sm:$0xf]
  %v109 = vld [vmem:[%s1 + $0x13c] sm:$0xf]
  %v110 = vld [vmem:[%s1 + $0x140] sm:$0xf]
  %v111 = vld [vmem:[%s1 + $0x144] sm:$0xf]
  %v112 = vld [vmem:[%s1 + $0x148] sm:$0xf]
  %v113 = vld [vmem:[%s1 + $0x14c] sm:$0xf]
  %v114 = vld [vmem:[%s1 + $0x150] sm:$0xf]
  %v115 = vld [vmem:[%s1 + $0x154] sm:$0xf]
  %v116 = vld [vmem:[%s1 + $0x158] sm:$0xf]
  %v117 = vld [vmem:[%s1 + $0x15c] sm:$0xf]
  %v118 = vld [vmem:[%s1 + $0x160] sm:$0xf]
  %v119 = vld [vmem:[%s1 + $0x164] sm:$0xf]
  %v120 = vld [vmem:[%s1 + $0x168] sm:$0xf]
  %v121 = vld [vmem:[%s1 + $0x16c] sm:$0xf]
  %v122 = vld [vmem:[%s1 + $0x170] sm:$0xf]
  %v123 = vld [vmem:[%s1 + $0x174] sm:$0xf]
  %v124 = vld [vmem:[%s1 + $0x178] sm:$0xf]
  %v125 = vld [vmem:[%s1 + $0x17c] sm:$0xf]
  %v126 = vld [vmem:[%s1 + $0x180] sm:$0xf]
  %v127 = vld [vmem:[%s1 + $0x184] sm:$0xf]
  %v128 = vld [vmem:[%s1 + $0x188] sm:$0xf]
  %v129 = vld [vmem:[%s1 + $0x18c] sm:$0xf]
  %v130 = vld [vmem:[%s1 + $0x190] sm:$0xf]
  %v131 = vld [vmem:[%s1 + $0x194] sm:$0xf]
  %v132 = vld [vmem:[%s1 + $0x198] sm:$0xf]
  %v133 = vld [vmem:[%s1 + $0x19c] sm:$0xf]
  %v134 = vld [vmem:[%s1 + $0x1a0] sm:$0xf]
  %v135 = vld [vmem:[%s1 + $0x1a4] sm:$0xf]
  %v136 = vld [vmem:[%s1 + $0x1a8] sm:$0xf]
  %v137 = vld [vmem:[%s1 + $0x1ac] sm:$0xf]
  %v138 = vld [vmem:[%s1 + $0x1b0] sm:$0xf]
  %v139 = vld [vmem:[%s1 + $0x1b4] sm:$0xf]
  %v140 = vld [vmem:[%s1 + $0x1b8] sm:$0xf]
  %v141 = vld [vmem:[%s1 + $0x1bc] sm:$0xf]
  %v142 = vld [vmem:[%s1 + $0x1c0] sm:$0xf]
  %v143 = vld [vmem:[%s1 + $0x1c4] sm:$0xf]
  %v144 = vld [vmem:[%s1 + $0x1c8] sm:$0xf]
  %v145 = vld [vmem:[%s1 + $0x1cc] sm:$0xf]
  %v146 = vld [vmem:[%s1 + $0x1d0] sm:$0xf]
  %v147 = vld [vmem:[%s1 + $0x1d4] sm:$0xf]
  %v148 = vld [vmem:[%s1 + $0x1d8] sm:$0xf]
  %v149 = vld [vmem:[%s1 + $0x1dc] sm:$0xf]
  %v150 = vld [vmem:[%s1 + $0x1e0] sm:$0xf]
  %v151 = vld [vmem:[%s1 + $0x1e4] sm:$0xf]
  %v152 = vld [vmem:[%s1 + $0x1e8] sm:$0xf]
  %v153 = vld [vmem:[%s1 + $0x1ec] sm:$0xf]
  %v154 = vld [vmem:[%s1 + $0x1f0] sm:$0xf]
  %v155 = vld [vmem:[%s1 + $0x1f4] sm:$0xf]
  %v156 = vld [vmem:[%s1 + $0x1f8] sm:$0xf]
  %v157 = vld [vmem:[%s1 + $0x1fc] sm:$0xf]
  %v158 = vld [vmem:[%s1 + $0x200] sm:$0xf]
  %v159 = vld [vmem:[%s1 + $0x204] sm:$0xf]
  %v160 = vld [vmem:[%s1 + $0x208] sm:$0xf]
  %v161 = vld [vmem:[%s1 + $0x20c] sm:$0xf]
  %v162 = vld [vmem:[%s1 + $0x210] sm:$0xf]
  %v163 = vld [vmem:[%s1 + $0x214] sm:$0xf]
  %v164 = vld [vmem:[%s1 + $0x218] sm:$0xf]
  %v165 = vld [vmem:[%s1 + $0x21c] sm:$0xf]
  %v166 = vld [vmem:[%s1 + $0x220] sm:$0xf]
  %v167 = vld [vmem:[%s1 + $0x224] sm:$0xf]
  %v168 = vld [vmem:[%s1 + $0x228] sm:$0xf]
  %v169 = vld [vmem:[%s1 + $0x22c] sm:$0xf]
  %v170 = vld [vmem:[%s1 + $0x230] sm:$0xf]
  %v171 = vld [vmem:[%s1 + $0x234] sm:$0xf]
  %v172 = vld [vmem:[%s1 + $0x238] sm:$0xf]
  %v173 = vld [vmem:[%s1 + $0x23c] sm:$0xf]
  %v174 = vld [vmem:[%s2] sm:$0x1]
  %v176 = vlaneseq
  %v177 = vshrl.u32 %v176, 7
  %v178 = vsub.s32 0, %v177
  %v179 = vrot.slane %v174, %v178
  %v196 = vunpack.c.l.b16 %v15
  %v197 = vunpack.c.h.b16 %v15
  %v198 = vunpack.c.l.b16 %v16
  %v199 = vunpack.c.h.b16 %v16
  %v200 = vunpack.c.l.b16 %v17
  %v201 = vunpack.c.h.b16 %v17
  %v202 = vunpack.c.l.b16 %v18
  %v203 = vunpack.c.h.b16 %v18
  %v204 = vunpack.c.l.b16 %v19
  %v205 = vunpack.c.l.b16 %v20
  %v206 = vunpack.c.h.b16 %v20
  %v207 = vunpack.c.l.b16 %v21
  %v208 = vunpack.c.h.b16 %v21
  %v209 = vunpack.c.l.b16 %v22
  %v210 = vunpack.c.h.b16 %v22
  %v211 = vunpack.c.l.b16 %v23
  %v212 = vunpack.c.h.b16 %v23
  %v213 = vunpack.c.l.b16 %v24
  %v214 = vunpack.c.l.b16 %v25
  %v215 = vunpack.c.h.b16 %v25
  %v216 = vunpack.c.l.b16 %v26
  %v217 = vunpack.c.h.b16 %v26
  %v218 = vunpack.c.l.b16 %v27
  %v219 = vunpack.c.h.b16 %v27
  %v220 = vunpack.c.l.b16 %v28
  %v221 = vunpack.c.h.b16 %v28
  %v222 = vunpack.c.l.b16 %v29
  %v223 = vpack.c.b16 %v205, %v196
  %v224 = vpack.c.b16 %v206, %v197
  %v225 = vpack.c.b16 %v207, %v198
  %v226 = vpack.c.b16 %v208, %v199
  %v227 = vpack.c.b16 %v209, %v200
  %v228 = vpack.c.b16 %v210, %v201
  %v229 = vpack.c.b16 %v211, %v202
  %v230 = vpack.c.b16 %v212, %v203
  %v231 = vpack.c.b16 %v213, %v204
  %v232 = vpack.c.b16 %v214, %v214
  %v233 = vpack.c.b16 %v215, %v215
  %v234 = vpack.c.b16 %v216, %v216
  %v235 = vpack.c.b16 %v217, %v217
  %v236 = vpack.c.b16 %v218, %v218
  %v237 = vpack.c.b16 %v219, %v219
  %v238 = vpack.c.b16 %v220, %v220
  %v239 = vpack.c.b16 %v221, %v221
  %v240 = vpack.c.b16 %v222, %v222
  %v403 = vunpack.c.l.b16 %v30
  %v404 = vunpack.c.l.b16 %v31
  %v405 = vunpack.c.l.b16 %v32
  %v406 = vunpack.c.l.b16 %v33
  %v407 = vunpack.c.l.b16 %v34
  %v408 = vunpack.c.l.b16 %v35
  %v409 = vunpack.c.l.b16 %v36
  %v410 = vunpack.c.l.b16 %v37
  %v411 = vunpack.c.l.b16 %v38
  %v412 = vunpack.c.l.b16 %v39
  %v413 = vunpack.c.l.b16 %v40
  %v414 = vunpack.c.l.b16 %v41
  %v415 = vunpack.c.l.b16 %v42
  %v416 = vunpack.c.l.b16 %v43
  %v417 = vunpack.c.l.b16 %v44
  %v418 = vunpack.c.l.b16 %v45
  %v419 = vunpack.c.l.b16 %v46
  %v420 = vunpack.c.l.b16 %v47
  %v421 = vunpack.c.l.b16 %v48
  %v422 = vunpack.c.l.b16 %v49
  %v423 = vunpack.c.l.b16 %v50
  %v424 = vunpack.c.l.b16 %v51
  %v425 = vunpack.c.l.b16 %v52
  %v426 = vunpack.c.l.b16 %v53
  %v427 = vunpack.c.l.b16 %v54
  %v428 = vunpack.c.l.b16 %v55
  %v429 = vunpack.c.l.b16 %v56
  %v430 = vunpack.c.l.b16 %v57
  %v431 = vunpack.c.l.b16 %v58
  %v432 = vunpack.c.l.b16 %v59
  %v433 = vunpack.c.l.b16 %v60
  %v434 = vunpack.c.l.b16 %v61
  %v435 = vunpack.c.l.b16 %v62
  %v436 = vunpack.c.l.b16 %v63
  %v437 = vunpack.c.l.b16 %v64
  %v438 = vunpack.c.l.b16 %v65
  %v439 = vunpack.c.l.b16 %v66
  %v440 = vunpack.c.l.b16 %v67
  %v441 = vunpack.c.l.b16 %v68
  %v442 = vunpack.c.l.b16 %v69
  %v443 = vunpack.c.l.b16 %v70
  %v444 = vunpack.c.l.b16 %v71
  %v445 = vunpack.c.l.b16 %v72
  %v446 = vunpack.c.l.b16 %v73
  %v447 = vunpack.c.l.b16 %v74
  %v448 = vunpack.c.l.b16 %v75
  %v449 = vunpack.c.l.b16 %v76
  %v450 = vunpack.c.l.b16 %v77
  %v451 = vunpack.c.l.b16 %v78
  %v452 = vunpack.c.l.b16 %v79
  %v453 = vunpack.c.l.b16 %v80
  %v454 = vunpack.c.l.b16 %v81
  %v455 = vunpack.c.l.b16 %v82
  %v456 = vunpack.c.l.b16 %v83
  %v457 = vunpack.c.l.b16 %v84
  %v458 = vunpack.c.l.b16 %v85
  %v459 = vunpack.c.l.b16 %v86
  %v460 = vunpack.c.l.b16 %v87
  %v461 = vunpack.c.l.b16 %v88
  %v462 = vunpack.c.l.b16 %v89
  %v463 = vunpack.c.l.b16 %v90
  %v464 = vunpack.c.l.b16 %v91
  %v465 = vunpack.c.l.b16 %v92
  %v466 = vunpack.c.l.b16 %v93
  %v467 = vunpack.c.l.b16 %v94
  %v468 = vunpack.c.l.b16 %v95
  %v469 = vunpack.c.l.b16 %v96
  %v470 = vunpack.c.l.b16 %v97
  %v471 = vunpack.c.l.b16 %v98
  %v472 = vunpack.c.l.b16 %v99
  %v473 = vunpack.c.l.b16 %v100
  %v474 = vunpack.c.l.b16 %v101
  %v475 = vunpack.c.l.b16 %v102
  %v476 = vunpack.c.l.b16 %v103
  %v477 = vunpack.c.l.b16 %v104
  %v478 = vunpack.c.l.b16 %v105
  %v479 = vunpack.c.l.b16 %v106
  %v480 = vunpack.c.l.b16 %v107
  %v481 = vunpack.c.l.b16 %v108
  %v482 = vunpack.c.l.b16 %v109
  %v483 = vunpack.c.l.b16 %v110
  %v484 = vunpack.c.l.b16 %v111
  %v485 = vunpack.c.l.b16 %v112
  %v486 = vunpack.c.l.b16 %v113
  %v487 = vunpack.c.l.b16 %v114
  %v488 = vunpack.c.l.b16 %v115
  %v489 = vunpack.c.l.b16 %v116
  %v490 = vunpack.c.l.b16 %v117
  %v491 = vunpack.c.l.b16 %v118
  %v492 = vunpack.c.l.b16 %v119
  %v493 = vunpack.c.l.b16 %v120
  %v494 = vunpack.c.l.b16 %v121
  %v495 = vunpack.c.l.b16 %v122
  %v496 = vunpack.c.l.b16 %v123
  %v497 = vunpack.c.l.b16 %v124
  %v498 = vunpack.c.l.b16 %v125
  %v499 = vunpack.c.l.b16 %v126
  %v500 = vunpack.c.l.b16 %v127
  %v501 = vunpack.c.l.b16 %v128
  %v502 = vunpack.c.l.b16 %v129
  %v503 = vunpack.c.l.b16 %v130
  %v504 = vunpack.c.l.b16 %v131
  %v505 = vunpack.c.l.b16 %v132
  %v506 = vunpack.c.l.b16 %v133
  %v507 = vunpack.c.l.b16 %v134
  %v508 = vunpack.c.l.b16 %v135
  %v509 = vunpack.c.l.b16 %v136
  %v510 = vunpack.c.l.b16 %v137
  %v511 = vunpack.c.l.b16 %v138
  %v512 = vunpack.c.l.b16 %v139
  %v513 = vunpack.c.l.b16 %v140
  %v514 = vunpack.c.l.b16 %v141
  %v515 = vunpack.c.l.b16 %v142
  %v516 = vunpack.c.l.b16 %v143
  %v517 = vunpack.c.l.b16 %v144
  %v518 = vunpack.c.l.b16 %v145
  %v519 = vunpack.c.l.b16 %v146
  %v520 = vunpack.c.l.b16 %v147
  %v521 = vunpack.c.l.b16 %v148
  %v522 = vunpack.c.l.b16 %v149
  %v523 = vunpack.c.l.b16 %v150
  %v524 = vunpack.c.l.b16 %v151
  %v525 = vunpack.c.l.b16 %v152
  %v526 = vunpack.c.l.b16 %v153
  %v527 = vunpack.c.l.b16 %v154
  %v528 = vunpack.c.l.b16 %v155
  %v529 = vunpack.c.l.b16 %v156
  %v530 = vunpack.c.l.b16 %v157
  %v531 = vunpack.c.l.b16 %v158
  %v532 = vunpack.c.l.b16 %v159
  %v533 = vunpack.c.l.b16 %v160
  %v534 = vunpack.c.l.b16 %v161
  %v535 = vunpack.c.l.b16 %v162
  %v536 = vunpack.c.l.b16 %v163
  %v537 = vunpack.c.l.b16 %v164
  %v538 = vunpack.c.l.b16 %v165
  %v539 = vunpack.c.l.b16 %v166
  %v540 = vunpack.c.l.b16 %v167
  %v541 = vunpack.c.l.b16 %v168
  %v542 = vunpack.c.l.b16 %v169
  %v543 = vunpack.c.l.b16 %v170
  %v544 = vunpack.c.l.b16 %v171
  %v545 = vunpack.c.l.b16 %v172
  %v546 = vunpack.c.l.b16 %v173
  %v547 = vpack.c.b16 %v404, %v403
  %v548 = vpack.c.b16 %v406, %v405
  %v549 = vpack.c.b16 %v408, %v407
  %v550 = vpack.c.b16 %v410, %v409
  %v551 = vpack.c.b16 %v412, %v411
  %v552 = vpack.c.b16 %v414, %v413
  %v553 = vpack.c.b16 %v416, %v415
  %v554 = vpack.c.b16 %v418, %v417
  %v555 = vpack.c.b16 %v420, %v419
  %v556 = vpack.c.b16 %v422, %v421
  %v557 = vpack.c.b16 %v424, %v423
  %v558 = vpack.c.b16 %v426, %v425
  %v559 = vpack.c.b16 %v428, %v427
  %v560 = vpack.c.b16 %v430, %v429
  %v561 = vpack.c.b16 %v432, %v431
  %v562 = vpack.c.b16 %v434, %v433
  %v563 = vpack.c.b16 %v436, %v435
  %v564 = vpack.c.b16 %v438, %v437
  %v565 = vpack.c.b16 %v440, %v439
  %v566 = vpack.c.b16 %v442, %v441
  %v567 = vpack.c.b16 %v444, %v443
  %v568 = vpack.c.b16 %v446, %v445
  %v569 = vpack.c.b16 %v448, %v447
  %v570 = vpack.c.b16 %v450, %v449
  %v571 = vpack.c.b16 %v452, %v451
  %v572 = vpack.c.b16 %v454, %v453
  %v573 = vpack.c.b16 %v456, %v455
  %v574 = vpack.c.b16 %v458, %v457
  %v575 = vpack.c.b16 %v460, %v459
  %v576 = vpack.c.b16 %v462, %v461
  %v577 = vpack.c.b16 %v464, %v463
  %v578 = vpack.c.b16 %v466, %v465
  %v579 = vpack.c.b16 %v468, %v467
  %v580 = vpack.c.b16 %v470, %v469
  %v581 = vpack.c.b16 %v472, %v471
  %v582 = vpack.c.b16 %v474, %v473
  %v583 = vpack.c.b16 %v476, %v475
  %v584 = vpack.c.b16 %v478, %v477
  %v585 = vpack.c.b16 %v480, %v479
  %v586 = vpack.c.b16 %v482, %v481
  %v587 = vpack.c.b16 %v484, %v483
  %v588 = vpack.c.b16 %v486, %v485
  %v589 = vpack.c.b16 %v488, %v487
  %v590 = vpack.c.b16 %v490, %v489
  %v591 = vpack.c.b16 %v492, %v491
  %v592 = vpack.c.b16 %v494, %v493
  %v593 = vpack.c.b16 %v496, %v495
  %v594 = vpack.c.b16 %v498, %v497
  %v595 = vpack.c.b16 %v500, %v499
  %v596 = vpack.c.b16 %v502, %v501
  %v597 = vpack.c.b16 %v504, %v503
  %v598 = vpack.c.b16 %v506, %v505
  %v599 = vpack.c.b16 %v508, %v507
  %v600 = vpack.c.b16 %v510, %v509
  %v601 = vpack.c.b16 %v512, %v511
  %v602 = vpack.c.b16 %v514, %v513
  %v603 = vpack.c.b16 %v516, %v515
  %v604 = vpack.c.b16 %v518, %v517
  %v605 = vpack.c.b16 %v520, %v519
  %v606 = vpack.c.b16 %v522, %v521
  %v607 = vpack.c.b16 %v524, %v523
  %v608 = vpack.c.b16 %v526, %v525
  %v609 = vpack.c.b16 %v528, %v527
  %v610 = vpack.c.b16 %v530, %v529
  %v611 = vpack.c.b16 %v532, %v531
  %v612 = vpack.c.b16 %v534, %v533
  %v613 = vpack.c.b16 %v536, %v535
  %v614 = vpack.c.b16 %v538, %v537
  %v615 = vpack.c.b16 %v540, %v539
  %v616 = vpack.c.b16 %v542, %v541
  %v617 = vpack.c.b16 %v544, %v543
  %v618 = vpack.c.b16 %v546, %v545
  %691 = vmatprep.subr.bf16.mxu0 0
  %692 = vmatpush1.bf16.msra.mxu0 %v547
  %693 = vmatprep.subr.bf16.mxu0 0
  %694 = vmatpush1.bf16.msra.mxu0 %v548
  %695 = vmatprep.subr.bf16.mxu0 0
  %696 = vmatpush1.bf16.msra.mxu0 %v549
  %697 = vmatprep.subr.bf16.mxu0 0
  %698 = vmatpush1.bf16.msra.mxu0 %v550
  %699 = vmatprep.subr.bf16.mxu0 0
  %700 = vmatpush1.bf16.msra.mxu0 %v551
  %701 = vmatprep.subr.bf16.mxu0 0
  %702 = vmatpush1.bf16.msra.mxu0 %v552
  %703 = vmatprep.subr.bf16.mxu0 0
  %704 = vmatpush1.bf16.msra.mxu0 %v553
  %705 = vmatprep.subr.bf16.mxu0 0
  %706 = vmatpush1.bf16.msra.mxu0 %v554
  %707 = vmatprep.subr.bf16.mxu0 0
  %708 = vmatpush1.bf16.msra.mxu0 %v555
  %709 = vmatprep.subr.bf16.mxu0 0
  %710 = vmatpush1.bf16.msra.mxu0 %v556
  %711 = vmatprep.subr.bf16.mxu0 0
  %712 = vmatpush1.bf16.msra.mxu0 %v557
  %713 = vmatprep.subr.bf16.mxu0 0
  %714 = vmatpush1.bf16.msra.mxu0 %v558
  %715 = vmatprep.subr.bf16.mxu0 0
  %716 = vmatpush1.bf16.msra.mxu0 %v559
  %717 = vmatprep.subr.bf16.mxu0 0
  %718 = vmatpush1.bf16.msra.mxu0 %v560
  %719 = vmatprep.subr.bf16.mxu0 0
  %720 = vmatpush1.bf16.msra.mxu0 %v561
  %721 = vmatprep.subr.bf16.mxu0 0
  %722 = vmatpush1.bf16.msra.mxu0 %v562
  %723 = vmatprep.mubr.bf16.mxu0 %v224
  %724 = vmatmul.mubr.bf16.gmra.mrb[0].mxu0 %v223
  %v725 = vpop.f32.mrb[0].mxu0
  %v726 = vadd.f32 %v179, %v725
  %v727 = vpop.f32.mrb[0].mxu0
  %v728 = vpop.f32.mrb[0].mxu0
  %v729 = vadd.f32 %v179, %v728
  %v730 = vpop.f32.mrb[0].mxu0
  %731 = vmatprep.mubr.bf16.mxu0 %v233
  %732 = vmatmul.mubr.bf16.gmra.mrb[0].mxu0 %v232
  %v733 = vpop.f32.mrb[0].mxu0
  %v734 = vadd.f32 %v179, %v733
  %v735 = vpop.f32.mrb[0].mxu0
  %v736 = vpop.f32.mrb[0].mxu0
  %v737 = vpop.f32.mrb[0].mxu0
  %738 = vdwg.mxu0
  %739 = vmatprep.subr.bf16.mxu0 0
  %740 = vmatpush1.bf16.msra.mxu0 %v563
  %741 = vmatprep.subr.bf16.mxu0 0
  %742 = vmatpush1.bf16.msra.mxu0 %v564
  %743 = vmatprep.subr.bf16.mxu0 0
  %744 = vmatpush1.bf16.msra.mxu0 %v565
  %745 = vmatprep.subr.bf16.mxu0 0
  %746 = vmatpush1.bf16.msra.mxu0 %v566
  %747 = vmatprep.subr.bf16.mxu0 0
  %748 = vmatpush1.bf16.msra.mxu0 %v567
  %749 = vmatprep.subr.bf16.mxu0 0
  %750 = vmatpush1.bf16.msra.mxu0 %v568
  %751 = vmatprep.subr.bf16.mxu0 0
  %752 = vmatpush1.bf16.msra.mxu0 %v569
  %753 = vmatprep.subr.bf16.mxu0 0
  %754 = vmatpush1.bf16.msra.mxu0 %v570
  %755 = vmatprep.subr.bf16.mxu0 0
  %756 = vmatpush1.bf16.msra.mxu0 %v571
  %757 = vmatprep.subr.bf16.mxu0 0
  %758 = vmatpush1.bf16.msra.mxu0 %v572
  %759 = vmatprep.subr.bf16.mxu0 0
  %760 = vmatpush1.bf16.msra.mxu0 %v573
  %761 = vmatprep.subr.bf16.mxu0 0
  %762 = vmatpush1.bf16.msra.mxu0 %v574
  %763 = vmatprep.subr.bf16.mxu0 0
  %764 = vmatpush1.bf16.msra.mxu0 %v575
  %765 = vmatprep.subr.bf16.mxu0 0
  %766 = vmatpush1.bf16.msra.mxu0 %v576
  %767 = vmatprep.subr.bf16.mxu0 0
  %768 = vmatpush1.bf16.msra.mxu0 %v577
  %769 = vmatprep.subr.bf16.mxu0 0
  %770 = vmatpush1.bf16.msra.mxu0 %v578
  %771 = vmatprep.mubr.bf16.mxu0 %v226
  %772 = vmatmul.mubr.bf16.gmra.mrb[0].mxu0 %v225
  %v773 = vpop.f32.mrb[0].mxu0
  %v774 = vadd.f32 %v726, %v773
  %v775 = vpop.f32.mrb[0].mxu0
  %v776 = vpop.f32.mrb[0].mxu0
  %v777 = vadd.f32 %v729, %v776
  %v778 = vpop.f32.mrb[0].mxu0
  %779 = vmatprep.mubr.bf16.mxu0 %v235
  %780 = vmatmul.mubr.bf16.gmra.mrb[0].mxu0 %v234
  %v781 = vpop.f32.mrb[0].mxu0
  %v782 = vadd.f32 %v734, %v781
  %v783 = vpop.f32.mrb[0].mxu0
  %v784 = vpop.f32.mrb[0].mxu0
  %v785 = vpop.f32.mrb[0].mxu0
  %786 = vdwg.mxu0
  %787 = vmatprep.subr.bf16.mxu0 0
  %788 = vmatpush1.bf16.msra.mxu0 %v579
  %789 = vmatprep.subr.bf16.mxu0 0
  %790 = vmatpush1.bf16.msra.mxu0 %v580
  %791 = vmatprep.subr.bf16.mxu0 0
  %792 = vmatpush1.bf16.msra.mxu0 %v581
  %793 = vmatprep.subr.bf16.mxu0 0
  %794 = vmatpush1.bf16.msra.mxu0 %v582
  %795 = vmatprep.subr.bf16.mxu0 0
  %796 = vmatpush1.bf16.msra.mxu0 %v583
  %797 = vmatprep.subr.bf16.mxu0 0
  %798 = vmatpush1.bf16.msra.mxu0 %v584
  %799 = vmatprep.subr.bf16.mxu0 0
  %800 = vmatpush1.bf16.msra.mxu0 %v585
  %801 = vmatprep.subr.bf16.mxu0 0
  %802 = vmatpush1.bf16.msra.mxu0 %v586
  %803 = vmatprep.subr.bf16.mxu0 0
  %804 = vmatpush1.bf16.msra.mxu0 %v587
  %805 = vmatprep.subr.bf16.mxu0 0
  %806 = vmatpush1.bf16.msra.mxu0 %v588
  %807 = vmatprep.subr.bf16.mxu0 0
  %808 = vmatpush1.bf16.msra.mxu0 %v589
  %809 = vmatprep.subr.bf16.mxu0 0
  %810 = vmatpush1.bf16.msra.mxu0 %v590
  %811 = vmatprep.subr.bf16.mxu0 0
  %812 = vmatpush1.bf16.msra.mxu0 %v591
  %813 = vmatprep.subr.bf16.mxu0 0
  %814 = vmatpush1.bf16.msra.mxu0 %v592
  %815 = vmatprep.subr.bf16.mxu0 0
  %816 = vmatpush1.bf16.msra.mxu0 %v593
  %817 = vmatprep.subr.bf16.mxu0 0
  %818 = vmatpush1.bf16.msra.mxu0 %v594
  %819 = vmatprep.mubr.bf16.mxu0 %v228
  %820 = vmatmul.mubr.bf16.gmra.mrb[0].mxu0 %v227
  %v821 = vpop.f32.mrb[0].mxu0
  %v822 = vadd.f32 %v774, %v821
  %v823 = vpop.f32.mrb[0].mxu0
  %v824 = vpop.f32.mrb[0].mxu0
  %v825 = vadd.f32 %v777, %v824
  %v826 = vpop.f32.mrb[0].mxu0
  %827 = vmatprep.mubr.bf16.mxu0 %v237
  %828 = vmatmul.mubr.bf16.gmra.mrb[0].mxu0 %v236
  %v829 = vpop.f32.mrb[0].mxu0
  %v830 = vadd.f32 %v782, %v829
  %v831 = vpop.f32.mrb[0].mxu0
  %v832 = vpop.f32.mrb[0].mxu0
  %v833 = vpop.f32.mrb[0].mxu0
  %834 = vdwg.mxu0
  %835 = vmatprep.subr.bf16.mxu0 0
  %836 = vmatpush1.bf16.msra.mxu0 %v595
  %837 = vmatprep.subr.bf16.mxu0 0
  %838 = vmatpush1.bf16.msra.mxu0 %v596
  %839 = vmatprep.subr.bf16.mxu0 0
  %840 = vmatpush1.bf16.msra.mxu0 %v597
  %841 = vmatprep.subr.bf16.mxu0 0
  %842 = vmatpush1.bf16.msra.mxu0 %v598
  %843 = vmatprep.subr.bf16.mxu0 0
  %844 = vmatpush1.bf16.msra.mxu0 %v599
  %845 = vmatprep.subr.bf16.mxu0 0
  %846 = vmatpush1.bf16.msra.mxu0 %v600
  %847 = vmatprep.subr.bf16.mxu0 0
  %848 = vmatpush1.bf16.msra.mxu0 %v601
  %849 = vmatprep.subr.bf16.mxu0 0
  %850 = vmatpush1.bf16.msra.mxu0 %v602
  %851 = vmatprep.subr.bf16.mxu0 0
  %852 = vmatpush1.bf16.msra.mxu0 %v603
  %853 = vmatprep.subr.bf16.mxu0 0
  %854 = vmatpush1.bf16.msra.mxu0 %v604
  %855 = vmatprep.subr.bf16.mxu0 0
  %856 = vmatpush1.bf16.msra.mxu0 %v605
  %857 = vmatprep.subr.bf16.mxu0 0
  %858 = vmatpush1.bf16.msra.mxu0 %v606
  %859 = vmatprep.subr.bf16.mxu0 0
  %860 = vmatpush1.bf16.msra.mxu0 %v607
  %861 = vmatprep.subr.bf16.mxu0 0
  %862 = vmatpush1.bf16.msra.mxu0 %v608
  %863 = vmatprep.subr.bf16.mxu0 0
  %864 = vmatpush1.bf16.msra.mxu0 %v609
  %865 = vmatprep.subr.bf16.mxu0 0
  %866 = vmatpush1.bf16.msra.mxu0 %v610
  %867 = vmatprep.mubr.bf16.mxu0 %v230
  %868 = vmatmul.mubr.bf16.gmra.mrb[0].mxu0 %v229
  %v869 = vpop.f32.mrb[0].mxu0
  %v870 = vadd.f32 %v822, %v869
  %v871 = vpop.f32.mrb[0].mxu0
  %v872 = vpop.f32.mrb[0].mxu0
  %v873 = vadd.f32 %v825, %v872
  %v874 = vpop.f32.mrb[0].mxu0
  %875 = vmatprep.mubr.bf16.mxu0 %v239
  %876 = vmatmul.mubr.bf16.gmra.mrb[0].mxu0 %v238
  %v877 = vpop.f32.mrb[0].mxu0
  %v878 = vadd.f32 %v830, %v877
  %v879 = vpop.f32.mrb[0].mxu0
  %v880 = vpop.f32.mrb[0].mxu0
  %v881 = vpop.f32.mrb[0].mxu0
  %882 = vdwg.mxu0
  %883 = vmatprep.subr.bf16.mxu0 0
  %884 = vmatpush1.bf16.msra.mxu0 %v611
  %885 = vmatprep.subr.bf16.mxu0 0
  %886 = vmatpush1.bf16.msra.mxu0 %v612
  %887 = vmatprep.subr.bf16.mxu0 0
  %888 = vmatpush1.bf16.msra.mxu0 %v613
  %889 = vmatprep.subr.bf16.mxu0 0
  %890 = vmatpush1.bf16.msra.mxu0 %v614
  %891 = vmatprep.subr.bf16.mxu0 0
  %892 = vmatpush1.bf16.msra.mxu0 %v615
  %893 = vmatprep.subr.bf16.mxu0 0
  %894 = vmatpush1.bf16.msra.mxu0 %v616
  %895 = vmatprep.subr.bf16.mxu0 0
  %896 = vmatpush1.bf16.msra.mxu0 %v617
  %897 = vmatprep.subr.bf16.mxu0 0
  %898 = vmatpush1.bf16.msra.mxu0 %v618
  %899 = vmatprep.subr.bf16.mxu0 0
  %900 = vmatpush1.bf16.msra.mxu0 0
  %901 = vmatprep.subr.bf16.mxu0 0
  %902 = vmatpush1.bf16.msra.mxu0 0
  %903 = vmatprep.subr.bf16.mxu0 0
  %904 = vmatpush1.bf16.msra.mxu0 0
  %905 = vmatprep.subr.bf16.mxu0 0
  %906 = vmatpush1.bf16.msra.mxu0 0
  %907 = vmatprep.subr.bf16.mxu0 0
  %908 = vmatpush1.bf16.msra.mxu0 0
  %909 = vmatprep.subr.bf16.mxu0 0
  %910 = vmatpush1.bf16.msra.mxu0 0
  %911 = vmatprep.subr.bf16.mxu0 0
  %912 = vmatpush1.bf16.msra.mxu0 0
  %913 = vmatprep.subr.bf16.mxu0 0
  %914 = vmatpush1.bf16.msra.mxu0 0
  %915 = vmatprep.mubr.bf16.mxu0 0
  %916 = vmatmul.mubr.bf16.gmra.mrb[0].mxu0 %v231
  %v917 = vpop.f32.mrb[0].mxu0
  %v918 = vadd.f32 %v870, %v917
  %v919 = vpop.f32.mrb[0].mxu0
  %v920 = vpop.f32.mrb[0].mxu0
  %v921 = vadd.f32 %v873, %v920
  %v922 = vpop.f32.mrb[0].mxu0
  %923 = vmatprep.mubr.bf16.mxu0 0
  %924 = vmatmul.mubr.bf16.gmra.mrb[0].mxu0 %v240
  %v925 = vpop.f32.mrb[0].mxu0
  %v926 = vadd.f32 %v878, %v925
  %v927 = vpop.f32.mrb[0].mxu0
  %v928 = vpop.f32.mrb[0].mxu0
  %v929 = vpop.f32.mrb[0].mxu0
  %930 = vdwg.mxu0
  %v931 = vmax.f32 %v918, 0.0
  %v932 = vmax.f32 %v921, 0.0
  %v933 = vmax.f32 %v926, 0.0
  %v934 = vpack.c.bf16 %v932, %v931
  %v935 = vpack.c.bf16 %v933, %v933
  %v938 = vunpack.c.l.b16 %v934
  %v939 = vunpack.c.h.b16 %v934
  %v940 = vunpack.c.l.b16 %v935
  %v941 = vpack.c.b16 %v938, %v938
  %v942 = vpack.c.b16 %v939, %v939
  %v943 = vpack.c.b16 %v940, %v940
  %947 = vst [vmem:[%s3] sm:$0xf] %v941
  %948 = vst [vmem:[%s3 + $0x4] sm:$0xf] %v942
  %949 = vst [vmem:[%s3 + $0x8] sm:$0xf] %v943
  // Predicated region
  $region14: #{_lambda_.25} parent=0 // pred_check
    _
  $region15: #{_lambda_.25} parent=0 // pred_check_branch
    %951 = sbr.rel (0) target = $region17
  $region16: #{_lambda_.25} parent=0 // pred_region
    _
  $region17: #{_lambda_.25} parent=0 // pred_fallthru
    _
  // Predicated region
  $region18: #{_lambda_.25} parent=0 // pred_check
    _
  $region19: #{_lambda_.25} parent=0 // pred_check_branch
    %953 = sbr.rel (0) target = $region21
  $region20: #{_lambda_.25} parent=0 // pred_region
    _
  $region21: #{_lambda_.25} parent=0 // pred_fallthru
    _

// kernel: _lambda_.24
$region0: #{_lambda_.24}
  #allocation0 [shape = 'u32[]', space=smem, size = 0x4, offset = 0x4, fixed_abs, tag = 'smem constant byte address 0x4 - core index']
  #allocation1 [shape = 'u32[144,128]{1,0:T(1,128)}', space=vmem, size = 0x12000, scoped, tag = 'internal scratch']
  %s0 = inlined_call_operand.vmem [shape: bf16[24,1152], index: 0, kind: input, shape index: {}]
  %s1 = inlined_call_operand.vmem [shape: bf16[1152,128], index: 1, kind: input, shape index: {}]
  %s2 = inlined_call_operand.vmem [shape: f32[1,128], index: 2, kind: input, shape index: {}]
  %s3 = inlined_call_operand.vmem [shape: bf16[24,128], index: 3, kind: input, shape index: {}]
  %s4 = inlined_call_operand.vmem [shape: bf16[128,128], index: 4, kind: input, shape index: {}]
  %s5 = inlined_call_operand.vmem [shape: f32[1,128], index: 5, kind: input, shape index: {}]
  %s6 = inlined_call_operand.vmem [shape: bf16[24,128], index: 6, kind: output, shape index: {}]
  %s7 = sld [smem:[#allocation0]]
  $region34: #{_lambda_.24} parent=0
    _
  %s9 = ssub.s32 1, %s7
  %s10 = scalar_select 0, %s9, %s7
  // Predicated region
  $region2: #{_lambda_.24} parent=0 // pred_check
    _
  $region3: #{_lambda_.24} parent=0 // pred_check_branch
    %12 = sbr.rel (0) target = $region5
  $region4: #{_lambda_.24} parent=0 // pred_region
    _
  $region5: #{_lambda_.24} parent=0 // pred_fallthru
    _
  // Predicated region
  $region6: #{_lambda_.24} parent=0 // pred_check
    _
  $region7: #{_lambda_.24} parent=0 // pred_check_branch
    %14 = sbr.rel (0) target = $region9
  $region8: #{_lambda_.24} parent=0 // pred_region
    _
  $region9: #{_lambda_.24} parent=0 // pred_fallthru
    _
  // Predicated region
  $region10: #{_lambda_.24} parent=0 // pred_check
    _
  $region11: #{_lambda_.24} parent=0 // pred_check_branch
    %16 = sbr.rel (0) target = $region13
  $region12: #{_lambda_.24} parent=0 // pred_region
    _
  $region13: #{_lambda_.24} parent=0 // pred_fallthru
    _
  // Predicated region
  $region14: #{_lambda_.24} parent=0 // pred_check
    _
  $region15: #{_lambda_.24} parent=0 // pred_check_branch
    %18 = sbr.rel (0) target = $region17
  $region16: #{_lambda_.24} parent=0 // pred_region
    _
  $region17: #{_lambda_.24} parent=0 // pred_fallthru
    _
  // Predicated region
  $region18: #{_lambda_.24} parent=0 // pred_check
    _
  $region19: #{_lambda_.24} parent=0 // pred_check_branch
    %20 = sbr.rel (0) target = $region21
  $region20: #{_lambda_.24} parent=0 // pred_region
    _
  $region21: #{_lambda_.24} parent=0 // pred_fallthru
    _
  // Predicated region
  $region22: #{_lambda_.24} parent=0 // pred_check
    _
  $region23: #{_lambda_.24} parent=0 // pred_check_branch
    %22 = sbr.rel (0) target = $region25
  $region24: #{_lambda_.24} parent=0 // pred_region
    _
  $region25: #{_lambda_.24} parent=0 // pred_fallthru
    _
  %v24 = vld [vmem:[%s0] sm:$0xff]
  %v25 = vld [vmem:[%s0 + $0x8] sm:$0xff]
  %v26 = vld [vmem:[%s0 + $0x10] sm:$0xff]
  %v27 = vld [vmem:[%s0 + $0x18] sm:$0xff]
  %v28 = vld [vmem:[%s0 + $0x20] sm:$0xf]
  %v29 = vld [vmem:[%s0 + $0x24] sm:$0xff]
  %v30 = vld [vmem:[%s0 + $0x2c] sm:$0xff]
  %v31 = vld [vmem:[%s0 + $0x34] sm:$0xff]
  %v32 = vld [vmem:[%s0 + $0x3c] sm:$0xff]
  %v33 = vld [vmem:[%s0 + $0x44] sm:$0xf]
  %v34 = vld [vmem:[%s0 + $0x48] sm:$0xff]
  %v35 = vld [vmem:[%s0 + $0x50] sm:$0xff]
  %v36 = vld [vmem:[%s0 + $0x58] sm:$0xff]
  %v37 = vld [vmem:[%s0 + $0x60] sm:$0xff]
  %v38 = vld [vmem:[%s0 + $0x68] sm:$0xf]
  %v39 = vld [vmem:[%s1] sm:$0xf]
  %v40 = vld [vmem:[%s1 + $0x4] sm:$0xf]
  %v41 = vld [vmem:[%s1 + $0x8] sm:$0xf]
  %v42 = vld [vmem:[%s1 + $0xc] sm:$0xf]
  %v43 = vld [vmem:[%s1 + $0x10] sm:$0xf]
  %v44 = vld [vmem:[%s1 + $0x14] sm:$0xf]
  %v45 = vld [vmem:[%s1 + $0x18] sm:$0xf]
  %v46 = vld [vmem:[%s1 + $0x1c] sm:$0xf]
  %v47 = vld [vmem:[%s1 + $0x20] sm:$0xf]
  %v48 = vld [vmem:[%s1 + $0x24] sm:$0xf]
  %v49 = vld [vmem:[%s1 + $0x28] sm:$0xf]
  %v50 = vld [vmem:[%s1 + $0x2c] sm:$0xf]
  %v51 = vld [vmem:[%s1 + $0x30] sm:$0xf]
  %v52 = vld [vmem:[%s1 + $0x34] sm:$0xf]
  %v53 = vld [vmem:[%s1 + $0x38] sm:$0xf]
  %v54 = vld [vmem:[%s1 + $0x3c] sm:$0xf]
  %v55 = vld [vmem:[%s1 + $0x40] sm:$0xf]
  %v56 = vld [vmem:[%s1 + $0x44] sm:$0xf]
  %v57 = vld [vmem:[%s1 + $0x48] sm:$0xf]
  %v58 = vld [vmem:[%s1 + $0x4c] sm:$0xf]
  %v59 = vld [vmem:[%s1 + $0x50] sm:$0xf]
  %v60 = vld [vmem:[%s1 + $0x54] sm:$0xf]
  %v61 = vld [vmem:[%s1 + $0x58] sm:$0xf]
  %v62 = vld [vmem:[%s1 + $0x5c] sm:$0xf]
  %v63 = vld [vmem:[%s1 + $0x60] sm:$0xf]
  %v64 = vld [vmem:[%s1 + $0x64] sm:$0xf]
  %v65 = vld [vmem:[%s1 + $0x68] sm:$0xf]
  %v66 = vld [vmem:[%s1 + $0x6c] sm:$0xf]
  %v67 = vld [vmem:[%s1 + $0x70] sm:$0xf]
  %v68 = vld [vmem:[%s1 + $0x74] sm:$0xf]
  %v69 = vld [vmem:[%s1 + $0x78] sm:$0xf]
  %v70 = vld [vmem:[%s1 + $0x7c] sm:$0xf]
  %v71 = vld [vmem:[%s1 + $0x80] sm:$0xf]
  %v72 = vld [vmem:[%s1 + $0x84] sm:$0xf]
  %v73 = vld [vmem:[%s1 + $0x88] sm:$0xf]
  %v74 = vld [vmem:[%s1 + $0x8c] sm:$0xf]
  %v75 = vld [vmem:[%s1 + $0x90] sm:$0xf]
  %v76 = vld [vmem:[%s1 + $0x94] sm:$0xf]
  %v77 = vld [vmem:[%s1 + $0x98] sm:$0xf]
  %v78 = vld [vmem:[%s1 + $0x9c] sm:$0xf]
  %v79 = vld [vmem:[%s1 + $0xa0] sm:$0xf]
  %v80 = vld [vmem:[%s1 + $0xa4] sm:$0xf]
  %v81 = vld [vmem:[%s1 + $0xa8] sm:$0xf]
  %v82 = vld [vmem:[%s1 + $0xac] sm:$0xf]
  %v83 = vld [vmem:[%s1 + $0xb0] sm:$0xf]
  %v84 = vld [vmem:[%s1 + $0xb4] sm:$0xf]
  %v85 = vld [vmem:[%s1 + $0xb8] sm:$0xf]
  %v86 = vld [vmem:[%s1 + $0xbc] sm:$0xf]
  %v87 = vld [vmem:[%s1 + $0xc0] sm:$0xf]
  %v88 = vld [vmem:[%s1 + $0xc4] sm:$0xf]
  %v89 = vld [vmem:[%s1 + $0xc8] sm:$0xf]
  %v90 = vld [vmem:[%s1 + $0xcc] sm:$0xf]
  %v91 = vld [vmem:[%s1 + $0xd0] sm:$0xf]
  %v92 = vld [vmem:[%s1 + $0xd4] sm:$0xf]
  %v93 = vld [vmem:[%s1 + $0xd8] sm:$0xf]
  %v94 = vld [vmem:[%s1 + $0xdc] sm:$0xf]
  %v95 = vld [vmem:[%s1 + $0xe0] sm:$0xf]
  %v96 = vld [vmem:[%s1 + $0xe4] sm:$0xf]
  %v97 = vld [vmem:[%s1 + $0xe8] sm:$0xf]
  %v98 = vld [vmem:[%s1 + $0xec] sm:$0xf]
  %v99 = vld [vmem:[%s1 + $0xf0] sm:$0xf]
  %v100 = vld [vmem:[%s1 + $0xf4] sm:$0xf]
  %v101 = vld [vmem:[%s1 + $0xf8] sm:$0xf]
  %v102 = vld [vmem:[%s1 + $0xfc] sm:$0xf]
  %v103 = vld [vmem:[%s1 + $0x100] sm:$0xf]
  %v104 = vld [vmem:[%s1 + $0x104] sm:$0xf]
  %v105 = vld [vmem:[%s1 + $0x108] sm:$0xf]
  %v106 = vld [vmem:[%s1 + $0x10c] sm:$0xf]
  %v107 = vld [vmem:[%s1 + $0x110] sm:$0xf]
  %v108 = vld [vmem:[%s1 + $0x114] sm:$0xf]
  %v109 = vld [vmem:[%s1 + $0x118] sm:$0xf]
  %v110 = vld [vmem:[%s1 + $0x11c] sm:$0xf]
  %v111 = vld [vmem:[%s1 + $0x120] sm:$0xf]
  %v112 = vld [vmem:[%s1 + $0x124] sm:$0xf]
  %v113 = vld [vmem:[%s1 + $0x128] sm:$0xf]
  %v114 = vld [vmem:[%s1 + $0x12c] sm:$0xf]
  %v115 = vld [vmem:[%s1 + $0x130] sm:$0xf]
  %v116 = vld [vmem:[%s1 + $0x134] sm:$0xf]
  %v117 = vld [vmem:[%s1 + $0x138] sm:$0xf]
  %v118 = vld [vmem:[%s1 + $0x13c] sm:$0xf]
  %v119 = vld [vmem:[%s1 + $0x140] sm:$0xf]
  %v120 = vld [vmem:[%s1 + $0x144] sm:$0xf]
  %v121 = vld [vmem:[%s1 + $0x148] sm:$0xf]
  %v122 = vld [vmem:[%s1 + $0x14c] sm:$0xf]
  %v123 = vld [vmem:[%s1 + $0x150] sm:$0xf]
  %v124 = vld [vmem:[%s1 + $0x154] sm:$0xf]
  %v125 = vld [vmem:[%s1 + $0x158] sm:$0xf]
  %v126 = vld [vmem:[%s1 + $0x15c] sm:$0xf]
  %v127 = vld [vmem:[%s1 + $0x160] sm:$0xf]
  %v128 = vld [vmem:[%s1 + $0x164] sm:$0xf]
  %v129 = vld [vmem:[%s1 + $0x168] sm:$0xf]
  %v130 = vld [vmem:[%s1 + $0x16c] sm:$0xf]
  %v131 = vld [vmem:[%s1 + $0x170] sm:$0xf]
  %v132 = vld [vmem:[%s1 + $0x174] sm:$0xf]
  %v133 = vld [vmem:[%s1 + $0x178] sm:$0xf]
  %v134 = vld [vmem:[%s1 + $0x17c] sm:$0xf]
  %v135 = vld [vmem:[%s1 + $0x180] sm:$0xf]
  %v136 = vld [vmem:[%s1 + $0x184] sm:$0xf]
  %v137 = vld [vmem:[%s1 + $0x188] sm:$0xf]
  %v138 = vld [vmem:[%s1 + $0x18c] sm:$0xf]
  %v139 = vld [vmem:[%s1 + $0x190] sm:$0xf]
  %v140 = vld [vmem:[%s1 + $0x194] sm:$0xf]
  %v141 = vld [vmem:[%s1 + $0x198] sm:$0xf]
  %v142 = vld [vmem:[%s1 + $0x19c] sm:$0xf]
  %v143 = vld [vmem:[%s1 + $0x1a0] sm:$0xf]
  %v144 = vld [vmem:[%s1 + $0x1a4] sm:$0xf]
  %v145 = vld [vmem:[%s1 + $0x1a8] sm:$0xf]
  %v146 = vld [vmem:[%s1 + $0x1ac] sm:$0xf]
  %v147 = vld [vmem:[%s1 + $0x1b0] sm:$0xf]
  %v148 = vld [vmem:[%s1 + $0x1b4] sm:$0xf]
  %v149 = vld [vmem:[%s1 + $0x1b8] sm:$0xf]
  %v150 = vld [vmem:[%s1 + $0x1bc] sm:$0xf]
  %v151 = vld [vmem:[%s1 + $0x1c0] sm:$0xf]
  %v152 = vld [vmem:[%s1 + $0x1c4] sm:$0xf]
  %v153 = vld [vmem:[%s1 + $0x1c8] sm:$0xf]
  %v154 = vld [vmem:[%s1 + $0x1cc] sm:$0xf]
  %v155 = vld [vmem:[%s1 + $0x1d0] sm:$0xf]
  %v156 = vld [vmem:[%s1 + $0x1d4] sm:$0xf]
  %v157 = vld [vmem:[%s1 + $0x1d8] sm:$0xf]
  %v158 = vld [vmem:[%s1 + $0x1dc] sm:$0xf]
  %v159 = vld [vmem:[%s1 + $0x1e0] sm:$0xf]
  %v160 = vld [vmem:[%s1 + $0x1e4] sm:$0xf]
  %v161 = vld [vmem:[%s1 + $0x1e8] sm:$0xf]
  %v162 = vld [vmem:[%s1 + $0x1ec] sm:$0xf]
  %v163 = vld [vmem:[%s1 + $0x1f0] sm:$0xf]
  %v164 = vld [vmem:[%s1 + $0x1f4] sm:$0xf]
  %v165 = vld [vmem:[%s1 + $0x1f8] sm:$0xf]
  %v166 = vld [vmem:[%s1 + $0x1fc] sm:$0xf]
  %v167 = vld [vmem:[%s1 + $0x200] sm:$0xf]
  %v168 = vld [vmem:[%s1 + $0x204] sm:$0xf]
  %v169 = vld [vmem:[%s1 + $0x208] sm:$0xf]
  %v170 = vld [vmem:[%s1 + $0x20c] sm:$0xf]
  %v171 = vld [vmem:[%s1 + $0x210] sm:$0xf]
  %v172 = vld [vmem:[%s1 + $0x214] sm:$0xf]
  %v173 = vld [vmem:[%s1 + $0x218] sm:$0xf]
  %v174 = vld [vmem:[%s1 + $0x21c] sm:$0xf]
  %v175 = vld [vmem:[%s1 + $0x220] sm:$0xf]
  %v176 = vld [vmem:[%s1 + $0x224] sm:$0xf]
  %v177 = vld [vmem:[%s1 + $0x228] sm:$0xf]
  %v178 = vld [vmem:[%s1 + $0x22c] sm:$0xf]
  %v179 = vld [vmem:[%s1 + $0x230] sm:$0xf]
  %v180 = vld [vmem:[%s1 + $0x234] sm:$0xf]
  %v181 = vld [vmem:[%s1 + $0x238] sm:$0xf]
  %v182 = vld [vmem:[%s1 + $0x23c] sm:$0xf]
  %v183 = vld [vmem:[%s2] sm:$0x1]
  %v185 = vlaneseq
  %v186 = vshrl.u32 %v185, 7
  %v187 = vsub.s32 0, %v186
  %v188 = vrot.slane %v183, %v187
  %v205 = vunpack.c.l.b16 %v24
  %v206 = vunpack.c.h.b16 %v24
  %v207 = vunpack.c.l.b16 %v25
  %v208 = vunpack.c.h.b16 %v25
  %v209 = vunpack.c.l.b16 %v26
  %v210 = vunpack.c.h.b16 %v26
  %v211 = vunpack.c.l.b16 %v27
  %v212 = vunpack.c.h.b16 %v27
  %v213 = vunpack.c.l.b16 %v28
  %v214 = vunpack.c.l.b16 %v29
  %v215 = vunpack.c.h.b16 %v29
  %v216 = vunpack.c.l.b16 %v30
  %v217 = vunpack.c.h.b16 %v30
  %v218 = vunpack.c.l.b16 %v31
  %v219 = vunpack.c.h.b16 %v31
  %v220 = vunpack.c.l.b16 %v32
  %v221 = vunpack.c.h.b16 %v32
  %v222 = vunpack.c.l.b16 %v33
  %v223 = vunpack.c.l.b16 %v34
  %v224 = vunpack.c.h.b16 %v34
  %v225 = vunpack.c.l.b16 %v35
  %v226 = vunpack.c.h.b16 %v35
  %v227 = vunpack.c.l.b16 %v36
  %v228 = vunpack.c.h.b16 %v36
  %v229 = vunpack.c.l.b16 %v37
  %v230 = vunpack.c.h.b16 %v37
  %v231 = vunpack.c.l.b16 %v38
  %v232 = vpack.c.b16 %v214, %v205
  %v233 = vpack.c.b16 %v215, %v206
  %v234 = vpack.c.b16 %v216, %v207
  %v235 = vpack.c.b16 %v217, %v208
  %v236 = vpack.c.b16 %v218, %v209
  %v237 = vpack.c.b16 %v219, %v210
  %v238 = vpack.c.b16 %v220, %v211
  %v239 = vpack.c.b16 %v221, %v212
  %v240 = vpack.c.b16 %v222, %v213
  %v241 = vpack.c.b16 %v223, %v223
  %v242 = vpack.c.b16 %v224, %v224
  %v243 = vpack.c.b16 %v225, %v225
  %v244 = vpack.c.b16 %v226, %v226
  %v245 = vpack.c.b16 %v227, %v227
  %v246 = vpack.c.b16 %v228, %v228
  %v247 = vpack.c.b16 %v229, %v229
  %v248 = vpack.c.b16 %v230, %v230
  %v249 = vpack.c.b16 %v231, %v231
  %v412 = vunpack.c.l.b16 %v39
  %v413 = vunpack.c.l.b16 %v40
  %v414 = vunpack.c.l.b16 %v41
  %v415 = vunpack.c.l.b16 %v42
  %v416 = vunpack.c.l.b16 %v43
  %v417 = vunpack.c.l.b16 %v44
  %v418 = vunpack.c.l.b16 %v45
  %v419 = vunpack.c.l.b16 %v46
  %v420 = vunpack.c.l.b16 %v47
  %v421 = vunpack.c.l.b16 %v48
  %v422 = vunpack.c.l.b16 %v49
  %v423 = vunpack.c.l.b16 %v50
  %v424 = vunpack.c.l.b16 %v51
  %v425 = vunpack.c.l.b16 %v52
  %v426 = vunpack.c.l.b16 %v53
  %v427 = vunpack.c.l.b16 %v54
  %v428 = vunpack.c.l.b16 %v55
  %v429 = vunpack.c.l.b16 %v56
  %v430 = vunpack.c.l.b16 %v57
  %v431 = vunpack.c.l.b16 %v58
  %v432 = vunpack.c.l.b16 %v59
  %v433 = vunpack.c.l.b16 %v60
  %v434 = vunpack.c.l.b16 %v61
  %v435 = vunpack.c.l.b16 %v62
  %v436 = vunpack.c.l.b16 %v63
  %v437 = vunpack.c.l.b16 %v64
  %v438 = vunpack.c.l.b16 %v65
  %v439 = vunpack.c.l.b16 %v66
  %v440 = vunpack.c.l.b16 %v67
  %v441 = vunpack.c.l.b16 %v68
  %v442 = vunpack.c.l.b16 %v69
  %v443 = vunpack.c.l.b16 %v70
  %v444 = vunpack.c.l.b16 %v71
  %v445 = vunpack.c.l.b16 %v72
  %v446 = vunpack.c.l.b16 %v73
  %v447 = vunpack.c.l.b16 %v74
  %v448 = vunpack.c.l.b16 %v75
  %v449 = vunpack.c.l.b16 %v76
  %v450 = vunpack.c.l.b16 %v77
  %v451 = vunpack.c.l.b16 %v78
  %v452 = vunpack.c.l.b16 %v79
  %v453 = vunpack.c.l.b16 %v80
  %v454 = vunpack.c.l.b16 %v81
  %v455 = vunpack.c.l.b16 %v82
  %v456 = vunpack.c.l.b16 %v83
  %v457 = vunpack.c.l.b16 %v84
  %v458 = vunpack.c.l.b16 %v85
  %v459 = vunpack.c.l.b16 %v86
  %v460 = vunpack.c.l.b16 %v87
  %v461 = vunpack.c.l.b16 %v88
  %v462 = vunpack.c.l.b16 %v89
  %v463 = vunpack.c.l.b16 %v90
  %v464 = vunpack.c.l.b16 %v91
  %v465 = vunpack.c.l.b16 %v92
  %v466 = vunpack.c.l.b16 %v93
  %v467 = vunpack.c.l.b16 %v94
  %v468 = vunpack.c.l.b16 %v95
  %v469 = vunpack.c.l.b16 %v96
  %v470 = vunpack.c.l.b16 %v97
  %v471 = vunpack.c.l.b16 %v98
  %v472 = vunpack.c.l.b16 %v99
  %v473 = vunpack.c.l.b16 %v100
  %v474 = vunpack.c.l.b16 %v101
  %v475 = vunpack.c.l.b16 %v102
  %v476 = vunpack.c.l.b16 %v103
  %v477 = vunpack.c.l.b16 %v104
  %v478 = vunpack.c.l.b16 %v105
  %v479 = vunpack.c.l.b16 %v106
  %v480 = vunpack.c.l.b16 %v107
  %v481 = vunpack.c.l.b16 %v108
  %v482 = vunpack.c.l.b16 %v109
  %v483 = vunpack.c.l.b16 %v110
  %v484 = vunpack.c.l.b16 %v111
  %v485 = vunpack.c.l.b16 %v112
  %v486 = vunpack.c.l.b16 %v113
  %v487 = vunpack.c.l.b16 %v114
  %v488 = vunpack.c.l.b16 %v115
  %v489 = vunpack.c.l.b16 %v116
  %v490 = vunpack.c.l.b16 %v117
  %v491 = vunpack.c.l.b16 %v118
  %v492 = vunpack.c.l.b16 %v119
  %v493 = vunpack.c.l.b16 %v120
  %v494 = vunpack.c.l.b16 %v121
  %v495 = vunpack.c.l.b16 %v122
  %v496 = vunpack.c.l.b16 %v123
  %v497 = vunpack.c.l.b16 %v124
  %v498 = vunpack.c.l.b16 %v125
  %v499 = vunpack.c.l.b16 %v126
  %v500 = vunpack.c.l.b16 %v127
  %v501 = vunpack.c.l.b16 %v128
  %v502 = vunpack.c.l.b16 %v129
  %v503 = vunpack.c.l.b16 %v130
  %v504 = vunpack.c.l.b16 %v131
  %v505 = vunpack.c.l.b16 %v132
  %v506 = vunpack.c.l.b16 %v133
  %v507 = vunpack.c.l.b16 %v134
  %v508 = vunpack.c.l.b16 %v135
  %v509 = vunpack.c.l.b16 %v136
  %v510 = vunpack.c.l.b16 %v137
  %v511 = vunpack.c.l.b16 %v138
  %v512 = vunpack.c.l.b16 %v139
  %v513 = vunpack.c.l.b16 %v140
  %v514 = vunpack.c.l.b16 %v141
  %v515 = vunpack.c.l.b16 %v142
  %v516 = vunpack.c.l.b16 %v143
  %v517 = vunpack.c.l.b16 %v144
  %v518 = vunpack.c.l.b16 %v145
  %v519 = vunpack.c.l.b16 %v146
  %v520 = vunpack.c.l.b16 %v147
  %v521 = vunpack.c.l.b16 %v148
  %v522 = vunpack.c.l.b16 %v149
  %v523 = vunpack.c.l.b16 %v150
  %v524 = vunpack.c.l.b16 %v151
  %v525 = vunpack.c.l.b16 %v152
  %v526 = vunpack.c.l.b16 %v153
  %v527 = vunpack.c.l.b16 %v154
  %v528 = vunpack.c.l.b16 %v155
  %v529 = vunpack.c.l.b16 %v156
  %v530 = vunpack.c.l.b16 %v157
  %v531 = vunpack.c.l.b16 %v158
  %v532 = vunpack.c.l.b16 %v159
  %v533 = vunpack.c.l.b16 %v160
  %v534 = vunpack.c.l.b16 %v161
  %v535 = vunpack.c.l.b16 %v162
  %v536 = vunpack.c.l.b16 %v163
  %v537 = vunpack.c.l.b16 %v164
  %v538 = vunpack.c.l.b16 %v165
  %v539 = vunpack.c.l.b16 %v166
  %v540 = vunpack.c.l.b16 %v167
  %v541 = vunpack.c.l.b16 %v168
  %v542 = vunpack.c.l.b16 %v169
  %v543 = vunpack.c.l.b16 %v170
  %v544 = vunpack.c.l.b16 %v171
  %v545 = vunpack.c.l.b16 %v172
  %v546 = vunpack.c.l.b16 %v173
  %v547 = vunpack.c.l.b16 %v174
  %v548 = vunpack.c.l.b16 %v175
  %v549 = vunpack.c.l.b16 %v176
  %v550 = vunpack.c.l.b16 %v177
  %v551 = vunpack.c.l.b16 %v178
  %v552 = vunpack.c.l.b16 %v179
  %v553 = vunpack.c.l.b16 %v180
  %v554 = vunpack.c.l.b16 %v181
  %v555 = vunpack.c.l.b16 %v182
  %v556 = vpack.c.b16 %v413, %v412
  %v557 = vpack.c.b16 %v415, %v414
  %v558 = vpack.c.b16 %v417, %v416
  %v559 = vpack.c.b16 %v419, %v418
  %v560 = vpack.c.b16 %v421, %v420
  %v561 = vpack.c.b16 %v423, %v422
  %v562 = vpack.c.b16 %v425, %v424
  %v563 = vpack.c.b16 %v427, %v426
  %v564 = vpack.c.b16 %v429, %v428
  %v565 = vpack.c.b16 %v431, %v430
  %v566 = vpack.c.b16 %v433, %v432
  %v567 = vpack.c.b16 %v435, %v434
  %v568 = vpack.c.b16 %v437, %v436
  %v569 = vpack.c.b16 %v439, %v438
  %v570 = vpack.c.b16 %v441, %v440
  %v571 = vpack.c.b16 %v443, %v442
  %v572 = vpack.c.b16 %v445, %v444
  %v573 = vpack.c.b16 %v447, %v446
  %v574 = vpack.c.b16 %v449, %v448
  %v575 = vpack.c.b16 %v451, %v450
  %v576 = vpack.c.b16 %v453, %v452
  %v577 = vpack.c.b16 %v455, %v454
  %v578 = vpack.c.b16 %v457, %v456
  %v579 = vpack.c.b16 %v459, %v458
  %v580 = vpack.c.b16 %v461, %v460
  %v581 = vpack.c.b16 %v463, %v462
  %v582 = vpack.c.b16 %v465, %v464
  %v583 = vpack.c.b16 %v467, %v466
  %v584 = vpack.c.b16 %v469, %v468
  %v585 = vpack.c.b16 %v471, %v470
  %v586 = vpack.c.b16 %v473, %v472
  %v587 = vpack.c.b16 %v475, %v474
  %v588 = vpack.c.b16 %v477, %v476
  %v589 = vpack.c.b16 %v479, %v478
  %v590 = vpack.c.b16 %v481, %v480
  %v591 = vpack.c.b16 %v483, %v482
  %v592 = vpack.c.b16 %v485, %v484
  %v593 = vpack.c.b16 %v487, %v486
  %v594 = vpack.c.b16 %v489, %v488
  %v595 = vpack.c.b16 %v491, %v490
  %v596 = vpack.c.b16 %v493, %v492
  %v597 = vpack.c.b16 %v495, %v494
  %v598 = vpack.c.b16 %v497, %v496
  %v599 = vpack.c.b16 %v499, %v498
  %v600 = vpack.c.b16 %v501, %v500
  %v601 = vpack.c.b16 %v503, %v502
  %v602 = vpack.c.b16 %v505, %v504
  %v603 = vpack.c.b16 %v507, %v506
  %v604 = vpack.c.b16 %v509, %v508
  %v605 = vpack.c.b16 %v511, %v510
  %v606 = vpack.c.b16 %v513, %v512
  %v607 = vpack.c.b16 %v515, %v514
  %v608 = vpack.c.b16 %v517, %v516
  %v609 = vpack.c.b16 %v519, %v518
  %v610 = vpack.c.b16 %v521, %v520
  %v611 = vpack.c.b16 %v523, %v522
  %v612 = vpack.c.b16 %v525, %v524
  %v613 = vpack.c.b16 %v527, %v526
  %v614 = vpack.c.b16 %v529, %v528
  %v615 = vpack.c.b16 %v531, %v530
  %v616 = vpack.c.b16 %v533, %v532
  %v617 = vpack.c.b16 %v535, %v534
  %v618 = vpack.c.b16 %v537, %v536
  %v619 = vpack.c.b16 %v539, %v538
  %v620 = vpack.c.b16 %v541, %v540
  %v621 = vpack.c.b16 %v543, %v542
  %v622 = vpack.c.b16 %v545, %v544
  %v623 = vpack.c.b16 %v547, %v546
  %v624 = vpack.c.b16 %v549, %v548
  %v625 = vpack.c.b16 %v551, %v550
  %v626 = vpack.c.b16 %v553, %v552
  %v627 = vpack.c.b16 %v555, %v554
  %700 = vmatprep.subr.bf16.mxu0 0
  %701 = vmatpush1.bf16.msra.mxu0 %v556
  %702 = vmatprep.subr.bf16.mxu0 0
  %703 = vmatpush1.bf16.msra.mxu0 %v557
  %704 = vmatprep.subr.bf16.mxu0 0
  %705 = vmatpush1.bf16.msra.mxu0 %v558
  %706 = vmatprep.subr.bf16.mxu0 0
  %707 = vmatpush1.bf16.msra.mxu0 %v559
  %708 = vmatprep.subr.bf16.mxu0 0
  %709 = vmatpush1.bf16.msra.mxu0 %v560
  %710 = vmatprep.subr.bf16.mxu0 0
  %711 = vmatpush1.bf16.msra.mxu0 %v561
  %712 = vmatprep.subr.bf16.mxu0 0
  %713 = vmatpush1.bf16.msra.mxu0 %v562
  %714 = vmatprep.subr.bf16.mxu0 0
  %715 = vmatpush1.bf16.msra.mxu0 %v563
  %716 = vmatprep.subr.bf16.mxu0 0
  %717 = vmatpush1.bf16.msra.mxu0 %v564
  %718 = vmatprep.subr.bf16.mxu0 0
  %719 = vmatpush1.bf16.msra.mxu0 %v565
  %720 = vmatprep.subr.bf16.mxu0 0
  %721 = vmatpush1.bf16.msra.mxu0 %v566
  %722 = vmatprep.subr.bf16.mxu0 0
  %723 = vmatpush1.bf16.msra.mxu0 %v567
  %724 = vmatprep.subr.bf16.mxu0 0
  %725 = vmatpush1.bf16.msra.mxu0 %v568
  %726 = vmatprep.subr.bf16.mxu0 0
  %727 = vmatpush1.bf16.msra.mxu0 %v569
  %728 = vmatprep.subr.bf16.mxu0 0
  %729 = vmatpush1.bf16.msra.mxu0 %v570
  %730 = vmatprep.subr.bf16.mxu0 0
  %731 = vmatpush1.bf16.msra.mxu0 %v571
  %732 = vmatprep.mubr.bf16.mxu0 %v233
  %733 = vmatmul.mubr.bf16.gmra.mrb[0].mxu0 %v232
  %v734 = vpop.f32.mrb[0].mxu0
  %v735 = vadd.f32 %v188, %v734
  %v736 = vpop.f32.mrb[0].mxu0
  %v737 = vpop.f32.mrb[0].mxu0
  %v738 = vadd.f32 %v188, %v737
  %v739 = vpop.f32.mrb[0].mxu0
  %740 = vmatprep.mubr.bf16.mxu0 %v242
  %741 = vmatmul.mubr.bf16.gmra.mrb[0].mxu0 %v241
  %v742 = vpop.f32.mrb[0].mxu0
  %v743 = vadd.f32 %v188, %v742
  %v744 = vpop.f32.mrb[0].mxu0
  %v745 = vpop.f32.mrb[0].mxu0
  %v746 = vpop.f32.mrb[0].mxu0
  %747 = vdwg.mxu0
  %748 = vmatprep.subr.bf16.mxu0 0
  %749 = vmatpush1.bf16.msra.mxu0 %v572
  %750 = vmatprep.subr.bf16.mxu0 0
  %751 = vmatpush1.bf16.msra.mxu0 %v573
  %752 = vmatprep.subr.bf16.mxu0 0
  %753 = vmatpush1.bf16.msra.mxu0 %v574
  %754 = vmatprep.subr.bf16.mxu0 0
  %755 = vmatpush1.bf16.msra.mxu0 %v575
  %756 = vmatprep.subr.bf16.mxu0 0
  %757 = vmatpush1.bf16.msra.mxu0 %v576
  %758 = vmatprep.subr.bf16.mxu0 0
  %759 = vmatpush1.bf16.msra.mxu0 %v577
  %760 = vmatprep.subr.bf16.mxu0 0
  %761 = vmatpush1.bf16.msra.mxu0 %v578
  %762 = vmatprep.subr.bf16.mxu0 0
  %763 = vmatpush1.bf16.msra.mxu0 %v579
  %764 = vmatprep.subr.bf16.mxu0 0
  %765 = vmatpush1.bf16.msra.mxu0 %v580
  %766 = vmatprep.subr.bf16.mxu0 0
  %767 = vmatpush1.bf16.msra.mxu0 %v581
  %768 = vmatprep.subr.bf16.mxu0 0
  %769 = vmatpush1.bf16.msra.mxu0 %v582
  %770 = vmatprep.subr.bf16.mxu0 0
  %771 = vmatpush1.bf16.msra.mxu0 %v583
  %772 = vmatprep.subr.bf16.mxu0 0
  %773 = vmatpush1.bf16.msra.mxu0 %v584
  %774 = vmatprep.subr.bf16.mxu0 0
  %775 = vmatpush1.bf16.msra.mxu0 %v585
  %776 = vmatprep.subr.bf16.mxu0 0
  %777 = vmatpush1.bf16.msra.mxu0 %v586
  %778 = vmatprep.subr.bf16.mxu0 0
  %779 = vmatpush1.bf16.msra.mxu0 %v587
  %780 = vmatprep.mubr.bf16.mxu0 %v235
  %781 = vmatmul.mubr.bf16.gmra.mrb[0].mxu0 %v234
  %v782 = vpop.f32.mrb[0].mxu0
  %v783 = vadd.f32 %v735, %v782
  %v784 = vpop.f32.mrb[0].mxu0
  %v785 = vpop.f32.mrb[0].mxu0
  %v786 = vadd.f32 %v738, %v785
  %v787 = vpop.f32.mrb[0].mxu0
  %788 = vmatprep.mubr.bf16.mxu0 %v244
  %789 = vmatmul.mubr.bf16.gmra.mrb[0].mxu0 %v243
  %v790 = vpop.f32.mrb[0].mxu0
  %v791 = vadd.f32 %v743, %v790
  %v792 = vpop.f32.mrb[0].mxu0
  %v793 = vpop.f32.mrb[0].mxu0
  %v794 = vpop.f32.mrb[0].mxu0
  %795 = vdwg.mxu0
  %796 = vmatprep.subr.bf16.mxu0 0
  %797 = vmatpush1.bf16.msra.mxu0 %v588
  %798 = vmatprep.subr.bf16.mxu0 0
  %799 = vmatpush1.bf16.msra.mxu0 %v589
  %800 = vmatprep.subr.bf16.mxu0 0
  %801 = vmatpush1.bf16.msra.mxu0 %v590
  %802 = vmatprep.subr.bf16.mxu0 0
  %803 = vmatpush1.bf16.msra.mxu0 %v591
  %804 = vmatprep.subr.bf16.mxu0 0
  %805 = vmatpush1.bf16.msra.mxu0 %v592
  %806 = vmatprep.subr.bf16.mxu0 0
  %807 = vmatpush1.bf16.msra.mxu0 %v593
  %808 = vmatprep.subr.bf16.mxu0 0
  %809 = vmatpush1.bf16.msra.mxu0 %v594
  %810 = vmatprep.subr.bf16.mxu0 0
  %811 = vmatpush1.bf16.msra.mxu0 %v595
  %812 = vmatprep.subr.bf16.mxu0 0
  %813 = vmatpush1.bf16.msra.mxu0 %v596
  %814 = vmatprep.subr.bf16.mxu0 0
  %815 = vmatpush1.bf16.msra.mxu0 %v597
  %816 = vmatprep.subr.bf16.mxu0 0
  %817 = vmatpush1.bf16.msra.mxu0 %v598
  %818 = vmatprep.subr.bf16.mxu0 0
  %819 = vmatpush1.bf16.msra.mxu0 %v599
  %820 = vmatprep.subr.bf16.mxu0 0
  %821 = vmatpush1.bf16.msra.mxu0 %v600
  %822 = vmatprep.subr.bf16.mxu0 0
  %823 = vmatpush1.bf16.msra.mxu0 %v601
  %824 = vmatprep.subr.bf16.mxu0 0
  %825 = vmatpush1.bf16.msra.mxu0 %v602
  %826 = vmatprep.subr.bf16.mxu0 0
  %827 = vmatpush1.bf16.msra.mxu0 %v603
  %828 = vmatprep.mubr.bf16.mxu0 %v237
  %829 = vmatmul.mubr.bf16.gmra.mrb[0].mxu0 %v236
  %v830 = vpop.f32.mrb[0].mxu0
  %v831 = vadd.f32 %v783, %v830
  %v832 = vpop.f32.mrb[0].mxu0
  %v833 = vpop.f32.mrb[0].mxu0
  %v834 = vadd.f32 %v786, %v833
  %v835 = vpop.f32.mrb[0].mxu0
  %836 = vmatprep.mubr.bf16.mxu0 %v246
  %837 = vmatmul.mubr.bf16.gmra.mrb[0].mxu0 %v245
  %v838 = vpop.f32.mrb[0].mxu0
  %v839 = vadd.f32 %v791, %v838
  %v840 = vpop.f32.mrb[0].mxu0
  %v841 = vpop.f32.mrb[0].mxu0
  %v842 = vpop.f32.mrb[0].mxu0
  %843 = vdwg.mxu0
  %844 = vmatprep.subr.bf16.mxu0 0
  %845 = vmatpush1.bf16.msra.mxu0 %v604
  %846 = vmatprep.subr.bf16.mxu0 0
  %847 = vmatpush1.bf16.msra.mxu0 %v605
  %848 = vmatprep.subr.bf16.mxu0 0
  %849 = vmatpush1.bf16.msra.mxu0 %v606
  %850 = vmatprep.subr.bf16.mxu0 0
  %851 = vmatpush1.bf16.msra.mxu0 %v607
  %852 = vmatprep.subr.bf16.mxu0 0
  %853 = vmatpush1.bf16.msra.mxu0 %v608
  %854 = vmatprep.subr.bf16.mxu0 0
  %855 = vmatpush1.bf16.msra.mxu0 %v609
  %856 = vmatprep.subr.bf16.mxu0 0
  %857 = vmatpush1.bf16.msra.mxu0 %v610
  %858 = vmatprep.subr.bf16.mxu0 0
  %859 = vmatpush1.bf16.msra.mxu0 %v611
  %860 = vmatprep.subr.bf16.mxu0 0
  %861 = vmatpush1.bf16.msra.mxu0 %v612
  %862 = vmatprep.subr.bf16.mxu0 0
  %863 = vmatpush1.bf16.msra.mxu0 %v613
  %864 = vmatprep.subr.bf16.mxu0 0
  %865 = vmatpush1.bf16.msra.mxu0 %v614
  %866 = vmatprep.subr.bf16.mxu0 0
  %867 = vmatpush1.bf16.msra.mxu0 %v615
  %868 = vmatprep.subr.bf16.mxu0 0
  %869 = vmatpush1.bf16.msra.mxu0 %v616
  %870 = vmatprep.subr.bf16.mxu0 0
  %871 = vmatpush1.bf16.msra.mxu0 %v617
  %872 = vmatprep.subr.bf16.mxu0 0
  %873 = vmatpush1.bf16.msra.mxu0 %v618
  %874 = vmatprep.subr.bf16.mxu0 0
  %875 = vmatpush1.bf16.msra.mxu0 %v619
  %876 = vmatprep.mubr.bf16.mxu0 %v239
  %877 = vmatmul.mubr.bf16.gmra.mrb[0].mxu0 %v238
  %v878 = vpop.f32.mrb[0].mxu0
  %v879 = vadd.f32 %v831, %v878
  %v880 = vpop.f32.mrb[0].mxu0
  %v881 = vpop.f32.mrb[0].mxu0
  %v882 = vadd.f32 %v834, %v881
  %v883 = vpop.f32.mrb[0].mxu0
  %884 = vmatprep.mubr.bf16.mxu0 %v248
  %885 = vmatmul.mubr.bf16.gmra.mrb[0].mxu0 %v247
  %v886 = vpop.f32.mrb[0].mxu0
  %v887 = vadd.f32 %v839, %v886
  %v888 = vpop.f32.mrb[0].mxu0
  %v889 = vpop.f32.mrb[0].mxu0
  %v890 = vpop.f32.mrb[0].mxu0
  %891 = vdwg.mxu0
  %892 = vmatprep.subr.bf16.mxu0 0
  %893 = vmatpush1.bf16.msra.mxu0 %v620
  %894 = vmatprep.subr.bf16.mxu0 0
  %895 = vmatpush1.bf16.msra.mxu0 %v621
  %896 = vmatprep.subr.bf16.mxu0 0
  %897 = vmatpush1.bf16.msra.mxu0 %v622
  %898 = vmatprep.subr.bf16.mxu0 0
  %899 = vmatpush1.bf16.msra.mxu0 %v623
  %900 = vmatprep.subr.bf16.mxu0 0
  %901 = vmatpush1.bf16.msra.mxu0 %v624
  %902 = vmatprep.subr.bf16.mxu0 0
  %903 = vmatpush1.bf16.msra.mxu0 %v625
  %904 = vmatprep.subr.bf16.mxu0 0
  %905 = vmatpush1.bf16.msra.mxu0 %v626
  %906 = vmatprep.subr.bf16.mxu0 0
  %907 = vmatpush1.bf16.msra.mxu0 %v627
  %908 = vmatprep.subr.bf16.mxu0 0
  %909 = vmatpush1.bf16.msra.mxu0 0
  %910 = vmatprep.subr.bf16.mxu0 0
  %911 = vmatpush1.bf16.msra.mxu0 0
  %912 = vmatprep.subr.bf16.mxu0 0
  %913 = vmatpush1.bf16.msra.mxu0 0
  %914 = vmatprep.subr.bf16.mxu0 0
  %915 = vmatpush1.bf16.msra.mxu0 0
  %916 = vmatprep.subr.bf16.mxu0 0
  %917 = vmatpush1.bf16.msra.mxu0 0
  %918 = vmatprep.subr.bf16.mxu0 0
  %919 = vmatpush1.bf16.msra.mxu0 0
  %920 = vmatprep.subr.bf16.mxu0 0
  %921 = vmatpush1.bf16.msra.mxu0 0
  %922 = vmatprep.subr.bf16.mxu0 0
  %923 = vmatpush1.bf16.msra.mxu0 0
  %924 = vmatprep.mubr.bf16.mxu0 0
  %925 = vmatmul.mubr.bf16.gmra.mrb[0].mxu0 %v240
  %v926 = vpop.f32.mrb[0].mxu0
  %v927 = vadd.f32 %v879, %v926
  %v928 = vpop.f32.mrb[0].mxu0
  %v929 = vpop.f32.mrb[0].mxu0
  %v930 = vadd.f32 %v882, %v929
  %v931 = vpop.f32.mrb[0].mxu0
  %932 = vmatprep.mubr.bf16.mxu0 0
  %933 = vmatmul.mubr.bf16.gmra.mrb[0].mxu0 %v249
  %v934 = vpop.f32.mrb[0].mxu0
  %v935 = vadd.f32 %v887, %v934
  %v936 = vpop.f32.mrb[0].mxu0
  %v937 = vpop.f32.mrb[0].mxu0
  %v938 = vpop.f32.mrb[0].mxu0
  %939 = vdwg.mxu0
  %v940 = vld [vmem:[%s3] sm:$0xf]
  %v941 = vld [vmem:[%s3 + $0x4] sm:$0xf]
  %v942 = vld [vmem:[%s3 + $0x8] sm:$0xf]
  %v943 = vld [vmem:[%s4] sm:$0xf]
  %v944 = vld [vmem:[%s4 + $0x4] sm:$0xf]
  %v945 = vld [vmem:[%s4 + $0x8] sm:$0xf]
  %v946 = vld [vmem:[%s4 + $0xc] sm:$0xf]
  %v947 = vld [vmem:[%s4 + $0x10] sm:$0xf]
  %v948 = vld [vmem:[%s4 + $0x14] sm:$0xf]
  %v949 = vld [vmem:[%s4 + $0x18] sm:$0xf]
  %v950 = vld [vmem:[%s4 + $0x1c] sm:$0xf]
  %v951 = vld [vmem:[%s4 + $0x20] sm:$0xf]
  %v952 = vld [vmem:[%s4 + $0x24] sm:$0xf]
  %v953 = vld [vmem:[%s4 + $0x28] sm:$0xf]
  %v954 = vld [vmem:[%s4 + $0x2c] sm:$0xf]
  %v955 = vld [vmem:[%s4 + $0x30] sm:$0xf]
  %v956 = vld [vmem:[%s4 + $0x34] sm:$0xf]
  %v957 = vld [vmem:[%s4 + $0x38] sm:$0xf]
  %v958 = vld [vmem:[%s4 + $0x3c] sm:$0xf]
  %v959 = vld [vmem:[%s5] sm:$0x1]
  %v961 = vlaneseq
  %v962 = vshrl.u32 %v961, 7
  %v963 = vsub.s32 0, %v962
  %v964 = vrot.slane %v959, %v963
  %v969 = vunpack.c.l.b16 %v940
  %v970 = vunpack.c.l.b16 %v941
  %v971 = vunpack.c.l.b16 %v942
  %v972 = vpack.c.b16 %v970, %v969
  %v973 = vpack.c.b16 %v971, %v971
  %v992 = vunpack.c.l.b16 %v943
  %v993 = vunpack.c.l.b16 %v944
  %v994 = vunpack.c.l.b16 %v945
  %v995 = vunpack.c.l.b16 %v946
  %v996 = vunpack.c.l.b16 %v947
  %v997 = vunpack.c.l.b16 %v948
  %v998 = vunpack.c.l.b16 %v949
  %v999 = vunpack.c.l.b16 %v950
  %v1000 = vunpack.c.l.b16 %v951
  %v1001 = vunpack.c.l.b16 %v952
  %v1002 = vunpack.c.l.b16 %v953
  %v1003 = vunpack.c.l.b16 %v954
  %v1004 = vunpack.c.l.b16 %v955
  %v1005 = vunpack.c.l.b16 %v956
  %v1006 = vunpack.c.l.b16 %v957
  %v1007 = vunpack.c.l.b16 %v958
  %v1008 = vpack.c.b16 %v993, %v992
  %v1009 = vpack.c.b16 %v995, %v994
  %v1010 = vpack.c.b16 %v997, %v996
  %v1011 = vpack.c.b16 %v999, %v998
  %v1012 = vpack.c.b16 %v1001, %v1000
  %v1013 = vpack.c.b16 %v1003, %v1002
  %v1014 = vpack.c.b16 %v1005, %v1004
  %v1015 = vpack.c.b16 %v1007, %v1006
  %1024 = vmatprep.subr.bf16.mxu0 0
  %1025 = vmatpush1.bf16.msra.mxu0 %v1008
  %1026 = vmatprep.subr.bf16.mxu0 0
  %1027 = vmatpush1.bf16.msra.mxu0 %v1009
  %1028 = vmatprep.subr.bf16.mxu0 0
  %1029 = vmatpush1.bf16.msra.mxu0 %v1010
  %1030 = vmatprep.subr.bf16.mxu0 0
  %1031 = vmatpush1.bf16.msra.mxu0 %v1011
  %1032 = vmatprep.subr.bf16.mxu0 0
  %1033 = vmatpush1.bf16.msra.mxu0 %v1012
  %1034 = vmatprep.subr.bf16.mxu0 0
  %1035 = vmatpush1.bf16.msra.mxu0 %v1013
  %1036 = vmatprep.subr.bf16.mxu0 0
  %1037 = vmatpush1.bf16.msra.mxu0 %v1014
  %1038 = vmatprep.subr.bf16.mxu0 0
  %1039 = vmatpush1.bf16.msra.mxu0 %v1015
  %1040 = vmatprep.subr.bf16.mxu0 0
  %1041 = vmatpush1.bf16.msra.mxu0 0
  %1042 = vmatprep.subr.bf16.mxu0 0
  %1043 = vmatpush1.bf16.msra.mxu0 0
  %1044 = vmatprep.subr.bf16.mxu0 0
  %1045 = vmatpush1.bf16.msra.mxu0 0
  %1046 = vmatprep.subr.bf16.mxu0 0
  %1047 = vmatpush1.bf16.msra.mxu0 0
  %1048 = vmatprep.subr.bf16.mxu0 0
  %1049 = vmatpush1.bf16.msra.mxu0 0
  %1050 = vmatprep.subr.bf16.mxu0 0
  %1051 = vmatpush1.bf16.msra.mxu0 0
  %1052 = vmatprep.subr.bf16.mxu0 0
  %1053 = vmatpush1.bf16.msra.mxu0 0
  %1054 = vmatprep.subr.bf16.mxu0 0
  %1055 = vmatpush1.bf16.msra.mxu0 0
  %1056 = vmatprep.mubr.bf16.mxu0 0
  %1057 = vmatmul.mubr.bf16.gmra.mrb[0].mxu0 %v972
  %v1058 = vpop.f32.mrb[0].mxu0
  %v1059 = vadd.f32 %v964, %v1058
  %v1060 = vpop.f32.mrb[0].mxu0
  %v1061 = vpop.f32.mrb[0].mxu0
  %v1062 = vadd.f32 %v964, %v1061
  %v1063 = vpop.f32.mrb[0].mxu0
  %1064 = vmatprep.mubr.bf16.mxu0 0
  %1065 = vmatmul.mubr.bf16.gmra.mrb[0].mxu0 %v973
  %v1066 = vpop.f32.mrb[0].mxu0
  %v1067 = vadd.f32 %v964, %v1066
  %v1068 = vpop.f32.mrb[0].mxu0
  %v1069 = vpop.f32.mrb[0].mxu0
  %v1070 = vpop.f32.mrb[0].mxu0
  %1071 = vdwg.mxu0
  %v1072 = vadd.f32 %v927, %v1059
  %v1073 = vadd.f32 %v930, %v1062
  %v1074 = vadd.f32 %v935, %v1067
  %v1075 = vmax.f32 %v1072, 0.0
  %v1076 = vmax.f32 %v1073, 0.0
  %v1077 = vmax.f32 %v1074, 0.0
  %v1078 = vpack.c.bf16 %v1076, %v1075
  %v1079 = vpack.c.bf16 %v1077, %v1077
  %v1082 = vunpack.c.l.b16 %v1078
  %v1083 = vunpack.c.h.b16 %v1078
  %v1084 = vunpack.c.l.b16 %v1079
  %v1085 = vpack.c.b16 %v1082, %v1082
  %v1086 = vpack.c.b16 %v1083, %v1083
  %v1087 = vpack.c.b16 %v1084, %v1084
  %1091 = vst [vmem:[%s6] sm:$0xf] %v1085
  %1092 = vst [vmem:[%s6 + $0x4] sm:$0xf] %v1086
  %1093 = vst [vmem:[%s6 + $0x8] sm:$0xf] %v1087
  // Predicated region
  $region26: #{_lambda_.24} parent=0 // pred_check
    _
  $region27: #{_lambda_.24} parent=0 // pred_check_branch
    %1095 = sbr.rel (0) target = $region29
  $region28: #{_lambda_.24} parent=0 // pred_region
    _
  $region29: #{_lambda_.24} parent=0 // pred_fallthru
    _
  // Predicated region
  $region30: #{_lambda_.24} parent=0 // pred_check
    _
  $region31: #{_lambda_.24} parent=0 // pred_check_branch
    %1097 = sbr.rel (0) target = $region33
  $region32: #{_lambda_.24} parent=0 // pred_region
    _
  $region33: #{_lambda_.24} parent=0 // pred_fallthru
    _

// kernel: _lambda_.26
$region0: #{_lambda_.26}
  #allocation0 [shape = 'u32[]', space=smem, size = 0x4, offset = 0x4, fixed_abs, tag = 'smem constant byte address 0x4 - core index']
  #allocation1 [shape = 'u32[144,128]{1,0:T(1,128)}', space=vmem, size = 0x12000, scoped, tag = 'internal scratch']
  %s0 = inlined_call_operand.vmem [shape: bf16[24,1152], index: 0, kind: input, shape index: {}]
  %s1 = inlined_call_operand.vmem [shape: bf16[1152,128], index: 1, kind: input, shape index: {}]
  %s2 = inlined_call_operand.vmem [shape: f32[1,128], index: 2, kind: input, shape index: {}]
  %s3 = inlined_call_operand.vmem [shape: bf16[24,128], index: 3, kind: input, shape index: {}]
  %s4 = inlined_call_operand.vmem [shape: bf16[24,128], index: 4, kind: output, shape index: {}]
  %s5 = sld [smem:[#allocation0]]
  $region26: #{_lambda_.26} parent=0
    _
  %s7 = ssub.s32 1, %s5
  %s8 = scalar_select 0, %s7, %s5
  // Predicated region
  $region2: #{_lambda_.26} parent=0 // pred_check
    _
  $region3: #{_lambda_.26} parent=0 // pred_check_branch
    %10 = sbr.rel (0) target = $region5
  $region4: #{_lambda_.26} parent=0 // pred_region
    _
  $region5: #{_lambda_.26} parent=0 // pred_fallthru
    _
  // Predicated region
  $region6: #{_lambda_.26} parent=0 // pred_check
    _
  $region7: #{_lambda_.26} parent=0 // pred_check_branch
    %12 = sbr.rel (0) target = $region9
  $region8: #{_lambda_.26} parent=0 // pred_region
    _
  $region9: #{_lambda_.26} parent=0 // pred_fallthru
    _
  // Predicated region
  $region10: #{_lambda_.26} parent=0 // pred_check
    _
  $region11: #{_lambda_.26} parent=0 // pred_check_branch
    %14 = sbr.rel (0) target = $region13
  $region12: #{_lambda_.26} parent=0 // pred_region
    _
  $region13: #{_lambda_.26} parent=0 // pred_fallthru
    _
  // Predicated region
  $region14: #{_lambda_.26} parent=0 // pred_check
    _
  $region15: #{_lambda_.26} parent=0 // pred_check_branch
    %16 = sbr.rel (0) target = $region17
  $region16: #{_lambda_.26} parent=0 // pred_region
    _
  $region17: #{_lambda_.26} parent=0 // pred_fallthru
    _
  %v18 = vld [vmem:[%s0] sm:$0xff]
  %v19 = vld [vmem:[%s0 + $0x8] sm:$0xff]
  %v20 = vld [vmem:[%s0 + $0x10] sm:$0xff]
  %v21 = vld [vmem:[%s0 + $0x18] sm:$0xff]
  %v22 = vld [vmem:[%s0 + $0x20] sm:$0xf]
  %v23 = vld [vmem:[%s0 + $0x24] sm:$0xff]
  %v24 = vld [vmem:[%s0 + $0x2c] sm:$0xff]
  %v25 = vld [vmem:[%s0 + $0x34] sm:$0xff]
  %v26 = vld [vmem:[%s0 + $0x3c] sm:$0xff]
  %v27 = vld [vmem:[%s0 + $0x44] sm:$0xf]
  %v28 = vld [vmem:[%s0 + $0x48] sm:$0xff]
  %v29 = vld [vmem:[%s0 + $0x50] sm:$0xff]
  %v30 = vld [vmem:[%s0 + $0x58] sm:$0xff]
  %v31 = vld [vmem:[%s0 + $0x60] sm:$0xff]
  %v32 = vld [vmem:[%s0 + $0x68] sm:$0xf]
  %v33 = vld [vmem:[%s1] sm:$0xf]
  %v34 = vld [vmem:[%s1 + $0x4] sm:$0xf]
  %v35 = vld [vmem:[%s1 + $0x8] sm:$0xf]
  %v36 = vld [vmem:[%s1 + $0xc] sm:$0xf]
  %v37 = vld [vmem:[%s1 + $0x10] sm:$0xf]
  %v38 = vld [vmem:[%s1 + $0x14] sm:$0xf]
  %v39 = vld [vmem:[%s1 + $0x18] sm:$0xf]
  %v40 = vld [vmem:[%s1 + $0x1c] sm:$0xf]
  %v41 = vld [vmem:[%s1 + $0x20] sm:$0xf]
  %v42 = vld [vmem:[%s1 + $0x24] sm:$0xf]
  %v43 = vld [vmem:[%s1 + $0x28] sm:$0xf]
  %v44 = vld [vmem:[%s1 + $0x2c] sm:$0xf]
  %v45 = vld [vmem:[%s1 + $0x30] sm:$0xf]
  %v46 = vld [vmem:[%s1 + $0x34] sm:$0xf]
  %v47 = vld [vmem:[%s1 + $0x38] sm:$0xf]
  %v48 = vld [vmem:[%s1 + $0x3c] sm:$0xf]
  %v49 = vld [vmem:[%s1 + $0x40] sm:$0xf]
  %v50 = vld [vmem:[%s1 + $0x44] sm:$0xf]
  %v51 = vld [vmem:[%s1 + $0x48] sm:$0xf]
  %v52 = vld [vmem:[%s1 + $0x4c] sm:$0xf]
  %v53 = vld [vmem:[%s1 + $0x50] sm:$0xf]
  %v54 = vld [vmem:[%s1 + $0x54] sm:$0xf]
  %v55 = vld [vmem:[%s1 + $0x58] sm:$0xf]
  %v56 = vld [vmem:[%s1 + $0x5c] sm:$0xf]
  %v57 = vld [vmem:[%s1 + $0x60] sm:$0xf]
  %v58 = vld [vmem:[%s1 + $0x64] sm:$0xf]
  %v59 = vld [vmem:[%s1 + $0x68] sm:$0xf]
  %v60 = vld [vmem:[%s1 + $0x6c] sm:$0xf]
  %v61 = vld [vmem:[%s1 + $0x70] sm:$0xf]
  %v62 = vld [vmem:[%s1 + $0x74] sm:$0xf]
  %v63 = vld [vmem:[%s1 + $0x78] sm:$0xf]
  %v64 = vld [vmem:[%s1 + $0x7c] sm:$0xf]
  %v65 = vld [vmem:[%s1 + $0x80] sm:$0xf]
  %v66 = vld [vmem:[%s1 + $0x84] sm:$0xf]
  %v67 = vld [vmem:[%s1 + $0x88] sm:$0xf]
  %v68 = vld [vmem:[%s1 + $0x8c] sm:$0xf]
  %v69 = vld [vmem:[%s1 + $0x90] sm:$0xf]
  %v70 = vld [vmem:[%s1 + $0x94] sm:$0xf]
  %v71 = vld [vmem:[%s1 + $0x98] sm:$0xf]
  %v72 = vld [vmem:[%s1 + $0x9c] sm:$0xf]
  %v73 = vld [vmem:[%s1 + $0xa0] sm:$0xf]
  %v74 = vld [vmem:[%s1 + $0xa4] sm:$0xf]
  %v75 = vld [vmem:[%s1 + $0xa8] sm:$0xf]
  %v76 = vld [vmem:[%s1 + $0xac] sm:$0xf]
  %v77 = vld [vmem:[%s1 + $0xb0] sm:$0xf]
  %v78 = vld [vmem:[%s1 + $0xb4] sm:$0xf]
  %v79 = vld [vmem:[%s1 + $0xb8] sm:$0xf]
  %v80 = vld [vmem:[%s1 + $0xbc] sm:$0xf]
  %v81 = vld [vmem:[%s1 + $0xc0] sm:$0xf]
  %v82 = vld [vmem:[%s1 + $0xc4] sm:$0xf]
  %v83 = vld [vmem:[%s1 + $0xc8] sm:$0xf]
  %v84 = vld [vmem:[%s1 + $0xcc] sm:$0xf]
  %v85 = vld [vmem:[%s1 + $0xd0] sm:$0xf]
  %v86 = vld [vmem:[%s1 + $0xd4] sm:$0xf]
  %v87 = vld [vmem:[%s1 + $0xd8] sm:$0xf]
  %v88 = vld [vmem:[%s1 + $0xdc] sm:$0xf]
  %v89 = vld [vmem:[%s1 + $0xe0] sm:$0xf]
  %v90 = vld [vmem:[%s1 + $0xe4] sm:$0xf]
  %v91 = vld [vmem:[%s1 + $0xe8] sm:$0xf]
  %v92 = vld [vmem:[%s1 + $0xec] sm:$0xf]
  %v93 = vld [vmem:[%s1 + $0xf0] sm:$0xf]
  %v94 = vld [vmem:[%s1 + $0xf4] sm:$0xf]
  %v95 = vld [vmem:[%s1 + $0xf8] sm:$0xf]
  %v96 = vld [vmem:[%s1 + $0xfc] sm:$0xf]
  %v97 = vld [vmem:[%s1 + $0x100] sm:$0xf]
  %v98 = vld [vmem:[%s1 + $0x104] sm:$0xf]
  %v99 = vld [vmem:[%s1 + $0x108] sm:$0xf]
  %v100 = vld [vmem:[%s1 + $0x10c] sm:$0xf]
  %v101 = vld [vmem:[%s1 + $0x110] sm:$0xf]
  %v102 = vld [vmem:[%s1 + $0x114] sm:$0xf]
  %v103 = vld [vmem:[%s1 + $0x118] sm:$0xf]
  %v104 = vld [vmem:[%s1 + $0x11c] sm:$0xf]
  %v105 = vld [vmem:[%s1 + $0x120] sm:$0xf]
  %v106 = vld [vmem:[%s1 + $0x124] sm:$0xf]
  %v107 = vld [vmem:[%s1 + $0x128] sm:$0xf]
  %v108 = vld [vmem:[%s1 + $0x12c] sm:$0xf]
  %v109 = vld [vmem:[%s1 + $0x130] sm:$0xf]
  %v110 = vld [vmem:[%s1 + $0x134] sm:$0xf]
  %v111 = vld [vmem:[%s1 + $0x138] sm:$0xf]
  %v112 = vld [vmem:[%s1 + $0x13c] sm:$0xf]
  %v113 = vld [vmem:[%s1 + $0x140] sm:$0xf]
  %v114 = vld [vmem:[%s1 + $0x144] sm:$0xf]
  %v115 = vld [vmem:[%s1 + $0x148] sm:$0xf]
  %v116 = vld [vmem:[%s1 + $0x14c] sm:$0xf]
  %v117 = vld [vmem:[%s1 + $0x150] sm:$0xf]
  %v118 = vld [vmem:[%s1 + $0x154] sm:$0xf]
  %v119 = vld [vmem:[%s1 + $0x158] sm:$0xf]
  %v120 = vld [vmem:[%s1 + $0x15c] sm:$0xf]
  %v121 = vld [vmem:[%s1 + $0x160] sm:$0xf]
  %v122 = vld [vmem:[%s1 + $0x164] sm:$0xf]
  %v123 = vld [vmem:[%s1 + $0x168] sm:$0xf]
  %v124 = vld [vmem:[%s1 + $0x16c] sm:$0xf]
  %v125 = vld [vmem:[%s1 + $0x170] sm:$0xf]
  %v126 = vld [vmem:[%s1 + $0x174] sm:$0xf]
  %v127 = vld [vmem:[%s1 + $0x178] sm:$0xf]
  %v128 = vld [vmem:[%s1 + $0x17c] sm:$0xf]
  %v129 = vld [vmem:[%s1 + $0x180] sm:$0xf]
  %v130 = vld [vmem:[%s1 + $0x184] sm:$0xf]
  %v131 = vld [vmem:[%s1 + $0x188] sm:$0xf]
  %v132 = vld [vmem:[%s1 + $0x18c] sm:$0xf]
  %v133 = vld [vmem:[%s1 + $0x190] sm:$0xf]
  %v134 = vld [vmem:[%s1 + $0x194] sm:$0xf]
  %v135 = vld [vmem:[%s1 + $0x198] sm:$0xf]
  %v136 = vld [vmem:[%s1 + $0x19c] sm:$0xf]
  %v137 = vld [vmem:[%s1 + $0x1a0] sm:$0xf]
  %v138 = vld [vmem:[%s1 + $0x1a4] sm:$0xf]
  %v139 = vld [vmem:[%s1 + $0x1a8] sm:$0xf]
  %v140 = vld [vmem:[%s1 + $0x1ac] sm:$0xf]
  %v141 = vld [vmem:[%s1 + $0x1b0] sm:$0xf]
  %v142 = vld [vmem:[%s1 + $0x1b4] sm:$0xf]
  %v143 = vld [vmem:[%s1 + $0x1b8] sm:$0xf]
  %v144 = vld [vmem:[%s1 + $0x1bc] sm:$0xf]
  %v145 = vld [vmem:[%s1 + $0x1c0] sm:$0xf]
  %v146 = vld [vmem:[%s1 + $0x1c4] sm:$0xf]
  %v147 = vld [vmem:[%s1 + $0x1c8] sm:$0xf]
  %v148 = vld [vmem:[%s1 + $0x1cc] sm:$0xf]
  %v149 = vld [vmem:[%s1 + $0x1d0] sm:$0xf]
  %v150 = vld [vmem:[%s1 + $0x1d4] sm:$0xf]
  %v151 = vld [vmem:[%s1 + $0x1d8] sm:$0xf]
  %v152 = vld [vmem:[%s1 + $0x1dc] sm:$0xf]
  %v153 = vld [vmem:[%s1 + $0x1e0] sm:$0xf]
  %v154 = vld [vmem:[%s1 + $0x1e4] sm:$0xf]
  %v155 = vld [vmem:[%s1 + $0x1e8] sm:$0xf]
  %v156 = vld [vmem:[%s1 + $0x1ec] sm:$0xf]
  %v157 = vld [vmem:[%s1 + $0x1f0] sm:$0xf]
  %v158 = vld [vmem:[%s1 + $0x1f4] sm:$0xf]
  %v159 = vld [vmem:[%s1 + $0x1f8] sm:$0xf]
  %v160 = vld [vmem:[%s1 + $0x1fc] sm:$0xf]
  %v161 = vld [vmem:[%s1 + $0x200] sm:$0xf]
  %v162 = vld [vmem:[%s1 + $0x204] sm:$0xf]
  %v163 = vld [vmem:[%s1 + $0x208] sm:$0xf]
  %v164 = vld [vmem:[%s1 + $0x20c] sm:$0xf]
  %v165 = vld [vmem:[%s1 + $0x210] sm:$0xf]
  %v166 = vld [vmem:[%s1 + $0x214] sm:$0xf]
  %v167 = vld [vmem:[%s1 + $0x218] sm:$0xf]
  %v168 = vld [vmem:[%s1 + $0x21c] sm:$0xf]
  %v169 = vld [vmem:[%s1 + $0x220] sm:$0xf]
  %v170 = vld [vmem:[%s1 + $0x224] sm:$0xf]
  %v171 = vld [vmem:[%s1 + $0x228] sm:$0xf]
  %v172 = vld [vmem:[%s1 + $0x22c] sm:$0xf]
  %v173 = vld [vmem:[%s1 + $0x230] sm:$0xf]
  %v174 = vld [vmem:[%s1 + $0x234] sm:$0xf]
  %v175 = vld [vmem:[%s1 + $0x238] sm:$0xf]
  %v176 = vld [vmem:[%s1 + $0x23c] sm:$0xf]
  %v177 = vld [vmem:[%s2] sm:$0x1]
  %v179 = vlaneseq
  %v180 = vshrl.u32 %v179, 7
  %v181 = vsub.s32 0, %v180
  %v182 = vrot.slane %v177, %v181
  %v199 = vunpack.c.l.b16 %v18
  %v200 = vunpack.c.h.b16 %v18
  %v201 = vunpack.c.l.b16 %v19
  %v202 = vunpack.c.h.b16 %v19
  %v203 = vunpack.c.l.b16 %v20
  %v204 = vunpack.c.h.b16 %v20
  %v205 = vunpack.c.l.b16 %v21
  %v206 = vunpack.c.h.b16 %v21
  %v207 = vunpack.c.l.b16 %v22
  %v208 = vunpack.c.l.b16 %v23
  %v209 = vunpack.c.h.b16 %v23
  %v210 = vunpack.c.l.b16 %v24
  %v211 = vunpack.c.h.b16 %v24
  %v212 = vunpack.c.l.b16 %v25
  %v213 = vunpack.c.h.b16 %v25
  %v214 = vunpack.c.l.b16 %v26
  %v215 = vunpack.c.h.b16 %v26
  %v216 = vunpack.c.l.b16 %v27
  %v217 = vunpack.c.l.b16 %v28
  %v218 = vunpack.c.h.b16 %v28
  %v219 = vunpack.c.l.b16 %v29
  %v220 = vunpack.c.h.b16 %v29
  %v221 = vunpack.c.l.b16 %v30
  %v222 = vunpack.c.h.b16 %v30
  %v223 = vunpack.c.l.b16 %v31
  %v224 = vunpack.c.h.b16 %v31
  %v225 = vunpack.c.l.b16 %v32
  %v226 = vpack.c.b16 %v208, %v199
  %v227 = vpack.c.b16 %v209, %v200
  %v228 = vpack.c.b16 %v210, %v201
  %v229 = vpack.c.b16 %v211, %v202
  %v230 = vpack.c.b16 %v212, %v203
  %v231 = vpack.c.b16 %v213, %v204
  %v232 = vpack.c.b16 %v214, %v205
  %v233 = vpack.c.b16 %v215, %v206
  %v234 = vpack.c.b16 %v216, %v207
  %v235 = vpack.c.b16 %v217, %v217
  %v236 = vpack.c.b16 %v218, %v218
  %v237 = vpack.c.b16 %v219, %v219
  %v238 = vpack.c.b16 %v220, %v220
  %v239 = vpack.c.b16 %v221, %v221
  %v240 = vpack.c.b16 %v222, %v222
  %v241 = vpack.c.b16 %v223, %v223
  %v242 = vpack.c.b16 %v224, %v224
  %v243 = vpack.c.b16 %v225, %v225
  %v406 = vunpack.c.l.b16 %v33
  %v407 = vunpack.c.l.b16 %v34
  %v408 = vunpack.c.l.b16 %v35
  %v409 = vunpack.c.l.b16 %v36
  %v410 = vunpack.c.l.b16 %v37
  %v411 = vunpack.c.l.b16 %v38
  %v412 = vunpack.c.l.b16 %v39
  %v413 = vunpack.c.l.b16 %v40
  %v414 = vunpack.c.l.b16 %v41
  %v415 = vunpack.c.l.b16 %v42
  %v416 = vunpack.c.l.b16 %v43
  %v417 = vunpack.c.l.b16 %v44
  %v418 = vunpack.c.l.b16 %v45
  %v419 = vunpack.c.l.b16 %v46
  %v420 = vunpack.c.l.b16 %v47
  %v421 = vunpack.c.l.b16 %v48
  %v422 = vunpack.c.l.b16 %v49
  %v423 = vunpack.c.l.b16 %v50
  %v424 = vunpack.c.l.b16 %v51
  %v425 = vunpack.c.l.b16 %v52
  %v426 = vunpack.c.l.b16 %v53
  %v427 = vunpack.c.l.b16 %v54
  %v428 = vunpack.c.l.b16 %v55
  %v429 = vunpack.c.l.b16 %v56
  %v430 = vunpack.c.l.b16 %v57
  %v431 = vunpack.c.l.b16 %v58
  %v432 = vunpack.c.l.b16 %v59
  %v433 = vunpack.c.l.b16 %v60
  %v434 = vunpack.c.l.b16 %v61
  %v435 = vunpack.c.l.b16 %v62
  %v436 = vunpack.c.l.b16 %v63
  %v437 = vunpack.c.l.b16 %v64
  %v438 = vunpack.c.l.b16 %v65
  %v439 = vunpack.c.l.b16 %v66
  %v440 = vunpack.c.l.b16 %v67
  %v441 = vunpack.c.l.b16 %v68
  %v442 = vunpack.c.l.b16 %v69
  %v443 = vunpack.c.l.b16 %v70
  %v444 = vunpack.c.l.b16 %v71
  %v445 = vunpack.c.l.b16 %v72
  %v446 = vunpack.c.l.b16 %v73
  %v447 = vunpack.c.l.b16 %v74
  %v448 = vunpack.c.l.b16 %v75
  %v449 = vunpack.c.l.b16 %v76
  %v450 = vunpack.c.l.b16 %v77
  %v451 = vunpack.c.l.b16 %v78
  %v452 = vunpack.c.l.b16 %v79
  %v453 = vunpack.c.l.b16 %v80
  %v454 = vunpack.c.l.b16 %v81
  %v455 = vunpack.c.l.b16 %v82
  %v456 = vunpack.c.l.b16 %v83
  %v457 = vunpack.c.l.b16 %v84
  %v458 = vunpack.c.l.b16 %v85
  %v459 = vunpack.c.l.b16 %v86
  %v460 = vunpack.c.l.b16 %v87
  %v461 = vunpack.c.l.b16 %v88
  %v462 = vunpack.c.l.b16 %v89
  %v463 = vunpack.c.l.b16 %v90
  %v464 = vunpack.c.l.b16 %v91
  %v465 = vunpack.c.l.b16 %v92
  %v466 = vunpack.c.l.b16 %v93
  %v467 = vunpack.c.l.b16 %v94
  %v468 = vunpack.c.l.b16 %v95
  %v469 = vunpack.c.l.b16 %v96
  %v470 = vunpack.c.l.b16 %v97
  %v471 = vunpack.c.l.b16 %v98
  %v472 = vunpack.c.l.b16 %v99
  %v473 = vunpack.c.l.b16 %v100
  %v474 = vunpack.c.l.b16 %v101
  %v475 = vunpack.c.l.b16 %v102
  %v476 = vunpack.c.l.b16 %v103
  %v477 = vunpack.c.l.b16 %v104
  %v478 = vunpack.c.l.b16 %v105
  %v479 = vunpack.c.l.b16 %v106
  %v480 = vunpack.c.l.b16 %v107
  %v481 = vunpack.c.l.b16 %v108
  %v482 = vunpack.c.l.b16 %v109
  %v483 = vunpack.c.l.b16 %v110
  %v484 = vunpack.c.l.b16 %v111
  %v485 = vunpack.c.l.b16 %v112
  %v486 = vunpack.c.l.b16 %v113
  %v487 = vunpack.c.l.b16 %v114
  %v488 = vunpack.c.l.b16 %v115
  %v489 = vunpack.c.l.b16 %v116
  %v490 = vunpack.c.l.b16 %v117
  %v491 = vunpack.c.l.b16 %v118
  %v492 = vunpack.c.l.b16 %v119
  %v493 = vunpack.c.l.b16 %v120
  %v494 = vunpack.c.l.b16 %v121
  %v495 = vunpack.c.l.b16 %v122
  %v496 = vunpack.c.l.b16 %v123
  %v497 = vunpack.c.l.b16 %v124
  %v498 = vunpack.c.l.b16 %v125
  %v499 = vunpack.c.l.b16 %v126
  %v500 = vunpack.c.l.b16 %v127
  %v501 = vunpack.c.l.b16 %v128
  %v502 = vunpack.c.l.b16 %v129
  %v503 = vunpack.c.l.b16 %v130
  %v504 = vunpack.c.l.b16 %v131
  %v505 = vunpack.c.l.b16 %v132
  %v506 = vunpack.c.l.b16 %v133
  %v507 = vunpack.c.l.b16 %v134
  %v508 = vunpack.c.l.b16 %v135
  %v509 = vunpack.c.l.b16 %v136
  %v510 = vunpack.c.l.b16 %v137
  %v511 = vunpack.c.l.b16 %v138
  %v512 = vunpack.c.l.b16 %v139
  %v513 = vunpack.c.l.b16 %v140
  %v514 = vunpack.c.l.b16 %v141
  %v515 = vunpack.c.l.b16 %v142
  %v516 = vunpack.c.l.b16 %v143
  %v517 = vunpack.c.l.b16 %v144
  %v518 = vunpack.c.l.b16 %v145
  %v519 = vunpack.c.l.b16 %v146
  %v520 = vunpack.c.l.b16 %v147
  %v521 = vunpack.c.l.b16 %v148
  %v522 = vunpack.c.l.b16 %v149
  %v523 = vunpack.c.l.b16 %v150
  %v524 = vunpack.c.l.b16 %v151
  %v525 = vunpack.c.l.b16 %v152
  %v526 = vunpack.c.l.b16 %v153
  %v527 = vunpack.c.l.b16 %v154
  %v528 = vunpack.c.l.b16 %v155
  %v529 = vunpack.c.l.b16 %v156
  %v530 = vunpack.c.l.b16 %v157
  %v531 = vunpack.c.l.b16 %v158
  %v532 = vunpack.c.l.b16 %v159
  %v533 = vunpack.c.l.b16 %v160
  %v534 = vunpack.c.l.b16 %v161
  %v535 = vunpack.c.l.b16 %v162
  %v536 = vunpack.c.l.b16 %v163
  %v537 = vunpack.c.l.b16 %v164
  %v538 = vunpack.c.l.b16 %v165
  %v539 = vunpack.c.l.b16 %v166
  %v540 = vunpack.c.l.b16 %v167
  %v541 = vunpack.c.l.b16 %v168
  %v542 = vunpack.c.l.b16 %v169
  %v543 = vunpack.c.l.b16 %v170
  %v544 = vunpack.c.l.b16 %v171
  %v545 = vunpack.c.l.b16 %v172
  %v546 = vunpack.c.l.b16 %v173
  %v547 = vunpack.c.l.b16 %v174
  %v548 = vunpack.c.l.b16 %v175
  %v549 = vunpack.c.l.b16 %v176
  %v550 = vpack.c.b16 %v407, %v406
  %v551 = vpack.c.b16 %v409, %v408
  %v552 = vpack.c.b16 %v411, %v410
  %v553 = vpack.c.b16 %v413, %v412
  %v554 = vpack.c.b16 %v415, %v414
  %v555 = vpack.c.b16 %v417, %v416
  %v556 = vpack.c.b16 %v419, %v418
  %v557 = vpack.c.b16 %v421, %v420
  %v558 = vpack.c.b16 %v423, %v422
  %v559 = vpack.c.b16 %v425, %v424
  %v560 = vpack.c.b16 %v427, %v426
  %v561 = vpack.c.b16 %v429, %v428
  %v562 = vpack.c.b16 %v431, %v430
  %v563 = vpack.c.b16 %v433, %v432
  %v564 = vpack.c.b16 %v435, %v434
  %v565 = vpack.c.b16 %v437, %v436
  %v566 = vpack.c.b16 %v439, %v438
  %v567 = vpack.c.b16 %v441, %v440
  %v568 = vpack.c.b16 %v443, %v442
  %v569 = vpack.c.b16 %v445, %v444
  %v570 = vpack.c.b16 %v447, %v446
  %v571 = vpack.c.b16 %v449, %v448
  %v572 = vpack.c.b16 %v451, %v450
  %v573 = vpack.c.b16 %v453, %v452
  %v574 = vpack.c.b16 %v455, %v454
  %v575 = vpack.c.b16 %v457, %v456
  %v576 = vpack.c.b16 %v459, %v458
  %v577 = vpack.c.b16 %v461, %v460
  %v578 = vpack.c.b16 %v463, %v462
  %v579 = vpack.c.b16 %v465, %v464
  %v580 = vpack.c.b16 %v467, %v466
  %v581 = vpack.c.b16 %v469, %v468
  %v582 = vpack.c.b16 %v471, %v470
  %v583 = vpack.c.b16 %v473, %v472
  %v584 = vpack.c.b16 %v475, %v474
  %v585 = vpack.c.b16 %v477, %v476
  %v586 = vpack.c.b16 %v479, %v478
  %v587 = vpack.c.b16 %v481, %v480
  %v588 = vpack.c.b16 %v483, %v482
  %v589 = vpack.c.b16 %v485, %v484
  %v590 = vpack.c.b16 %v487, %v486
  %v591 = vpack.c.b16 %v489, %v488
  %v592 = vpack.c.b16 %v491, %v490
  %v593 = vpack.c.b16 %v493, %v492
  %v594 = vpack.c.b16 %v495, %v494
  %v595 = vpack.c.b16 %v497, %v496
  %v596 = vpack.c.b16 %v499, %v498
  %v597 = vpack.c.b16 %v501, %v500
  %v598 = vpack.c.b16 %v503, %v502
  %v599 = vpack.c.b16 %v505, %v504
  %v600 = vpack.c.b16 %v507, %v506
  %v601 = vpack.c.b16 %v509, %v508
  %v602 = vpack.c.b16 %v511, %v510
  %v603 = vpack.c.b16 %v513, %v512
  %v604 = vpack.c.b16 %v515, %v514
  %v605 = vpack.c.b16 %v517, %v516
  %v606 = vpack.c.b16 %v519, %v518
  %v607 = vpack.c.b16 %v521, %v520
  %v608 = vpack.c.b16 %v523, %v522
  %v609 = vpack.c.b16 %v525, %v524
  %v610 = vpack.c.b16 %v527, %v526
  %v611 = vpack.c.b16 %v529, %v528
  %v612 = vpack.c.b16 %v531, %v530
  %v613 = vpack.c.b16 %v533, %v532
  %v614 = vpack.c.b16 %v535, %v534
  %v615 = vpack.c.b16 %v537, %v536
  %v616 = vpack.c.b16 %v539, %v538
  %v617 = vpack.c.b16 %v541, %v540
  %v618 = vpack.c.b16 %v543, %v542
  %v619 = vpack.c.b16 %v545, %v544
  %v620 = vpack.c.b16 %v547, %v546
  %v621 = vpack.c.b16 %v549, %v548
  %694 = vmatprep.subr.bf16.mxu0 0
  %695 = vmatpush1.bf16.msra.mxu0 %v550
  %696 = vmatprep.subr.bf16.mxu0 0
  %697 = vmatpush1.bf16.msra.mxu0 %v551
  %698 = vmatprep.subr.bf16.mxu0 0
  %699 = vmatpush1.bf16.msra.mxu0 %v552
  %700 = vmatprep.subr.bf16.mxu0 0
  %701 = vmatpush1.bf16.msra.mxu0 %v553
  %702 = vmatprep.subr.bf16.mxu0 0
  %703 = vmatpush1.bf16.msra.mxu0 %v554
  %704 = vmatprep.subr.bf16.mxu0 0
  %705 = vmatpush1.bf16.msra.mxu0 %v555
  %706 = vmatprep.subr.bf16.mxu0 0
  %707 = vmatpush1.bf16.msra.mxu0 %v556
  %708 = vmatprep.subr.bf16.mxu0 0
  %709 = vmatpush1.bf16.msra.mxu0 %v557
  %710 = vmatprep.subr.bf16.mxu0 0
  %711 = vmatpush1.bf16.msra.mxu0 %v558
  %712 = vmatprep.subr.bf16.mxu0 0
  %713 = vmatpush1.bf16.msra.mxu0 %v559
  %714 = vmatprep.subr.bf16.mxu0 0
  %715 = vmatpush1.bf16.msra.mxu0 %v560
  %716 = vmatprep.subr.bf16.mxu0 0
  %717 = vmatpush1.bf16.msra.mxu0 %v561
  %718 = vmatprep.subr.bf16.mxu0 0
  %719 = vmatpush1.bf16.msra.mxu0 %v562
  %720 = vmatprep.subr.bf16.mxu0 0
  %721 = vmatpush1.bf16.msra.mxu0 %v563
  %722 = vmatprep.subr.bf16.mxu0 0
  %723 = vmatpush1.bf16.msra.mxu0 %v564
  %724 = vmatprep.subr.bf16.mxu0 0
  %725 = vmatpush1.bf16.msra.mxu0 %v565
  %726 = vmatprep.mubr.bf16.mxu0 %v227
  %727 = vmatmul.mubr.bf16.gmra.mrb[0].mxu0 %v226
  %v728 = vpop.f32.mrb[0].mxu0
  %v729 = vadd.f32 %v182, %v728
  %v730 = vpop.f32.mrb[0].mxu0
  %v731 = vpop.f32.mrb[0].mxu0
  %v732 = vadd.f32 %v182, %v731
  %v733 = vpop.f32.mrb[0].mxu0
  %734 = vmatprep.mubr.bf16.mxu0 %v236
  %735 = vmatmul.mubr.bf16.gmra.mrb[0].mxu0 %v235
  %v736 = vpop.f32.mrb[0].mxu0
  %v737 = vadd.f32 %v182, %v736
  %v738 = vpop.f32.mrb[0].mxu0
  %v739 = vpop.f32.mrb[0].mxu0
  %v740 = vpop.f32.mrb[0].mxu0
  %741 = vdwg.mxu0
  %742 = vmatprep.subr.bf16.mxu0 0
  %743 = vmatpush1.bf16.msra.mxu0 %v566
  %744 = vmatprep.subr.bf16.mxu0 0
  %745 = vmatpush1.bf16.msra.mxu0 %v567
  %746 = vmatprep.subr.bf16.mxu0 0
  %747 = vmatpush1.bf16.msra.mxu0 %v568
  %748 = vmatprep.subr.bf16.mxu0 0
  %749 = vmatpush1.bf16.msra.mxu0 %v569
  %750 = vmatprep.subr.bf16.mxu0 0
  %751 = vmatpush1.bf16.msra.mxu0 %v570
  %752 = vmatprep.subr.bf16.mxu0 0
  %753 = vmatpush1.bf16.msra.mxu0 %v571
  %754 = vmatprep.subr.bf16.mxu0 0
  %755 = vmatpush1.bf16.msra.mxu0 %v572
  %756 = vmatprep.subr.bf16.mxu0 0
  %757 = vmatpush1.bf16.msra.mxu0 %v573
  %758 = vmatprep.subr.bf16.mxu0 0
  %759 = vmatpush1.bf16.msra.mxu0 %v574
  %760 = vmatprep.subr.bf16.mxu0 0
  %761 = vmatpush1.bf16.msra.mxu0 %v575
  %762 = vmatprep.subr.bf16.mxu0 0
  %763 = vmatpush1.bf16.msra.mxu0 %v576
  %764 = vmatprep.subr.bf16.mxu0 0
  %765 = vmatpush1.bf16.msra.mxu0 %v577
  %766 = vmatprep.subr.bf16.mxu0 0
  %767 = vmatpush1.bf16.msra.mxu0 %v578
  %768 = vmatprep.subr.bf16.mxu0 0
  %769 = vmatpush1.bf16.msra.mxu0 %v579
  %770 = vmatprep.subr.bf16.mxu0 0
  %771 = vmatpush1.bf16.msra.mxu0 %v580
  %772 = vmatprep.subr.bf16.mxu0 0
  %773 = vmatpush1.bf16.msra.mxu0 %v581
  %774 = vmatprep.mubr.bf16.mxu0 %v229
  %775 = vmatmul.mubr.bf16.gmra.mrb[0].mxu0 %v228
  %v776 = vpop.f32.mrb[0].mxu0
  %v777 = vadd.f32 %v729, %v776
  %v778 = vpop.f32.mrb[0].mxu0
  %v779 = vpop.f32.mrb[0].mxu0
  %v780 = vadd.f32 %v732, %v779
  %v781 = vpop.f32.mrb[0].mxu0
  %782 = vmatprep.mubr.bf16.mxu0 %v238
  %783 = vmatmul.mubr.bf16.gmra.mrb[0].mxu0 %v237
  %v784 = vpop.f32.mrb[0].mxu0
  %v785 = vadd.f32 %v737, %v784
  %v786 = vpop.f32.mrb[0].mxu0
  %v787 = vpop.f32.mrb[0].mxu0
  %v788 = vpop.f32.mrb[0].mxu0
  %789 = vdwg.mxu0
  %790 = vmatprep.subr.bf16.mxu0 0
  %791 = vmatpush1.bf16.msra.mxu0 %v582
  %792 = vmatprep.subr.bf16.mxu0 0
  %793 = vmatpush1.bf16.msra.mxu0 %v583
  %794 = vmatprep.subr.bf16.mxu0 0
  %795 = vmatpush1.bf16.msra.mxu0 %v584
  %796 = vmatprep.subr.bf16.mxu0 0
  %797 = vmatpush1.bf16.msra.mxu0 %v585
  %798 = vmatprep.subr.bf16.mxu0 0
  %799 = vmatpush1.bf16.msra.mxu0 %v586
  %800 = vmatprep.subr.bf16.mxu0 0
  %801 = vmatpush1.bf16.msra.mxu0 %v587
  %802 = vmatprep.subr.bf16.mxu0 0
  %803 = vmatpush1.bf16.msra.mxu0 %v588
  %804 = vmatprep.subr.bf16.mxu0 0
  %805 = vmatpush1.bf16.msra.mxu0 %v589
  %806 = vmatprep.subr.bf16.mxu0 0
  %807 = vmatpush1.bf16.msra.mxu0 %v590
  %808 = vmatprep.subr.bf16.mxu0 0
  %809 = vmatpush1.bf16.msra.mxu0 %v591
  %810 = vmatprep.subr.bf16.mxu0 0
  %811 = vmatpush1.bf16.msra.mxu0 %v592
  %812 = vmatprep.subr.bf16.mxu0 0
  %813 = vmatpush1.bf16.msra.mxu0 %v593
  %814 = vmatprep.subr.bf16.mxu0 0
  %815 = vmatpush1.bf16.msra.mxu0 %v594
  %816 = vmatprep.subr.bf16.mxu0 0
  %817 = vmatpush1.bf16.msra.mxu0 %v595
  %818 = vmatprep.subr.bf16.mxu0 0
  %819 = vmatpush1.bf16.msra.mxu0 %v596
  %820 = vmatprep.subr.bf16.mxu0 0
  %821 = vmatpush1.bf16.msra.mxu0 %v597
  %822 = vmatprep.mubr.bf16.mxu0 %v231
  %823 = vmatmul.mubr.bf16.gmra.mrb[0].mxu0 %v230
  %v824 = vpop.f32.mrb[0].mxu0
  %v825 = vadd.f32 %v777, %v824
  %v826 = vpop.f32.mrb[0].mxu0
  %v827 = vpop.f32.mrb[0].mxu0
  %v828 = vadd.f32 %v780, %v827
  %v829 = vpop.f32.mrb[0].mxu0
  %830 = vmatprep.mubr.bf16.mxu0 %v240
  %831 = vmatmul.mubr.bf16.gmra.mrb[0].mxu0 %v239
  %v832 = vpop.f32.mrb[0].mxu0
  %v833 = vadd.f32 %v785, %v832
  %v834 = vpop.f32.mrb[0].mxu0
  %v835 = vpop.f32.mrb[0].mxu0
  %v836 = vpop.f32.mrb[0].mxu0
  %837 = vdwg.mxu0
  %838 = vmatprep.subr.bf16.mxu0 0
  %839 = vmatpush1.bf16.msra.mxu0 %v598
  %840 = vmatprep.subr.bf16.mxu0 0
  %841 = vmatpush1.bf16.msra.mxu0 %v599
  %842 = vmatprep.subr.bf16.mxu0 0
  %843 = vmatpush1.bf16.msra.mxu0 %v600
  %844 = vmatprep.subr.bf16.mxu0 0
  %845 = vmatpush1.bf16.msra.mxu0 %v601
  %846 = vmatprep.subr.bf16.mxu0 0
  %847 = vmatpush1.bf16.msra.mxu0 %v602
  %848 = vmatprep.subr.bf16.mxu0 0
  %849 = vmatpush1.bf16.msra.mxu0 %v603
  %850 = vmatprep.subr.bf16.mxu0 0
  %851 = vmatpush1.bf16.msra.mxu0 %v604
  %852 = vmatprep.subr.bf16.mxu0 0
  %853 = vmatpush1.bf16.msra.mxu0 %v605
  %854 = vmatprep.subr.bf16.mxu0 0
  %855 = vmatpush1.bf16.msra.mxu0 %v606
  %856 = vmatprep.subr.bf16.mxu0 0
  %857 = vmatpush1.bf16.msra.mxu0 %v607
  %858 = vmatprep.subr.bf16.mxu0 0
  %859 = vmatpush1.bf16.msra.mxu0 %v608
  %860 = vmatprep.subr.bf16.mxu0 0
  %861 = vmatpush1.bf16.msra.mxu0 %v609
  %862 = vmatprep.subr.bf16.mxu0 0
  %863 = vmatpush1.bf16.msra.mxu0 %v610
  %864 = vmatprep.subr.bf16.mxu0 0
  %865 = vmatpush1.bf16.msra.mxu0 %v611
  %866 = vmatprep.subr.bf16.mxu0 0
  %867 = vmatpush1.bf16.msra.mxu0 %v612
  %868 = vmatprep.subr.bf16.mxu0 0
  %869 = vmatpush1.bf16.msra.mxu0 %v613
  %870 = vmatprep.mubr.bf16.mxu0 %v233
  %871 = vmatmul.mubr.bf16.gmra.mrb[0].mxu0 %v232
  %v872 = vpop.f32.mrb[0].mxu0
  %v873 = vadd.f32 %v825, %v872
  %v874 = vpop.f32.mrb[0].mxu0
  %v875 = vpop.f32.mrb[0].mxu0
  %v876 = vadd.f32 %v828, %v875
  %v877 = vpop.f32.mrb[0].mxu0
  %878 = vmatprep.mubr.bf16.mxu0 %v242
  %879 = vmatmul.mubr.bf16.gmra.mrb[0].mxu0 %v241
  %v880 = vpop.f32.mrb[0].mxu0
  %v881 = vadd.f32 %v833, %v880
  %v882 = vpop.f32.mrb[0].mxu0
  %v883 = vpop.f32.mrb[0].mxu0
  %v884 = vpop.f32.mrb[0].mxu0
  %885 = vdwg.mxu0
  %886 = vmatprep.subr.bf16.mxu0 0
  %887 = vmatpush1.bf16.msra.mxu0 %v614
  %888 = vmatprep.subr.bf16.mxu0 0
  %889 = vmatpush1.bf16.msra.mxu0 %v615
  %890 = vmatprep.subr.bf16.mxu0 0
  %891 = vmatpush1.bf16.msra.mxu0 %v616
  %892 = vmatprep.subr.bf16.mxu0 0
  %893 = vmatpush1.bf16.msra.mxu0 %v617
  %894 = vmatprep.subr.bf16.mxu0 0
  %895 = vmatpush1.bf16.msra.mxu0 %v618
  %896 = vmatprep.subr.bf16.mxu0 0
  %897 = vmatpush1.bf16.msra.mxu0 %v619
  %898 = vmatprep.subr.bf16.mxu0 0
  %899 = vmatpush1.bf16.msra.mxu0 %v620
  %900 = vmatprep.subr.bf16.mxu0 0
  %901 = vmatpush1.bf16.msra.mxu0 %v621
  %902 = vmatprep.subr.bf16.mxu0 0
  %903 = vmatpush1.bf16.msra.mxu0 0
  %904 = vmatprep.subr.bf16.mxu0 0
  %905 = vmatpush1.bf16.msra.mxu0 0
  %906 = vmatprep.subr.bf16.mxu0 0
  %907 = vmatpush1.bf16.msra.mxu0 0
  %908 = vmatprep.subr.bf16.mxu0 0
  %909 = vmatpush1.bf16.msra.mxu0 0
  %910 = vmatprep.subr.bf16.mxu0 0
  %911 = vmatpush1.bf16.msra.mxu0 0
  %912 = vmatprep.subr.bf16.mxu0 0
  %913 = vmatpush1.bf16.msra.mxu0 0
  %914 = vmatprep.subr.bf16.mxu0 0
  %915 = vmatpush1.bf16.msra.mxu0 0
  %916 = vmatprep.subr.bf16.mxu0 0
  %917 = vmatpush1.bf16.msra.mxu0 0
  %918 = vmatprep.mubr.bf16.mxu0 0
  %919 = vmatmul.mubr.bf16.gmra.mrb[0].mxu0 %v234
  %v920 = vpop.f32.mrb[0].mxu0
  %v921 = vadd.f32 %v873, %v920
  %v922 = vpop.f32.mrb[0].mxu0
  %v923 = vpop.f32.mrb[0].mxu0
  %v924 = vadd.f32 %v876, %v923
  %v925 = vpop.f32.mrb[0].mxu0
  %926 = vmatprep.mubr.bf16.mxu0 0
  %927 = vmatmul.mubr.bf16.gmra.mrb[0].mxu0 %v243
  %v928 = vpop.f32.mrb[0].mxu0
  %v929 = vadd.f32 %v881, %v928
  %v930 = vpop.f32.mrb[0].mxu0
  %v931 = vpop.f32.mrb[0].mxu0
  %v932 = vpop.f32.mrb[0].mxu0
  %933 = vdwg.mxu0
  %v934 = vld [vmem:[%s3] sm:$0xf]
  %v935 = vld [vmem:[%s3 + $0x4] sm:$0xf]
  %v936 = vld [vmem:[%s3 + $0x8] sm:$0xf]
  %v937 = vunpack.c.l.bf16 %v934
  %v938 = vunpack.c.l.bf16 %v935
  %v939 = vunpack.c.l.bf16 %v936
  %v940 = vadd.f32 %v921, %v937
  %v941 = vadd.f32 %v924, %v938
  %v942 = vadd.f32 %v929, %v939
  %v943 = vmax.f32 %v940, 0.0
  %v944 = vmax.f32 %v941, 0.0
  %v945 = vmax.f32 %v942, 0.0
  %v946 = vpack.c.bf16 %v944, %v943
  %v947 = vpack.c.bf16 %v945, %v945
  %v950 = vunpack.c.l.b16 %v946
  %v951 = vunpack.c.h.b16 %v946
  %v952 = vunpack.c.l.b16 %v947
  %v953 = vpack.c.b16 %v950, %v950
  %v954 = vpack.c.b16 %v951, %v951
  %v955 = vpack.c.b16 %v952, %v952
  %959 = vst [vmem:[%s4] sm:$0xf] %v953
  %960 = vst [vmem:[%s4 + $0x4] sm:$0xf] %v954
  %961 = vst [vmem:[%s4 + $0x8] sm:$0xf] %v955
  // Predicated region
  $region18: #{_lambda_.26} parent=0 // pred_check
    _
  $region19: #{_lambda_.26} parent=0 // pred_check_branch
    %963 = sbr.rel (0) target = $region21
  $region20: #{_lambda_.26} parent=0 // pred_region
    _
  $region21: #{_lambda_.26} parent=0 // pred_fallthru
    _
  // Predicated region
  $region22: #{_lambda_.26} parent=0 // pred_check
    _
  $region23: #{_lambda_.26} parent=0 // pred_check_branch
    %965 = sbr.rel (0) target = $region25
  $region24: #{_lambda_.26} parent=0 // pred_region
    _
  $region25: #{_lambda_.26} parent=0 // pred_fallthru
    _

// kernel: _lambda_.27
$region0: #{_lambda_.27}
  #allocation0 [shape = 'u32[]', space=smem, size = 0x4, offset = 0x4, fixed_abs, tag = 'smem constant byte address 0x4 - core index']
  #allocation1 [shape = 'u32[144,128]{1,0:T(1,128)}', space=vmem, size = 0x12000, scoped, tag = 'internal scratch']
  %s0 = inlined_call_operand.vmem [shape: bf16[6,512], index: 0, kind: input, shape index: {}]
  %s1 = inlined_call_operand.vmem [shape: bf16[512,256], index: 1, kind: input, shape index: {}]
  %s2 = inlined_call_operand.vmem [shape: f32[1,256], index: 2, kind: input, shape index: {}]
  %s3 = inlined_call_operand.vmem [shape: bf16[6,256], index: 3, kind: output, shape index: {}]
  %s4 = sld [smem:[#allocation0]]
  $region22: #{_lambda_.27} parent=0
    _
  %s6 = ssub.s32 1, %s4
  %s7 = scalar_select 0, %s6, %s4
  // Predicated region
  $region2: #{_lambda_.27} parent=0 // pred_check
    _
  $region3: #{_lambda_.27} parent=0 // pred_check_branch
    %9 = sbr.rel (0) target = $region5
  $region4: #{_lambda_.27} parent=0 // pred_region
    _
  $region5: #{_lambda_.27} parent=0 // pred_fallthru
    _
  // Predicated region
  $region6: #{_lambda_.27} parent=0 // pred_check
    _
  $region7: #{_lambda_.27} parent=0 // pred_check_branch
    %11 = sbr.rel (0) target = $region9
  $region8: #{_lambda_.27} parent=0 // pred_region
    _
  $region9: #{_lambda_.27} parent=0 // pred_fallthru
    _
  // Predicated region
  $region10: #{_lambda_.27} parent=0 // pred_check
    _
  $region11: #{_lambda_.27} parent=0 // pred_check_branch
    %13 = sbr.rel (0) target = $region13
  $region12: #{_lambda_.27} parent=0 // pred_region
    _
  $region13: #{_lambda_.27} parent=0 // pred_fallthru
    _
  %v14 = vld [vmem:[%s0] sm:$0x77]
  %v15 = vld [vmem:[%s0 + $0x8] sm:$0x77]
  %v16 = vld [vmem:[%s1] sm:$0xff]
  %v17 = vld [vmem:[%s1 + $0x8] sm:$0xff]
  %v18 = vld [vmem:[%s1 + $0x10] sm:$0xff]
  %v19 = vld [vmem:[%s1 + $0x18] sm:$0xff]
  %v20 = vld [vmem:[%s1 + $0x20] sm:$0xff]
  %v21 = vld [vmem:[%s1 + $0x28] sm:$0xff]
  %v22 = vld [vmem:[%s1 + $0x30] sm:$0xff]
  %v23 = vld [vmem:[%s1 + $0x38] sm:$0xff]
  %v24 = vld [vmem:[%s1 + $0x40] sm:$0xff]
  %v25 = vld [vmem:[%s1 + $0x48] sm:$0xff]
  %v26 = vld [vmem:[%s1 + $0x50] sm:$0xff]
  %v27 = vld [vmem:[%s1 + $0x58] sm:$0xff]
  %v28 = vld [vmem:[%s1 + $0x60] sm:$0xff]
  %v29 = vld [vmem:[%s1 + $0x68] sm:$0xff]
  %v30 = vld [vmem:[%s1 + $0x70] sm:$0xff]
  %v31 = vld [vmem:[%s1 + $0x78] sm:$0xff]
  %v32 = vld [vmem:[%s1 + $0x80] sm:$0xff]
  %v33 = vld [vmem:[%s1 + $0x88] sm:$0xff]
  %v34 = vld [vmem:[%s1 + $0x90] sm:$0xff]
  %v35 = vld [vmem:[%s1 + $0x98] sm:$0xff]
  %v36 = vld [vmem:[%s1 + $0xa0] sm:$0xff]
  %v37 = vld [vmem:[%s1 + $0xa8] sm:$0xff]
  %v38 = vld [vmem:[%s1 + $0xb0] sm:$0xff]
  %v39 = vld [vmem:[%s1 + $0xb8] sm:$0xff]
  %v40 = vld [vmem:[%s1 + $0xc0] sm:$0xff]
  %v41 = vld [vmem:[%s1 + $0xc8] sm:$0xff]
  %v42 = vld [vmem:[%s1 + $0xd0] sm:$0xff]
  %v43 = vld [vmem:[%s1 + $0xd8] sm:$0xff]
  %v44 = vld [vmem:[%s1 + $0xe0] sm:$0xff]
  %v45 = vld [vmem:[%s1 + $0xe8] sm:$0xff]
  %v46 = vld [vmem:[%s1 + $0xf0] sm:$0xff]
  %v47 = vld [vmem:[%s1 + $0xf8] sm:$0xff]
  %v48 = vld [vmem:[%s1 + $0x100] sm:$0xff]
  %v49 = vld [vmem:[%s1 + $0x108] sm:$0xff]
  %v50 = vld [vmem:[%s1 + $0x110] sm:$0xff]
  %v51 = vld [vmem:[%s1 + $0x118] sm:$0xff]
  %v52 = vld [vmem:[%s1 + $0x120] sm:$0xff]
  %v53 = vld [vmem:[%s1 + $0x128] sm:$0xff]
  %v54 = vld [vmem:[%s1 + $0x130] sm:$0xff]
  %v55 = vld [vmem:[%s1 + $0x138] sm:$0xff]
  %v56 = vld [vmem:[%s1 + $0x140] sm:$0xff]
  %v57 = vld [vmem:[%s1 + $0x148] sm:$0xff]
  %v58 = vld [vmem:[%s1 + $0x150] sm:$0xff]
  %v59 = vld [vmem:[%s1 + $0x158] sm:$0xff]
  %v60 = vld [vmem:[%s1 + $0x160] sm:$0xff]
  %v61 = vld [vmem:[%s1 + $0x168] sm:$0xff]
  %v62 = vld [vmem:[%s1 + $0x170] sm:$0xff]
  %v63 = vld [vmem:[%s1 + $0x178] sm:$0xff]
  %v64 = vld [vmem:[%s1 + $0x180] sm:$0xff]
  %v65 = vld [vmem:[%s1 + $0x188] sm:$0xff]
  %v66 = vld [vmem:[%s1 + $0x190] sm:$0xff]
  %v67 = vld [vmem:[%s1 + $0x198] sm:$0xff]
  %v68 = vld [vmem:[%s1 + $0x1a0] sm:$0xff]
  %v69 = vld [vmem:[%s1 + $0x1a8] sm:$0xff]
  %v70 = vld [vmem:[%s1 + $0x1b0] sm:$0xff]
  %v71 = vld [vmem:[%s1 + $0x1b8] sm:$0xff]
  %v72 = vld [vmem:[%s1 + $0x1c0] sm:$0xff]
  %v73 = vld [vmem:[%s1 + $0x1c8] sm:$0xff]
  %v74 = vld [vmem:[%s1 + $0x1d0] sm:$0xff]
  %v75 = vld [vmem:[%s1 + $0x1d8] sm:$0xff]
  %v76 = vld [vmem:[%s1 + $0x1e0] sm:$0xff]
  %v77 = vld [vmem:[%s1 + $0x1e8] sm:$0xff]
  %v78 = vld [vmem:[%s1 + $0x1f0] sm:$0xff]
  %v79 = vld [vmem:[%s1 + $0x1f8] sm:$0xff]
  %v80 = vld [vmem:[%s2] sm:$0x3]
  %v82 = vlaneseq
  %v83 = vshrl.u32 %v82, 7
  %v84 = vsub.s32 0, %v83
  %v85 = vrot.slane %v80, %v84
  %v86 = vlaneseq
  %v87 = vshrl.u32 %v86, 7
  %v88 = vsub.s32 1, %v87
  %v89 = vrot.slane %v80, %v88
  %v94 = vunpack.c.l.b16 %v14
  %v95 = vunpack.c.h.b16 %v14
  %v96 = vunpack.c.l.b16 %v15
  %v97 = vunpack.c.h.b16 %v15
  %v98 = vpack.c.b16 %v94, %v94
  %v99 = vpack.c.b16 %v95, %v95
  %v100 = vpack.c.b16 %v96, %v96
  %v101 = vpack.c.b16 %v97, %v97
  %v170 = vunpack.c.l.b16 %v16
  %v171 = vunpack.c.h.b16 %v16
  %v172 = vunpack.c.l.b16 %v17
  %v173 = vunpack.c.h.b16 %v17
  %v174 = vunpack.c.l.b16 %v18
  %v175 = vunpack.c.h.b16 %v18
  %v176 = vunpack.c.l.b16 %v19
  %v177 = vunpack.c.h.b16 %v19
  %v178 = vunpack.c.l.b16 %v20
  %v179 = vunpack.c.h.b16 %v20
  %v180 = vunpack.c.l.b16 %v21
  %v181 = vunpack.c.h.b16 %v21
  %v182 = vunpack.c.l.b16 %v22
  %v183 = vunpack.c.h.b16 %v22
  %v184 = vunpack.c.l.b16 %v23
  %v185 = vunpack.c.h.b16 %v23
  %v186 = vunpack.c.l.b16 %v24
  %v187 = vunpack.c.h.b16 %v24
  %v188 = vunpack.c.l.b16 %v25
  %v189 = vunpack.c.h.b16 %v25
  %v190 = vunpack.c.l.b16 %v26
  %v191 = vunpack.c.h.b16 %v26
  %v192 = vunpack.c.l.b16 %v27
  %v193 = vunpack.c.h.b16 %v27
  %v194 = vunpack.c.l.b16 %v28
  %v195 = vunpack.c.h.b16 %v28
  %v196 = vunpack.c.l.b16 %v29
  %v197 = vunpack.c.h.b16 %v29
  %v198 = vunpack.c.l.b16 %v30
  %v199 = vunpack.c.h.b16 %v30
  %v200 = vunpack.c.l.b16 %v31
  %v201 = vunpack.c.h.b16 %v31
  %v202 = vunpack.c.l.b16 %v32
  %v203 = vunpack.c.h.b16 %v32
  %v204 = vunpack.c.l.b16 %v33
  %v205 = vunpack.c.h.b16 %v33
  %v206 = vunpack.c.l.b16 %v34
  %v207 = vunpack.c.h.b16 %v34
  %v208 = vunpack.c.l.b16 %v35
  %v209 = vunpack.c.h.b16 %v35
  %v210 = vunpack.c.l.b16 %v36
  %v211 = vunpack.c.h.b16 %v36
  %v212 = vunpack.c.l.b16 %v37
  %v213 = vunpack.c.h.b16 %v37
  %v214 = vunpack.c.l.b16 %v38
  %v215 = vunpack.c.h.b16 %v38
  %v216 = vunpack.c.l.b16 %v39
  %v217 = vunpack.c.h.b16 %v39
  %v218 = vunpack.c.l.b16 %v40
  %v219 = vunpack.c.h.b16 %v40
  %v220 = vunpack.c.l.b16 %v41
  %v221 = vunpack.c.h.b16 %v41
  %v222 = vunpack.c.l.b16 %v42
  %v223 = vunpack.c.h.b16 %v42
  %v224 = vunpack.c.l.b16 %v43
  %v225 = vunpack.c.h.b16 %v43
  %v226 = vunpack.c.l.b16 %v44
  %v227 = vunpack.c.h.b16 %v44
  %v228 = vunpack.c.l.b16 %v45
  %v229 = vunpack.c.h.b16 %v45
  %v230 = vunpack.c.l.b16 %v46
  %v231 = vunpack.c.h.b16 %v46
  %v232 = vunpack.c.l.b16 %v47
  %v233 = vunpack.c.h.b16 %v47
  %v234 = vunpack.c.l.b16 %v48
  %v235 = vunpack.c.h.b16 %v48
  %v236 = vunpack.c.l.b16 %v49
  %v237 = vunpack.c.h.b16 %v49
  %v238 = vunpack.c.l.b16 %v50
  %v239 = vunpack.c.h.b16 %v50
  %v240 = vunpack.c.l.b16 %v51
  %v241 = vunpack.c.h.b16 %v51
  %v242 = vunpack.c.l.b16 %v52
  %v243 = vunpack.c.h.b16 %v52
  %v244 = vunpack.c.l.b16 %v53
  %v245 = vunpack.c.h.b16 %v53
  %v246 = vunpack.c.l.b16 %v54
  %v247 = vunpack.c.h.b16 %v54
  %v248 = vunpack.c.l.b16 %v55
  %v249 = vunpack.c.h.b16 %v55
  %v250 = vunpack.c.l.b16 %v56
  %v251 = vunpack.c.h.b16 %v56
  %v252 = vunpack.c.l.b16 %v57
  %v253 = vunpack.c.h.b16 %v57
  %v254 = vunpack.c.l.b16 %v58
  %v255 = vunpack.c.h.b16 %v58
  %v256 = vunpack.c.l.b16 %v59
  %v257 = vunpack.c.h.b16 %v59
  %v258 = vunpack.c.l.b16 %v60
  %v259 = vunpack.c.h.b16 %v60
  %v260 = vunpack.c.l.b16 %v61
  %v261 = vunpack.c.h.b16 %v61
  %v262 = vunpack.c.l.b16 %v62
  %v263 = vunpack.c.h.b16 %v62
  %v264 = vunpack.c.l.b16 %v63
  %v265 = vunpack.c.h.b16 %v63
  %v266 = vunpack.c.l.b16 %v64
  %v267 = vunpack.c.h.b16 %v64
  %v268 = vunpack.c.l.b16 %v65
  %v269 = vunpack.c.h.b16 %v65
  %v270 = vunpack.c.l.b16 %v66
  %v271 = vunpack.c.h.b16 %v66
  %v272 = vunpack.c.l.b16 %v67
  %v273 = vunpack.c.h.b16 %v67
  %v274 = vunpack.c.l.b16 %v68
  %v275 = vunpack.c.h.b16 %v68
  %v276 = vunpack.c.l.b16 %v69
  %v277 = vunpack.c.h.b16 %v69
  %v278 = vunpack.c.l.b16 %v70
  %v279 = vunpack.c.h.b16 %v70
  %v280 = vunpack.c.l.b16 %v71
  %v281 = vunpack.c.h.b16 %v71
  %v282 = vunpack.c.l.b16 %v72
  %v283 = vunpack.c.h.b16 %v72
  %v284 = vunpack.c.l.b16 %v73
  %v285 = vunpack.c.h.b16 %v73
  %v286 = vunpack.c.l.b16 %v74
  %v287 = vunpack.c.h.b16 %v74
  %v288 = vunpack.c.l.b16 %v75
  %v289 = vunpack.c.h.b16 %v75
  %v290 = vunpack.c.l.b16 %v76
  %v291 = vunpack.c.h.b16 %v76
  %v292 = vunpack.c.l.b16 %v77
  %v293 = vunpack.c.h.b16 %v77
  %v294 = vunpack.c.l.b16 %v78
  %v295 = vunpack.c.h.b16 %v78
  %v296 = vunpack.c.l.b16 %v79
  %v297 = vunpack.c.h.b16 %v79
  %v298 = vpack.c.b16 %v172, %v170
  %v299 = vpack.c.b16 %v173, %v171
  %v300 = vpack.c.b16 %v176, %v174
  %v301 = vpack.c.b16 %v177, %v175
  %v302 = vpack.c.b16 %v180, %v178
  %v303 = vpack.c.b16 %v181, %v179
  %v304 = vpack.c.b16 %v184, %v182
  %v305 = vpack.c.b16 %v185, %v183
  %v306 = vpack.c.b16 %v188, %v186
  %v307 = vpack.c.b16 %v189, %v187
  %v308 = vpack.c.b16 %v192, %v190
  %v309 = vpack.c.b16 %v193, %v191
  %v310 = vpack.c.b16 %v196, %v194
  %v311 = vpack.c.b16 %v197, %v195
  %v312 = vpack.c.b16 %v200, %v198
  %v313 = vpack.c.b16 %v201, %v199
  %v314 = vpack.c.b16 %v204, %v202
  %v315 = vpack.c.b16 %v205, %v203
  %v316 = vpack.c.b16 %v208, %v206
  %v317 = vpack.c.b16 %v209, %v207
  %v318 = vpack.c.b16 %v212, %v210
  %v319 = vpack.c.b16 %v213, %v211
  %v320 = vpack.c.b16 %v216, %v214
  %v321 = vpack.c.b16 %v217, %v215
  %v322 = vpack.c.b16 %v220, %v218
  %v323 = vpack.c.b16 %v221, %v219
  %v324 = vpack.c.b16 %v224, %v222
  %v325 = vpack.c.b16 %v225, %v223
  %v326 = vpack.c.b16 %v228, %v226
  %v327 = vpack.c.b16 %v229, %v227
  %v328 = vpack.c.b16 %v232, %v230
  %v329 = vpack.c.b16 %v233, %v231
  %v330 = vpack.c.b16 %v236, %v234
  %v331 = vpack.c.b16 %v237, %v235
  %v332 = vpack.c.b16 %v240, %v238
  %v333 = vpack.c.b16 %v241, %v239
  %v334 = vpack.c.b16 %v244, %v242
  %v335 = vpack.c.b16 %v245, %v243
  %v336 = vpack.c.b16 %v248, %v246
  %v337 = vpack.c.b16 %v249, %v247
  %v338 = vpack.c.b16 %v252, %v250
  %v339 = vpack.c.b16 %v253, %v251
  %v340 = vpack.c.b16 %v256, %v254
  %v341 = vpack.c.b16 %v257, %v255
  %v342 = vpack.c.b16 %v260, %v258
  %v343 = vpack.c.b16 %v261, %v259
  %v344 = vpack.c.b16 %v264, %v262
  %v345 = vpack.c.b16 %v265, %v263
  %v346 = vpack.c.b16 %v268, %v266
  %v347 = vpack.c.b16 %v269, %v267
  %v348 = vpack.c.b16 %v272, %v270
  %v349 = vpack.c.b16 %v273, %v271
  %v350 = vpack.c.b16 %v276, %v274
  %v351 = vpack.c.b16 %v277, %v275
  %v352 = vpack.c.b16 %v280, %v278
  %v353 = vpack.c.b16 %v281, %v279
  %v354 = vpack.c.b16 %v284, %v282
  %v355 = vpack.c.b16 %v285, %v283
  %v356 = vpack.c.b16 %v288, %v286
  %v357 = vpack.c.b16 %v289, %v287
  %v358 = vpack.c.b16 %v292, %v290
  %v359 = vpack.c.b16 %v293, %v291
  %v360 = vpack.c.b16 %v296, %v294
  %v361 = vpack.c.b16 %v297, %v295
  %426 = vmatprep.subr.bf16.mxu0 %v299
  %427 = vmatpush1.bf16.msra.mxu0 %v298
  %428 = vmatprep.subr.bf16.mxu0 %v301
  %429 = vmatpush1.bf16.msra.mxu0 %v300
  %430 = vmatprep.subr.bf16.mxu0 %v303
  %431 = vmatpush1.bf16.msra.mxu0 %v302
  %432 = vmatprep.subr.bf16.mxu0 %v305
  %433 = vmatpush1.bf16.msra.mxu0 %v304
  %434 = vmatprep.subr.bf16.mxu0 %v307
  %435 = vmatpush1.bf16.msra.mxu0 %v306
  %436 = vmatprep.subr.bf16.mxu0 %v309
  %437 = vmatpush1.bf16.msra.mxu0 %v308
  %438 = vmatprep.subr.bf16.mxu0 %v311
  %439 = vmatpush1.bf16.msra.mxu0 %v310
  %440 = vmatprep.subr.bf16.mxu0 %v313
  %441 = vmatpush1.bf16.msra.mxu0 %v312
  %442 = vmatprep.subr.bf16.mxu0 %v315
  %443 = vmatpush1.bf16.msra.mxu0 %v314
  %444 = vmatprep.subr.bf16.mxu0 %v317
  %445 = vmatpush1.bf16.msra.mxu0 %v316
  %446 = vmatprep.subr.bf16.mxu0 %v319
  %447 = vmatpush1.bf16.msra.mxu0 %v318
  %448 = vmatprep.subr.bf16.mxu0 %v321
  %449 = vmatpush1.bf16.msra.mxu0 %v320
  %450 = vmatprep.subr.bf16.mxu0 %v323
  %451 = vmatpush1.bf16.msra.mxu0 %v322
  %452 = vmatprep.subr.bf16.mxu0 %v325
  %453 = vmatpush1.bf16.msra.mxu0 %v324
  %454 = vmatprep.subr.bf16.mxu0 %v327
  %455 = vmatpush1.bf16.msra.mxu0 %v326
  %456 = vmatprep.subr.bf16.mxu0 %v329
  %457 = vmatpush1.bf16.msra.mxu0 %v328
  %458 = vmatprep.mubr.bf16.mxu0 %v99
  %459 = vmatmul.mubr.bf16.gmra.mrb[0].mxu0 %v98
  %v460 = vpop.f32.mrb[0].mxu0
  %v461 = vadd.f32 %v85, %v460
  %v462 = vpop.f32.mrb[0].mxu0
  %v463 = vadd.f32 %v89, %v462
  %v464 = vpop.f32.mrb[0].mxu0
  %v465 = vpop.f32.mrb[0].mxu0
  %466 = vdwg.mxu0
  %467 = vmatprep.subr.bf16.mxu0 %v331
  %468 = vmatpush1.bf16.msra.mxu0 %v330
  %469 = vmatprep.subr.bf16.mxu0 %v333
  %470 = vmatpush1.bf16.msra.mxu0 %v332
  %471 = vmatprep.subr.bf16.mxu0 %v335
  %472 = vmatpush1.bf16.msra.mxu0 %v334
  %473 = vmatprep.subr.bf16.mxu0 %v337
  %474 = vmatpush1.bf16.msra.mxu0 %v336
  %475 = vmatprep.subr.bf16.mxu0 %v339
  %476 = vmatpush1.bf16.msra.mxu0 %v338
  %477 = vmatprep.subr.bf16.mxu0 %v341
  %478 = vmatpush1.bf16.msra.mxu0 %v340
  %479 = vmatprep.subr.bf16.mxu0 %v343
  %480 = vmatpush1.bf16.msra.mxu0 %v342
  %481 = vmatprep.subr.bf16.mxu0 %v345
  %482 = vmatpush1.bf16.msra.mxu0 %v344
  %483 = vmatprep.subr.bf16.mxu0 %v347
  %484 = vmatpush1.bf16.msra.mxu0 %v346
  %485 = vmatprep.subr.bf16.mxu0 %v349
  %486 = vmatpush1.bf16.msra.mxu0 %v348
  %487 = vmatprep.subr.bf16.mxu0 %v351
  %488 = vmatpush1.bf16.msra.mxu0 %v350
  %489 = vmatprep.subr.bf16.mxu0 %v353
  %490 = vmatpush1.bf16.msra.mxu0 %v352
  %491 = vmatprep.subr.bf16.mxu0 %v355
  %492 = vmatpush1.bf16.msra.mxu0 %v354
  %493 = vmatprep.subr.bf16.mxu0 %v357
  %494 = vmatpush1.bf16.msra.mxu0 %v356
  %495 = vmatprep.subr.bf16.mxu0 %v359
  %496 = vmatpush1.bf16.msra.mxu0 %v358
  %497 = vmatprep.subr.bf16.mxu0 %v361
  %498 = vmatpush1.bf16.msra.mxu0 %v360
  %499 = vmatprep.mubr.bf16.mxu0 %v101
  %500 = vmatmul.mubr.bf16.gmra.mrb[0].mxu0 %v100
  %v501 = vpop.f32.mrb[0].mxu0
  %v502 = vadd.f32 %v461, %v501
  %v503 = vpop.f32.mrb[0].mxu0
  %v504 = vadd.f32 %v463, %v503
  %v505 = vpop.f32.mrb[0].mxu0
  %v506 = vpop.f32.mrb[0].mxu0
  %507 = vdwg.mxu0
  %v508 = vmax.f32 %v502, 0.0
  %v509 = vmax.f32 %v504, 0.0
  %v510 = vpack.c.bf16 %v508, %v508
  %v511 = vpack.c.bf16 %v509, %v509
  %v514 = vunpack.c.l.b16 %v510
  %v515 = vunpack.c.l.b16 %v511
  %v516 = vpack.c.b16 %v515, %v514
  %518 = vst [vmem:[%s3] sm:$0x77] %v516
  // Predicated region
  $region14: #{_lambda_.27} parent=0 // pred_check
    _
  $region15: #{_lambda_.27} parent=0 // pred_check_branch
    %520 = sbr.rel (0) target = $region17
  $region16: #{_lambda_.27} parent=0 // pred_region
    _
  $region17: #{_lambda_.27} parent=0 // pred_fallthru
    _
  // Predicated region
  $region18: #{_lambda_.27} parent=0 // pred_check
    _
  $region19: #{_lambda_.27} parent=0 // pred_check_branch
    %522 = sbr.rel (0) target = $region21
  $region20: #{_lambda_.27} parent=0 // pred_region
    _
  $region21: #{_lambda_.27} parent=0 // pred_fallthru
    _

// kernel: _lambda_.29
$region0: #{_lambda_.29}
  #allocation0 [shape = 'u32[]', space=smem, size = 0x4, offset = 0x4, fixed_abs, tag = 'smem constant byte address 0x4 - core index']
  #allocation1 [shape = 'u32[144,128]{1,0:T(1,128)}', space=vmem, size = 0x12000, scoped, tag = 'internal scratch']
  %s0 = inlined_call_operand.vmem [shape: bf16[6,256], index: 0, kind: input, shape index: {}]
  %s1 = inlined_call_operand.vmem [shape: bf16[256,256], index: 1, kind: input, shape index: {}]
  %s2 = inlined_call_operand.vmem [shape: f32[1,256], index: 2, kind: input, shape index: {}]
  %s3 = inlined_call_operand.vmem [shape: bf16[6,256], index: 3, kind: output, shape index: {}]
  %s4 = sld [smem:[#allocation0]]
  $region22: #{_lambda_.29} parent=0
    _
  %s6 = ssub.s32 1, %s4
  %s7 = scalar_select 0, %s6, %s4
  // Predicated region
  $region2: #{_lambda_.29} parent=0 // pred_check
    _
  $region3: #{_lambda_.29} parent=0 // pred_check_branch
    %9 = sbr.rel (0) target = $region5
  $region4: #{_lambda_.29} parent=0 // pred_region
    _
  $region5: #{_lambda_.29} parent=0 // pred_fallthru
    _
  // Predicated region
  $region6: #{_lambda_.29} parent=0 // pred_check
    _
  $region7: #{_lambda_.29} parent=0 // pred_check_branch
    %11 = sbr.rel (0) target = $region9
  $region8: #{_lambda_.29} parent=0 // pred_region
    _
  $region9: #{_lambda_.29} parent=0 // pred_fallthru
    _
  // Predicated region
  $region10: #{_lambda_.29} parent=0 // pred_check
    _
  $region11: #{_lambda_.29} parent=0 // pred_check_branch
    %13 = sbr.rel (0) target = $region13
  $region12: #{_lambda_.29} parent=0 // pred_region
    _
  $region13: #{_lambda_.29} parent=0 // pred_fallthru
    _
  %v14 = vld [vmem:[%s0] sm:$0x77]
  %v15 = vld [vmem:[%s1] sm:$0xff]
  %v16 = vld [vmem:[%s1 + $0x8] sm:$0xff]
  %v17 = vld [vmem:[%s1 + $0x10] sm:$0xff]
  %v18 = vld [vmem:[%s1 + $0x18] sm:$0xff]
  %v19 = vld [vmem:[%s1 + $0x20] sm:$0xff]
  %v20 = vld [vmem:[%s1 + $0x28] sm:$0xff]
  %v21 = vld [vmem:[%s1 + $0x30] sm:$0xff]
  %v22 = vld [vmem:[%s1 + $0x38] sm:$0xff]
  %v23 = vld [vmem:[%s1 + $0x40] sm:$0xff]
  %v24 = vld [vmem:[%s1 + $0x48] sm:$0xff]
  %v25 = vld [vmem:[%s1 + $0x50] sm:$0xff]
  %v26 = vld [vmem:[%s1 + $0x58] sm:$0xff]
  %v27 = vld [vmem:[%s1 + $0x60] sm:$0xff]
  %v28 = vld [vmem:[%s1 + $0x68] sm:$0xff]
  %v29 = vld [vmem:[%s1 + $0x70] sm:$0xff]
  %v30 = vld [vmem:[%s1 + $0x78] sm:$0xff]
  %v31 = vld [vmem:[%s1 + $0x80] sm:$0xff]
  %v32 = vld [vmem:[%s1 + $0x88] sm:$0xff]
  %v33 = vld [vmem:[%s1 + $0x90] sm:$0xff]
  %v34 = vld [vmem:[%s1 + $0x98] sm:$0xff]
  %v35 = vld [vmem:[%s1 + $0xa0] sm:$0xff]
  %v36 = vld [vmem:[%s1 + $0xa8] sm:$0xff]
  %v37 = vld [vmem:[%s1 + $0xb0] sm:$0xff]
  %v38 = vld [vmem:[%s1 + $0xb8] sm:$0xff]
  %v39 = vld [vmem:[%s1 + $0xc0] sm:$0xff]
  %v40 = vld [vmem:[%s1 + $0xc8] sm:$0xff]
  %v41 = vld [vmem:[%s1 + $0xd0] sm:$0xff]
  %v42 = vld [vmem:[%s1 + $0xd8] sm:$0xff]
  %v43 = vld [vmem:[%s1 + $0xe0] sm:$0xff]
  %v44 = vld [vmem:[%s1 + $0xe8] sm:$0xff]
  %v45 = vld [vmem:[%s1 + $0xf0] sm:$0xff]
  %v46 = vld [vmem:[%s1 + $0xf8] sm:$0xff]
  %v47 = vld [vmem:[%s2] sm:$0x3]
  %v49 = vlaneseq
  %v50 = vshrl.u32 %v49, 7
  %v51 = vsub.s32 0, %v50
  %v52 = vrot.slane %v47, %v51
  %v53 = vlaneseq
  %v54 = vshrl.u32 %v53, 7
  %v55 = vsub.s32 1, %v54
  %v56 = vrot.slane %v47, %v55
  %v60 = vunpack.c.l.b16 %v14
  %v61 = vunpack.c.h.b16 %v14
  %v62 = vpack.c.b16 %v60, %v60
  %v63 = vpack.c.b16 %v61, %v61
  %v98 = vunpack.c.l.b16 %v15
  %v99 = vunpack.c.h.b16 %v15
  %v100 = vunpack.c.l.b16 %v16
  %v101 = vunpack.c.h.b16 %v16
  %v102 = vunpack.c.l.b16 %v17
  %v103 = vunpack.c.h.b16 %v17
  %v104 = vunpack.c.l.b16 %v18
  %v105 = vunpack.c.h.b16 %v18
  %v106 = vunpack.c.l.b16 %v19
  %v107 = vunpack.c.h.b16 %v19
  %v108 = vunpack.c.l.b16 %v20
  %v109 = vunpack.c.h.b16 %v20
  %v110 = vunpack.c.l.b16 %v21
  %v111 = vunpack.c.h.b16 %v21
  %v112 = vunpack.c.l.b16 %v22
  %v113 = vunpack.c.h.b16 %v22
  %v114 = vunpack.c.l.b16 %v23
  %v115 = vunpack.c.h.b16 %v23
  %v116 = vunpack.c.l.b16 %v24
  %v117 = vunpack.c.h.b16 %v24
  %v118 = vunpack.c.l.b16 %v25
  %v119 = vunpack.c.h.b16 %v25
  %v120 = vunpack.c.l.b16 %v26
  %v121 = vunpack.c.h.b16 %v26
  %v122 = vunpack.c.l.b16 %v27
  %v123 = vunpack.c.h.b16 %v27
  %v124 = vunpack.c.l.b16 %v28
  %v125 = vunpack.c.h.b16 %v28
  %v126 = vunpack.c.l.b16 %v29
  %v127 = vunpack.c.h.b16 %v29
  %v128 = vunpack.c.l.b16 %v30
  %v129 = vunpack.c.h.b16 %v30
  %v130 = vunpack.c.l.b16 %v31
  %v131 = vunpack.c.h.b16 %v31
  %v132 = vunpack.c.l.b16 %v32
  %v133 = vunpack.c.h.b16 %v32
  %v134 = vunpack.c.l.b16 %v33
  %v135 = vunpack.c.h.b16 %v33
  %v136 = vunpack.c.l.b16 %v34
  %v137 = vunpack.c.h.b16 %v34
  %v138 = vunpack.c.l.b16 %v35
  %v139 = vunpack.c.h.b16 %v35
  %v140 = vunpack.c.l.b16 %v36
  %v141 = vunpack.c.h.b16 %v36
  %v142 = vunpack.c.l.b16 %v37
  %v143 = vunpack.c.h.b16 %v37
  %v144 = vunpack.c.l.b16 %v38
  %v145 = vunpack.c.h.b16 %v38
  %v146 = vunpack.c.l.b16 %v39
  %v147 = vunpack.c.h.b16 %v39
  %v148 = vunpack.c.l.b16 %v40
  %v149 = vunpack.c.h.b16 %v40
  %v150 = vunpack.c.l.b16 %v41
  %v151 = vunpack.c.h.b16 %v41
  %v152 = vunpack.c.l.b16 %v42
  %v153 = vunpack.c.h.b16 %v42
  %v154 = vunpack.c.l.b16 %v43
  %v155 = vunpack.c.h.b16 %v43
  %v156 = vunpack.c.l.b16 %v44
  %v157 = vunpack.c.h.b16 %v44
  %v158 = vunpack.c.l.b16 %v45
  %v159 = vunpack.c.h.b16 %v45
  %v160 = vunpack.c.l.b16 %v46
  %v161 = vunpack.c.h.b16 %v46
  %v162 = vpack.c.b16 %v100, %v98
  %v163 = vpack.c.b16 %v101, %v99
  %v164 = vpack.c.b16 %v104, %v102
  %v165 = vpack.c.b16 %v105, %v103
  %v166 = vpack.c.b16 %v108, %v106
  %v167 = vpack.c.b16 %v109, %v107
  %v168 = vpack.c.b16 %v112, %v110
  %v169 = vpack.c.b16 %v113, %v111
  %v170 = vpack.c.b16 %v116, %v114
  %v171 = vpack.c.b16 %v117, %v115
  %v172 = vpack.c.b16 %v120, %v118
  %v173 = vpack.c.b16 %v121, %v119
  %v174 = vpack.c.b16 %v124, %v122
  %v175 = vpack.c.b16 %v125, %v123
  %v176 = vpack.c.b16 %v128, %v126
  %v177 = vpack.c.b16 %v129, %v127
  %v178 = vpack.c.b16 %v132, %v130
  %v179 = vpack.c.b16 %v133, %v131
  %v180 = vpack.c.b16 %v136, %v134
  %v181 = vpack.c.b16 %v137, %v135
  %v182 = vpack.c.b16 %v140, %v138
  %v183 = vpack.c.b16 %v141, %v139
  %v184 = vpack.c.b16 %v144, %v142
  %v185 = vpack.c.b16 %v145, %v143
  %v186 = vpack.c.b16 %v148, %v146
  %v187 = vpack.c.b16 %v149, %v147
  %v188 = vpack.c.b16 %v152, %v150
  %v189 = vpack.c.b16 %v153, %v151
  %v190 = vpack.c.b16 %v156, %v154
  %v191 = vpack.c.b16 %v157, %v155
  %v192 = vpack.c.b16 %v160, %v158
  %v193 = vpack.c.b16 %v161, %v159
  %226 = vmatprep.subr.bf16.mxu0 %v163
  %227 = vmatpush1.bf16.msra.mxu0 %v162
  %228 = vmatprep.subr.bf16.mxu0 %v165
  %229 = vmatpush1.bf16.msra.mxu0 %v164
  %230 = vmatprep.subr.bf16.mxu0 %v167
  %231 = vmatpush1.bf16.msra.mxu0 %v166
  %232 = vmatprep.subr.bf16.mxu0 %v169
  %233 = vmatpush1.bf16.msra.mxu0 %v168
  %234 = vmatprep.subr.bf16.mxu0 %v171
  %235 = vmatpush1.bf16.msra.mxu0 %v170
  %236 = vmatprep.subr.bf16.mxu0 %v173
  %237 = vmatpush1.bf16.msra.mxu0 %v172
  %238 = vmatprep.subr.bf16.mxu0 %v175
  %239 = vmatpush1.bf16.msra.mxu0 %v174
  %240 = vmatprep.subr.bf16.mxu0 %v177
  %241 = vmatpush1.bf16.msra.mxu0 %v176
  %242 = vmatprep.subr.bf16.mxu0 %v179
  %243 = vmatpush1.bf16.msra.mxu0 %v178
  %244 = vmatprep.subr.bf16.mxu0 %v181
  %245 = vmatpush1.bf16.msra.mxu0 %v180
  %246 = vmatprep.subr.bf16.mxu0 %v183
  %247 = vmatpush1.bf16.msra.mxu0 %v182
  %248 = vmatprep.subr.bf16.mxu0 %v185
  %249 = vmatpush1.bf16.msra.mxu0 %v184
  %250 = vmatprep.subr.bf16.mxu0 %v187
  %251 = vmatpush1.bf16.msra.mxu0 %v186
  %252 = vmatprep.subr.bf16.mxu0 %v189
  %253 = vmatpush1.bf16.msra.mxu0 %v188
  %254 = vmatprep.subr.bf16.mxu0 %v191
  %255 = vmatpush1.bf16.msra.mxu0 %v190
  %256 = vmatprep.subr.bf16.mxu0 %v193
  %257 = vmatpush1.bf16.msra.mxu0 %v192
  %258 = vmatprep.mubr.bf16.mxu0 %v63
  %259 = vmatmul.mubr.bf16.gmra.mrb[0].mxu0 %v62
  %v260 = vpop.f32.mrb[0].mxu0
  %v261 = vadd.f32 %v52, %v260
  %v262 = vpop.f32.mrb[0].mxu0
  %v263 = vadd.f32 %v56, %v262
  %v264 = vpop.f32.mrb[0].mxu0
  %v265 = vpop.f32.mrb[0].mxu0
  %266 = vdwg.mxu0
  %v267 = vmax.f32 %v261, 0.0
  %v268 = vmax.f32 %v263, 0.0
  %v269 = vpack.c.bf16 %v267, %v267
  %v270 = vpack.c.bf16 %v268, %v268
  %v273 = vunpack.c.l.b16 %v269
  %v274 = vunpack.c.l.b16 %v270
  %v275 = vpack.c.b16 %v274, %v273
  %277 = vst [vmem:[%s3] sm:$0x77] %v275
  // Predicated region
  $region14: #{_lambda_.29} parent=0 // pred_check
    _
  $region15: #{_lambda_.29} parent=0 // pred_check_branch
    %279 = sbr.rel (0) target = $region17
  $region16: #{_lambda_.29} parent=0 // pred_region
    _
  $region17: #{_lambda_.29} parent=0 // pred_fallthru
    _
  // Predicated region
  $region18: #{_lambda_.29} parent=0 // pred_check
    _
  $region19: #{_lambda_.29} parent=0 // pred_check_branch
    %281 = sbr.rel (0) target = $region21
  $region20: #{_lambda_.29} parent=0 // pred_region
    _
  $region21: #{_lambda_.29} parent=0 // pred_fallthru
    _

// kernel: _lambda_.28
$region0: #{_lambda_.28}
  #allocation0 [shape = 'u32[]', space=smem, size = 0x4, offset = 0x4, fixed_abs, tag = 'smem constant byte address 0x4 - core index']
  #allocation1 [shape = 'u32[144,128]{1,0:T(1,128)}', space=vmem, size = 0x12000, scoped, tag = 'internal scratch']
  %s0 = inlined_call_operand.vmem [shape: bf16[6,256], index: 0, kind: input, shape index: {}]
  %s1 = inlined_call_operand.vmem [shape: bf16[256,256], index: 1, kind: input, shape index: {}]
  %s2 = inlined_call_operand.vmem [shape: f32[1,256], index: 2, kind: input, shape index: {}]
  %s3 = inlined_call_operand.vmem [shape: bf16[6,128], index: 3, kind: input, shape index: {}]
  %s4 = inlined_call_operand.vmem [shape: bf16[128,256], index: 4, kind: input, shape index: {}]
  %s5 = inlined_call_operand.vmem [shape: f32[1,256], index: 5, kind: input, shape index: {}]
  %s6 = inlined_call_operand.vmem [shape: bf16[6,256], index: 6, kind: output, shape index: {}]
  %s7 = sld [smem:[#allocation0]]
  $region34: #{_lambda_.28} parent=0
    _
  %s9 = ssub.s32 1, %s7
  %s10 = scalar_select 0, %s9, %s7
  // Predicated region
  $region2: #{_lambda_.28} parent=0 // pred_check
    _
  $region3: #{_lambda_.28} parent=0 // pred_check_branch
    %12 = sbr.rel (0) target = $region5
  $region4: #{_lambda_.28} parent=0 // pred_region
    _
  $region5: #{_lambda_.28} parent=0 // pred_fallthru
    _
  // Predicated region
  $region6: #{_lambda_.28} parent=0 // pred_check
    _
  $region7: #{_lambda_.28} parent=0 // pred_check_branch
    %14 = sbr.rel (0) target = $region9
  $region8: #{_lambda_.28} parent=0 // pred_region
    _
  $region9: #{_lambda_.28} parent=0 // pred_fallthru
    _
  // Predicated region
  $region10: #{_lambda_.28} parent=0 // pred_check
    _
  $region11: #{_lambda_.28} parent=0 // pred_check_branch
    %16 = sbr.rel (0) target = $region13
  $region12: #{_lambda_.28} parent=0 // pred_region
    _
  $region13: #{_lambda_.28} parent=0 // pred_fallthru
    _
  // Predicated region
  $region14: #{_lambda_.28} parent=0 // pred_check
    _
  $region15: #{_lambda_.28} parent=0 // pred_check_branch
    %18 = sbr.rel (0) target = $region17
  $region16: #{_lambda_.28} parent=0 // pred_region
    _
  $region17: #{_lambda_.28} parent=0 // pred_fallthru
    _
  // Predicated region
  $region18: #{_lambda_.28} parent=0 // pred_check
    _
  $region19: #{_lambda_.28} parent=0 // pred_check_branch
    %20 = sbr.rel (0) target = $region21
  $region20: #{_lambda_.28} parent=0 // pred_region
    _
  $region21: #{_lambda_.28} parent=0 // pred_fallthru
    _
  // Predicated region
  $region22: #{_lambda_.28} parent=0 // pred_check
    _
  $region23: #{_lambda_.28} parent=0 // pred_check_branch
    %22 = sbr.rel (0) target = $region25
  $region24: #{_lambda_.28} parent=0 // pred_region
    _
  $region25: #{_lambda_.28} parent=0 // pred_fallthru
    _
  %v24 = vld [vmem:[%s0] sm:$0x77]
  %v25 = vld [vmem:[%s1] sm:$0xff]
  %v26 = vld [vmem:[%s1 + $0x8] sm:$0xff]
  %v27 = vld [vmem:[%s1 + $0x10] sm:$0xff]
  %v28 = vld [vmem:[%s1 + $0x18] sm:$0xff]
  %v29 = vld [vmem:[%s1 + $0x20] sm:$0xff]
  %v30 = vld [vmem:[%s1 + $0x28] sm:$0xff]
  %v31 = vld [vmem:[%s1 + $0x30] sm:$0xff]
  %v32 = vld [vmem:[%s1 + $0x38] sm:$0xff]
  %v33 = vld [vmem:[%s1 + $0x40] sm:$0xff]
  %v34 = vld [vmem:[%s1 + $0x48] sm:$0xff]
  %v35 = vld [vmem:[%s1 + $0x50] sm:$0xff]
  %v36 = vld [vmem:[%s1 + $0x58] sm:$0xff]
  %v37 = vld [vmem:[%s1 + $0x60] sm:$0xff]
  %v38 = vld [vmem:[%s1 + $0x68] sm:$0xff]
  %v39 = vld [vmem:[%s1 + $0x70] sm:$0xff]
  %v40 = vld [vmem:[%s1 + $0x78] sm:$0xff]
  %v41 = vld [vmem:[%s1 + $0x80] sm:$0xff]
  %v42 = vld [vmem:[%s1 + $0x88] sm:$0xff]
  %v43 = vld [vmem:[%s1 + $0x90] sm:$0xff]
  %v44 = vld [vmem:[%s1 + $0x98] sm:$0xff]
  %v45 = vld [vmem:[%s1 + $0xa0] sm:$0xff]
  %v46 = vld [vmem:[%s1 + $0xa8] sm:$0xff]
  %v47 = vld [vmem:[%s1 + $0xb0] sm:$0xff]
  %v48 = vld [vmem:[%s1 + $0xb8] sm:$0xff]
  %v49 = vld [vmem:[%s1 + $0xc0] sm:$0xff]
  %v50 = vld [vmem:[%s1 + $0xc8] sm:$0xff]
  %v51 = vld [vmem:[%s1 + $0xd0] sm:$0xff]
  %v52 = vld [vmem:[%s1 + $0xd8] sm:$0xff]
  %v53 = vld [vmem:[%s1 + $0xe0] sm:$0xff]
  %v54 = vld [vmem:[%s1 + $0xe8] sm:$0xff]
  %v55 = vld [vmem:[%s1 + $0xf0] sm:$0xff]
  %v56 = vld [vmem:[%s1 + $0xf8] sm:$0xff]
  %v57 = vld [vmem:[%s2] sm:$0x3]
  %v59 = vlaneseq
  %v60 = vshrl.u32 %v59, 7
  %v61 = vsub.s32 0, %v60
  %v62 = vrot.slane %v57, %v61
  %v63 = vlaneseq
  %v64 = vshrl.u32 %v63, 7
  %v65 = vsub.s32 1, %v64
  %v66 = vrot.slane %v57, %v65
  %v70 = vunpack.c.l.b16 %v24
  %v71 = vunpack.c.h.b16 %v24
  %v72 = vpack.c.b16 %v70, %v70
  %v73 = vpack.c.b16 %v71, %v71
  %v108 = vunpack.c.l.b16 %v25
  %v109 = vunpack.c.h.b16 %v25
  %v110 = vunpack.c.l.b16 %v26
  %v111 = vunpack.c.h.b16 %v26
  %v112 = vunpack.c.l.b16 %v27
  %v113 = vunpack.c.h.b16 %v27
  %v114 = vunpack.c.l.b16 %v28
  %v115 = vunpack.c.h.b16 %v28
  %v116 = vunpack.c.l.b16 %v29
  %v117 = vunpack.c.h.b16 %v29
  %v118 = vunpack.c.l.b16 %v30
  %v119 = vunpack.c.h.b16 %v30
  %v120 = vunpack.c.l.b16 %v31
  %v121 = vunpack.c.h.b16 %v31
  %v122 = vunpack.c.l.b16 %v32
  %v123 = vunpack.c.h.b16 %v32
  %v124 = vunpack.c.l.b16 %v33
  %v125 = vunpack.c.h.b16 %v33
  %v126 = vunpack.c.l.b16 %v34
  %v127 = vunpack.c.h.b16 %v34
  %v128 = vunpack.c.l.b16 %v35
  %v129 = vunpack.c.h.b16 %v35
  %v130 = vunpack.c.l.b16 %v36
  %v131 = vunpack.c.h.b16 %v36
  %v132 = vunpack.c.l.b16 %v37
  %v133 = vunpack.c.h.b16 %v37
  %v134 = vunpack.c.l.b16 %v38
  %v135 = vunpack.c.h.b16 %v38
  %v136 = vunpack.c.l.b16 %v39
  %v137 = vunpack.c.h.b16 %v39
  %v138 = vunpack.c.l.b16 %v40
  %v139 = vunpack.c.h.b16 %v40
  %v140 = vunpack.c.l.b16 %v41
  %v141 = vunpack.c.h.b16 %v41
  %v142 = vunpack.c.l.b16 %v42
  %v143 = vunpack.c.h.b16 %v42
  %v144 = vunpack.c.l.b16 %v43
  %v145 = vunpack.c.h.b16 %v43
  %v146 = vunpack.c.l.b16 %v44
  %v147 = vunpack.c.h.b16 %v44
  %v148 = vunpack.c.l.b16 %v45
  %v149 = vunpack.c.h.b16 %v45
  %v150 = vunpack.c.l.b16 %v46
  %v151 = vunpack.c.h.b16 %v46
  %v152 = vunpack.c.l.b16 %v47
  %v153 = vunpack.c.h.b16 %v47
  %v154 = vunpack.c.l.b16 %v48
  %v155 = vunpack.c.h.b16 %v48
  %v156 = vunpack.c.l.b16 %v49
  %v157 = vunpack.c.h.b16 %v49
  %v158 = vunpack.c.l.b16 %v50
  %v159 = vunpack.c.h.b16 %v50
  %v160 = vunpack.c.l.b16 %v51
  %v161 = vunpack.c.h.b16 %v51
  %v162 = vunpack.c.l.b16 %v52
  %v163 = vunpack.c.h.b16 %v52
  %v164 = vunpack.c.l.b16 %v53
  %v165 = vunpack.c.h.b16 %v53
  %v166 = vunpack.c.l.b16 %v54
  %v167 = vunpack.c.h.b16 %v54
  %v168 = vunpack.c.l.b16 %v55
  %v169 = vunpack.c.h.b16 %v55
  %v170 = vunpack.c.l.b16 %v56
  %v171 = vunpack.c.h.b16 %v56
  %v172 = vpack.c.b16 %v110, %v108
  %v173 = vpack.c.b16 %v111, %v109
  %v174 = vpack.c.b16 %v114, %v112
  %v175 = vpack.c.b16 %v115, %v113
  %v176 = vpack.c.b16 %v118, %v116
  %v177 = vpack.c.b16 %v119, %v117
  %v178 = vpack.c.b16 %v122, %v120
  %v179 = vpack.c.b16 %v123, %v121
  %v180 = vpack.c.b16 %v126, %v124
  %v181 = vpack.c.b16 %v127, %v125
  %v182 = vpack.c.b16 %v130, %v128
  %v183 = vpack.c.b16 %v131, %v129
  %v184 = vpack.c.b16 %v134, %v132
  %v185 = vpack.c.b16 %v135, %v133
  %v186 = vpack.c.b16 %v138, %v136
  %v187 = vpack.c.b16 %v139, %v137
  %v188 = vpack.c.b16 %v142, %v140
  %v189 = vpack.c.b16 %v143, %v141
  %v190 = vpack.c.b16 %v146, %v144
  %v191 = vpack.c.b16 %v147, %v145
  %v192 = vpack.c.b16 %v150, %v148
  %v193 = vpack.c.b16 %v151, %v149
  %v194 = vpack.c.b16 %v154, %v152
  %v195 = vpack.c.b16 %v155, %v153
  %v196 = vpack.c.b16 %v158, %v156
  %v197 = vpack.c.b16 %v159, %v157
  %v198 = vpack.c.b16 %v162, %v160
  %v199 = vpack.c.b16 %v163, %v161
  %v200 = vpack.c.b16 %v166, %v164
  %v201 = vpack.c.b16 %v167, %v165
  %v202 = vpack.c.b16 %v170, %v168
  %v203 = vpack.c.b16 %v171, %v169
  %236 = vmatprep.subr.bf16.mxu0 %v173
  %237 = vmatpush1.bf16.msra.mxu0 %v172
  %238 = vmatprep.subr.bf16.mxu0 %v175
  %239 = vmatpush1.bf16.msra.mxu0 %v174
  %240 = vmatprep.subr.bf16.mxu0 %v177
  %241 = vmatpush1.bf16.msra.mxu0 %v176
  %242 = vmatprep.subr.bf16.mxu0 %v179
  %243 = vmatpush1.bf16.msra.mxu0 %v178
  %244 = vmatprep.subr.bf16.mxu0 %v181
  %245 = vmatpush1.bf16.msra.mxu0 %v180
  %246 = vmatprep.subr.bf16.mxu0 %v183
  %247 = vmatpush1.bf16.msra.mxu0 %v182
  %248 = vmatprep.subr.bf16.mxu0 %v185
  %249 = vmatpush1.bf16.msra.mxu0 %v184
  %250 = vmatprep.subr.bf16.mxu0 %v187
  %251 = vmatpush1.bf16.msra.mxu0 %v186
  %252 = vmatprep.subr.bf16.mxu0 %v189
  %253 = vmatpush1.bf16.msra.mxu0 %v188
  %254 = vmatprep.subr.bf16.mxu0 %v191
  %255 = vmatpush1.bf16.msra.mxu0 %v190
  %256 = vmatprep.subr.bf16.mxu0 %v193
  %257 = vmatpush1.bf16.msra.mxu0 %v192
  %258 = vmatprep.subr.bf16.mxu0 %v195
  %259 = vmatpush1.bf16.msra.mxu0 %v194
  %260 = vmatprep.subr.bf16.mxu0 %v197
  %261 = vmatpush1.bf16.msra.mxu0 %v196
  %262 = vmatprep.subr.bf16.mxu0 %v199
  %263 = vmatpush1.bf16.msra.mxu0 %v198
  %264 = vmatprep.subr.bf16.mxu0 %v201
  %265 = vmatpush1.bf16.msra.mxu0 %v200
  %266 = vmatprep.subr.bf16.mxu0 %v203
  %267 = vmatpush1.bf16.msra.mxu0 %v202
  %268 = vmatprep.mubr.bf16.mxu0 %v73
  %269 = vmatmul.mubr.bf16.gmra.mrb[0].mxu0 %v72
  %v270 = vpop.f32.mrb[0].mxu0
  %v271 = vadd.f32 %v62, %v270
  %v272 = vpop.f32.mrb[0].mxu0
  %v273 = vadd.f32 %v66, %v272
  %v274 = vpop.f32.mrb[0].mxu0
  %v275 = vpop.f32.mrb[0].mxu0
  %276 = vdwg.mxu0
  %v277 = vld [vmem:[%s3] sm:$0x7]
  %v278 = vld [vmem:[%s4] sm:$0xff]
  %v279 = vld [vmem:[%s4 + $0x8] sm:$0xff]
  %v280 = vld [vmem:[%s4 + $0x10] sm:$0xff]
  %v281 = vld [vmem:[%s4 + $0x18] sm:$0xff]
  %v282 = vld [vmem:[%s4 + $0x20] sm:$0xff]
  %v283 = vld [vmem:[%s4 + $0x28] sm:$0xff]
  %v284 = vld [vmem:[%s4 + $0x30] sm:$0xff]
  %v285 = vld [vmem:[%s4 + $0x38] sm:$0xff]
  %v286 = vld [vmem:[%s4 + $0x40] sm:$0xff]
  %v287 = vld [vmem:[%s4 + $0x48] sm:$0xff]
  %v288 = vld [vmem:[%s4 + $0x50] sm:$0xff]
  %v289 = vld [vmem:[%s4 + $0x58] sm:$0xff]
  %v290 = vld [vmem:[%s4 + $0x60] sm:$0xff]
  %v291 = vld [vmem:[%s4 + $0x68] sm:$0xff]
  %v292 = vld [vmem:[%s4 + $0x70] sm:$0xff]
  %v293 = vld [vmem:[%s4 + $0x78] sm:$0xff]
  %v294 = vld [vmem:[%s5] sm:$0x3]
  %v296 = vlaneseq
  %v297 = vshrl.u32 %v296, 7
  %v298 = vsub.s32 0, %v297
  %v299 = vrot.slane %v294, %v298
  %v300 = vlaneseq
  %v301 = vshrl.u32 %v300, 7
  %v302 = vsub.s32 1, %v301
  %v303 = vrot.slane %v294, %v302
  %v322 = vunpack.c.l.b16 %v278
  %v323 = vunpack.c.h.b16 %v278
  %v324 = vunpack.c.l.b16 %v279
  %v325 = vunpack.c.h.b16 %v279
  %v326 = vunpack.c.l.b16 %v280
  %v327 = vunpack.c.h.b16 %v280
  %v328 = vunpack.c.l.b16 %v281
  %v329 = vunpack.c.h.b16 %v281
  %v330 = vunpack.c.l.b16 %v282
  %v331 = vunpack.c.h.b16 %v282
  %v332 = vunpack.c.l.b16 %v283
  %v333 = vunpack.c.h.b16 %v283
  %v334 = vunpack.c.l.b16 %v284
  %v335 = vunpack.c.h.b16 %v284
  %v336 = vunpack.c.l.b16 %v285
  %v337 = vunpack.c.h.b16 %v285
  %v338 = vunpack.c.l.b16 %v286
  %v339 = vunpack.c.h.b16 %v286
  %v340 = vunpack.c.l.b16 %v287
  %v341 = vunpack.c.h.b16 %v287
  %v342 = vunpack.c.l.b16 %v288
  %v343 = vunpack.c.h.b16 %v288
  %v344 = vunpack.c.l.b16 %v289
  %v345 = vunpack.c.h.b16 %v289
  %v346 = vunpack.c.l.b16 %v290
  %v347 = vunpack.c.h.b16 %v290
  %v348 = vunpack.c.l.b16 %v291
  %v349 = vunpack.c.h.b16 %v291
  %v350 = vunpack.c.l.b16 %v292
  %v351 = vunpack.c.h.b16 %v292
  %v352 = vunpack.c.l.b16 %v293
  %v353 = vunpack.c.h.b16 %v293
  %v354 = vpack.c.b16 %v324, %v322
  %v355 = vpack.c.b16 %v325, %v323
  %v356 = vpack.c.b16 %v328, %v326
  %v357 = vpack.c.b16 %v329, %v327
  %v358 = vpack.c.b16 %v332, %v330
  %v359 = vpack.c.b16 %v333, %v331
  %v360 = vpack.c.b16 %v336, %v334
  %v361 = vpack.c.b16 %v337, %v335
  %v362 = vpack.c.b16 %v340, %v338
  %v363 = vpack.c.b16 %v341, %v339
  %v364 = vpack.c.b16 %v344, %v342
  %v365 = vpack.c.b16 %v345, %v343
  %v366 = vpack.c.b16 %v348, %v346
  %v367 = vpack.c.b16 %v349, %v347
  %v368 = vpack.c.b16 %v352, %v350
  %v369 = vpack.c.b16 %v353, %v351
  %386 = vmatprep.subr.bf16.mxu0 %v355
  %387 = vmatpush1.bf16.msra.mxu0 %v354
  %388 = vmatprep.subr.bf16.mxu0 %v357
  %389 = vmatpush1.bf16.msra.mxu0 %v356
  %390 = vmatprep.subr.bf16.mxu0 %v359
  %391 = vmatpush1.bf16.msra.mxu0 %v358
  %392 = vmatprep.subr.bf16.mxu0 %v361
  %393 = vmatpush1.bf16.msra.mxu0 %v360
  %394 = vmatprep.subr.bf16.mxu0 %v363
  %395 = vmatpush1.bf16.msra.mxu0 %v362
  %396 = vmatprep.subr.bf16.mxu0 %v365
  %397 = vmatpush1.bf16.msra.mxu0 %v364
  %398 = vmatprep.subr.bf16.mxu0 %v367
  %399 = vmatpush1.bf16.msra.mxu0 %v366
  %400 = vmatprep.subr.bf16.mxu0 %v369
  %401 = vmatpush1.bf16.msra.mxu0 %v368
  %402 = vmatprep.subr.bf16.mxu0 0
  %403 = vmatpush1.bf16.msra.mxu0 0
  %404 = vmatprep.subr.bf16.mxu0 0
  %405 = vmatpush1.bf16.msra.mxu0 0
  %406 = vmatprep.subr.bf16.mxu0 0
  %407 = vmatpush1.bf16.msra.mxu0 0
  %408 = vmatprep.subr.bf16.mxu0 0
  %409 = vmatpush1.bf16.msra.mxu0 0
  %410 = vmatprep.subr.bf16.mxu0 0
  %411 = vmatpush1.bf16.msra.mxu0 0
  %412 = vmatprep.subr.bf16.mxu0 0
  %413 = vmatpush1.bf16.msra.mxu0 0
  %414 = vmatprep.subr.bf16.mxu0 0
  %415 = vmatpush1.bf16.msra.mxu0 0
  %416 = vmatprep.subr.bf16.mxu0 0
  %417 = vmatpush1.bf16.msra.mxu0 0
  %418 = vmatprep.mubr.bf16.mxu0 0
  %419 = vmatmul.mubr.bf16.gmra.mrb[0].mxu0 %v277
  %v420 = vpop.f32.mrb[0].mxu0
  %v421 = vadd.f32 %v299, %v420
  %v422 = vpop.f32.mrb[0].mxu0
  %v423 = vadd.f32 %v303, %v422
  %v424 = vpop.f32.mrb[0].mxu0
  %v425 = vpop.f32.mrb[0].mxu0
  %426 = vdwg.mxu0
  %v427 = vadd.f32 %v271, %v421
  %v428 = vadd.f32 %v273, %v423
  %v429 = vmax.f32 %v427, 0.0
  %v430 = vmax.f32 %v428, 0.0
  %v431 = vpack.c.bf16 %v429, %v429
  %v432 = vpack.c.bf16 %v430, %v430
  %v435 = vunpack.c.l.b16 %v431
  %v436 = vunpack.c.l.b16 %v432
  %v437 = vpack.c.b16 %v436, %v435
  %439 = vst [vmem:[%s6] sm:$0x77] %v437
  // Predicated region
  $region26: #{_lambda_.28} parent=0 // pred_check
    _
  $region27: #{_lambda_.28} parent=0 // pred_check_branch
    %441 = sbr.rel (0) target = $region29
  $region28: #{_lambda_.28} parent=0 // pred_region
    _
  $region29: #{_lambda_.28} parent=0 // pred_fallthru
    _
  // Predicated region
  $region30: #{_lambda_.28} parent=0 // pred_check
    _
  $region31: #{_lambda_.28} parent=0 // pred_check_branch
    %443 = sbr.rel (0) target = $region33
  $region32: #{_lambda_.28} parent=0 // pred_region
    _
  $region33: #{_lambda_.28} parent=0 // pred_fallthru
    _

// kernel: _lambda_.30
$region0: #{_lambda_.30}
  #allocation0 [shape = 'u32[]', space=smem, size = 0x4, offset = 0x4, fixed_abs, tag = 'smem constant byte address 0x4 - core index']
  #allocation1 [shape = 'u32[144,128]{1,0:T(1,128)}', space=vmem, size = 0x12000, scoped, tag = 'internal scratch']
  %s0 = inlined_call_operand.vmem [shape: bf16[6,256], index: 0, kind: input, shape index: {}]
  %s1 = inlined_call_operand.vmem [shape: bf16[256,256], index: 1, kind: input, shape index: {}]
  %s2 = inlined_call_operand.vmem [shape: f32[1,256], index: 2, kind: input, shape index: {}]
  %s3 = inlined_call_operand.vmem [shape: bf16[6,256], index: 3, kind: input, shape index: {}]
  %s4 = inlined_call_operand.vmem [shape: bf16[6,256], index: 4, kind: output, shape index: {}]
  %s5 = sld [smem:[#allocation0]]
  $region26: #{_lambda_.30} parent=0
    _
  %s7 = ssub.s32 1, %s5
  %s8 = scalar_select 0, %s7, %s5
  // Predicated region
  $region2: #{_lambda_.30} parent=0 // pred_check
    _
  $region3: #{_lambda_.30} parent=0 // pred_check_branch
    %10 = sbr.rel (0) target = $region5
  $region4: #{_lambda_.30} parent=0 // pred_region
    _
  $region5: #{_lambda_.30} parent=0 // pred_fallthru
    _
  // Predicated region
  $region6: #{_lambda_.30} parent=0 // pred_check
    _
  $region7: #{_lambda_.30} parent=0 // pred_check_branch
    %12 = sbr.rel (0) target = $region9
  $region8: #{_lambda_.30} parent=0 // pred_region
    _
  $region9: #{_lambda_.30} parent=0 // pred_fallthru
    _
  // Predicated region
  $region10: #{_lambda_.30} parent=0 // pred_check
    _
  $region11: #{_lambda_.30} parent=0 // pred_check_branch
    %14 = sbr.rel (0) target = $region13
  $region12: #{_lambda_.30} parent=0 // pred_region
    _
  $region13: #{_lambda_.30} parent=0 // pred_fallthru
    _
  // Predicated region
  $region14: #{_lambda_.30} parent=0 // pred_check
    _
  $region15: #{_lambda_.30} parent=0 // pred_check_branch
    %16 = sbr.rel (0) target = $region17
  $region16: #{_lambda_.30} parent=0 // pred_region
    _
  $region17: #{_lambda_.30} parent=0 // pred_fallthru
    _
  %v17 = vld [vmem:[%s0] sm:$0x77]
  %v18 = vld [vmem:[%s1] sm:$0xff]
  %v19 = vld [vmem:[%s1 + $0x8] sm:$0xff]
  %v20 = vld [vmem:[%s1 + $0x10] sm:$0xff]
  %v21 = vld [vmem:[%s1 + $0x18] sm:$0xff]
  %v22 = vld [vmem:[%s1 + $0x20] sm:$0xff]
  %v23 = vld [vmem:[%s1 + $0x28] sm:$0xff]
  %v24 = vld [vmem:[%s1 + $0x30] sm:$0xff]
  %v25 = vld [vmem:[%s1 + $0x38] sm:$0xff]
  %v26 = vld [vmem:[%s1 + $0x40] sm:$0xff]
  %v27 = vld [vmem:[%s1 + $0x48] sm:$0xff]
  %v28 = vld [vmem:[%s1 + $0x50] sm:$0xff]
  %v29 = vld [vmem:[%s1 + $0x58] sm:$0xff]
  %v30 = vld [vmem:[%s1 + $0x60] sm:$0xff]
  %v31 = vld [vmem:[%s1 + $0x68] sm:$0xff]
  %v32 = vld [vmem:[%s1 + $0x70] sm:$0xff]
  %v33 = vld [vmem:[%s1 + $0x78] sm:$0xff]
  %v34 = vld [vmem:[%s1 + $0x80] sm:$0xff]
  %v35 = vld [vmem:[%s1 + $0x88] sm:$0xff]
  %v36 = vld [vmem:[%s1 + $0x90] sm:$0xff]
  %v37 = vld [vmem:[%s1 + $0x98] sm:$0xff]
  %v38 = vld [vmem:[%s1 + $0xa0] sm:$0xff]
  %v39 = vld [vmem:[%s1 + $0xa8] sm:$0xff]
  %v40 = vld [vmem:[%s1 + $0xb0] sm:$0xff]
  %v41 = vld [vmem:[%s1 + $0xb8] sm:$0xff]
  %v42 = vld [vmem:[%s1 + $0xc0] sm:$0xff]
  %v43 = vld [vmem:[%s1 + $0xc8] sm:$0xff]
  %v44 = vld [vmem:[%s1 + $0xd0] sm:$0xff]
  %v45 = vld [vmem:[%s1 + $0xd8] sm:$0xff]
  %v46 = vld [vmem:[%s1 + $0xe0] sm:$0xff]
  %v47 = vld [vmem:[%s1 + $0xe8] sm:$0xff]
  %v48 = vld [vmem:[%s1 + $0xf0] sm:$0xff]
  %v49 = vld [vmem:[%s1 + $0xf8] sm:$0xff]
  %v50 = vld [vmem:[%s2] sm:$0x3]
  %v52 = vlaneseq
  %v53 = vshrl.u32 %v52, 7
  %v54 = vsub.s32 0, %v53
  %v55 = vrot.slane %v50, %v54
  %v56 = vlaneseq
  %v57 = vshrl.u32 %v56, 7
  %v58 = vsub.s32 1, %v57
  %v59 = vrot.slane %v50, %v58
  %v63 = vunpack.c.l.b16 %v17
  %v64 = vunpack.c.h.b16 %v17
  %v65 = vpack.c.b16 %v63, %v63
  %v66 = vpack.c.b16 %v64, %v64
  %v101 = vunpack.c.l.b16 %v18
  %v102 = vunpack.c.h.b16 %v18
  %v103 = vunpack.c.l.b16 %v19
  %v104 = vunpack.c.h.b16 %v19
  %v105 = vunpack.c.l.b16 %v20
  %v106 = vunpack.c.h.b16 %v20
  %v107 = vunpack.c.l.b16 %v21
  %v108 = vunpack.c.h.b16 %v21
  %v109 = vunpack.c.l.b16 %v22
  %v110 = vunpack.c.h.b16 %v22
  %v111 = vunpack.c.l.b16 %v23
  %v112 = vunpack.c.h.b16 %v23
  %v113 = vunpack.c.l.b16 %v24
  %v114 = vunpack.c.h.b16 %v24
  %v115 = vunpack.c.l.b16 %v25
  %v116 = vunpack.c.h.b16 %v25
  %v117 = vunpack.c.l.b16 %v26
  %v118 = vunpack.c.h.b16 %v26
  %v119 = vunpack.c.l.b16 %v27
  %v120 = vunpack.c.h.b16 %v27
  %v121 = vunpack.c.l.b16 %v28
  %v122 = vunpack.c.h.b16 %v28
  %v123 = vunpack.c.l.b16 %v29
  %v124 = vunpack.c.h.b16 %v29
  %v125 = vunpack.c.l.b16 %v30
  %v126 = vunpack.c.h.b16 %v30
  %v127 = vunpack.c.l.b16 %v31
  %v128 = vunpack.c.h.b16 %v31
  %v129 = vunpack.c.l.b16 %v32
  %v130 = vunpack.c.h.b16 %v32
  %v131 = vunpack.c.l.b16 %v33
  %v132 = vunpack.c.h.b16 %v33
  %v133 = vunpack.c.l.b16 %v34
  %v134 = vunpack.c.h.b16 %v34
  %v135 = vunpack.c.l.b16 %v35
  %v136 = vunpack.c.h.b16 %v35
  %v137 = vunpack.c.l.b16 %v36
  %v138 = vunpack.c.h.b16 %v36
  %v139 = vunpack.c.l.b16 %v37
  %v140 = vunpack.c.h.b16 %v37
  %v141 = vunpack.c.l.b16 %v38
  %v142 = vunpack.c.h.b16 %v38
  %v143 = vunpack.c.l.b16 %v39
  %v144 = vunpack.c.h.b16 %v39
  %v145 = vunpack.c.l.b16 %v40
  %v146 = vunpack.c.h.b16 %v40
  %v147 = vunpack.c.l.b16 %v41
  %v148 = vunpack.c.h.b16 %v41
  %v149 = vunpack.c.l.b16 %v42
  %v150 = vunpack.c.h.b16 %v42
  %v151 = vunpack.c.l.b16 %v43
  %v152 = vunpack.c.h.b16 %v43
  %v153 = vunpack.c.l.b16 %v44
  %v154 = vunpack.c.h.b16 %v44
  %v155 = vunpack.c.l.b16 %v45
  %v156 = vunpack.c.h.b16 %v45
  %v157 = vunpack.c.l.b16 %v46
  %v158 = vunpack.c.h.b16 %v46
  %v159 = vunpack.c.l.b16 %v47
  %v160 = vunpack.c.h.b16 %v47
  %v161 = vunpack.c.l.b16 %v48
  %v162 = vunpack.c.h.b16 %v48
  %v163 = vunpack.c.l.b16 %v49
  %v164 = vunpack.c.h.b16 %v49
  %v165 = vpack.c.b16 %v103, %v101
  %v166 = vpack.c.b16 %v104, %v102
  %v167 = vpack.c.b16 %v107, %v105
  %v168 = vpack.c.b16 %v108, %v106
  %v169 = vpack.c.b16 %v111, %v109
  %v170 = vpack.c.b16 %v112, %v110
  %v171 = vpack.c.b16 %v115, %v113
  %v172 = vpack.c.b16 %v116, %v114
  %v173 = vpack.c.b16 %v119, %v117
  %v174 = vpack.c.b16 %v120, %v118
  %v175 = vpack.c.b16 %v123, %v121
  %v176 = vpack.c.b16 %v124, %v122
  %v177 = vpack.c.b16 %v127, %v125
  %v178 = vpack.c.b16 %v128, %v126
  %v179 = vpack.c.b16 %v131, %v129
  %v180 = vpack.c.b16 %v132, %v130
  %v181 = vpack.c.b16 %v135, %v133
  %v182 = vpack.c.b16 %v136, %v134
  %v183 = vpack.c.b16 %v139, %v137
  %v184 = vpack.c.b16 %v140, %v138
  %v185 = vpack.c.b16 %v143, %v141
  %v186 = vpack.c.b16 %v144, %v142
  %v187 = vpack.c.b16 %v147, %v145
  %v188 = vpack.c.b16 %v148, %v146
  %v189 = vpack.c.b16 %v151, %v149
  %v190 = vpack.c.b16 %v152, %v150
  %v191 = vpack.c.b16 %v155, %v153
  %v192 = vpack.c.b16 %v156, %v154
  %v193 = vpack.c.b16 %v159, %v157
  %v194 = vpack.c.b16 %v160, %v158
  %v195 = vpack.c.b16 %v163, %v161
  %v196 = vpack.c.b16 %v164, %v162
  %229 = vmatprep.subr.bf16.mxu0 %v166
  %230 = vmatpush1.bf16.msra.mxu0 %v165
  %231 = vmatprep.subr.bf16.mxu0 %v168
  %232 = vmatpush1.bf16.msra.mxu0 %v167
  %233 = vmatprep.subr.bf16.mxu0 %v170
  %234 = vmatpush1.bf16.msra.mxu0 %v169
  %235 = vmatprep.subr.bf16.mxu0 %v172
  %236 = vmatpush1.bf16.msra.mxu0 %v171
  %237 = vmatprep.subr.bf16.mxu0 %v174
  %238 = vmatpush1.bf16.msra.mxu0 %v173
  %239 = vmatprep.subr.bf16.mxu0 %v176
  %240 = vmatpush1.bf16.msra.mxu0 %v175
  %241 = vmatprep.subr.bf16.mxu0 %v178
  %242 = vmatpush1.bf16.msra.mxu0 %v177
  %243 = vmatprep.subr.bf16.mxu0 %v180
  %244 = vmatpush1.bf16.msra.mxu0 %v179
  %245 = vmatprep.subr.bf16.mxu0 %v182
  %246 = vmatpush1.bf16.msra.mxu0 %v181
  %247 = vmatprep.subr.bf16.mxu0 %v184
  %248 = vmatpush1.bf16.msra.mxu0 %v183
  %249 = vmatprep.subr.bf16.mxu0 %v186
  %250 = vmatpush1.bf16.msra.mxu0 %v185
  %251 = vmatprep.subr.bf16.mxu0 %v188
  %252 = vmatpush1.bf16.msra.mxu0 %v187
  %253 = vmatprep.subr.bf16.mxu0 %v190
  %254 = vmatpush1.bf16.msra.mxu0 %v189
  %255 = vmatprep.subr.bf16.mxu0 %v192
  %256 = vmatpush1.bf16.msra.mxu0 %v191
  %257 = vmatprep.subr.bf16.mxu0 %v194
  %258 = vmatpush1.bf16.msra.mxu0 %v193
  %259 = vmatprep.subr.bf16.mxu0 %v196
  %260 = vmatpush1.bf16.msra.mxu0 %v195
  %261 = vmatprep.mubr.bf16.mxu0 %v66
  %262 = vmatmul.mubr.bf16.gmra.mrb[0].mxu0 %v65
  %v263 = vpop.f32.mrb[0].mxu0
  %v264 = vadd.f32 %v55, %v263
  %v265 = vpop.f32.mrb[0].mxu0
  %v266 = vadd.f32 %v59, %v265
  %v267 = vpop.f32.mrb[0].mxu0
  %v268 = vpop.f32.mrb[0].mxu0
  %269 = vdwg.mxu0
  %v270 = vld [vmem:[%s3] sm:$0x77]
  %v271 = vunpack.c.l.bf16 %v270
  %v272 = vunpack.c.h.bf16 %v270
  %v273 = vadd.f32 %v264, %v271
  %v274 = vadd.f32 %v266, %v272
  %v275 = vmax.f32 %v273, 0.0
  %v276 = vmax.f32 %v274, 0.0
  %v277 = vpack.c.bf16 %v275, %v275
  %v278 = vpack.c.bf16 %v276, %v276
  %v281 = vunpack.c.l.b16 %v277
  %v282 = vunpack.c.l.b16 %v278
  %v283 = vpack.c.b16 %v282, %v281
  %285 = vst [vmem:[%s4] sm:$0x77] %v283
  // Predicated region
  $region18: #{_lambda_.30} parent=0 // pred_check
    _
  $region19: #{_lambda_.30} parent=0 // pred_check_branch
    %287 = sbr.rel (0) target = $region21
  $region20: #{_lambda_.30} parent=0 // pred_region
    _
  $region21: #{_lambda_.30} parent=0 // pred_fallthru
    _
  // Predicated region
  $region22: #{_lambda_.30} parent=0 // pred_check
    _
  $region23: #{_lambda_.30} parent=0 // pred_check_branch
    %289 = sbr.rel (0) target = $region25
  $region24: #{_lambda_.30} parent=0 // pred_region
    _
  $region25: #{_lambda_.30} parent=0 // pred_fallthru
    _

// kernel: _lambda_.31
$region0: #{_lambda_.31}
  #allocation0 [shape = 'u32[]', space=smem, size = 0x4, offset = 0x4, fixed_abs, tag = 'smem constant byte address 0x4 - core index']
  #allocation1 [shape = 'u32[144,128]{1,0:T(1,128)}', space=vmem, size = 0x12000, scoped, tag = 'internal scratch']
  %s0 = inlined_call_operand.vmem [shape: bf16[6,256], index: 0, kind: input, shape index: {}]
  %s1 = inlined_call_operand.vmem [shape: bf16[256,512], index: 1, kind: input, shape index: {}]
  %s2 = inlined_call_operand.vmem [shape: f32[1,512], index: 2, kind: input, shape index: {}]
  %s3 = inlined_call_operand.vmem [shape: bf16[6,512], index: 3, kind: output, shape index: {}]
  %s4 = sld [smem:[#allocation0]]
  $region22: #{_lambda_.31} parent=0
    _
  %s6 = ssub.s32 1, %s4
  %s7 = scalar_select 0, %s6, %s4
  // Predicated region
  $region2: #{_lambda_.31} parent=0 // pred_check
    _
  $region3: #{_lambda_.31} parent=0 // pred_check_branch
    %9 = sbr.rel (0) target = $region5
  $region4: #{_lambda_.31} parent=0 // pred_region
    _
  $region5: #{_lambda_.31} parent=0 // pred_fallthru
    _
  // Predicated region
  $region6: #{_lambda_.31} parent=0 // pred_check
    _
  $region7: #{_lambda_.31} parent=0 // pred_check_branch
    %11 = sbr.rel (0) target = $region9
  $region8: #{_lambda_.31} parent=0 // pred_region
    _
  $region9: #{_lambda_.31} parent=0 // pred_fallthru
    _
  // Predicated region
  $region10: #{_lambda_.31} parent=0 // pred_check
    _
  $region11: #{_lambda_.31} parent=0 // pred_check_branch
    %13 = sbr.rel (0) target = $region13
  $region12: #{_lambda_.31} parent=0 // pred_region
    _
  $region13: #{_lambda_.31} parent=0 // pred_fallthru
    _
  %v14 = vld [vmem:[%s0] sm:$0x77]
  %v15 = vld [vmem:[%s1] sm:$0xff]
  %v16 = vld [vmem:[%s1 + $0x8] sm:$0xff]
  %v17 = vld [vmem:[%s1 + $0x10] sm:$0xff]
  %v18 = vld [vmem:[%s1 + $0x18] sm:$0xff]
  %v19 = vld [vmem:[%s1 + $0x20] sm:$0xff]
  %v20 = vld [vmem:[%s1 + $0x28] sm:$0xff]
  %v21 = vld [vmem:[%s1 + $0x30] sm:$0xff]
  %v22 = vld [vmem:[%s1 + $0x38] sm:$0xff]
  %v23 = vld [vmem:[%s1 + $0x40] sm:$0xff]
  %v24 = vld [vmem:[%s1 + $0x48] sm:$0xff]
  %v25 = vld [vmem:[%s1 + $0x50] sm:$0xff]
  %v26 = vld [vmem:[%s1 + $0x58] sm:$0xff]
  %v27 = vld [vmem:[%s1 + $0x60] sm:$0xff]
  %v28 = vld [vmem:[%s1 + $0x68] sm:$0xff]
  %v29 = vld [vmem:[%s1 + $0x70] sm:$0xff]
  %v30 = vld [vmem:[%s1 + $0x78] sm:$0xff]
  %v31 = vld [vmem:[%s1 + $0x80] sm:$0xff]
  %v32 = vld [vmem:[%s1 + $0x88] sm:$0xff]
  %v33 = vld [vmem:[%s1 + $0x90] sm:$0xff]
  %v34 = vld [vmem:[%s1 + $0x98] sm:$0xff]
  %v35 = vld [vmem:[%s1 + $0xa0] sm:$0xff]
  %v36 = vld [vmem:[%s1 + $0xa8] sm:$0xff]
  %v37 = vld [vmem:[%s1 + $0xb0] sm:$0xff]
  %v38 = vld [vmem:[%s1 + $0xb8] sm:$0xff]
  %v39 = vld [vmem:[%s1 + $0xc0] sm:$0xff]
  %v40 = vld [vmem:[%s1 + $0xc8] sm:$0xff]
  %v41 = vld [vmem:[%s1 + $0xd0] sm:$0xff]
  %v42 = vld [vmem:[%s1 + $0xd8] sm:$0xff]
  %v43 = vld [vmem:[%s1 + $0xe0] sm:$0xff]
  %v44 = vld [vmem:[%s1 + $0xe8] sm:$0xff]
  %v45 = vld [vmem:[%s1 + $0xf0] sm:$0xff]
  %v46 = vld [vmem:[%s1 + $0xf8] sm:$0xff]
  %v47 = vld [vmem:[%s1 + $0x100] sm:$0xff]
  %v48 = vld [vmem:[%s1 + $0x108] sm:$0xff]
  %v49 = vld [vmem:[%s1 + $0x110] sm:$0xff]
  %v50 = vld [vmem:[%s1 + $0x118] sm:$0xff]
  %v51 = vld [vmem:[%s1 + $0x120] sm:$0xff]
  %v52 = vld [vmem:[%s1 + $0x128] sm:$0xff]
  %v53 = vld [vmem:[%s1 + $0x130] sm:$0xff]
  %v54 = vld [vmem:[%s1 + $0x138] sm:$0xff]
  %v55 = vld [vmem:[%s1 + $0x140] sm:$0xff]
  %v56 = vld [vmem:[%s1 + $0x148] sm:$0xff]
  %v57 = vld [vmem:[%s1 + $0x150] sm:$0xff]
  %v58 = vld [vmem:[%s1 + $0x158] sm:$0xff]
  %v59 = vld [vmem:[%s1 + $0x160] sm:$0xff]
  %v60 = vld [vmem:[%s1 + $0x168] sm:$0xff]
  %v61 = vld [vmem:[%s1 + $0x170] sm:$0xff]
  %v62 = vld [vmem:[%s1 + $0x178] sm:$0xff]
  %v63 = vld [vmem:[%s1 + $0x180] sm:$0xff]
  %v64 = vld [vmem:[%s1 + $0x188] sm:$0xff]
  %v65 = vld [vmem:[%s1 + $0x190] sm:$0xff]
  %v66 = vld [vmem:[%s1 + $0x198] sm:$0xff]
  %v67 = vld [vmem:[%s1 + $0x1a0] sm:$0xff]
  %v68 = vld [vmem:[%s1 + $0x1a8] sm:$0xff]
  %v69 = vld [vmem:[%s1 + $0x1b0] sm:$0xff]
  %v70 = vld [vmem:[%s1 + $0x1b8] sm:$0xff]
  %v71 = vld [vmem:[%s1 + $0x1c0] sm:$0xff]
  %v72 = vld [vmem:[%s1 + $0x1c8] sm:$0xff]
  %v73 = vld [vmem:[%s1 + $0x1d0] sm:$0xff]
  %v74 = vld [vmem:[%s1 + $0x1d8] sm:$0xff]
  %v75 = vld [vmem:[%s1 + $0x1e0] sm:$0xff]
  %v76 = vld [vmem:[%s1 + $0x1e8] sm:$0xff]
  %v77 = vld [vmem:[%s1 + $0x1f0] sm:$0xff]
  %v78 = vld [vmem:[%s1 + $0x1f8] sm:$0xff]
  %v79 = vld [vmem:[%s2] sm:$0xf]
  %v81 = vlaneseq
  %v82 = vshrl.u32 %v81, 7
  %v83 = vsub.s32 0, %v82
  %v84 = vrot.slane %v79, %v83
  %v85 = vlaneseq
  %v86 = vshrl.u32 %v85, 7
  %v87 = vsub.s32 1, %v86
  %v88 = vrot.slane %v79, %v87
  %v89 = vlaneseq
  %v90 = vshrl.u32 %v89, 7
  %v91 = vsub.s32 2, %v90
  %v92 = vrot.slane %v79, %v91
  %v93 = vlaneseq
  %v94 = vshrl.u32 %v93, 7
  %v95 = vsub.s32 3, %v94
  %v96 = vrot.slane %v79, %v95
  %v102 = vunpack.c.l.b16 %v14
  %v103 = vunpack.c.h.b16 %v14
  %v104 = vpack.c.b16 %v102, %v102
  %v105 = vpack.c.b16 %v103, %v103
  %v172 = vunpack.c.l.b16 %v15
  %v173 = vunpack.c.h.b16 %v15
  %v174 = vunpack.c.l.b16 %v16
  %v175 = vunpack.c.h.b16 %v16
  %v176 = vunpack.c.l.b16 %v17
  %v177 = vunpack.c.h.b16 %v17
  %v178 = vunpack.c.l.b16 %v18
  %v179 = vunpack.c.h.b16 %v18
  %v180 = vunpack.c.l.b16 %v19
  %v181 = vunpack.c.h.b16 %v19
  %v182 = vunpack.c.l.b16 %v20
  %v183 = vunpack.c.h.b16 %v20
  %v184 = vunpack.c.l.b16 %v21
  %v185 = vunpack.c.h.b16 %v21
  %v186 = vunpack.c.l.b16 %v22
  %v187 = vunpack.c.h.b16 %v22
  %v188 = vunpack.c.l.b16 %v23
  %v189 = vunpack.c.h.b16 %v23
  %v190 = vunpack.c.l.b16 %v24
  %v191 = vunpack.c.h.b16 %v24
  %v192 = vunpack.c.l.b16 %v25
  %v193 = vunpack.c.h.b16 %v25
  %v194 = vunpack.c.l.b16 %v26
  %v195 = vunpack.c.h.b16 %v26
  %v196 = vunpack.c.l.b16 %v27
  %v197 = vunpack.c.h.b16 %v27
  %v198 = vunpack.c.l.b16 %v28
  %v199 = vunpack.c.h.b16 %v28
  %v200 = vunpack.c.l.b16 %v29
  %v201 = vunpack.c.h.b16 %v29
  %v202 = vunpack.c.l.b16 %v30
  %v203 = vunpack.c.h.b16 %v30
  %v204 = vunpack.c.l.b16 %v31
  %v205 = vunpack.c.h.b16 %v31
  %v206 = vunpack.c.l.b16 %v32
  %v207 = vunpack.c.h.b16 %v32
  %v208 = vunpack.c.l.b16 %v33
  %v209 = vunpack.c.h.b16 %v33
  %v210 = vunpack.c.l.b16 %v34
  %v211 = vunpack.c.h.b16 %v34
  %v212 = vunpack.c.l.b16 %v35
  %v213 = vunpack.c.h.b16 %v35
  %v214 = vunpack.c.l.b16 %v36
  %v215 = vunpack.c.h.b16 %v36
  %v216 = vunpack.c.l.b16 %v37
  %v217 = vunpack.c.h.b16 %v37
  %v218 = vunpack.c.l.b16 %v38
  %v219 = vunpack.c.h.b16 %v38
  %v220 = vunpack.c.l.b16 %v39
  %v221 = vunpack.c.h.b16 %v39
  %v222 = vunpack.c.l.b16 %v40
  %v223 = vunpack.c.h.b16 %v40
  %v224 = vunpack.c.l.b16 %v41
  %v225 = vunpack.c.h.b16 %v41
  %v226 = vunpack.c.l.b16 %v42
  %v227 = vunpack.c.h.b16 %v42
  %v228 = vunpack.c.l.b16 %v43
  %v229 = vunpack.c.h.b16 %v43
  %v230 = vunpack.c.l.b16 %v44
  %v231 = vunpack.c.h.b16 %v44
  %v232 = vunpack.c.l.b16 %v45
  %v233 = vunpack.c.h.b16 %v45
  %v234 = vunpack.c.l.b16 %v46
  %v235 = vunpack.c.h.b16 %v46
  %v236 = vunpack.c.l.b16 %v47
  %v237 = vunpack.c.h.b16 %v47
  %v238 = vunpack.c.l.b16 %v48
  %v239 = vunpack.c.h.b16 %v48
  %v240 = vunpack.c.l.b16 %v49
  %v241 = vunpack.c.h.b16 %v49
  %v242 = vunpack.c.l.b16 %v50
  %v243 = vunpack.c.h.b16 %v50
  %v244 = vunpack.c.l.b16 %v51
  %v245 = vunpack.c.h.b16 %v51
  %v246 = vunpack.c.l.b16 %v52
  %v247 = vunpack.c.h.b16 %v52
  %v248 = vunpack.c.l.b16 %v53
  %v249 = vunpack.c.h.b16 %v53
  %v250 = vunpack.c.l.b16 %v54
  %v251 = vunpack.c.h.b16 %v54
  %v252 = vunpack.c.l.b16 %v55
  %v253 = vunpack.c.h.b16 %v55
  %v254 = vunpack.c.l.b16 %v56
  %v255 = vunpack.c.h.b16 %v56
  %v256 = vunpack.c.l.b16 %v57
  %v257 = vunpack.c.h.b16 %v57
  %v258 = vunpack.c.l.b16 %v58
  %v259 = vunpack.c.h.b16 %v58
  %v260 = vunpack.c.l.b16 %v59
  %v261 = vunpack.c.h.b16 %v59
  %v262 = vunpack.c.l.b16 %v60
  %v263 = vunpack.c.h.b16 %v60
  %v264 = vunpack.c.l.b16 %v61
  %v265 = vunpack.c.h.b16 %v61
  %v266 = vunpack.c.l.b16 %v62
  %v267 = vunpack.c.h.b16 %v62
  %v268 = vunpack.c.l.b16 %v63
  %v269 = vunpack.c.h.b16 %v63
  %v270 = vunpack.c.l.b16 %v64
  %v271 = vunpack.c.h.b16 %v64
  %v272 = vunpack.c.l.b16 %v65
  %v273 = vunpack.c.h.b16 %v65
  %v274 = vunpack.c.l.b16 %v66
  %v275 = vunpack.c.h.b16 %v66
  %v276 = vunpack.c.l.b16 %v67
  %v277 = vunpack.c.h.b16 %v67
  %v278 = vunpack.c.l.b16 %v68
  %v279 = vunpack.c.h.b16 %v68
  %v280 = vunpack.c.l.b16 %v69
  %v281 = vunpack.c.h.b16 %v69
  %v282 = vunpack.c.l.b16 %v70
  %v283 = vunpack.c.h.b16 %v70
  %v284 = vunpack.c.l.b16 %v71
  %v285 = vunpack.c.h.b16 %v71
  %v286 = vunpack.c.l.b16 %v72
  %v287 = vunpack.c.h.b16 %v72
  %v288 = vunpack.c.l.b16 %v73
  %v289 = vunpack.c.h.b16 %v73
  %v290 = vunpack.c.l.b16 %v74
  %v291 = vunpack.c.h.b16 %v74
  %v292 = vunpack.c.l.b16 %v75
  %v293 = vunpack.c.h.b16 %v75
  %v294 = vunpack.c.l.b16 %v76
  %v295 = vunpack.c.h.b16 %v76
  %v296 = vunpack.c.l.b16 %v77
  %v297 = vunpack.c.h.b16 %v77
  %v298 = vunpack.c.l.b16 %v78
  %v299 = vunpack.c.h.b16 %v78
  %v300 = vpack.c.b16 %v176, %v172
  %v301 = vpack.c.b16 %v177, %v173
  %v302 = vpack.c.b16 %v178, %v174
  %v303 = vpack.c.b16 %v179, %v175
  %v304 = vpack.c.b16 %v184, %v180
  %v305 = vpack.c.b16 %v185, %v181
  %v306 = vpack.c.b16 %v186, %v182
  %v307 = vpack.c.b16 %v187, %v183
  %v308 = vpack.c.b16 %v192, %v188
  %v309 = vpack.c.b16 %v193, %v189
  %v310 = vpack.c.b16 %v194, %v190
  %v311 = vpack.c.b16 %v195, %v191
  %v312 = vpack.c.b16 %v200, %v196
  %v313 = vpack.c.b16 %v201, %v197
  %v314 = vpack.c.b16 %v202, %v198
  %v315 = vpack.c.b16 %v203, %v199
  %v316 = vpack.c.b16 %v208, %v204
  %v317 = vpack.c.b16 %v209, %v205
  %v318 = vpack.c.b16 %v210, %v206
  %v319 = vpack.c.b16 %v211, %v207
  %v320 = vpack.c.b16 %v216, %v212
  %v321 = vpack.c.b16 %v217, %v213
  %v322 = vpack.c.b16 %v218, %v214
  %v323 = vpack.c.b16 %v219, %v215
  %v324 = vpack.c.b16 %v224, %v220
  %v325 = vpack.c.b16 %v225, %v221
  %v326 = vpack.c.b16 %v226, %v222
  %v327 = vpack.c.b16 %v227, %v223
  %v328 = vpack.c.b16 %v232, %v228
  %v329 = vpack.c.b16 %v233, %v229
  %v330 = vpack.c.b16 %v234, %v230
  %v331 = vpack.c.b16 %v235, %v231
  %v332 = vpack.c.b16 %v240, %v236
  %v333 = vpack.c.b16 %v241, %v237
  %v334 = vpack.c.b16 %v242, %v238
  %v335 = vpack.c.b16 %v243, %v239
  %v336 = vpack.c.b16 %v248, %v244
  %v337 = vpack.c.b16 %v249, %v245
  %v338 = vpack.c.b16 %v250, %v246
  %v339 = vpack.c.b16 %v251, %v247
  %v340 = vpack.c.b16 %v256, %v252
  %v341 = vpack.c.b16 %v257, %v253
  %v342 = vpack.c.b16 %v258, %v254
  %v343 = vpack.c.b16 %v259, %v255
  %v344 = vpack.c.b16 %v264, %v260
  %v345 = vpack.c.b16 %v265, %v261
  %v346 = vpack.c.b16 %v266, %v262
  %v347 = vpack.c.b16 %v267, %v263
  %v348 = vpack.c.b16 %v272, %v268
  %v349 = vpack.c.b16 %v273, %v269
  %v350 = vpack.c.b16 %v274, %v270
  %v351 = vpack.c.b16 %v275, %v271
  %v352 = vpack.c.b16 %v280, %v276
  %v353 = vpack.c.b16 %v281, %v277
  %v354 = vpack.c.b16 %v282, %v278
  %v355 = vpack.c.b16 %v283, %v279
  %v356 = vpack.c.b16 %v288, %v284
  %v357 = vpack.c.b16 %v289, %v285
  %v358 = vpack.c.b16 %v290, %v286
  %v359 = vpack.c.b16 %v291, %v287
  %v360 = vpack.c.b16 %v296, %v292
  %v361 = vpack.c.b16 %v297, %v293
  %v362 = vpack.c.b16 %v298, %v294
  %v363 = vpack.c.b16 %v299, %v295
  %428 = vmatprep.subr.bf16.mxu0 %v301
  %429 = vmatpush1.bf16.msra.mxu0 %v300
  %430 = vmatprep.subr.bf16.mxu0 %v305
  %431 = vmatpush1.bf16.msra.mxu0 %v304
  %432 = vmatprep.subr.bf16.mxu0 %v309
  %433 = vmatpush1.bf16.msra.mxu0 %v308
  %434 = vmatprep.subr.bf16.mxu0 %v313
  %435 = vmatpush1.bf16.msra.mxu0 %v312
  %436 = vmatprep.subr.bf16.mxu0 %v317
  %437 = vmatpush1.bf16.msra.mxu0 %v316
  %438 = vmatprep.subr.bf16.mxu0 %v321
  %439 = vmatpush1.bf16.msra.mxu0 %v320
  %440 = vmatprep.subr.bf16.mxu0 %v325
  %441 = vmatpush1.bf16.msra.mxu0 %v324
  %442 = vmatprep.subr.bf16.mxu0 %v329
  %443 = vmatpush1.bf16.msra.mxu0 %v328
  %444 = vmatprep.subr.bf16.mxu0 %v333
  %445 = vmatpush1.bf16.msra.mxu0 %v332
  %446 = vmatprep.subr.bf16.mxu0 %v337
  %447 = vmatpush1.bf16.msra.mxu0 %v336
  %448 = vmatprep.subr.bf16.mxu0 %v341
  %449 = vmatpush1.bf16.msra.mxu0 %v340
  %450 = vmatprep.subr.bf16.mxu0 %v345
  %451 = vmatpush1.bf16.msra.mxu0 %v344
  %452 = vmatprep.subr.bf16.mxu0 %v349
  %453 = vmatpush1.bf16.msra.mxu0 %v348
  %454 = vmatprep.subr.bf16.mxu0 %v353
  %455 = vmatpush1.bf16.msra.mxu0 %v352
  %456 = vmatprep.subr.bf16.mxu0 %v357
  %457 = vmatpush1.bf16.msra.mxu0 %v356
  %458 = vmatprep.subr.bf16.mxu0 %v361
  %459 = vmatpush1.bf16.msra.mxu0 %v360
  %460 = vmatprep.mubr.bf16.mxu0 %v105
  %461 = vmatmul.mubr.bf16.gmra.mrb[0].mxu0 %v104
  %v462 = vpop.f32.mrb[0].mxu0
  %v463 = vadd.f32 %v84, %v462
  %v464 = vpop.f32.mrb[0].mxu0
  %v465 = vadd.f32 %v88, %v464
  %v466 = vpop.f32.mrb[0].mxu0
  %v467 = vpop.f32.mrb[0].mxu0
  %468 = vdwg.mxu0
  %469 = vmatprep.subr.bf16.mxu0 %v303
  %470 = vmatpush1.bf16.msra.mxu0 %v302
  %471 = vmatprep.subr.bf16.mxu0 %v307
  %472 = vmatpush1.bf16.msra.mxu0 %v306
  %473 = vmatprep.subr.bf16.mxu0 %v311
  %474 = vmatpush1.bf16.msra.mxu0 %v310
  %475 = vmatprep.subr.bf16.mxu0 %v315
  %476 = vmatpush1.bf16.msra.mxu0 %v314
  %477 = vmatprep.subr.bf16.mxu0 %v319
  %478 = vmatpush1.bf16.msra.mxu0 %v318
  %479 = vmatprep.subr.bf16.mxu0 %v323
  %480 = vmatpush1.bf16.msra.mxu0 %v322
  %481 = vmatprep.subr.bf16.mxu0 %v327
  %482 = vmatpush1.bf16.msra.mxu0 %v326
  %483 = vmatprep.subr.bf16.mxu0 %v331
  %484 = vmatpush1.bf16.msra.mxu0 %v330
  %485 = vmatprep.subr.bf16.mxu0 %v335
  %486 = vmatpush1.bf16.msra.mxu0 %v334
  %487 = vmatprep.subr.bf16.mxu0 %v339
  %488 = vmatpush1.bf16.msra.mxu0 %v338
  %489 = vmatprep.subr.bf16.mxu0 %v343
  %490 = vmatpush1.bf16.msra.mxu0 %v342
  %491 = vmatprep.subr.bf16.mxu0 %v347
  %492 = vmatpush1.bf16.msra.mxu0 %v346
  %493 = vmatprep.subr.bf16.mxu0 %v351
  %494 = vmatpush1.bf16.msra.mxu0 %v350
  %495 = vmatprep.subr.bf16.mxu0 %v355
  %496 = vmatpush1.bf16.msra.mxu0 %v354
  %497 = vmatprep.subr.bf16.mxu0 %v359
  %498 = vmatpush1.bf16.msra.mxu0 %v358
  %499 = vmatprep.subr.bf16.mxu0 %v363
  %500 = vmatpush1.bf16.msra.mxu0 %v362
  %501 = vmatprep.mubr.bf16.mxu0 %v105
  %502 = vmatmul.mubr.bf16.gmra.mrb[0].mxu0 %v104
  %v503 = vpop.f32.mrb[0].mxu0
  %v504 = vadd.f32 %v92, %v503
  %v505 = vpop.f32.mrb[0].mxu0
  %v506 = vadd.f32 %v96, %v505
  %v507 = vpop.f32.mrb[0].mxu0
  %v508 = vpop.f32.mrb[0].mxu0
  %509 = vdwg.mxu0
  %v510 = vmax.f32 %v463, 0.0
  %v511 = vmax.f32 %v465, 0.0
  %v512 = vmax.f32 %v504, 0.0
  %v513 = vmax.f32 %v506, 0.0
  %v514 = vpack.c.bf16 %v510, %v510
  %v515 = vpack.c.bf16 %v511, %v511
  %v516 = vpack.c.bf16 %v512, %v512
  %v517 = vpack.c.bf16 %v513, %v513
  %v522 = vunpack.c.l.b16 %v514
  %v523 = vunpack.c.l.b16 %v515
  %v524 = vunpack.c.l.b16 %v516
  %v525 = vunpack.c.l.b16 %v517
  %v526 = vpack.c.b16 %v523, %v522
  %v527 = vpack.c.b16 %v525, %v524
  %530 = vst [vmem:[%s3] sm:$0x77] %v526
  %531 = vst [vmem:[%s3 + $0x8] sm:$0x77] %v527
  // Predicated region
  $region14: #{_lambda_.31} parent=0 // pred_check
    _
  $region15: #{_lambda_.31} parent=0 // pred_check_branch
    %533 = sbr.rel (0) target = $region17
  $region16: #{_lambda_.31} parent=0 // pred_region
    _
  $region17: #{_lambda_.31} parent=0 // pred_fallthru
    _
  // Predicated region
  $region18: #{_lambda_.31} parent=0 // pred_check
    _
  $region19: #{_lambda_.31} parent=0 // pred_check_branch
    %535 = sbr.rel (0) target = $region21
  $region20: #{_lambda_.31} parent=0 // pred_region
    _
  $region21: #{_lambda_.31} parent=0 // pred_fallthru
    _

// kernel: _lambda_.33
$region0: #{_lambda_.33}
  #allocation0 [shape = 'u32[]', space=smem, size = 0x4, offset = 0x4, fixed_abs, tag = 'smem constant byte address 0x4 - core index']
  #allocation1 [shape = 'u32[144,128]{1,0:T(1,128)}', space=vmem, size = 0x12000, scoped, tag = 'internal scratch']
  %s0 = inlined_call_operand.vmem [shape: bf16[6,512], index: 0, kind: input, shape index: {}]
  %s1 = inlined_call_operand.vmem [shape: bf16[512,512], index: 1, kind: input, shape index: {}]
  %s2 = inlined_call_operand.vmem [shape: f32[1,512], index: 2, kind: input, shape index: {}]
  %s3 = inlined_call_operand.vmem [shape: bf16[6,512], index: 3, kind: output, shape index: {}]
  %s4 = sld [smem:[#allocation0]]
  $region22: #{_lambda_.33} parent=0
    _
  %s6 = ssub.s32 1, %s4
  %s7 = scalar_select 0, %s6, %s4
  // Predicated region
  $region2: #{_lambda_.33} parent=0 // pred_check
    _
  $region3: #{_lambda_.33} parent=0 // pred_check_branch
    %9 = sbr.rel (0) target = $region5
  $region4: #{_lambda_.33} parent=0 // pred_region
    _
  $region5: #{_lambda_.33} parent=0 // pred_fallthru
    _
  // Predicated region
  $region6: #{_lambda_.33} parent=0 // pred_check
    _
  $region7: #{_lambda_.33} parent=0 // pred_check_branch
    %11 = sbr.rel (0) target = $region9
  $region8: #{_lambda_.33} parent=0 // pred_region
    _
  $region9: #{_lambda_.33} parent=0 // pred_fallthru
    _
  // Predicated region
  $region10: #{_lambda_.33} parent=0 // pred_check
    _
  $region11: #{_lambda_.33} parent=0 // pred_check_branch
    %13 = sbr.rel (0) target = $region13
  $region12: #{_lambda_.33} parent=0 // pred_region
    _
  $region13: #{_lambda_.33} parent=0 // pred_fallthru
    _
  %v14 = vld [vmem:[%s0] sm:$0x77]
  %v15 = vld [vmem:[%s0 + $0x8] sm:$0x77]
  %v16 = vld [vmem:[%s1] sm:$0xff]
  %v17 = vld [vmem:[%s1 + $0x8] sm:$0xff]
  %v18 = vld [vmem:[%s1 + $0x10] sm:$0xff]
  %v19 = vld [vmem:[%s1 + $0x18] sm:$0xff]
  %v20 = vld [vmem:[%s1 + $0x20] sm:$0xff]
  %v21 = vld [vmem:[%s1 + $0x28] sm:$0xff]
  %v22 = vld [vmem:[%s1 + $0x30] sm:$0xff]
  %v23 = vld [vmem:[%s1 + $0x38] sm:$0xff]
  %v24 = vld [vmem:[%s1 + $0x40] sm:$0xff]
  %v25 = vld [vmem:[%s1 + $0x48] sm:$0xff]
  %v26 = vld [vmem:[%s1 + $0x50] sm:$0xff]
  %v27 = vld [vmem:[%s1 + $0x58] sm:$0xff]
  %v28 = vld [vmem:[%s1 + $0x60] sm:$0xff]
  %v29 = vld [vmem:[%s1 + $0x68] sm:$0xff]
  %v30 = vld [vmem:[%s1 + $0x70] sm:$0xff]
  %v31 = vld [vmem:[%s1 + $0x78] sm:$0xff]
  %v32 = vld [vmem:[%s1 + $0x80] sm:$0xff]
  %v33 = vld [vmem:[%s1 + $0x88] sm:$0xff]
  %v34 = vld [vmem:[%s1 + $0x90] sm:$0xff]
  %v35 = vld [vmem:[%s1 + $0x98] sm:$0xff]
  %v36 = vld [vmem:[%s1 + $0xa0] sm:$0xff]
  %v37 = vld [vmem:[%s1 + $0xa8] sm:$0xff]
  %v38 = vld [vmem:[%s1 + $0xb0] sm:$0xff]
  %v39 = vld [vmem:[%s1 + $0xb8] sm:$0xff]
  %v40 = vld [vmem:[%s1 + $0xc0] sm:$0xff]
  %v41 = vld [vmem:[%s1 + $0xc8] sm:$0xff]
  %v42 = vld [vmem:[%s1 + $0xd0] sm:$0xff]
  %v43 = vld [vmem:[%s1 + $0xd8] sm:$0xff]
  %v44 = vld [vmem:[%s1 + $0xe0] sm:$0xff]
  %v45 = vld [vmem:[%s1 + $0xe8] sm:$0xff]
  %v46 = vld [vmem:[%s1 + $0xf0] sm:$0xff]
  %v47 = vld [vmem:[%s1 + $0xf8] sm:$0xff]
  %v48 = vld [vmem:[%s1 + $0x100] sm:$0xff]
  %v49 = vld [vmem:[%s1 + $0x108] sm:$0xff]
  %v50 = vld [vmem:[%s1 + $0x110] sm:$0xff]
  %v51 = vld [vmem:[%s1 + $0x118] sm:$0xff]
  %v52 = vld [vmem:[%s1 + $0x120] sm:$0xff]
  %v53 = vld [vmem:[%s1 + $0x128] sm:$0xff]
  %v54 = vld [vmem:[%s1 + $0x130] sm:$0xff]
  %v55 = vld [vmem:[%s1 + $0x138] sm:$0xff]
  %v56 = vld [vmem:[%s1 + $0x140] sm:$0xff]
  %v57 = vld [vmem:[%s1 + $0x148] sm:$0xff]
  %v58 = vld [vmem:[%s1 + $0x150] sm:$0xff]
  %v59 = vld [vmem:[%s1 + $0x158] sm:$0xff]
  %v60 = vld [vmem:[%s1 + $0x160] sm:$0xff]
  %v61 = vld [vmem:[%s1 + $0x168] sm:$0xff]
  %v62 = vld [vmem:[%s1 + $0x170] sm:$0xff]
  %v63 = vld [vmem:[%s1 + $0x178] sm:$0xff]
  %v64 = vld [vmem:[%s1 + $0x180] sm:$0xff]
  %v65 = vld [vmem:[%s1 + $0x188] sm:$0xff]
  %v66 = vld [vmem:[%s1 + $0x190] sm:$0xff]
  %v67 = vld [vmem:[%s1 + $0x198] sm:$0xff]
  %v68 = vld [vmem:[%s1 + $0x1a0] sm:$0xff]
  %v69 = vld [vmem:[%s1 + $0x1a8] sm:$0xff]
  %v70 = vld [vmem:[%s1 + $0x1b0] sm:$0xff]
  %v71 = vld [vmem:[%s1 + $0x1b8] sm:$0xff]
  %v72 = vld [vmem:[%s1 + $0x1c0] sm:$0xff]
  %v73 = vld [vmem:[%s1 + $0x1c8] sm:$0xff]
  %v74 = vld [vmem:[%s1 + $0x1d0] sm:$0xff]
  %v75 = vld [vmem:[%s1 + $0x1d8] sm:$0xff]
  %v76 = vld [vmem:[%s1 + $0x1e0] sm:$0xff]
  %v77 = vld [vmem:[%s1 + $0x1e8] sm:$0xff]
  %v78 = vld [vmem:[%s1 + $0x1f0] sm:$0xff]
  %v79 = vld [vmem:[%s1 + $0x1f8] sm:$0xff]
  %v80 = vld [vmem:[%s1 + $0x200] sm:$0xff]
  %v81 = vld [vmem:[%s1 + $0x208] sm:$0xff]
  %v82 = vld [vmem:[%s1 + $0x210] sm:$0xff]
  %v83 = vld [vmem:[%s1 + $0x218] sm:$0xff]
  %v84 = vld [vmem:[%s1 + $0x220] sm:$0xff]
  %v85 = vld [vmem:[%s1 + $0x228] sm:$0xff]
  %v86 = vld [vmem:[%s1 + $0x230] sm:$0xff]
  %v87 = vld [vmem:[%s1 + $0x238] sm:$0xff]
  %v88 = vld [vmem:[%s1 + $0x240] sm:$0xff]
  %v89 = vld [vmem:[%s1 + $0x248] sm:$0xff]
  %v90 = vld [vmem:[%s1 + $0x250] sm:$0xff]
  %v91 = vld [vmem:[%s1 + $0x258] sm:$0xff]
  %v92 = vld [vmem:[%s1 + $0x260] sm:$0xff]
  %v93 = vld [vmem:[%s1 + $0x268] sm:$0xff]
  %v94 = vld [vmem:[%s1 + $0x270] sm:$0xff]
  %v95 = vld [vmem:[%s1 + $0x278] sm:$0xff]
  %v96 = vld [vmem:[%s1 + $0x280] sm:$0xff]
  %v97 = vld [vmem:[%s1 + $0x288] sm:$0xff]
  %v98 = vld [vmem:[%s1 + $0x290] sm:$0xff]
  %v99 = vld [vmem:[%s1 + $0x298] sm:$0xff]
  %v100 = vld [vmem:[%s1 + $0x2a0] sm:$0xff]
  %v101 = vld [vmem:[%s1 + $0x2a8] sm:$0xff]
  %v102 = vld [vmem:[%s1 + $0x2b0] sm:$0xff]
  %v103 = vld [vmem:[%s1 + $0x2b8] sm:$0xff]
  %v104 = vld [vmem:[%s1 + $0x2c0] sm:$0xff]
  %v105 = vld [vmem:[%s1 + $0x2c8] sm:$0xff]
  %v106 = vld [vmem:[%s1 + $0x2d0] sm:$0xff]
  %v107 = vld [vmem:[%s1 + $0x2d8] sm:$0xff]
  %v108 = vld [vmem:[%s1 + $0x2e0] sm:$0xff]
  %v109 = vld [vmem:[%s1 + $0x2e8] sm:$0xff]
  %v110 = vld [vmem:[%s1 + $0x2f0] sm:$0xff]
  %v111 = vld [vmem:[%s1 + $0x2f8] sm:$0xff]
  %v112 = vld [vmem:[%s1 + $0x300] sm:$0xff]
  %v113 = vld [vmem:[%s1 + $0x308] sm:$0xff]
  %v114 = vld [vmem:[%s1 + $0x310] sm:$0xff]
  %v115 = vld [vmem:[%s1 + $0x318] sm:$0xff]
  %v116 = vld [vmem:[%s1 + $0x320] sm:$0xff]
  %v117 = vld [vmem:[%s1 + $0x328] sm:$0xff]
  %v118 = vld [vmem:[%s1 + $0x330] sm:$0xff]
  %v119 = vld [vmem:[%s1 + $0x338] sm:$0xff]
  %v120 = vld [vmem:[%s1 + $0x340] sm:$0xff]
  %v121 = vld [vmem:[%s1 + $0x348] sm:$0xff]
  %v122 = vld [vmem:[%s1 + $0x350] sm:$0xff]
  %v123 = vld [vmem:[%s1 + $0x358] sm:$0xff]
  %v124 = vld [vmem:[%s1 + $0x360] sm:$0xff]
  %v125 = vld [vmem:[%s1 + $0x368] sm:$0xff]
  %v126 = vld [vmem:[%s1 + $0x370] sm:$0xff]
  %v127 = vld [vmem:[%s1 + $0x378] sm:$0xff]
  %v128 = vld [vmem:[%s1 + $0x380] sm:$0xff]
  %v129 = vld [vmem:[%s1 + $0x388] sm:$0xff]
  %v130 = vld [vmem:[%s1 + $0x390] sm:$0xff]
  %v131 = vld [vmem:[%s1 + $0x398] sm:$0xff]
  %v132 = vld [vmem:[%s1 + $0x3a0] sm:$0xff]
  %v133 = vld [vmem:[%s1 + $0x3a8] sm:$0xff]
  %v134 = vld [vmem:[%s1 + $0x3b0] sm:$0xff]
  %v135 = vld [vmem:[%s1 + $0x3b8] sm:$0xff]
  %v136 = vld [vmem:[%s1 + $0x3c0] sm:$0xff]
  %v137 = vld [vmem:[%s1 + $0x3c8] sm:$0xff]
  %v138 = vld [vmem:[%s1 + $0x3d0] sm:$0xff]
  %v139 = vld [vmem:[%s1 + $0x3d8] sm:$0xff]
  %v140 = vld [vmem:[%s1 + $0x3e0] sm:$0xff]
  %v141 = vld [vmem:[%s1 + $0x3e8] sm:$0xff]
  %v142 = vld [vmem:[%s1 + $0x3f0] sm:$0xff]
  %v143 = vld [vmem:[%s1 + $0x3f8] sm:$0xff]
  %v144 = vld [vmem:[%s2] sm:$0xf]
  %v146 = vlaneseq
  %v147 = vshrl.u32 %v146, 7
  %v148 = vsub.s32 0, %v147
  %v149 = vrot.slane %v144, %v148
  %v150 = vlaneseq
  %v151 = vshrl.u32 %v150, 7
  %v152 = vsub.s32 1, %v151
  %v153 = vrot.slane %v144, %v152
  %v154 = vlaneseq
  %v155 = vshrl.u32 %v154, 7
  %v156 = vsub.s32 2, %v155
  %v157 = vrot.slane %v144, %v156
  %v158 = vlaneseq
  %v159 = vshrl.u32 %v158, 7
  %v160 = vsub.s32 3, %v159
  %v161 = vrot.slane %v144, %v160
  %v168 = vunpack.c.l.b16 %v14
  %v169 = vunpack.c.h.b16 %v14
  %v170 = vunpack.c.l.b16 %v15
  %v171 = vunpack.c.h.b16 %v15
  %v172 = vpack.c.b16 %v168, %v168
  %v173 = vpack.c.b16 %v169, %v169
  %v174 = vpack.c.b16 %v170, %v170
  %v175 = vpack.c.b16 %v171, %v171
  %v308 = vunpack.c.l.b16 %v16
  %v309 = vunpack.c.h.b16 %v16
  %v310 = vunpack.c.l.b16 %v17
  %v311 = vunpack.c.h.b16 %v17
  %v312 = vunpack.c.l.b16 %v18
  %v313 = vunpack.c.h.b16 %v18
  %v314 = vunpack.c.l.b16 %v19
  %v315 = vunpack.c.h.b16 %v19
  %v316 = vunpack.c.l.b16 %v20
  %v317 = vunpack.c.h.b16 %v20
  %v318 = vunpack.c.l.b16 %v21
  %v319 = vunpack.c.h.b16 %v21
  %v320 = vunpack.c.l.b16 %v22
  %v321 = vunpack.c.h.b16 %v22
  %v322 = vunpack.c.l.b16 %v23
  %v323 = vunpack.c.h.b16 %v23
  %v324 = vunpack.c.l.b16 %v24
  %v325 = vunpack.c.h.b16 %v24
  %v326 = vunpack.c.l.b16 %v25
  %v327 = vunpack.c.h.b16 %v25
  %v328 = vunpack.c.l.b16 %v26
  %v329 = vunpack.c.h.b16 %v26
  %v330 = vunpack.c.l.b16 %v27
  %v331 = vunpack.c.h.b16 %v27
  %v332 = vunpack.c.l.b16 %v28
  %v333 = vunpack.c.h.b16 %v28
  %v334 = vunpack.c.l.b16 %v29
  %v335 = vunpack.c.h.b16 %v29
  %v336 = vunpack.c.l.b16 %v30
  %v337 = vunpack.c.h.b16 %v30
  %v338 = vunpack.c.l.b16 %v31
  %v339 = vunpack.c.h.b16 %v31
  %v340 = vunpack.c.l.b16 %v32
  %v341 = vunpack.c.h.b16 %v32
  %v342 = vunpack.c.l.b16 %v33
  %v343 = vunpack.c.h.b16 %v33
  %v344 = vunpack.c.l.b16 %v34
  %v345 = vunpack.c.h.b16 %v34
  %v346 = vunpack.c.l.b16 %v35
  %v347 = vunpack.c.h.b16 %v35
  %v348 = vunpack.c.l.b16 %v36
  %v349 = vunpack.c.h.b16 %v36
  %v350 = vunpack.c.l.b16 %v37
  %v351 = vunpack.c.h.b16 %v37
  %v352 = vunpack.c.l.b16 %v38
  %v353 = vunpack.c.h.b16 %v38
  %v354 = vunpack.c.l.b16 %v39
  %v355 = vunpack.c.h.b16 %v39
  %v356 = vunpack.c.l.b16 %v40
  %v357 = vunpack.c.h.b16 %v40
  %v358 = vunpack.c.l.b16 %v41
  %v359 = vunpack.c.h.b16 %v41
  %v360 = vunpack.c.l.b16 %v42
  %v361 = vunpack.c.h.b16 %v42
  %v362 = vunpack.c.l.b16 %v43
  %v363 = vunpack.c.h.b16 %v43
  %v364 = vunpack.c.l.b16 %v44
  %v365 = vunpack.c.h.b16 %v44
  %v366 = vunpack.c.l.b16 %v45
  %v367 = vunpack.c.h.b16 %v45
  %v368 = vunpack.c.l.b16 %v46
  %v369 = vunpack.c.h.b16 %v46
  %v370 = vunpack.c.l.b16 %v47
  %v371 = vunpack.c.h.b16 %v47
  %v372 = vunpack.c.l.b16 %v48
  %v373 = vunpack.c.h.b16 %v48
  %v374 = vunpack.c.l.b16 %v49
  %v375 = vunpack.c.h.b16 %v49
  %v376 = vunpack.c.l.b16 %v50
  %v377 = vunpack.c.h.b16 %v50
  %v378 = vunpack.c.l.b16 %v51
  %v379 = vunpack.c.h.b16 %v51
  %v380 = vunpack.c.l.b16 %v52
  %v381 = vunpack.c.h.b16 %v52
  %v382 = vunpack.c.l.b16 %v53
  %v383 = vunpack.c.h.b16 %v53
  %v384 = vunpack.c.l.b16 %v54
  %v385 = vunpack.c.h.b16 %v54
  %v386 = vunpack.c.l.b16 %v55
  %v387 = vunpack.c.h.b16 %v55
  %v388 = vunpack.c.l.b16 %v56
  %v389 = vunpack.c.h.b16 %v56
  %v390 = vunpack.c.l.b16 %v57
  %v391 = vunpack.c.h.b16 %v57
  %v392 = vunpack.c.l.b16 %v58
  %v393 = vunpack.c.h.b16 %v58
  %v394 = vunpack.c.l.b16 %v59
  %v395 = vunpack.c.h.b16 %v59
  %v396 = vunpack.c.l.b16 %v60
  %v397 = vunpack.c.h.b16 %v60
  %v398 = vunpack.c.l.b16 %v61
  %v399 = vunpack.c.h.b16 %v61
  %v400 = vunpack.c.l.b16 %v62
  %v401 = vunpack.c.h.b16 %v62
  %v402 = vunpack.c.l.b16 %v63
  %v403 = vunpack.c.h.b16 %v63
  %v404 = vunpack.c.l.b16 %v64
  %v405 = vunpack.c.h.b16 %v64
  %v406 = vunpack.c.l.b16 %v65
  %v407 = vunpack.c.h.b16 %v65
  %v408 = vunpack.c.l.b16 %v66
  %v409 = vunpack.c.h.b16 %v66
  %v410 = vunpack.c.l.b16 %v67
  %v411 = vunpack.c.h.b16 %v67
  %v412 = vunpack.c.l.b16 %v68
  %v413 = vunpack.c.h.b16 %v68
  %v414 = vunpack.c.l.b16 %v69
  %v415 = vunpack.c.h.b16 %v69
  %v416 = vunpack.c.l.b16 %v70
  %v417 = vunpack.c.h.b16 %v70
  %v418 = vunpack.c.l.b16 %v71
  %v419 = vunpack.c.h.b16 %v71
  %v420 = vunpack.c.l.b16 %v72
  %v421 = vunpack.c.h.b16 %v72
  %v422 = vunpack.c.l.b16 %v73
  %v423 = vunpack.c.h.b16 %v73
  %v424 = vunpack.c.l.b16 %v74
  %v425 = vunpack.c.h.b16 %v74
  %v426 = vunpack.c.l.b16 %v75
  %v427 = vunpack.c.h.b16 %v75
  %v428 = vunpack.c.l.b16 %v76
  %v429 = vunpack.c.h.b16 %v76
  %v430 = vunpack.c.l.b16 %v77
  %v431 = vunpack.c.h.b16 %v77
  %v432 = vunpack.c.l.b16 %v78
  %v433 = vunpack.c.h.b16 %v78
  %v434 = vunpack.c.l.b16 %v79
  %v435 = vunpack.c.h.b16 %v79
  %v436 = vunpack.c.l.b16 %v80
  %v437 = vunpack.c.h.b16 %v80
  %v438 = vunpack.c.l.b16 %v81
  %v439 = vunpack.c.h.b16 %v81
  %v440 = vunpack.c.l.b16 %v82
  %v441 = vunpack.c.h.b16 %v82
  %v442 = vunpack.c.l.b16 %v83
  %v443 = vunpack.c.h.b16 %v83
  %v444 = vunpack.c.l.b16 %v84
  %v445 = vunpack.c.h.b16 %v84
  %v446 = vunpack.c.l.b16 %v85
  %v447 = vunpack.c.h.b16 %v85
  %v448 = vunpack.c.l.b16 %v86
  %v449 = vunpack.c.h.b16 %v86
  %v450 = vunpack.c.l.b16 %v87
  %v451 = vunpack.c.h.b16 %v87
  %v452 = vunpack.c.l.b16 %v88
  %v453 = vunpack.c.h.b16 %v88
  %v454 = vunpack.c.l.b16 %v89
  %v455 = vunpack.c.h.b16 %v89
  %v456 = vunpack.c.l.b16 %v90
  %v457 = vunpack.c.h.b16 %v90
  %v458 = vunpack.c.l.b16 %v91
  %v459 = vunpack.c.h.b16 %v91
  %v460 = vunpack.c.l.b16 %v92
  %v461 = vunpack.c.h.b16 %v92
  %v462 = vunpack.c.l.b16 %v93
  %v463 = vunpack.c.h.b16 %v93
  %v464 = vunpack.c.l.b16 %v94
  %v465 = vunpack.c.h.b16 %v94
  %v466 = vunpack.c.l.b16 %v95
  %v467 = vunpack.c.h.b16 %v95
  %v468 = vunpack.c.l.b16 %v96
  %v469 = vunpack.c.h.b16 %v96
  %v470 = vunpack.c.l.b16 %v97
  %v471 = vunpack.c.h.b16 %v97
  %v472 = vunpack.c.l.b16 %v98
  %v473 = vunpack.c.h.b16 %v98
  %v474 = vunpack.c.l.b16 %v99
  %v475 = vunpack.c.h.b16 %v99
  %v476 = vunpack.c.l.b16 %v100
  %v477 = vunpack.c.h.b16 %v100
  %v478 = vunpack.c.l.b16 %v101
  %v479 = vunpack.c.h.b16 %v101
  %v480 = vunpack.c.l.b16 %v102
  %v481 = vunpack.c.h.b16 %v102
  %v482 = vunpack.c.l.b16 %v103
  %v483 = vunpack.c.h.b16 %v103
  %v484 = vunpack.c.l.b16 %v104
  %v485 = vunpack.c.h.b16 %v104
  %v486 = vunpack.c.l.b16 %v105
  %v487 = vunpack.c.h.b16 %v105
  %v488 = vunpack.c.l.b16 %v106
  %v489 = vunpack.c.h.b16 %v106
  %v490 = vunpack.c.l.b16 %v107
  %v491 = vunpack.c.h.b16 %v107
  %v492 = vunpack.c.l.b16 %v108
  %v493 = vunpack.c.h.b16 %v108
  %v494 = vunpack.c.l.b16 %v109
  %v495 = vunpack.c.h.b16 %v109
  %v496 = vunpack.c.l.b16 %v110
  %v497 = vunpack.c.h.b16 %v110
  %v498 = vunpack.c.l.b16 %v111
  %v499 = vunpack.c.h.b16 %v111
  %v500 = vunpack.c.l.b16 %v112
  %v501 = vunpack.c.h.b16 %v112
  %v502 = vunpack.c.l.b16 %v113
  %v503 = vunpack.c.h.b16 %v113
  %v504 = vunpack.c.l.b16 %v114
  %v505 = vunpack.c.h.b16 %v114
  %v506 = vunpack.c.l.b16 %v115
  %v507 = vunpack.c.h.b16 %v115
  %v508 = vunpack.c.l.b16 %v116
  %v509 = vunpack.c.h.b16 %v116
  %v510 = vunpack.c.l.b16 %v117
  %v511 = vunpack.c.h.b16 %v117
  %v512 = vunpack.c.l.b16 %v118
  %v513 = vunpack.c.h.b16 %v118
  %v514 = vunpack.c.l.b16 %v119
  %v515 = vunpack.c.h.b16 %v119
  %v516 = vunpack.c.l.b16 %v120
  %v517 = vunpack.c.h.b16 %v120
  %v518 = vunpack.c.l.b16 %v121
  %v519 = vunpack.c.h.b16 %v121
  %v520 = vunpack.c.l.b16 %v122
  %v521 = vunpack.c.h.b16 %v122
  %v522 = vunpack.c.l.b16 %v123
  %v523 = vunpack.c.h.b16 %v123
  %v524 = vunpack.c.l.b16 %v124
  %v525 = vunpack.c.h.b16 %v124
  %v526 = vunpack.c.l.b16 %v125
  %v527 = vunpack.c.h.b16 %v125
  %v528 = vunpack.c.l.b16 %v126
  %v529 = vunpack.c.h.b16 %v126
  %v530 = vunpack.c.l.b16 %v127
  %v531 = vunpack.c.h.b16 %v127
  %v532 = vunpack.c.l.b16 %v128
  %v533 = vunpack.c.h.b16 %v128
  %v534 = vunpack.c.l.b16 %v129
  %v535 = vunpack.c.h.b16 %v129
  %v536 = vunpack.c.l.b16 %v130
  %v537 = vunpack.c.h.b16 %v130
  %v538 = vunpack.c.l.b16 %v131
  %v539 = vunpack.c.h.b16 %v131
  %v540 = vunpack.c.l.b16 %v132
  %v541 = vunpack.c.h.b16 %v132
  %v542 = vunpack.c.l.b16 %v133
  %v543 = vunpack.c.h.b16 %v133
  %v544 = vunpack.c.l.b16 %v134
  %v545 = vunpack.c.h.b16 %v134
  %v546 = vunpack.c.l.b16 %v135
  %v547 = vunpack.c.h.b16 %v135
  %v548 = vunpack.c.l.b16 %v136
  %v549 = vunpack.c.h.b16 %v136
  %v550 = vunpack.c.l.b16 %v137
  %v551 = vunpack.c.h.b16 %v137
  %v552 = vunpack.c.l.b16 %v138
  %v553 = vunpack.c.h.b16 %v138
  %v554 = vunpack.c.l.b16 %v139
  %v555 = vunpack.c.h.b16 %v139
  %v556 = vunpack.c.l.b16 %v140
  %v557 = vunpack.c.h.b16 %v140
  %v558 = vunpack.c.l.b16 %v141
  %v559 = vunpack.c.h.b16 %v141
  %v560 = vunpack.c.l.b16 %v142
  %v561 = vunpack.c.h.b16 %v142
  %v562 = vunpack.c.l.b16 %v143
  %v563 = vunpack.c.h.b16 %v143
  %v564 = vpack.c.b16 %v312, %v308
  %v565 = vpack.c.b16 %v313, %v309
  %v566 = vpack.c.b16 %v314, %v310
  %v567 = vpack.c.b16 %v315, %v311
  %v568 = vpack.c.b16 %v320, %v316
  %v569 = vpack.c.b16 %v321, %v317
  %v570 = vpack.c.b16 %v322, %v318
  %v571 = vpack.c.b16 %v323, %v319
  %v572 = vpack.c.b16 %v328, %v324
  %v573 = vpack.c.b16 %v329, %v325
  %v574 = vpack.c.b16 %v330, %v326
  %v575 = vpack.c.b16 %v331, %v327
  %v576 = vpack.c.b16 %v336, %v332
  %v577 = vpack.c.b16 %v337, %v333
  %v578 = vpack.c.b16 %v338, %v334
  %v579 = vpack.c.b16 %v339, %v335
  %v580 = vpack.c.b16 %v344, %v340
  %v581 = vpack.c.b16 %v345, %v341
  %v582 = vpack.c.b16 %v346, %v342
  %v583 = vpack.c.b16 %v347, %v343
  %v584 = vpack.c.b16 %v352, %v348
  %v585 = vpack.c.b16 %v353, %v349
  %v586 = vpack.c.b16 %v354, %v350
  %v587 = vpack.c.b16 %v355, %v351
  %v588 = vpack.c.b16 %v360, %v356
  %v589 = vpack.c.b16 %v361, %v357
  %v590 = vpack.c.b16 %v362, %v358
  %v591 = vpack.c.b16 %v363, %v359
  %v592 = vpack.c.b16 %v368, %v364
  %v593 = vpack.c.b16 %v369, %v365
  %v594 = vpack.c.b16 %v370, %v366
  %v595 = vpack.c.b16 %v371, %v367
  %v596 = vpack.c.b16 %v376, %v372
  %v597 = vpack.c.b16 %v377, %v373
  %v598 = vpack.c.b16 %v378, %v374
  %v599 = vpack.c.b16 %v379, %v375
  %v600 = vpack.c.b16 %v384, %v380
  %v601 = vpack.c.b16 %v385, %v381
  %v602 = vpack.c.b16 %v386, %v382
  %v603 = vpack.c.b16 %v387, %v383
  %v604 = vpack.c.b16 %v392, %v388
  %v605 = vpack.c.b16 %v393, %v389
  %v606 = vpack.c.b16 %v394, %v390
  %v607 = vpack.c.b16 %v395, %v391
  %v608 = vpack.c.b16 %v400, %v396
  %v609 = vpack.c.b16 %v401, %v397
  %v610 = vpack.c.b16 %v402, %v398
  %v611 = vpack.c.b16 %v403, %v399
  %v612 = vpack.c.b16 %v408, %v404
  %v613 = vpack.c.b16 %v409, %v405
  %v614 = vpack.c.b16 %v410, %v406
  %v615 = vpack.c.b16 %v411, %v407
  %v616 = vpack.c.b16 %v416, %v412
  %v617 = vpack.c.b16 %v417, %v413
  %v618 = vpack.c.b16 %v418, %v414
  %v619 = vpack.c.b16 %v419, %v415
  %v620 = vpack.c.b16 %v424, %v420
  %v621 = vpack.c.b16 %v425, %v421
  %v622 = vpack.c.b16 %v426, %v422
  %v623 = vpack.c.b16 %v427, %v423
  %v624 = vpack.c.b16 %v432, %v428
  %v625 = vpack.c.b16 %v433, %v429
  %v626 = vpack.c.b16 %v434, %v430
  %v627 = vpack.c.b16 %v435, %v431
  %v628 = vpack.c.b16 %v440, %v436
  %v629 = vpack.c.b16 %v441, %v437
  %v630 = vpack.c.b16 %v442, %v438
  %v631 = vpack.c.b16 %v443, %v439
  %v632 = vpack.c.b16 %v448, %v444
  %v633 = vpack.c.b16 %v449, %v445
  %v634 = vpack.c.b16 %v450, %v446
  %v635 = vpack.c.b16 %v451, %v447
  %v636 = vpack.c.b16 %v456, %v452
  %v637 = vpack.c.b16 %v457, %v453
  %v638 = vpack.c.b16 %v458, %v454
  %v639 = vpack.c.b16 %v459, %v455
  %v640 = vpack.c.b16 %v464, %v460
  %v641 = vpack.c.b16 %v465, %v461
  %v642 = vpack.c.b16 %v466, %v462
  %v643 = vpack.c.b16 %v467, %v463
  %v644 = vpack.c.b16 %v472, %v468
  %v645 = vpack.c.b16 %v473, %v469
  %v646 = vpack.c.b16 %v474, %v470
  %v647 = vpack.c.b16 %v475, %v471
  %v648 = vpack.c.b16 %v480, %v476
  %v649 = vpack.c.b16 %v481, %v477
  %v650 = vpack.c.b16 %v482, %v478
  %v651 = vpack.c.b16 %v483, %v479
  %v652 = vpack.c.b16 %v488, %v484
  %v653 = vpack.c.b16 %v489, %v485
  %v654 = vpack.c.b16 %v490, %v486
  %v655 = vpack.c.b16 %v491, %v487
  %v656 = vpack.c.b16 %v496, %v492
  %v657 = vpack.c.b16 %v497, %v493
  %v658 = vpack.c.b16 %v498, %v494
  %v659 = vpack.c.b16 %v499, %v495
  %v660 = vpack.c.b16 %v504, %v500
  %v661 = vpack.c.b16 %v505, %v501
  %v662 = vpack.c.b16 %v506, %v502
  %v663 = vpack.c.b16 %v507, %v503
  %v664 = vpack.c.b16 %v512, %v508
  %v665 = vpack.c.b16 %v513, %v509
  %v666 = vpack.c.b16 %v514, %v510
  %v667 = vpack.c.b16 %v515, %v511
  %v668 = vpack.c.b16 %v520, %v516
  %v669 = vpack.c.b16 %v521, %v517
  %v670 = vpack.c.b16 %v522, %v518
  %v671 = vpack.c.b16 %v523, %v519
  %v672 = vpack.c.b16 %v528, %v524
  %v673 = vpack.c.b16 %v529, %v525
  %v674 = vpack.c.b16 %v530, %v526
  %v675 = vpack.c.b16 %v531, %v527
  %v676 = vpack.c.b16 %v536, %v532
  %v677 = vpack.c.b16 %v537, %v533
  %v678 = vpack.c.b16 %v538, %v534
  %v679 = vpack.c.b16 %v539, %v535
  %v680 = vpack.c.b16 %v544, %v540
  %v681 = vpack.c.b16 %v545, %v541
  %v682 = vpack.c.b16 %v546, %v542
  %v683 = vpack.c.b16 %v547, %v543
  %v684 = vpack.c.b16 %v552, %v548
  %v685 = vpack.c.b16 %v553, %v549
  %v686 = vpack.c.b16 %v554, %v550
  %v687 = vpack.c.b16 %v555, %v551
  %v688 = vpack.c.b16 %v560, %v556
  %v689 = vpack.c.b16 %v561, %v557
  %v690 = vpack.c.b16 %v562, %v558
  %v691 = vpack.c.b16 %v563, %v559
  %820 = vmatprep.subr.bf16.mxu0 %v565
  %821 = vmatpush1.bf16.msra.mxu0 %v564
  %822 = vmatprep.subr.bf16.mxu0 %v569
  %823 = vmatpush1.bf16.msra.mxu0 %v568
  %824 = vmatprep.subr.bf16.mxu0 %v573
  %825 = vmatpush1.bf16.msra.mxu0 %v572
  %826 = vmatprep.subr.bf16.mxu0 %v577
  %827 = vmatpush1.bf16.msra.mxu0 %v576
  %828 = vmatprep.subr.bf16.mxu0 %v581
  %829 = vmatpush1.bf16.msra.mxu0 %v580
  %830 = vmatprep.subr.bf16.mxu0 %v585
  %831 = vmatpush1.bf16.msra.mxu0 %v584
  %832 = vmatprep.subr.bf16.mxu0 %v589
  %833 = vmatpush1.bf16.msra.mxu0 %v588
  %834 = vmatprep.subr.bf16.mxu0 %v593
  %835 = vmatpush1.bf16.msra.mxu0 %v592
  %836 = vmatprep.subr.bf16.mxu0 %v597
  %837 = vmatpush1.bf16.msra.mxu0 %v596
  %838 = vmatprep.subr.bf16.mxu0 %v601
  %839 = vmatpush1.bf16.msra.mxu0 %v600
  %840 = vmatprep.subr.bf16.mxu0 %v605
  %841 = vmatpush1.bf16.msra.mxu0 %v604
  %842 = vmatprep.subr.bf16.mxu0 %v609
  %843 = vmatpush1.bf16.msra.mxu0 %v608
  %844 = vmatprep.subr.bf16.mxu0 %v613
  %845 = vmatpush1.bf16.msra.mxu0 %v612
  %846 = vmatprep.subr.bf16.mxu0 %v617
  %847 = vmatpush1.bf16.msra.mxu0 %v616
  %848 = vmatprep.subr.bf16.mxu0 %v621
  %849 = vmatpush1.bf16.msra.mxu0 %v620
  %850 = vmatprep.subr.bf16.mxu0 %v625
  %851 = vmatpush1.bf16.msra.mxu0 %v624
  %852 = vmatprep.mubr.bf16.mxu0 %v173
  %853 = vmatmul.mubr.bf16.gmra.mrb[0].mxu0 %v172
  %v854 = vpop.f32.mrb[0].mxu0
  %v855 = vadd.f32 %v149, %v854
  %v856 = vpop.f32.mrb[0].mxu0
  %v857 = vadd.f32 %v153, %v856
  %v858 = vpop.f32.mrb[0].mxu0
  %v859 = vpop.f32.mrb[0].mxu0
  %860 = vdwg.mxu0
  %861 = vmatprep.subr.bf16.mxu0 %v629
  %862 = vmatpush1.bf16.msra.mxu0 %v628
  %863 = vmatprep.subr.bf16.mxu0 %v633
  %864 = vmatpush1.bf16.msra.mxu0 %v632
  %865 = vmatprep.subr.bf16.mxu0 %v637
  %866 = vmatpush1.bf16.msra.mxu0 %v636
  %867 = vmatprep.subr.bf16.mxu0 %v641
  %868 = vmatpush1.bf16.msra.mxu0 %v640
  %869 = vmatprep.subr.bf16.mxu0 %v645
  %870 = vmatpush1.bf16.msra.mxu0 %v644
  %871 = vmatprep.subr.bf16.mxu0 %v649
  %872 = vmatpush1.bf16.msra.mxu0 %v648
  %873 = vmatprep.subr.bf16.mxu0 %v653
  %874 = vmatpush1.bf16.msra.mxu0 %v652
  %875 = vmatprep.subr.bf16.mxu0 %v657
  %876 = vmatpush1.bf16.msra.mxu0 %v656
  %877 = vmatprep.subr.bf16.mxu0 %v661
  %878 = vmatpush1.bf16.msra.mxu0 %v660
  %879 = vmatprep.subr.bf16.mxu0 %v665
  %880 = vmatpush1.bf16.msra.mxu0 %v664
  %881 = vmatprep.subr.bf16.mxu0 %v669
  %882 = vmatpush1.bf16.msra.mxu0 %v668
  %883 = vmatprep.subr.bf16.mxu0 %v673
  %884 = vmatpush1.bf16.msra.mxu0 %v672
  %885 = vmatprep.subr.bf16.mxu0 %v677
  %886 = vmatpush1.bf16.msra.mxu0 %v676
  %887 = vmatprep.subr.bf16.mxu0 %v681
  %888 = vmatpush1.bf16.msra.mxu0 %v680
  %889 = vmatprep.subr.bf16.mxu0 %v685
  %890 = vmatpush1.bf16.msra.mxu0 %v684
  %891 = vmatprep.subr.bf16.mxu0 %v689
  %892 = vmatpush1.bf16.msra.mxu0 %v688
  %893 = vmatprep.mubr.bf16.mxu0 %v175
  %894 = vmatmul.mubr.bf16.gmra.mrb[0].mxu0 %v174
  %v895 = vpop.f32.mrb[0].mxu0
  %v896 = vadd.f32 %v855, %v895
  %v897 = vpop.f32.mrb[0].mxu0
  %v898 = vadd.f32 %v857, %v897
  %v899 = vpop.f32.mrb[0].mxu0
  %v900 = vpop.f32.mrb[0].mxu0
  %901 = vdwg.mxu0
  %902 = vmatprep.subr.bf16.mxu0 %v567
  %903 = vmatpush1.bf16.msra.mxu0 %v566
  %904 = vmatprep.subr.bf16.mxu0 %v571
  %905 = vmatpush1.bf16.msra.mxu0 %v570
  %906 = vmatprep.subr.bf16.mxu0 %v575
  %907 = vmatpush1.bf16.msra.mxu0 %v574
  %908 = vmatprep.subr.bf16.mxu0 %v579
  %909 = vmatpush1.bf16.msra.mxu0 %v578
  %910 = vmatprep.subr.bf16.mxu0 %v583
  %911 = vmatpush1.bf16.msra.mxu0 %v582
  %912 = vmatprep.subr.bf16.mxu0 %v587
  %913 = vmatpush1.bf16.msra.mxu0 %v586
  %914 = vmatprep.subr.bf16.mxu0 %v591
  %915 = vmatpush1.bf16.msra.mxu0 %v590
  %916 = vmatprep.subr.bf16.mxu0 %v595
  %917 = vmatpush1.bf16.msra.mxu0 %v594
  %918 = vmatprep.subr.bf16.mxu0 %v599
  %919 = vmatpush1.bf16.msra.mxu0 %v598
  %920 = vmatprep.subr.bf16.mxu0 %v603
  %921 = vmatpush1.bf16.msra.mxu0 %v602
  %922 = vmatprep.subr.bf16.mxu0 %v607
  %923 = vmatpush1.bf16.msra.mxu0 %v606
  %924 = vmatprep.subr.bf16.mxu0 %v611
  %925 = vmatpush1.bf16.msra.mxu0 %v610
  %926 = vmatprep.subr.bf16.mxu0 %v615
  %927 = vmatpush1.bf16.msra.mxu0 %v614
  %928 = vmatprep.subr.bf16.mxu0 %v619
  %929 = vmatpush1.bf16.msra.mxu0 %v618
  %930 = vmatprep.subr.bf16.mxu0 %v623
  %931 = vmatpush1.bf16.msra.mxu0 %v622
  %932 = vmatprep.subr.bf16.mxu0 %v627
  %933 = vmatpush1.bf16.msra.mxu0 %v626
  %934 = vmatprep.mubr.bf16.mxu0 %v173
  %935 = vmatmul.mubr.bf16.gmra.mrb[0].mxu0 %v172
  %v936 = vpop.f32.mrb[0].mxu0
  %v937 = vadd.f32 %v157, %v936
  %v938 = vpop.f32.mrb[0].mxu0
  %v939 = vadd.f32 %v161, %v938
  %v940 = vpop.f32.mrb[0].mxu0
  %v941 = vpop.f32.mrb[0].mxu0
  %942 = vdwg.mxu0
  %943 = vmatprep.subr.bf16.mxu0 %v631
  %944 = vmatpush1.bf16.msra.mxu0 %v630
  %945 = vmatprep.subr.bf16.mxu0 %v635
  %946 = vmatpush1.bf16.msra.mxu0 %v634
  %947 = vmatprep.subr.bf16.mxu0 %v639
  %948 = vmatpush1.bf16.msra.mxu0 %v638
  %949 = vmatprep.subr.bf16.mxu0 %v643
  %950 = vmatpush1.bf16.msra.mxu0 %v642
  %951 = vmatprep.subr.bf16.mxu0 %v647
  %952 = vmatpush1.bf16.msra.mxu0 %v646
  %953 = vmatprep.subr.bf16.mxu0 %v651
  %954 = vmatpush1.bf16.msra.mxu0 %v650
  %955 = vmatprep.subr.bf16.mxu0 %v655
  %956 = vmatpush1.bf16.msra.mxu0 %v654
  %957 = vmatprep.subr.bf16.mxu0 %v659
  %958 = vmatpush1.bf16.msra.mxu0 %v658
  %959 = vmatprep.subr.bf16.mxu0 %v663
  %960 = vmatpush1.bf16.msra.mxu0 %v662
  %961 = vmatprep.subr.bf16.mxu0 %v667
  %962 = vmatpush1.bf16.msra.mxu0 %v666
  %963 = vmatprep.subr.bf16.mxu0 %v671
  %964 = vmatpush1.bf16.msra.mxu0 %v670
  %965 = vmatprep.subr.bf16.mxu0 %v675
  %966 = vmatpush1.bf16.msra.mxu0 %v674
  %967 = vmatprep.subr.bf16.mxu0 %v679
  %968 = vmatpush1.bf16.msra.mxu0 %v678
  %969 = vmatprep.subr.bf16.mxu0 %v683
  %970 = vmatpush1.bf16.msra.mxu0 %v682
  %971 = vmatprep.subr.bf16.mxu0 %v687
  %972 = vmatpush1.bf16.msra.mxu0 %v686
  %973 = vmatprep.subr.bf16.mxu0 %v691
  %974 = vmatpush1.bf16.msra.mxu0 %v690
  %975 = vmatprep.mubr.bf16.mxu0 %v175
  %976 = vmatmul.mubr.bf16.gmra.mrb[0].mxu0 %v174
  %v977 = vpop.f32.mrb[0].mxu0
  %v978 = vadd.f32 %v937, %v977
  %v979 = vpop.f32.mrb[0].mxu0
  %v980 = vadd.f32 %v939, %v979
  %v981 = vpop.f32.mrb[0].mxu0
  %v982 = vpop.f32.mrb[0].mxu0
  %983 = vdwg.mxu0
  %v984 = vmax.f32 %v896, 0.0
  %v985 = vmax.f32 %v898, 0.0
  %v986 = vmax.f32 %v978, 0.0
  %v987 = vmax.f32 %v980, 0.0
  %v988 = vpack.c.bf16 %v984, %v984
  %v989 = vpack.c.bf16 %v985, %v985
  %v990 = vpack.c.bf16 %v986, %v986
  %v991 = vpack.c.bf16 %v987, %v987
  %v996 = vunpack.c.l.b16 %v988
  %v997 = vunpack.c.l.b16 %v989
  %v998 = vunpack.c.l.b16 %v990
  %v999 = vunpack.c.l.b16 %v991
  %v1000 = vpack.c.b16 %v997, %v996
  %v1001 = vpack.c.b16 %v999, %v998
  %1004 = vst [vmem:[%s3] sm:$0x77] %v1000
  %1005 = vst [vmem:[%s3 + $0x8] sm:$0x77] %v1001
  // Predicated region
  $region14: #{_lambda_.33} parent=0 // pred_check
    _
  $region15: #{_lambda_.33} parent=0 // pred_check_branch
    %1007 = sbr.rel (0) target = $region17
  $region16: #{_lambda_.33} parent=0 // pred_region
    _
  $region17: #{_lambda_.33} parent=0 // pred_fallthru
    _
  // Predicated region
  $region18: #{_lambda_.33} parent=0 // pred_check
    _
  $region19: #{_lambda_.33} parent=0 // pred_check_branch
    %1009 = sbr.rel (0) target = $region21
  $region20: #{_lambda_.33} parent=0 // pred_region
    _
  $region21: #{_lambda_.33} parent=0 // pred_fallthru
    _

// kernel: _lambda_.34
$region0: #{_lambda_.34}
  #allocation0 [shape = 'u32[]', space=smem, size = 0x4, offset = 0x4, fixed_abs, tag = 'smem constant byte address 0x4 - core index']
  #allocation1 [shape = 'u32[144,128]{1,0:T(1,128)}', space=vmem, size = 0x12000, scoped, tag = 'internal scratch']
  %s0 = inlined_call_operand.vmem [shape: bf16[6,512], index: 0, kind: input, shape index: {}]
  %s1 = inlined_call_operand.vmem [shape: bf16[512,512], index: 1, kind: input, shape index: {}]
  %s2 = inlined_call_operand.vmem [shape: f32[1,512], index: 2, kind: input, shape index: {}]
  %s3 = inlined_call_operand.vmem [shape: bf16[6,512], index: 3, kind: input, shape index: {}]
  %s4 = inlined_call_operand.vmem [shape: bf16[6,512], index: 4, kind: output, shape index: {}]
  %s5 = sld [smem:[#allocation0]]
  $region26: #{_lambda_.34} parent=0
    _
  %s7 = ssub.s32 1, %s5
  %s8 = scalar_select 0, %s7, %s5
  // Predicated region
  $region2: #{_lambda_.34} parent=0 // pred_check
    _
  $region3: #{_lambda_.34} parent=0 // pred_check_branch
    %10 = sbr.rel (0) target = $region5
  $region4: #{_lambda_.34} parent=0 // pred_region
    _
  $region5: #{_lambda_.34} parent=0 // pred_fallthru
    _
  // Predicated region
  $region6: #{_lambda_.34} parent=0 // pred_check
    _
  $region7: #{_lambda_.34} parent=0 // pred_check_branch
    %12 = sbr.rel (0) target = $region9
  $region8: #{_lambda_.34} parent=0 // pred_region
    _
  $region9: #{_lambda_.34} parent=0 // pred_fallthru
    _
  // Predicated region
  $region10: #{_lambda_.34} parent=0 // pred_check
    _
  $region11: #{_lambda_.34} parent=0 // pred_check_branch
    %14 = sbr.rel (0) target = $region13
  $region12: #{_lambda_.34} parent=0 // pred_region
    _
  $region13: #{_lambda_.34} parent=0 // pred_fallthru
    _
  // Predicated region
  $region14: #{_lambda_.34} parent=0 // pred_check
    _
  $region15: #{_lambda_.34} parent=0 // pred_check_branch
    %16 = sbr.rel (0) target = $region17
  $region16: #{_lambda_.34} parent=0 // pred_region
    _
  $region17: #{_lambda_.34} parent=0 // pred_fallthru
    _
  %v17 = vld [vmem:[%s0] sm:$0x77]
  %v18 = vld [vmem:[%s0 + $0x8] sm:$0x77]
  %v19 = vld [vmem:[%s1] sm:$0xff]
  %v20 = vld [vmem:[%s1 + $0x8] sm:$0xff]
  %v21 = vld [vmem:[%s1 + $0x10] sm:$0xff]
  %v22 = vld [vmem:[%s1 + $0x18] sm:$0xff]
  %v23 = vld [vmem:[%s1 + $0x20] sm:$0xff]
  %v24 = vld [vmem:[%s1 + $0x28] sm:$0xff]
  %v25 = vld [vmem:[%s1 + $0x30] sm:$0xff]
  %v26 = vld [vmem:[%s1 + $0x38] sm:$0xff]
  %v27 = vld [vmem:[%s1 + $0x40] sm:$0xff]
  %v28 = vld [vmem:[%s1 + $0x48] sm:$0xff]
  %v29 = vld [vmem:[%s1 + $0x50] sm:$0xff]
  %v30 = vld [vmem:[%s1 + $0x58] sm:$0xff]
  %v31 = vld [vmem:[%s1 + $0x60] sm:$0xff]
  %v32 = vld [vmem:[%s1 + $0x68] sm:$0xff]
  %v33 = vld [vmem:[%s1 + $0x70] sm:$0xff]
  %v34 = vld [vmem:[%s1 + $0x78] sm:$0xff]
  %v35 = vld [vmem:[%s1 + $0x80] sm:$0xff]
  %v36 = vld [vmem:[%s1 + $0x88] sm:$0xff]
  %v37 = vld [vmem:[%s1 + $0x90] sm:$0xff]
  %v38 = vld [vmem:[%s1 + $0x98] sm:$0xff]
  %v39 = vld [vmem:[%s1 + $0xa0] sm:$0xff]
  %v40 = vld [vmem:[%s1 + $0xa8] sm:$0xff]
  %v41 = vld [vmem:[%s1 + $0xb0] sm:$0xff]
  %v42 = vld [vmem:[%s1 + $0xb8] sm:$0xff]
  %v43 = vld [vmem:[%s1 + $0xc0] sm:$0xff]
  %v44 = vld [vmem:[%s1 + $0xc8] sm:$0xff]
  %v45 = vld [vmem:[%s1 + $0xd0] sm:$0xff]
  %v46 = vld [vmem:[%s1 + $0xd8] sm:$0xff]
  %v47 = vld [vmem:[%s1 + $0xe0] sm:$0xff]
  %v48 = vld [vmem:[%s1 + $0xe8] sm:$0xff]
  %v49 = vld [vmem:[%s1 + $0xf0] sm:$0xff]
  %v50 = vld [vmem:[%s1 + $0xf8] sm:$0xff]
  %v51 = vld [vmem:[%s1 + $0x100] sm:$0xff]
  %v52 = vld [vmem:[%s1 + $0x108] sm:$0xff]
  %v53 = vld [vmem:[%s1 + $0x110] sm:$0xff]
  %v54 = vld [vmem:[%s1 + $0x118] sm:$0xff]
  %v55 = vld [vmem:[%s1 + $0x120] sm:$0xff]
  %v56 = vld [vmem:[%s1 + $0x128] sm:$0xff]
  %v57 = vld [vmem:[%s1 + $0x130] sm:$0xff]
  %v58 = vld [vmem:[%s1 + $0x138] sm:$0xff]
  %v59 = vld [vmem:[%s1 + $0x140] sm:$0xff]
  %v60 = vld [vmem:[%s1 + $0x148] sm:$0xff]
  %v61 = vld [vmem:[%s1 + $0x150] sm:$0xff]
  %v62 = vld [vmem:[%s1 + $0x158] sm:$0xff]
  %v63 = vld [vmem:[%s1 + $0x160] sm:$0xff]
  %v64 = vld [vmem:[%s1 + $0x168] sm:$0xff]
  %v65 = vld [vmem:[%s1 + $0x170] sm:$0xff]
  %v66 = vld [vmem:[%s1 + $0x178] sm:$0xff]
  %v67 = vld [vmem:[%s1 + $0x180] sm:$0xff]
  %v68 = vld [vmem:[%s1 + $0x188] sm:$0xff]
  %v69 = vld [vmem:[%s1 + $0x190] sm:$0xff]
  %v70 = vld [vmem:[%s1 + $0x198] sm:$0xff]
  %v71 = vld [vmem:[%s1 + $0x1a0] sm:$0xff]
  %v72 = vld [vmem:[%s1 + $0x1a8] sm:$0xff]
  %v73 = vld [vmem:[%s1 + $0x1b0] sm:$0xff]
  %v74 = vld [vmem:[%s1 + $0x1b8] sm:$0xff]
  %v75 = vld [vmem:[%s1 + $0x1c0] sm:$0xff]
  %v76 = vld [vmem:[%s1 + $0x1c8] sm:$0xff]
  %v77 = vld [vmem:[%s1 + $0x1d0] sm:$0xff]
  %v78 = vld [vmem:[%s1 + $0x1d8] sm:$0xff]
  %v79 = vld [vmem:[%s1 + $0x1e0] sm:$0xff]
  %v80 = vld [vmem:[%s1 + $0x1e8] sm:$0xff]
  %v81 = vld [vmem:[%s1 + $0x1f0] sm:$0xff]
  %v82 = vld [vmem:[%s1 + $0x1f8] sm:$0xff]
  %v83 = vld [vmem:[%s1 + $0x200] sm:$0xff]
  %v84 = vld [vmem:[%s1 + $0x208] sm:$0xff]
  %v85 = vld [vmem:[%s1 + $0x210] sm:$0xff]
  %v86 = vld [vmem:[%s1 + $0x218] sm:$0xff]
  %v87 = vld [vmem:[%s1 + $0x220] sm:$0xff]
  %v88 = vld [vmem:[%s1 + $0x228] sm:$0xff]
  %v89 = vld [vmem:[%s1 + $0x230] sm:$0xff]
  %v90 = vld [vmem:[%s1 + $0x238] sm:$0xff]
  %v91 = vld [vmem:[%s1 + $0x240] sm:$0xff]
  %v92 = vld [vmem:[%s1 + $0x248] sm:$0xff]
  %v93 = vld [vmem:[%s1 + $0x250] sm:$0xff]
  %v94 = vld [vmem:[%s1 + $0x258] sm:$0xff]
  %v95 = vld [vmem:[%s1 + $0x260] sm:$0xff]
  %v96 = vld [vmem:[%s1 + $0x268] sm:$0xff]
  %v97 = vld [vmem:[%s1 + $0x270] sm:$0xff]
  %v98 = vld [vmem:[%s1 + $0x278] sm:$0xff]
  %v99 = vld [vmem:[%s1 + $0x280] sm:$0xff]
  %v100 = vld [vmem:[%s1 + $0x288] sm:$0xff]
  %v101 = vld [vmem:[%s1 + $0x290] sm:$0xff]
  %v102 = vld [vmem:[%s1 + $0x298] sm:$0xff]
  %v103 = vld [vmem:[%s1 + $0x2a0] sm:$0xff]
  %v104 = vld [vmem:[%s1 + $0x2a8] sm:$0xff]
  %v105 = vld [vmem:[%s1 + $0x2b0] sm:$0xff]
  %v106 = vld [vmem:[%s1 + $0x2b8] sm:$0xff]
  %v107 = vld [vmem:[%s1 + $0x2c0] sm:$0xff]
  %v108 = vld [vmem:[%s1 + $0x2c8] sm:$0xff]
  %v109 = vld [vmem:[%s1 + $0x2d0] sm:$0xff]
  %v110 = vld [vmem:[%s1 + $0x2d8] sm:$0xff]
  %v111 = vld [vmem:[%s1 + $0x2e0] sm:$0xff]
  %v112 = vld [vmem:[%s1 + $0x2e8] sm:$0xff]
  %v113 = vld [vmem:[%s1 + $0x2f0] sm:$0xff]
  %v114 = vld [vmem:[%s1 + $0x2f8] sm:$0xff]
  %v115 = vld [vmem:[%s1 + $0x300] sm:$0xff]
  %v116 = vld [vmem:[%s1 + $0x308] sm:$0xff]
  %v117 = vld [vmem:[%s1 + $0x310] sm:$0xff]
  %v118 = vld [vmem:[%s1 + $0x318] sm:$0xff]
  %v119 = vld [vmem:[%s1 + $0x320] sm:$0xff]
  %v120 = vld [vmem:[%s1 + $0x328] sm:$0xff]
  %v121 = vld [vmem:[%s1 + $0x330] sm:$0xff]
  %v122 = vld [vmem:[%s1 + $0x338] sm:$0xff]
  %v123 = vld [vmem:[%s1 + $0x340] sm:$0xff]
  %v124 = vld [vmem:[%s1 + $0x348] sm:$0xff]
  %v125 = vld [vmem:[%s1 + $0x350] sm:$0xff]
  %v126 = vld [vmem:[%s1 + $0x358] sm:$0xff]
  %v127 = vld [vmem:[%s1 + $0x360] sm:$0xff]
  %v128 = vld [vmem:[%s1 + $0x368] sm:$0xff]
  %v129 = vld [vmem:[%s1 + $0x370] sm:$0xff]
  %v130 = vld [vmem:[%s1 + $0x378] sm:$0xff]
  %v131 = vld [vmem:[%s1 + $0x380] sm:$0xff]
  %v132 = vld [vmem:[%s1 + $0x388] sm:$0xff]
  %v133 = vld [vmem:[%s1 + $0x390] sm:$0xff]
  %v134 = vld [vmem:[%s1 + $0x398] sm:$0xff]
  %v135 = vld [vmem:[%s1 + $0x3a0] sm:$0xff]
  %v136 = vld [vmem:[%s1 + $0x3a8] sm:$0xff]
  %v137 = vld [vmem:[%s1 + $0x3b0] sm:$0xff]
  %v138 = vld [vmem:[%s1 + $0x3b8] sm:$0xff]
  %v139 = vld [vmem:[%s1 + $0x3c0] sm:$0xff]
  %v140 = vld [vmem:[%s1 + $0x3c8] sm:$0xff]
  %v141 = vld [vmem:[%s1 + $0x3d0] sm:$0xff]
  %v142 = vld [vmem:[%s1 + $0x3d8] sm:$0xff]
  %v143 = vld [vmem:[%s1 + $0x3e0] sm:$0xff]
  %v144 = vld [vmem:[%s1 + $0x3e8] sm:$0xff]
  %v145 = vld [vmem:[%s1 + $0x3f0] sm:$0xff]
  %v146 = vld [vmem:[%s1 + $0x3f8] sm:$0xff]
  %v147 = vld [vmem:[%s2] sm:$0xf]
  %v149 = vlaneseq
  %v150 = vshrl.u32 %v149, 7
  %v151 = vsub.s32 0, %v150
  %v152 = vrot.slane %v147, %v151
  %v153 = vlaneseq
  %v154 = vshrl.u32 %v153, 7
  %v155 = vsub.s32 1, %v154
  %v156 = vrot.slane %v147, %v155
  %v157 = vlaneseq
  %v158 = vshrl.u32 %v157, 7
  %v159 = vsub.s32 2, %v158
  %v160 = vrot.slane %v147, %v159
  %v161 = vlaneseq
  %v162 = vshrl.u32 %v161, 7
  %v163 = vsub.s32 3, %v162
  %v164 = vrot.slane %v147, %v163
  %v171 = vunpack.c.l.b16 %v17
  %v172 = vunpack.c.h.b16 %v17
  %v173 = vunpack.c.l.b16 %v18
  %v174 = vunpack.c.h.b16 %v18
  %v175 = vpack.c.b16 %v171, %v171
  %v176 = vpack.c.b16 %v172, %v172
  %v177 = vpack.c.b16 %v173, %v173
  %v178 = vpack.c.b16 %v174, %v174
  %v311 = vunpack.c.l.b16 %v19
  %v312 = vunpack.c.h.b16 %v19
  %v313 = vunpack.c.l.b16 %v20
  %v314 = vunpack.c.h.b16 %v20
  %v315 = vunpack.c.l.b16 %v21
  %v316 = vunpack.c.h.b16 %v21
  %v317 = vunpack.c.l.b16 %v22
  %v318 = vunpack.c.h.b16 %v22
  %v319 = vunpack.c.l.b16 %v23
  %v320 = vunpack.c.h.b16 %v23
  %v321 = vunpack.c.l.b16 %v24
  %v322 = vunpack.c.h.b16 %v24
  %v323 = vunpack.c.l.b16 %v25
  %v324 = vunpack.c.h.b16 %v25
  %v325 = vunpack.c.l.b16 %v26
  %v326 = vunpack.c.h.b16 %v26
  %v327 = vunpack.c.l.b16 %v27
  %v328 = vunpack.c.h.b16 %v27
  %v329 = vunpack.c.l.b16 %v28
  %v330 = vunpack.c.h.b16 %v28
  %v331 = vunpack.c.l.b16 %v29
  %v332 = vunpack.c.h.b16 %v29
  %v333 = vunpack.c.l.b16 %v30
  %v334 = vunpack.c.h.b16 %v30
  %v335 = vunpack.c.l.b16 %v31
  %v336 = vunpack.c.h.b16 %v31
  %v337 = vunpack.c.l.b16 %v32
  %v338 = vunpack.c.h.b16 %v32
  %v339 = vunpack.c.l.b16 %v33
  %v340 = vunpack.c.h.b16 %v33
  %v341 = vunpack.c.l.b16 %v34
  %v342 = vunpack.c.h.b16 %v34
  %v343 = vunpack.c.l.b16 %v35
  %v344 = vunpack.c.h.b16 %v35
  %v345 = vunpack.c.l.b16 %v36
  %v346 = vunpack.c.h.b16 %v36
  %v347 = vunpack.c.l.b16 %v37
  %v348 = vunpack.c.h.b16 %v37
  %v349 = vunpack.c.l.b16 %v38
  %v350 = vunpack.c.h.b16 %v38
  %v351 = vunpack.c.l.b16 %v39
  %v352 = vunpack.c.h.b16 %v39
  %v353 = vunpack.c.l.b16 %v40
  %v354 = vunpack.c.h.b16 %v40
  %v355 = vunpack.c.l.b16 %v41
  %v356 = vunpack.c.h.b16 %v41
  %v357 = vunpack.c.l.b16 %v42
  %v358 = vunpack.c.h.b16 %v42
  %v359 = vunpack.c.l.b16 %v43
  %v360 = vunpack.c.h.b16 %v43
  %v361 = vunpack.c.l.b16 %v44
  %v362 = vunpack.c.h.b16 %v44
  %v363 = vunpack.c.l.b16 %v45
  %v364 = vunpack.c.h.b16 %v45
  %v365 = vunpack.c.l.b16 %v46
  %v366 = vunpack.c.h.b16 %v46
  %v367 = vunpack.c.l.b16 %v47
  %v368 = vunpack.c.h.b16 %v47
  %v369 = vunpack.c.l.b16 %v48
  %v370 = vunpack.c.h.b16 %v48
  %v371 = vunpack.c.l.b16 %v49
  %v372 = vunpack.c.h.b16 %v49
  %v373 = vunpack.c.l.b16 %v50
  %v374 = vunpack.c.h.b16 %v50
  %v375 = vunpack.c.l.b16 %v51
  %v376 = vunpack.c.h.b16 %v51
  %v377 = vunpack.c.l.b16 %v52
  %v378 = vunpack.c.h.b16 %v52
  %v379 = vunpack.c.l.b16 %v53
  %v380 = vunpack.c.h.b16 %v53
  %v381 = vunpack.c.l.b16 %v54
  %v382 = vunpack.c.h.b16 %v54
  %v383 = vunpack.c.l.b16 %v55
  %v384 = vunpack.c.h.b16 %v55
  %v385 = vunpack.c.l.b16 %v56
  %v386 = vunpack.c.h.b16 %v56
  %v387 = vunpack.c.l.b16 %v57
  %v388 = vunpack.c.h.b16 %v57
  %v389 = vunpack.c.l.b16 %v58
  %v390 = vunpack.c.h.b16 %v58
  %v391 = vunpack.c.l.b16 %v59
  %v392 = vunpack.c.h.b16 %v59
  %v393 = vunpack.c.l.b16 %v60
  %v394 = vunpack.c.h.b16 %v60
  %v395 = vunpack.c.l.b16 %v61
  %v396 = vunpack.c.h.b16 %v61
  %v397 = vunpack.c.l.b16 %v62
  %v398 = vunpack.c.h.b16 %v62
  %v399 = vunpack.c.l.b16 %v63
  %v400 = vunpack.c.h.b16 %v63
  %v401 = vunpack.c.l.b16 %v64
  %v402 = vunpack.c.h.b16 %v64
  %v403 = vunpack.c.l.b16 %v65
  %v404 = vunpack.c.h.b16 %v65
  %v405 = vunpack.c.l.b16 %v66
  %v406 = vunpack.c.h.b16 %v66
  %v407 = vunpack.c.l.b16 %v67
  %v408 = vunpack.c.h.b16 %v67
  %v409 = vunpack.c.l.b16 %v68
  %v410 = vunpack.c.h.b16 %v68
  %v411 = vunpack.c.l.b16 %v69
  %v412 = vunpack.c.h.b16 %v69
  %v413 = vunpack.c.l.b16 %v70
  %v414 = vunpack.c.h.b16 %v70
  %v415 = vunpack.c.l.b16 %v71
  %v416 = vunpack.c.h.b16 %v71
  %v417 = vunpack.c.l.b16 %v72
  %v418 = vunpack.c.h.b16 %v72
  %v419 = vunpack.c.l.b16 %v73
  %v420 = vunpack.c.h.b16 %v73
  %v421 = vunpack.c.l.b16 %v74
  %v422 = vunpack.c.h.b16 %v74
  %v423 = vunpack.c.l.b16 %v75
  %v424 = vunpack.c.h.b16 %v75
  %v425 = vunpack.c.l.b16 %v76
  %v426 = vunpack.c.h.b16 %v76
  %v427 = vunpack.c.l.b16 %v77
  %v428 = vunpack.c.h.b16 %v77
  %v429 = vunpack.c.l.b16 %v78
  %v430 = vunpack.c.h.b16 %v78
  %v431 = vunpack.c.l.b16 %v79
  %v432 = vunpack.c.h.b16 %v79
  %v433 = vunpack.c.l.b16 %v80
  %v434 = vunpack.c.h.b16 %v80
  %v435 = vunpack.c.l.b16 %v81
  %v436 = vunpack.c.h.b16 %v81
  %v437 = vunpack.c.l.b16 %v82
  %v438 = vunpack.c.h.b16 %v82
  %v439 = vunpack.c.l.b16 %v83
  %v440 = vunpack.c.h.b16 %v83
  %v441 = vunpack.c.l.b16 %v84
  %v442 = vunpack.c.h.b16 %v84
  %v443 = vunpack.c.l.b16 %v85
  %v444 = vunpack.c.h.b16 %v85
  %v445 = vunpack.c.l.b16 %v86
  %v446 = vunpack.c.h.b16 %v86
  %v447 = vunpack.c.l.b16 %v87
  %v448 = vunpack.c.h.b16 %v87
  %v449 = vunpack.c.l.b16 %v88
  %v450 = vunpack.c.h.b16 %v88
  %v451 = vunpack.c.l.b16 %v89
  %v452 = vunpack.c.h.b16 %v89
  %v453 = vunpack.c.l.b16 %v90
  %v454 = vunpack.c.h.b16 %v90
  %v455 = vunpack.c.l.b16 %v91
  %v456 = vunpack.c.h.b16 %v91
  %v457 = vunpack.c.l.b16 %v92
  %v458 = vunpack.c.h.b16 %v92
  %v459 = vunpack.c.l.b16 %v93
  %v460 = vunpack.c.h.b16 %v93
  %v461 = vunpack.c.l.b16 %v94
  %v462 = vunpack.c.h.b16 %v94
  %v463 = vunpack.c.l.b16 %v95
  %v464 = vunpack.c.h.b16 %v95
  %v465 = vunpack.c.l.b16 %v96
  %v466 = vunpack.c.h.b16 %v96
  %v467 = vunpack.c.l.b16 %v97
  %v468 = vunpack.c.h.b16 %v97
  %v469 = vunpack.c.l.b16 %v98
  %v470 = vunpack.c.h.b16 %v98
  %v471 = vunpack.c.l.b16 %v99
  %v472 = vunpack.c.h.b16 %v99
  %v473 = vunpack.c.l.b16 %v100
  %v474 = vunpack.c.h.b16 %v100
  %v475 = vunpack.c.l.b16 %v101
  %v476 = vunpack.c.h.b16 %v101
  %v477 = vunpack.c.l.b16 %v102
  %v478 = vunpack.c.h.b16 %v102
  %v479 = vunpack.c.l.b16 %v103
  %v480 = vunpack.c.h.b16 %v103
  %v481 = vunpack.c.l.b16 %v104
  %v482 = vunpack.c.h.b16 %v104
  %v483 = vunpack.c.l.b16 %v105
  %v484 = vunpack.c.h.b16 %v105
  %v485 = vunpack.c.l.b16 %v106
  %v486 = vunpack.c.h.b16 %v106
  %v487 = vunpack.c.l.b16 %v107
  %v488 = vunpack.c.h.b16 %v107
  %v489 = vunpack.c.l.b16 %v108
  %v490 = vunpack.c.h.b16 %v108
  %v491 = vunpack.c.l.b16 %v109
  %v492 = vunpack.c.h.b16 %v109
  %v493 = vunpack.c.l.b16 %v110
  %v494 = vunpack.c.h.b16 %v110
  %v495 = vunpack.c.l.b16 %v111
  %v496 = vunpack.c.h.b16 %v111
  %v497 = vunpack.c.l.b16 %v112
  %v498 = vunpack.c.h.b16 %v112
  %v499 = vunpack.c.l.b16 %v113
  %v500 = vunpack.c.h.b16 %v113
  %v501 = vunpack.c.l.b16 %v114
  %v502 = vunpack.c.h.b16 %v114
  %v503 = vunpack.c.l.b16 %v115
  %v504 = vunpack.c.h.b16 %v115
  %v505 = vunpack.c.l.b16 %v116
  %v506 = vunpack.c.h.b16 %v116
  %v507 = vunpack.c.l.b16 %v117
  %v508 = vunpack.c.h.b16 %v117
  %v509 = vunpack.c.l.b16 %v118
  %v510 = vunpack.c.h.b16 %v118
  %v511 = vunpack.c.l.b16 %v119
  %v512 = vunpack.c.h.b16 %v119
  %v513 = vunpack.c.l.b16 %v120
  %v514 = vunpack.c.h.b16 %v120
  %v515 = vunpack.c.l.b16 %v121
  %v516 = vunpack.c.h.b16 %v121
  %v517 = vunpack.c.l.b16 %v122
  %v518 = vunpack.c.h.b16 %v122
  %v519 = vunpack.c.l.b16 %v123
  %v520 = vunpack.c.h.b16 %v123
  %v521 = vunpack.c.l.b16 %v124
  %v522 = vunpack.c.h.b16 %v124
  %v523 = vunpack.c.l.b16 %v125
  %v524 = vunpack.c.h.b16 %v125
  %v525 = vunpack.c.l.b16 %v126
  %v526 = vunpack.c.h.b16 %v126
  %v527 = vunpack.c.l.b16 %v127
  %v528 = vunpack.c.h.b16 %v127
  %v529 = vunpack.c.l.b16 %v128
  %v530 = vunpack.c.h.b16 %v128
  %v531 = vunpack.c.l.b16 %v129
  %v532 = vunpack.c.h.b16 %v129
  %v533 = vunpack.c.l.b16 %v130
  %v534 = vunpack.c.h.b16 %v130
  %v535 = vunpack.c.l.b16 %v131
  %v536 = vunpack.c.h.b16 %v131
  %v537 = vunpack.c.l.b16 %v132
  %v538 = vunpack.c.h.b16 %v132
  %v539 = vunpack.c.l.b16 %v133
  %v540 = vunpack.c.h.b16 %v133
  %v541 = vunpack.c.l.b16 %v134
  %v542 = vunpack.c.h.b16 %v134
  %v543 = vunpack.c.l.b16 %v135
  %v544 = vunpack.c.h.b16 %v135
  %v545 = vunpack.c.l.b16 %v136
  %v546 = vunpack.c.h.b16 %v136
  %v547 = vunpack.c.l.b16 %v137
  %v548 = vunpack.c.h.b16 %v137
  %v549 = vunpack.c.l.b16 %v138
  %v550 = vunpack.c.h.b16 %v138
  %v551 = vunpack.c.l.b16 %v139
  %v552 = vunpack.c.h.b16 %v139
  %v553 = vunpack.c.l.b16 %v140
  %v554 = vunpack.c.h.b16 %v140
  %v555 = vunpack.c.l.b16 %v141
  %v556 = vunpack.c.h.b16 %v141
  %v557 = vunpack.c.l.b16 %v142
  %v558 = vunpack.c.h.b16 %v142
  %v559 = vunpack.c.l.b16 %v143
  %v560 = vunpack.c.h.b16 %v143
  %v561 = vunpack.c.l.b16 %v144
  %v562 = vunpack.c.h.b16 %v144
  %v563 = vunpack.c.l.b16 %v145
  %v564 = vunpack.c.h.b16 %v145
  %v565 = vunpack.c.l.b16 %v146
  %v566 = vunpack.c.h.b16 %v146
  %v567 = vpack.c.b16 %v315, %v311
  %v568 = vpack.c.b16 %v316, %v312
  %v569 = vpack.c.b16 %v317, %v313
  %v570 = vpack.c.b16 %v318, %v314
  %v571 = vpack.c.b16 %v323, %v319
  %v572 = vpack.c.b16 %v324, %v320
  %v573 = vpack.c.b16 %v325, %v321
  %v574 = vpack.c.b16 %v326, %v322
  %v575 = vpack.c.b16 %v331, %v327
  %v576 = vpack.c.b16 %v332, %v328
  %v577 = vpack.c.b16 %v333, %v329
  %v578 = vpack.c.b16 %v334, %v330
  %v579 = vpack.c.b16 %v339, %v335
  %v580 = vpack.c.b16 %v340, %v336
  %v581 = vpack.c.b16 %v341, %v337
  %v582 = vpack.c.b16 %v342, %v338
  %v583 = vpack.c.b16 %v347, %v343
  %v584 = vpack.c.b16 %v348, %v344
  %v585 = vpack.c.b16 %v349, %v345
  %v586 = vpack.c.b16 %v350, %v346
  %v587 = vpack.c.b16 %v355, %v351
  %v588 = vpack.c.b16 %v356, %v352
  %v589 = vpack.c.b16 %v357, %v353
  %v590 = vpack.c.b16 %v358, %v354
  %v591 = vpack.c.b16 %v363, %v359
  %v592 = vpack.c.b16 %v364, %v360
  %v593 = vpack.c.b16 %v365, %v361
  %v594 = vpack.c.b16 %v366, %v362
  %v595 = vpack.c.b16 %v371, %v367
  %v596 = vpack.c.b16 %v372, %v368
  %v597 = vpack.c.b16 %v373, %v369
  %v598 = vpack.c.b16 %v374, %v370
  %v599 = vpack.c.b16 %v379, %v375
  %v600 = vpack.c.b16 %v380, %v376
  %v601 = vpack.c.b16 %v381, %v377
  %v602 = vpack.c.b16 %v382, %v378
  %v603 = vpack.c.b16 %v387, %v383
  %v604 = vpack.c.b16 %v388, %v384
  %v605 = vpack.c.b16 %v389, %v385
  %v606 = vpack.c.b16 %v390, %v386
  %v607 = vpack.c.b16 %v395, %v391
  %v608 = vpack.c.b16 %v396, %v392
  %v609 = vpack.c.b16 %v397, %v393
  %v610 = vpack.c.b16 %v398, %v394
  %v611 = vpack.c.b16 %v403, %v399
  %v612 = vpack.c.b16 %v404, %v400
  %v613 = vpack.c.b16 %v405, %v401
  %v614 = vpack.c.b16 %v406, %v402
  %v615 = vpack.c.b16 %v411, %v407
  %v616 = vpack.c.b16 %v412, %v408
  %v617 = vpack.c.b16 %v413, %v409
  %v618 = vpack.c.b16 %v414, %v410
  %v619 = vpack.c.b16 %v419, %v415
  %v620 = vpack.c.b16 %v420, %v416
  %v621 = vpack.c.b16 %v421, %v417
  %v622 = vpack.c.b16 %v422, %v418
  %v623 = vpack.c.b16 %v427, %v423
  %v624 = vpack.c.b16 %v428, %v424
  %v625 = vpack.c.b16 %v429, %v425
  %v626 = vpack.c.b16 %v430, %v426
  %v627 = vpack.c.b16 %v435, %v431
  %v628 = vpack.c.b16 %v436, %v432
  %v629 = vpack.c.b16 %v437, %v433
  %v630 = vpack.c.b16 %v438, %v434
  %v631 = vpack.c.b16 %v443, %v439
  %v632 = vpack.c.b16 %v444, %v440
  %v633 = vpack.c.b16 %v445, %v441
  %v634 = vpack.c.b16 %v446, %v442
  %v635 = vpack.c.b16 %v451, %v447
  %v636 = vpack.c.b16 %v452, %v448
  %v637 = vpack.c.b16 %v453, %v449
  %v638 = vpack.c.b16 %v454, %v450
  %v639 = vpack.c.b16 %v459, %v455
  %v640 = vpack.c.b16 %v460, %v456
  %v641 = vpack.c.b16 %v461, %v457
  %v642 = vpack.c.b16 %v462, %v458
  %v643 = vpack.c.b16 %v467, %v463
  %v644 = vpack.c.b16 %v468, %v464
  %v645 = vpack.c.b16 %v469, %v465
  %v646 = vpack.c.b16 %v470, %v466
  %v647 = vpack.c.b16 %v475, %v471
  %v648 = vpack.c.b16 %v476, %v472
  %v649 = vpack.c.b16 %v477, %v473
  %v650 = vpack.c.b16 %v478, %v474
  %v651 = vpack.c.b16 %v483, %v479
  %v652 = vpack.c.b16 %v484, %v480
  %v653 = vpack.c.b16 %v485, %v481
  %v654 = vpack.c.b16 %v486, %v482
  %v655 = vpack.c.b16 %v491, %v487
  %v656 = vpack.c.b16 %v492, %v488
  %v657 = vpack.c.b16 %v493, %v489
  %v658 = vpack.c.b16 %v494, %v490
  %v659 = vpack.c.b16 %v499, %v495
  %v660 = vpack.c.b16 %v500, %v496
  %v661 = vpack.c.b16 %v501, %v497
  %v662 = vpack.c.b16 %v502, %v498
  %v663 = vpack.c.b16 %v507, %v503
  %v664 = vpack.c.b16 %v508, %v504
  %v665 = vpack.c.b16 %v509, %v505
  %v666 = vpack.c.b16 %v510, %v506
  %v667 = vpack.c.b16 %v515, %v511
  %v668 = vpack.c.b16 %v516, %v512
  %v669 = vpack.c.b16 %v517, %v513
  %v670 = vpack.c.b16 %v518, %v514
  %v671 = vpack.c.b16 %v523, %v519
  %v672 = vpack.c.b16 %v524, %v520
  %v673 = vpack.c.b16 %v525, %v521
  %v674 = vpack.c.b16 %v526, %v522
  %v675 = vpack.c.b16 %v531, %v527
  %v676 = vpack.c.b16 %v532, %v528
  %v677 = vpack.c.b16 %v533, %v529
  %v678 = vpack.c.b16 %v534, %v530
  %v679 = vpack.c.b16 %v539, %v535
  %v680 = vpack.c.b16 %v540, %v536
  %v681 = vpack.c.b16 %v541, %v537
  %v682 = vpack.c.b16 %v542, %v538
  %v683 = vpack.c.b16 %v547, %v543
  %v684 = vpack.c.b16 %v548, %v544
  %v685 = vpack.c.b16 %v549, %v545
  %v686 = vpack.c.b16 %v550, %v546
  %v687 = vpack.c.b16 %v555, %v551
  %v688 = vpack.c.b16 %v556, %v552
  %v689 = vpack.c.b16 %v557, %v553
  %v690 = vpack.c.b16 %v558, %v554
  %v691 = vpack.c.b16 %v563, %v559
  %v692 = vpack.c.b16 %v564, %v560
  %v693 = vpack.c.b16 %v565, %v561
  %v694 = vpack.c.b16 %v566, %v562
  %823 = vmatprep.subr.bf16.mxu0 %v568
  %824 = vmatpush1.bf16.msra.mxu0 %v567
  %825 = vmatprep.subr.bf16.mxu0 %v572
  %826 = vmatpush1.bf16.msra.mxu0 %v571
  %827 = vmatprep.subr.bf16.mxu0 %v576
  %828 = vmatpush1.bf16.msra.mxu0 %v575
  %829 = vmatprep.subr.bf16.mxu0 %v580
  %830 = vmatpush1.bf16.msra.mxu0 %v579
  %831 = vmatprep.subr.bf16.mxu0 %v584
  %832 = vmatpush1.bf16.msra.mxu0 %v583
  %833 = vmatprep.subr.bf16.mxu0 %v588
  %834 = vmatpush1.bf16.msra.mxu0 %v587
  %835 = vmatprep.subr.bf16.mxu0 %v592
  %836 = vmatpush1.bf16.msra.mxu0 %v591
  %837 = vmatprep.subr.bf16.mxu0 %v596
  %838 = vmatpush1.bf16.msra.mxu0 %v595
  %839 = vmatprep.subr.bf16.mxu0 %v600
  %840 = vmatpush1.bf16.msra.mxu0 %v599
  %841 = vmatprep.subr.bf16.mxu0 %v604
  %842 = vmatpush1.bf16.msra.mxu0 %v603
  %843 = vmatprep.subr.bf16.mxu0 %v608
  %844 = vmatpush1.bf16.msra.mxu0 %v607
  %845 = vmatprep.subr.bf16.mxu0 %v612
  %846 = vmatpush1.bf16.msra.mxu0 %v611
  %847 = vmatprep.subr.bf16.mxu0 %v616
  %848 = vmatpush1.bf16.msra.mxu0 %v615
  %849 = vmatprep.subr.bf16.mxu0 %v620
  %850 = vmatpush1.bf16.msra.mxu0 %v619
  %851 = vmatprep.subr.bf16.mxu0 %v624
  %852 = vmatpush1.bf16.msra.mxu0 %v623
  %853 = vmatprep.subr.bf16.mxu0 %v628
  %854 = vmatpush1.bf16.msra.mxu0 %v627
  %855 = vmatprep.mubr.bf16.mxu0 %v176
  %856 = vmatmul.mubr.bf16.gmra.mrb[0].mxu0 %v175
  %v857 = vpop.f32.mrb[0].mxu0
  %v858 = vadd.f32 %v152, %v857
  %v859 = vpop.f32.mrb[0].mxu0
  %v860 = vadd.f32 %v156, %v859
  %v861 = vpop.f32.mrb[0].mxu0
  %v862 = vpop.f32.mrb[0].mxu0
  %863 = vdwg.mxu0
  %864 = vmatprep.subr.bf16.mxu0 %v632
  %865 = vmatpush1.bf16.msra.mxu0 %v631
  %866 = vmatprep.subr.bf16.mxu0 %v636
  %867 = vmatpush1.bf16.msra.mxu0 %v635
  %868 = vmatprep.subr.bf16.mxu0 %v640
  %869 = vmatpush1.bf16.msra.mxu0 %v639
  %870 = vmatprep.subr.bf16.mxu0 %v644
  %871 = vmatpush1.bf16.msra.mxu0 %v643
  %872 = vmatprep.subr.bf16.mxu0 %v648
  %873 = vmatpush1.bf16.msra.mxu0 %v647
  %874 = vmatprep.subr.bf16.mxu0 %v652
  %875 = vmatpush1.bf16.msra.mxu0 %v651
  %876 = vmatprep.subr.bf16.mxu0 %v656
  %877 = vmatpush1.bf16.msra.mxu0 %v655
  %878 = vmatprep.subr.bf16.mxu0 %v660
  %879 = vmatpush1.bf16.msra.mxu0 %v659
  %880 = vmatprep.subr.bf16.mxu0 %v664
  %881 = vmatpush1.bf16.msra.mxu0 %v663
  %882 = vmatprep.subr.bf16.mxu0 %v668
  %883 = vmatpush1.bf16.msra.mxu0 %v667
  %884 = vmatprep.subr.bf16.mxu0 %v672
  %885 = vmatpush1.bf16.msra.mxu0 %v671
  %886 = vmatprep.subr.bf16.mxu0 %v676
  %887 = vmatpush1.bf16.msra.mxu0 %v675
  %888 = vmatprep.subr.bf16.mxu0 %v680
  %889 = vmatpush1.bf16.msra.mxu0 %v679
  %890 = vmatprep.subr.bf16.mxu0 %v684
  %891 = vmatpush1.bf16.msra.mxu0 %v683
  %892 = vmatprep.subr.bf16.mxu0 %v688
  %893 = vmatpush1.bf16.msra.mxu0 %v687
  %894 = vmatprep.subr.bf16.mxu0 %v692
  %895 = vmatpush1.bf16.msra.mxu0 %v691
  %896 = vmatprep.mubr.bf16.mxu0 %v178
  %897 = vmatmul.mubr.bf16.gmra.mrb[0].mxu0 %v177
  %v898 = vpop.f32.mrb[0].mxu0
  %v899 = vadd.f32 %v858, %v898
  %v900 = vpop.f32.mrb[0].mxu0
  %v901 = vadd.f32 %v860, %v900
  %v902 = vpop.f32.mrb[0].mxu0
  %v903 = vpop.f32.mrb[0].mxu0
  %904 = vdwg.mxu0
  %905 = vmatprep.subr.bf16.mxu0 %v570
  %906 = vmatpush1.bf16.msra.mxu0 %v569
  %907 = vmatprep.subr.bf16.mxu0 %v574
  %908 = vmatpush1.bf16.msra.mxu0 %v573
  %909 = vmatprep.subr.bf16.mxu0 %v578
  %910 = vmatpush1.bf16.msra.mxu0 %v577
  %911 = vmatprep.subr.bf16.mxu0 %v582
  %912 = vmatpush1.bf16.msra.mxu0 %v581
  %913 = vmatprep.subr.bf16.mxu0 %v586
  %914 = vmatpush1.bf16.msra.mxu0 %v585
  %915 = vmatprep.subr.bf16.mxu0 %v590
  %916 = vmatpush1.bf16.msra.mxu0 %v589
  %917 = vmatprep.subr.bf16.mxu0 %v594
  %918 = vmatpush1.bf16.msra.mxu0 %v593
  %919 = vmatprep.subr.bf16.mxu0 %v598
  %920 = vmatpush1.bf16.msra.mxu0 %v597
  %921 = vmatprep.subr.bf16.mxu0 %v602
  %922 = vmatpush1.bf16.msra.mxu0 %v601
  %923 = vmatprep.subr.bf16.mxu0 %v606
  %924 = vmatpush1.bf16.msra.mxu0 %v605
  %925 = vmatprep.subr.bf16.mxu0 %v610
  %926 = vmatpush1.bf16.msra.mxu0 %v609
  %927 = vmatprep.subr.bf16.mxu0 %v614
  %928 = vmatpush1.bf16.msra.mxu0 %v613
  %929 = vmatprep.subr.bf16.mxu0 %v618
  %930 = vmatpush1.bf16.msra.mxu0 %v617
  %931 = vmatprep.subr.bf16.mxu0 %v622
  %932 = vmatpush1.bf16.msra.mxu0 %v621
  %933 = vmatprep.subr.bf16.mxu0 %v626
  %934 = vmatpush1.bf16.msra.mxu0 %v625
  %935 = vmatprep.subr.bf16.mxu0 %v630
  %936 = vmatpush1.bf16.msra.mxu0 %v629
  %937 = vmatprep.mubr.bf16.mxu0 %v176
  %938 = vmatmul.mubr.bf16.gmra.mrb[0].mxu0 %v175
  %v939 = vpop.f32.mrb[0].mxu0
  %v940 = vadd.f32 %v160, %v939
  %v941 = vpop.f32.mrb[0].mxu0
  %v942 = vadd.f32 %v164, %v941
  %v943 = vpop.f32.mrb[0].mxu0
  %v944 = vpop.f32.mrb[0].mxu0
  %945 = vdwg.mxu0
  %946 = vmatprep.subr.bf16.mxu0 %v634
  %947 = vmatpush1.bf16.msra.mxu0 %v633
  %948 = vmatprep.subr.bf16.mxu0 %v638
  %949 = vmatpush1.bf16.msra.mxu0 %v637
  %950 = vmatprep.subr.bf16.mxu0 %v642
  %951 = vmatpush1.bf16.msra.mxu0 %v641
  %952 = vmatprep.subr.bf16.mxu0 %v646
  %953 = vmatpush1.bf16.msra.mxu0 %v645
  %954 = vmatprep.subr.bf16.mxu0 %v650
  %955 = vmatpush1.bf16.msra.mxu0 %v649
  %956 = vmatprep.subr.bf16.mxu0 %v654
  %957 = vmatpush1.bf16.msra.mxu0 %v653
  %958 = vmatprep.subr.bf16.mxu0 %v658
  %959 = vmatpush1.bf16.msra.mxu0 %v657
  %960 = vmatprep.subr.bf16.mxu0 %v662
  %961 = vmatpush1.bf16.msra.mxu0 %v661
  %962 = vmatprep.subr.bf16.mxu0 %v666
  %963 = vmatpush1.bf16.msra.mxu0 %v665
  %964 = vmatprep.subr.bf16.mxu0 %v670
  %965 = vmatpush1.bf16.msra.mxu0 %v669
  %966 = vmatprep.subr.bf16.mxu0 %v674
  %967 = vmatpush1.bf16.msra.mxu0 %v673
  %968 = vmatprep.subr.bf16.mxu0 %v678
  %969 = vmatpush1.bf16.msra.mxu0 %v677
  %970 = vmatprep.subr.bf16.mxu0 %v682
  %971 = vmatpush1.bf16.msra.mxu0 %v681
  %972 = vmatprep.subr.bf16.mxu0 %v686
  %973 = vmatpush1.bf16.msra.mxu0 %v685
  %974 = vmatprep.subr.bf16.mxu0 %v690
  %975 = vmatpush1.bf16.msra.mxu0 %v689
  %976 = vmatprep.subr.bf16.mxu0 %v694
  %977 = vmatpush1.bf16.msra.mxu0 %v693
  %978 = vmatprep.mubr.bf16.mxu0 %v178
  %979 = vmatmul.mubr.bf16.gmra.mrb[0].mxu0 %v177
  %v980 = vpop.f32.mrb[0].mxu0
  %v981 = vadd.f32 %v940, %v980
  %v982 = vpop.f32.mrb[0].mxu0
  %v983 = vadd.f32 %v942, %v982
  %v984 = vpop.f32.mrb[0].mxu0
  %v985 = vpop.f32.mrb[0].mxu0
  %986 = vdwg.mxu0
  %v987 = vld [vmem:[%s3] sm:$0x77]
  %v988 = vld [vmem:[%s3 + $0x8] sm:$0x77]
  %v989 = vunpack.c.l.bf16 %v987
  %v990 = vunpack.c.h.bf16 %v987
  %v991 = vunpack.c.l.bf16 %v988
  %v992 = vunpack.c.h.bf16 %v988
  %v993 = vadd.f32 %v899, %v989
  %v994 = vadd.f32 %v901, %v990
  %v995 = vadd.f32 %v981, %v991
  %v996 = vadd.f32 %v983, %v992
  %v997 = vmax.f32 %v993, 0.0
  %v998 = vmax.f32 %v994, 0.0
  %v999 = vmax.f32 %v995, 0.0
  %v1000 = vmax.f32 %v996, 0.0
  %v1001 = vpack.c.bf16 %v997, %v997
  %v1002 = vpack.c.bf16 %v998, %v998
  %v1003 = vpack.c.bf16 %v999, %v999
  %v1004 = vpack.c.bf16 %v1000, %v1000
  %v1009 = vunpack.c.l.b16 %v1001
  %v1010 = vunpack.c.l.b16 %v1002
  %v1011 = vunpack.c.l.b16 %v1003
  %v1012 = vunpack.c.l.b16 %v1004
  %v1013 = vpack.c.b16 %v1010, %v1009
  %v1014 = vpack.c.b16 %v1012, %v1011
  %1017 = vst [vmem:[%s4] sm:$0x77] %v1013
  %1018 = vst [vmem:[%s4 + $0x8] sm:$0x77] %v1014
  // Predicated region
  $region18: #{_lambda_.34} parent=0 // pred_check
    _
  $region19: #{_lambda_.34} parent=0 // pred_check_branch
    %1020 = sbr.rel (0) target = $region21
  $region20: #{_lambda_.34} parent=0 // pred_region
    _
  $region21: #{_lambda_.34} parent=0 // pred_fallthru
    _
  // Predicated region
  $region22: #{_lambda_.34} parent=0 // pred_check
    _
  $region23: #{_lambda_.34} parent=0 // pred_check_branch
    %1022 = sbr.rel (0) target = $region25
  $region24: #{_lambda_.34} parent=0 // pred_region
    _
  $region25: #{_lambda_.34} parent=0 // pred_fallthru
    _

// kernel: _lambda_.32
$region0: #{_lambda_.32}
  #allocation0 [shape = 'u32[]', space=smem, size = 0x4, offset = 0x4, fixed_abs, tag = 'smem constant byte address 0x4 - core index']
  #allocation1 [shape = 'u32[144,128]{1,0:T(1,128)}', space=vmem, size = 0x12000, scoped, tag = 'internal scratch']
  %s0 = inlined_call_operand.vmem [shape: bf16[6,512], index: 0, kind: input, shape index: {}]
  %s1 = inlined_call_operand.vmem [shape: bf16[512,512], index: 1, kind: input, shape index: {}]
  %s2 = inlined_call_operand.vmem [shape: f32[1,512], index: 2, kind: input, shape index: {}]
  %s3 = inlined_call_operand.vmem [shape: bf16[6,256], index: 3, kind: input, shape index: {}]
  %s4 = inlined_call_operand.vmem [shape: bf16[256,512], index: 4, kind: input, shape index: {}]
  %s5 = inlined_call_operand.vmem [shape: f32[1,512], index: 5, kind: input, shape index: {}]
  %s6 = inlined_call_operand.vmem [shape: bf16[6,512], index: 6, kind: output, shape index: {}]
  %s7 = sld [smem:[#allocation0]]
  $region34: #{_lambda_.32} parent=0
    _
  %s9 = ssub.s32 1, %s7
  %s10 = scalar_select 0, %s9, %s7
  // Predicated region
  $region2: #{_lambda_.32} parent=0 // pred_check
    _
  $region3: #{_lambda_.32} parent=0 // pred_check_branch
    %12 = sbr.rel (0) target = $region5
  $region4: #{_lambda_.32} parent=0 // pred_region
    _
  $region5: #{_lambda_.32} parent=0 // pred_fallthru
    _
  // Predicated region
  $region6: #{_lambda_.32} parent=0 // pred_check
    _
  $region7: #{_lambda_.32} parent=0 // pred_check_branch
    %14 = sbr.rel (0) target = $region9
  $region8: #{_lambda_.32} parent=0 // pred_region
    _
  $region9: #{_lambda_.32} parent=0 // pred_fallthru
    _
  // Predicated region
  $region10: #{_lambda_.32} parent=0 // pred_check
    _
  $region11: #{_lambda_.32} parent=0 // pred_check_branch
    %16 = sbr.rel (0) target = $region13
  $region12: #{_lambda_.32} parent=0 // pred_region
    _
  $region13: #{_lambda_.32} parent=0 // pred_fallthru
    _
  // Predicated region
  $region14: #{_lambda_.32} parent=0 // pred_check
    _
  $region15: #{_lambda_.32} parent=0 // pred_check_branch
    %18 = sbr.rel (0) target = $region17
  $region16: #{_lambda_.32} parent=0 // pred_region
    _
  $region17: #{_lambda_.32} parent=0 // pred_fallthru
    _
  // Predicated region
  $region18: #{_lambda_.32} parent=0 // pred_check
    _
  $region19: #{_lambda_.32} parent=0 // pred_check_branch
    %20 = sbr.rel (0) target = $region21
  $region20: #{_lambda_.32} parent=0 // pred_region
    _
  $region21: #{_lambda_.32} parent=0 // pred_fallthru
    _
  // Predicated region
  $region22: #{_lambda_.32} parent=0 // pred_check
    _
  $region23: #{_lambda_.32} parent=0 // pred_check_branch
    %22 = sbr.rel (0) target = $region25
  $region24: #{_lambda_.32} parent=0 // pred_region
    _
  $region25: #{_lambda_.32} parent=0 // pred_fallthru
    _
  %v23 = vld [vmem:[%s0] sm:$0x77]
  %v24 = vld [vmem:[%s0 + $0x8] sm:$0x77]
  %v25 = vld [vmem:[%s1] sm:$0xff]
  %v26 = vld [vmem:[%s1 + $0x8] sm:$0xff]
  %v27 = vld [vmem:[%s1 + $0x10] sm:$0xff]
  %v28 = vld [vmem:[%s1 + $0x18] sm:$0xff]
  %v29 = vld [vmem:[%s1 + $0x20] sm:$0xff]
  %v30 = vld [vmem:[%s1 + $0x28] sm:$0xff]
  %v31 = vld [vmem:[%s1 + $0x30] sm:$0xff]
  %v32 = vld [vmem:[%s1 + $0x38] sm:$0xff]
  %v33 = vld [vmem:[%s1 + $0x40] sm:$0xff]
  %v34 = vld [vmem:[%s1 + $0x48] sm:$0xff]
  %v35 = vld [vmem:[%s1 + $0x50] sm:$0xff]
  %v36 = vld [vmem:[%s1 + $0x58] sm:$0xff]
  %v37 = vld [vmem:[%s1 + $0x60] sm:$0xff]
  %v38 = vld [vmem:[%s1 + $0x68] sm:$0xff]
  %v39 = vld [vmem:[%s1 + $0x70] sm:$0xff]
  %v40 = vld [vmem:[%s1 + $0x78] sm:$0xff]
  %v41 = vld [vmem:[%s1 + $0x80] sm:$0xff]
  %v42 = vld [vmem:[%s1 + $0x88] sm:$0xff]
  %v43 = vld [vmem:[%s1 + $0x90] sm:$0xff]
  %v44 = vld [vmem:[%s1 + $0x98] sm:$0xff]
  %v45 = vld [vmem:[%s1 + $0xa0] sm:$0xff]
  %v46 = vld [vmem:[%s1 + $0xa8] sm:$0xff]
  %v47 = vld [vmem:[%s1 + $0xb0] sm:$0xff]
  %v48 = vld [vmem:[%s1 + $0xb8] sm:$0xff]
  %v49 = vld [vmem:[%s1 + $0xc0] sm:$0xff]
  %v50 = vld [vmem:[%s1 + $0xc8] sm:$0xff]
  %v51 = vld [vmem:[%s1 + $0xd0] sm:$0xff]
  %v52 = vld [vmem:[%s1 + $0xd8] sm:$0xff]
  %v53 = vld [vmem:[%s1 + $0xe0] sm:$0xff]
  %v54 = vld [vmem:[%s1 + $0xe8] sm:$0xff]
  %v55 = vld [vmem:[%s1 + $0xf0] sm:$0xff]
  %v56 = vld [vmem:[%s1 + $0xf8] sm:$0xff]
  %v57 = vld [vmem:[%s1 + $0x100] sm:$0xff]
  %v58 = vld [vmem:[%s1 + $0x108] sm:$0xff]
  %v59 = vld [vmem:[%s1 + $0x110] sm:$0xff]
  %v60 = vld [vmem:[%s1 + $0x118] sm:$0xff]
  %v61 = vld [vmem:[%s1 + $0x120] sm:$0xff]
  %v62 = vld [vmem:[%s1 + $0x128] sm:$0xff]
  %v63 = vld [vmem:[%s1 + $0x130] sm:$0xff]
  %v64 = vld [vmem:[%s1 + $0x138] sm:$0xff]
  %v65 = vld [vmem:[%s1 + $0x140] sm:$0xff]
  %v66 = vld [vmem:[%s1 + $0x148] sm:$0xff]
  %v67 = vld [vmem:[%s1 + $0x150] sm:$0xff]
  %v68 = vld [vmem:[%s1 + $0x158] sm:$0xff]
  %v69 = vld [vmem:[%s1 + $0x160] sm:$0xff]
  %v70 = vld [vmem:[%s1 + $0x168] sm:$0xff]
  %v71 = vld [vmem:[%s1 + $0x170] sm:$0xff]
  %v72 = vld [vmem:[%s1 + $0x178] sm:$0xff]
  %v73 = vld [vmem:[%s1 + $0x180] sm:$0xff]
  %v74 = vld [vmem:[%s1 + $0x188] sm:$0xff]
  %v75 = vld [vmem:[%s1 + $0x190] sm:$0xff]
  %v76 = vld [vmem:[%s1 + $0x198] sm:$0xff]
  %v77 = vld [vmem:[%s1 + $0x1a0] sm:$0xff]
  %v78 = vld [vmem:[%s1 + $0x1a8] sm:$0xff]
  %v79 = vld [vmem:[%s1 + $0x1b0] sm:$0xff]
  %v80 = vld [vmem:[%s1 + $0x1b8] sm:$0xff]
  %v81 = vld [vmem:[%s1 + $0x1c0] sm:$0xff]
  %v82 = vld [vmem:[%s1 + $0x1c8] sm:$0xff]
  %v83 = vld [vmem:[%s1 + $0x1d0] sm:$0xff]
  %v84 = vld [vmem:[%s1 + $0x1d8] sm:$0xff]
  %v85 = vld [vmem:[%s1 + $0x1e0] sm:$0xff]
  %v86 = vld [vmem:[%s1 + $0x1e8] sm:$0xff]
  %v87 = vld [vmem:[%s1 + $0x1f0] sm:$0xff]
  %v88 = vld [vmem:[%s1 + $0x1f8] sm:$0xff]
  %v89 = vld [vmem:[%s1 + $0x200] sm:$0xff]
  %v90 = vld [vmem:[%s1 + $0x208] sm:$0xff]
  %v91 = vld [vmem:[%s1 + $0x210] sm:$0xff]
  %v92 = vld [vmem:[%s1 + $0x218] sm:$0xff]
  %v93 = vld [vmem:[%s1 + $0x220] sm:$0xff]
  %v94 = vld [vmem:[%s1 + $0x228] sm:$0xff]
  %v95 = vld [vmem:[%s1 + $0x230] sm:$0xff]
  %v96 = vld [vmem:[%s1 + $0x238] sm:$0xff]
  %v97 = vld [vmem:[%s1 + $0x240] sm:$0xff]
  %v98 = vld [vmem:[%s1 + $0x248] sm:$0xff]
  %v99 = vld [vmem:[%s1 + $0x250] sm:$0xff]
  %v100 = vld [vmem:[%s1 + $0x258] sm:$0xff]
  %v101 = vld [vmem:[%s1 + $0x260] sm:$0xff]
  %v102 = vld [vmem:[%s1 + $0x268] sm:$0xff]
  %v103 = vld [vmem:[%s1 + $0x270] sm:$0xff]
  %v104 = vld [vmem:[%s1 + $0x278] sm:$0xff]
  %v105 = vld [vmem:[%s1 + $0x280] sm:$0xff]
  %v106 = vld [vmem:[%s1 + $0x288] sm:$0xff]
  %v107 = vld [vmem:[%s1 + $0x290] sm:$0xff]
  %v108 = vld [vmem:[%s1 + $0x298] sm:$0xff]
  %v109 = vld [vmem:[%s1 + $0x2a0] sm:$0xff]
  %v110 = vld [vmem:[%s1 + $0x2a8] sm:$0xff]
  %v111 = vld [vmem:[%s1 + $0x2b0] sm:$0xff]
  %v112 = vld [vmem:[%s1 + $0x2b8] sm:$0xff]
  %v113 = vld [vmem:[%s1 + $0x2c0] sm:$0xff]
  %v114 = vld [vmem:[%s1 + $0x2c8] sm:$0xff]
  %v115 = vld [vmem:[%s1 + $0x2d0] sm:$0xff]
  %v116 = vld [vmem:[%s1 + $0x2d8] sm:$0xff]
  %v117 = vld [vmem:[%s1 + $0x2e0] sm:$0xff]
  %v118 = vld [vmem:[%s1 + $0x2e8] sm:$0xff]
  %v119 = vld [vmem:[%s1 + $0x2f0] sm:$0xff]
  %v120 = vld [vmem:[%s1 + $0x2f8] sm:$0xff]
  %v121 = vld [vmem:[%s1 + $0x300] sm:$0xff]
  %v122 = vld [vmem:[%s1 + $0x308] sm:$0xff]
  %v123 = vld [vmem:[%s1 + $0x310] sm:$0xff]
  %v124 = vld [vmem:[%s1 + $0x318] sm:$0xff]
  %v125 = vld [vmem:[%s1 + $0x320] sm:$0xff]
  %v126 = vld [vmem:[%s1 + $0x328] sm:$0xff]
  %v127 = vld [vmem:[%s1 + $0x330] sm:$0xff]
  %v128 = vld [vmem:[%s1 + $0x338] sm:$0xff]
  %v129 = vld [vmem:[%s1 + $0x340] sm:$0xff]
  %v130 = vld [vmem:[%s1 + $0x348] sm:$0xff]
  %v131 = vld [vmem:[%s1 + $0x350] sm:$0xff]
  %v132 = vld [vmem:[%s1 + $0x358] sm:$0xff]
  %v133 = vld [vmem:[%s1 + $0x360] sm:$0xff]
  %v134 = vld [vmem:[%s1 + $0x368] sm:$0xff]
  %v135 = vld [vmem:[%s1 + $0x370] sm:$0xff]
  %v136 = vld [vmem:[%s1 + $0x378] sm:$0xff]
  %v137 = vld [vmem:[%s1 + $0x380] sm:$0xff]
  %v138 = vld [vmem:[%s1 + $0x388] sm:$0xff]
  %v139 = vld [vmem:[%s1 + $0x390] sm:$0xff]
  %v140 = vld [vmem:[%s1 + $0x398] sm:$0xff]
  %v141 = vld [vmem:[%s1 + $0x3a0] sm:$0xff]
  %v142 = vld [vmem:[%s1 + $0x3a8] sm:$0xff]
  %v143 = vld [vmem:[%s1 + $0x3b0] sm:$0xff]
  %v144 = vld [vmem:[%s1 + $0x3b8] sm:$0xff]
  %v145 = vld [vmem:[%s1 + $0x3c0] sm:$0xff]
  %v146 = vld [vmem:[%s1 + $0x3c8] sm:$0xff]
  %v147 = vld [vmem:[%s1 + $0x3d0] sm:$0xff]
  %v148 = vld [vmem:[%s1 + $0x3d8] sm:$0xff]
  %v149 = vld [vmem:[%s1 + $0x3e0] sm:$0xff]
  %v150 = vld [vmem:[%s1 + $0x3e8] sm:$0xff]
  %v151 = vld [vmem:[%s1 + $0x3f0] sm:$0xff]
  %v152 = vld [vmem:[%s1 + $0x3f8] sm:$0xff]
  %v153 = vld [vmem:[%s2] sm:$0xf]
  %v155 = vlaneseq
  %v156 = vshrl.u32 %v155, 7
  %v157 = vsub.s32 0, %v156
  %v158 = vrot.slane %v153, %v157
  %v159 = vlaneseq
  %v160 = vshrl.u32 %v159, 7
  %v161 = vsub.s32 1, %v160
  %v162 = vrot.slane %v153, %v161
  %v163 = vlaneseq
  %v164 = vshrl.u32 %v163, 7
  %v165 = vsub.s32 2, %v164
  %v166 = vrot.slane %v153, %v165
  %v167 = vlaneseq
  %v168 = vshrl.u32 %v167, 7
  %v169 = vsub.s32 3, %v168
  %v170 = vrot.slane %v153, %v169
  %v177 = vunpack.c.l.b16 %v23
  %v178 = vunpack.c.h.b16 %v23
  %v179 = vunpack.c.l.b16 %v24
  %v180 = vunpack.c.h.b16 %v24
  %v181 = vpack.c.b16 %v177, %v177
  %v182 = vpack.c.b16 %v178, %v178
  %v183 = vpack.c.b16 %v179, %v179
  %v184 = vpack.c.b16 %v180, %v180
  %v317 = vunpack.c.l.b16 %v25
  %v318 = vunpack.c.h.b16 %v25
  %v319 = vunpack.c.l.b16 %v26
  %v320 = vunpack.c.h.b16 %v26
  %v321 = vunpack.c.l.b16 %v27
  %v322 = vunpack.c.h.b16 %v27
  %v323 = vunpack.c.l.b16 %v28
  %v324 = vunpack.c.h.b16 %v28
  %v325 = vunpack.c.l.b16 %v29
  %v326 = vunpack.c.h.b16 %v29
  %v327 = vunpack.c.l.b16 %v30
  %v328 = vunpack.c.h.b16 %v30
  %v329 = vunpack.c.l.b16 %v31
  %v330 = vunpack.c.h.b16 %v31
  %v331 = vunpack.c.l.b16 %v32
  %v332 = vunpack.c.h.b16 %v32
  %v333 = vunpack.c.l.b16 %v33
  %v334 = vunpack.c.h.b16 %v33
  %v335 = vunpack.c.l.b16 %v34
  %v336 = vunpack.c.h.b16 %v34
  %v337 = vunpack.c.l.b16 %v35
  %v338 = vunpack.c.h.b16 %v35
  %v339 = vunpack.c.l.b16 %v36
  %v340 = vunpack.c.h.b16 %v36
  %v341 = vunpack.c.l.b16 %v37
  %v342 = vunpack.c.h.b16 %v37
  %v343 = vunpack.c.l.b16 %v38
  %v344 = vunpack.c.h.b16 %v38
  %v345 = vunpack.c.l.b16 %v39
  %v346 = vunpack.c.h.b16 %v39
  %v347 = vunpack.c.l.b16 %v40
  %v348 = vunpack.c.h.b16 %v40
  %v349 = vunpack.c.l.b16 %v41
  %v350 = vunpack.c.h.b16 %v41
  %v351 = vunpack.c.l.b16 %v42
  %v352 = vunpack.c.h.b16 %v42
  %v353 = vunpack.c.l.b16 %v43
  %v354 = vunpack.c.h.b16 %v43
  %v355 = vunpack.c.l.b16 %v44
  %v356 = vunpack.c.h.b16 %v44
  %v357 = vunpack.c.l.b16 %v45
  %v358 = vunpack.c.h.b16 %v45
  %v359 = vunpack.c.l.b16 %v46
  %v360 = vunpack.c.h.b16 %v46
  %v361 = vunpack.c.l.b16 %v47
  %v362 = vunpack.c.h.b16 %v47
  %v363 = vunpack.c.l.b16 %v48
  %v364 = vunpack.c.h.b16 %v48
  %v365 = vunpack.c.l.b16 %v49
  %v366 = vunpack.c.h.b16 %v49
  %v367 = vunpack.c.l.b16 %v50
  %v368 = vunpack.c.h.b16 %v50
  %v369 = vunpack.c.l.b16 %v51
  %v370 = vunpack.c.h.b16 %v51
  %v371 = vunpack.c.l.b16 %v52
  %v372 = vunpack.c.h.b16 %v52
  %v373 = vunpack.c.l.b16 %v53
  %v374 = vunpack.c.h.b16 %v53
  %v375 = vunpack.c.l.b16 %v54
  %v376 = vunpack.c.h.b16 %v54
  %v377 = vunpack.c.l.b16 %v55
  %v378 = vunpack.c.h.b16 %v55
  %v379 = vunpack.c.l.b16 %v56
  %v380 = vunpack.c.h.b16 %v56
  %v381 = vunpack.c.l.b16 %v57
  %v382 = vunpack.c.h.b16 %v57
  %v383 = vunpack.c.l.b16 %v58
  %v384 = vunpack.c.h.b16 %v58
  %v385 = vunpack.c.l.b16 %v59
  %v386 = vunpack.c.h.b16 %v59
  %v387 = vunpack.c.l.b16 %v60
  %v388 = vunpack.c.h.b16 %v60
  %v389 = vunpack.c.l.b16 %v61
  %v390 = vunpack.c.h.b16 %v61
  %v391 = vunpack.c.l.b16 %v62
  %v392 = vunpack.c.h.b16 %v62
  %v393 = vunpack.c.l.b16 %v63
  %v394 = vunpack.c.h.b16 %v63
  %v395 = vunpack.c.l.b16 %v64
  %v396 = vunpack.c.h.b16 %v64
  %v397 = vunpack.c.l.b16 %v65
  %v398 = vunpack.c.h.b16 %v65
  %v399 = vunpack.c.l.b16 %v66
  %v400 = vunpack.c.h.b16 %v66
  %v401 = vunpack.c.l.b16 %v67
  %v402 = vunpack.c.h.b16 %v67
  %v403 = vunpack.c.l.b16 %v68
  %v404 = vunpack.c.h.b16 %v68
  %v405 = vunpack.c.l.b16 %v69
  %v406 = vunpack.c.h.b16 %v69
  %v407 = vunpack.c.l.b16 %v70
  %v408 = vunpack.c.h.b16 %v70
  %v409 = vunpack.c.l.b16 %v71
  %v410 = vunpack.c.h.b16 %v71
  %v411 = vunpack.c.l.b16 %v72
  %v412 = vunpack.c.h.b16 %v72
  %v413 = vunpack.c.l.b16 %v73
  %v414 = vunpack.c.h.b16 %v73
  %v415 = vunpack.c.l.b16 %v74
  %v416 = vunpack.c.h.b16 %v74
  %v417 = vunpack.c.l.b16 %v75
  %v418 = vunpack.c.h.b16 %v75
  %v419 = vunpack.c.l.b16 %v76
  %v420 = vunpack.c.h.b16 %v76
  %v421 = vunpack.c.l.b16 %v77
  %v422 = vunpack.c.h.b16 %v77
  %v423 = vunpack.c.l.b16 %v78
  %v424 = vunpack.c.h.b16 %v78
  %v425 = vunpack.c.l.b16 %v79
  %v426 = vunpack.c.h.b16 %v79
  %v427 = vunpack.c.l.b16 %v80
  %v428 = vunpack.c.h.b16 %v80
  %v429 = vunpack.c.l.b16 %v81
  %v430 = vunpack.c.h.b16 %v81
  %v431 = vunpack.c.l.b16 %v82
  %v432 = vunpack.c.h.b16 %v82
  %v433 = vunpack.c.l.b16 %v83
  %v434 = vunpack.c.h.b16 %v83
  %v435 = vunpack.c.l.b16 %v84
  %v436 = vunpack.c.h.b16 %v84
  %v437 = vunpack.c.l.b16 %v85
  %v438 = vunpack.c.h.b16 %v85
  %v439 = vunpack.c.l.b16 %v86
  %v440 = vunpack.c.h.b16 %v86
  %v441 = vunpack.c.l.b16 %v87
  %v442 = vunpack.c.h.b16 %v87
  %v443 = vunpack.c.l.b16 %v88
  %v444 = vunpack.c.h.b16 %v88
  %v445 = vunpack.c.l.b16 %v89
  %v446 = vunpack.c.h.b16 %v89
  %v447 = vunpack.c.l.b16 %v90
  %v448 = vunpack.c.h.b16 %v90
  %v449 = vunpack.c.l.b16 %v91
  %v450 = vunpack.c.h.b16 %v91
  %v451 = vunpack.c.l.b16 %v92
  %v452 = vunpack.c.h.b16 %v92
  %v453 = vunpack.c.l.b16 %v93
  %v454 = vunpack.c.h.b16 %v93
  %v455 = vunpack.c.l.b16 %v94
  %v456 = vunpack.c.h.b16 %v94
  %v457 = vunpack.c.l.b16 %v95
  %v458 = vunpack.c.h.b16 %v95
  %v459 = vunpack.c.l.b16 %v96
  %v460 = vunpack.c.h.b16 %v96
  %v461 = vunpack.c.l.b16 %v97
  %v462 = vunpack.c.h.b16 %v97
  %v463 = vunpack.c.l.b16 %v98
  %v464 = vunpack.c.h.b16 %v98
  %v465 = vunpack.c.l.b16 %v99
  %v466 = vunpack.c.h.b16 %v99
  %v467 = vunpack.c.l.b16 %v100
  %v468 = vunpack.c.h.b16 %v100
  %v469 = vunpack.c.l.b16 %v101
  %v470 = vunpack.c.h.b16 %v101
  %v471 = vunpack.c.l.b16 %v102
  %v472 = vunpack.c.h.b16 %v102
  %v473 = vunpack.c.l.b16 %v103
  %v474 = vunpack.c.h.b16 %v103
  %v475 = vunpack.c.l.b16 %v104
  %v476 = vunpack.c.h.b16 %v104
  %v477 = vunpack.c.l.b16 %v105
  %v478 = vunpack.c.h.b16 %v105
  %v479 = vunpack.c.l.b16 %v106
  %v480 = vunpack.c.h.b16 %v106
  %v481 = vunpack.c.l.b16 %v107
  %v482 = vunpack.c.h.b16 %v107
  %v483 = vunpack.c.l.b16 %v108
  %v484 = vunpack.c.h.b16 %v108
  %v485 = vunpack.c.l.b16 %v109
  %v486 = vunpack.c.h.b16 %v109
  %v487 = vunpack.c.l.b16 %v110
  %v488 = vunpack.c.h.b16 %v110
  %v489 = vunpack.c.l.b16 %v111
  %v490 = vunpack.c.h.b16 %v111
  %v491 = vunpack.c.l.b16 %v112
  %v492 = vunpack.c.h.b16 %v112
  %v493 = vunpack.c.l.b16 %v113
  %v494 = vunpack.c.h.b16 %v113
  %v495 = vunpack.c.l.b16 %v114
  %v496 = vunpack.c.h.b16 %v114
  %v497 = vunpack.c.l.b16 %v115
  %v498 = vunpack.c.h.b16 %v115
  %v499 = vunpack.c.l.b16 %v116
  %v500 = vunpack.c.h.b16 %v116
  %v501 = vunpack.c.l.b16 %v117
  %v502 = vunpack.c.h.b16 %v117
  %v503 = vunpack.c.l.b16 %v118
  %v504 = vunpack.c.h.b16 %v118
  %v505 = vunpack.c.l.b16 %v119
  %v506 = vunpack.c.h.b16 %v119
  %v507 = vunpack.c.l.b16 %v120
  %v508 = vunpack.c.h.b16 %v120
  %v509 = vunpack.c.l.b16 %v121
  %v510 = vunpack.c.h.b16 %v121
  %v511 = vunpack.c.l.b16 %v122
  %v512 = vunpack.c.h.b16 %v122
  %v513 = vunpack.c.l.b16 %v123
  %v514 = vunpack.c.h.b16 %v123
  %v515 = vunpack.c.l.b16 %v124
  %v516 = vunpack.c.h.b16 %v124
  %v517 = vunpack.c.l.b16 %v125
  %v518 = vunpack.c.h.b16 %v125
  %v519 = vunpack.c.l.b16 %v126
  %v520 = vunpack.c.h.b16 %v126
  %v521 = vunpack.c.l.b16 %v127
  %v522 = vunpack.c.h.b16 %v127
  %v523 = vunpack.c.l.b16 %v128
  %v524 = vunpack.c.h.b16 %v128
  %v525 = vunpack.c.l.b16 %v129
  %v526 = vunpack.c.h.b16 %v129
  %v527 = vunpack.c.l.b16 %v130
  %v528 = vunpack.c.h.b16 %v130
  %v529 = vunpack.c.l.b16 %v131
  %v530 = vunpack.c.h.b16 %v131
  %v531 = vunpack.c.l.b16 %v132
  %v532 = vunpack.c.h.b16 %v132
  %v533 = vunpack.c.l.b16 %v133
  %v534 = vunpack.c.h.b16 %v133
  %v535 = vunpack.c.l.b16 %v134
  %v536 = vunpack.c.h.b16 %v134
  %v537 = vunpack.c.l.b16 %v135
  %v538 = vunpack.c.h.b16 %v135
  %v539 = vunpack.c.l.b16 %v136
  %v540 = vunpack.c.h.b16 %v136
  %v541 = vunpack.c.l.b16 %v137
  %v542 = vunpack.c.h.b16 %v137
  %v543 = vunpack.c.l.b16 %v138
  %v544 = vunpack.c.h.b16 %v138
  %v545 = vunpack.c.l.b16 %v139
  %v546 = vunpack.c.h.b16 %v139
  %v547 = vunpack.c.l.b16 %v140
  %v548 = vunpack.c.h.b16 %v140
  %v549 = vunpack.c.l.b16 %v141
  %v550 = vunpack.c.h.b16 %v141
  %v551 = vunpack.c.l.b16 %v142
  %v552 = vunpack.c.h.b16 %v142
  %v553 = vunpack.c.l.b16 %v143
  %v554 = vunpack.c.h.b16 %v143
  %v555 = vunpack.c.l.b16 %v144
  %v556 = vunpack.c.h.b16 %v144
  %v557 = vunpack.c.l.b16 %v145
  %v558 = vunpack.c.h.b16 %v145
  %v559 = vunpack.c.l.b16 %v146
  %v560 = vunpack.c.h.b16 %v146
  %v561 = vunpack.c.l.b16 %v147
  %v562 = vunpack.c.h.b16 %v147
  %v563 = vunpack.c.l.b16 %v148
  %v564 = vunpack.c.h.b16 %v148
  %v565 = vunpack.c.l.b16 %v149
  %v566 = vunpack.c.h.b16 %v149
  %v567 = vunpack.c.l.b16 %v150
  %v568 = vunpack.c.h.b16 %v150
  %v569 = vunpack.c.l.b16 %v151
  %v570 = vunpack.c.h.b16 %v151
  %v571 = vunpack.c.l.b16 %v152
  %v572 = vunpack.c.h.b16 %v152
  %v573 = vpack.c.b16 %v321, %v317
  %v574 = vpack.c.b16 %v322, %v318
  %v575 = vpack.c.b16 %v323, %v319
  %v576 = vpack.c.b16 %v324, %v320
  %v577 = vpack.c.b16 %v329, %v325
  %v578 = vpack.c.b16 %v330, %v326
  %v579 = vpack.c.b16 %v331, %v327
  %v580 = vpack.c.b16 %v332, %v328
  %v581 = vpack.c.b16 %v337, %v333
  %v582 = vpack.c.b16 %v338, %v334
  %v583 = vpack.c.b16 %v339, %v335
  %v584 = vpack.c.b16 %v340, %v336
  %v585 = vpack.c.b16 %v345, %v341
  %v586 = vpack.c.b16 %v346, %v342
  %v587 = vpack.c.b16 %v347, %v343
  %v588 = vpack.c.b16 %v348, %v344
  %v589 = vpack.c.b16 %v353, %v349
  %v590 = vpack.c.b16 %v354, %v350
  %v591 = vpack.c.b16 %v355, %v351
  %v592 = vpack.c.b16 %v356, %v352
  %v593 = vpack.c.b16 %v361, %v357
  %v594 = vpack.c.b16 %v362, %v358
  %v595 = vpack.c.b16 %v363, %v359
  %v596 = vpack.c.b16 %v364, %v360
  %v597 = vpack.c.b16 %v369, %v365
  %v598 = vpack.c.b16 %v370, %v366
  %v599 = vpack.c.b16 %v371, %v367
  %v600 = vpack.c.b16 %v372, %v368
  %v601 = vpack.c.b16 %v377, %v373
  %v602 = vpack.c.b16 %v378, %v374
  %v603 = vpack.c.b16 %v379, %v375
  %v604 = vpack.c.b16 %v380, %v376
  %v605 = vpack.c.b16 %v385, %v381
  %v606 = vpack.c.b16 %v386, %v382
  %v607 = vpack.c.b16 %v387, %v383
  %v608 = vpack.c.b16 %v388, %v384
  %v609 = vpack.c.b16 %v393, %v389
  %v610 = vpack.c.b16 %v394, %v390
  %v611 = vpack.c.b16 %v395, %v391
  %v612 = vpack.c.b16 %v396, %v392
  %v613 = vpack.c.b16 %v401, %v397
  %v614 = vpack.c.b16 %v402, %v398
  %v615 = vpack.c.b16 %v403, %v399
  %v616 = vpack.c.b16 %v404, %v400
  %v617 = vpack.c.b16 %v409, %v405
  %v618 = vpack.c.b16 %v410, %v406
  %v619 = vpack.c.b16 %v411, %v407
  %v620 = vpack.c.b16 %v412, %v408
  %v621 = vpack.c.b16 %v417, %v413
  %v622 = vpack.c.b16 %v418, %v414
  %v623 = vpack.c.b16 %v419, %v415
  %v624 = vpack.c.b16 %v420, %v416
  %v625 = vpack.c.b16 %v425, %v421
  %v626 = vpack.c.b16 %v426, %v422
  %v627 = vpack.c.b16 %v427, %v423
  %v628 = vpack.c.b16 %v428, %v424
  %v629 = vpack.c.b16 %v433, %v429
  %v630 = vpack.c.b16 %v434, %v430
  %v631 = vpack.c.b16 %v435, %v431
  %v632 = vpack.c.b16 %v436, %v432
  %v633 = vpack.c.b16 %v441, %v437
  %v634 = vpack.c.b16 %v442, %v438
  %v635 = vpack.c.b16 %v443, %v439
  %v636 = vpack.c.b16 %v444, %v440
  %v637 = vpack.c.b16 %v449, %v445
  %v638 = vpack.c.b16 %v450, %v446
  %v639 = vpack.c.b16 %v451, %v447
  %v640 = vpack.c.b16 %v452, %v448
  %v641 = vpack.c.b16 %v457, %v453
  %v642 = vpack.c.b16 %v458, %v454
  %v643 = vpack.c.b16 %v459, %v455
  %v644 = vpack.c.b16 %v460, %v456
  %v645 = vpack.c.b16 %v465, %v461
  %v646 = vpack.c.b16 %v466, %v462
  %v647 = vpack.c.b16 %v467, %v463
  %v648 = vpack.c.b16 %v468, %v464
  %v649 = vpack.c.b16 %v473, %v469
  %v650 = vpack.c.b16 %v474, %v470
  %v651 = vpack.c.b16 %v475, %v471
  %v652 = vpack.c.b16 %v476, %v472
  %v653 = vpack.c.b16 %v481, %v477
  %v654 = vpack.c.b16 %v482, %v478
  %v655 = vpack.c.b16 %v483, %v479
  %v656 = vpack.c.b16 %v484, %v480
  %v657 = vpack.c.b16 %v489, %v485
  %v658 = vpack.c.b16 %v490, %v486
  %v659 = vpack.c.b16 %v491, %v487
  %v660 = vpack.c.b16 %v492, %v488
  %v661 = vpack.c.b16 %v497, %v493
  %v662 = vpack.c.b16 %v498, %v494
  %v663 = vpack.c.b16 %v499, %v495
  %v664 = vpack.c.b16 %v500, %v496
  %v665 = vpack.c.b16 %v505, %v501
  %v666 = vpack.c.b16 %v506, %v502
  %v667 = vpack.c.b16 %v507, %v503
  %v668 = vpack.c.b16 %v508, %v504
  %v669 = vpack.c.b16 %v513, %v509
  %v670 = vpack.c.b16 %v514, %v510
  %v671 = vpack.c.b16 %v515, %v511
  %v672 = vpack.c.b16 %v516, %v512
  %v673 = vpack.c.b16 %v521, %v517
  %v674 = vpack.c.b16 %v522, %v518
  %v675 = vpack.c.b16 %v523, %v519
  %v676 = vpack.c.b16 %v524, %v520
  %v677 = vpack.c.b16 %v529, %v525
  %v678 = vpack.c.b16 %v530, %v526
  %v679 = vpack.c.b16 %v531, %v527
  %v680 = vpack.c.b16 %v532, %v528
  %v681 = vpack.c.b16 %v537, %v533
  %v682 = vpack.c.b16 %v538, %v534
  %v683 = vpack.c.b16 %v539, %v535
  %v684 = vpack.c.b16 %v540, %v536
  %v685 = vpack.c.b16 %v545, %v541
  %v686 = vpack.c.b16 %v546, %v542
  %v687 = vpack.c.b16 %v547, %v543
  %v688 = vpack.c.b16 %v548, %v544
  %v689 = vpack.c.b16 %v553, %v549
  %v690 = vpack.c.b16 %v554, %v550
  %v691 = vpack.c.b16 %v555, %v551
  %v692 = vpack.c.b16 %v556, %v552
  %v693 = vpack.c.b16 %v561, %v557
  %v694 = vpack.c.b16 %v562, %v558
  %v695 = vpack.c.b16 %v563, %v559
  %v696 = vpack.c.b16 %v564, %v560
  %v697 = vpack.c.b16 %v569, %v565
  %v698 = vpack.c.b16 %v570, %v566
  %v699 = vpack.c.b16 %v571, %v567
  %v700 = vpack.c.b16 %v572, %v568
  %829 = vmatprep.subr.bf16.mxu0 %v574
  %830 = vmatpush1.bf16.msra.mxu0 %v573
  %831 = vmatprep.subr.bf16.mxu0 %v578
  %832 = vmatpush1.bf16.msra.mxu0 %v577
  %833 = vmatprep.subr.bf16.mxu0 %v582
  %834 = vmatpush1.bf16.msra.mxu0 %v581
  %835 = vmatprep.subr.bf16.mxu0 %v586
  %836 = vmatpush1.bf16.msra.mxu0 %v585
  %837 = vmatprep.subr.bf16.mxu0 %v590
  %838 = vmatpush1.bf16.msra.mxu0 %v589
  %839 = vmatprep.subr.bf16.mxu0 %v594
  %840 = vmatpush1.bf16.msra.mxu0 %v593
  %841 = vmatprep.subr.bf16.mxu0 %v598
  %842 = vmatpush1.bf16.msra.mxu0 %v597
  %843 = vmatprep.subr.bf16.mxu0 %v602
  %844 = vmatpush1.bf16.msra.mxu0 %v601
  %845 = vmatprep.subr.bf16.mxu0 %v606
  %846 = vmatpush1.bf16.msra.mxu0 %v605
  %847 = vmatprep.subr.bf16.mxu0 %v610
  %848 = vmatpush1.bf16.msra.mxu0 %v609
  %849 = vmatprep.subr.bf16.mxu0 %v614
  %850 = vmatpush1.bf16.msra.mxu0 %v613
  %851 = vmatprep.subr.bf16.mxu0 %v618
  %852 = vmatpush1.bf16.msra.mxu0 %v617
  %853 = vmatprep.subr.bf16.mxu0 %v622
  %854 = vmatpush1.bf16.msra.mxu0 %v621
  %855 = vmatprep.subr.bf16.mxu0 %v626
  %856 = vmatpush1.bf16.msra.mxu0 %v625
  %857 = vmatprep.subr.bf16.mxu0 %v630
  %858 = vmatpush1.bf16.msra.mxu0 %v629
  %859 = vmatprep.subr.bf16.mxu0 %v634
  %860 = vmatpush1.bf16.msra.mxu0 %v633
  %861 = vmatprep.mubr.bf16.mxu0 %v182
  %862 = vmatmul.mubr.bf16.gmra.mrb[0].mxu0 %v181
  %v863 = vpop.f32.mrb[0].mxu0
  %v864 = vadd.f32 %v158, %v863
  %v865 = vpop.f32.mrb[0].mxu0
  %v866 = vadd.f32 %v162, %v865
  %v867 = vpop.f32.mrb[0].mxu0
  %v868 = vpop.f32.mrb[0].mxu0
  %869 = vdwg.mxu0
  %870 = vmatprep.subr.bf16.mxu0 %v638
  %871 = vmatpush1.bf16.msra.mxu0 %v637
  %872 = vmatprep.subr.bf16.mxu0 %v642
  %873 = vmatpush1.bf16.msra.mxu0 %v641
  %874 = vmatprep.subr.bf16.mxu0 %v646
  %875 = vmatpush1.bf16.msra.mxu0 %v645
  %876 = vmatprep.subr.bf16.mxu0 %v650
  %877 = vmatpush1.bf16.msra.mxu0 %v649
  %878 = vmatprep.subr.bf16.mxu0 %v654
  %879 = vmatpush1.bf16.msra.mxu0 %v653
  %880 = vmatprep.subr.bf16.mxu0 %v658
  %881 = vmatpush1.bf16.msra.mxu0 %v657
  %882 = vmatprep.subr.bf16.mxu0 %v662
  %883 = vmatpush1.bf16.msra.mxu0 %v661
  %884 = vmatprep.subr.bf16.mxu0 %v666
  %885 = vmatpush1.bf16.msra.mxu0 %v665
  %886 = vmatprep.subr.bf16.mxu0 %v670
  %887 = vmatpush1.bf16.msra.mxu0 %v669
  %888 = vmatprep.subr.bf16.mxu0 %v674
  %889 = vmatpush1.bf16.msra.mxu0 %v673
  %890 = vmatprep.subr.bf16.mxu0 %v678
  %891 = vmatpush1.bf16.msra.mxu0 %v677
  %892 = vmatprep.subr.bf16.mxu0 %v682
  %893 = vmatpush1.bf16.msra.mxu0 %v681
  %894 = vmatprep.subr.bf16.mxu0 %v686
  %895 = vmatpush1.bf16.msra.mxu0 %v685
  %896 = vmatprep.subr.bf16.mxu0 %v690
  %897 = vmatpush1.bf16.msra.mxu0 %v689
  %898 = vmatprep.subr.bf16.mxu0 %v694
  %899 = vmatpush1.bf16.msra.mxu0 %v693
  %900 = vmatprep.subr.bf16.mxu0 %v698
  %901 = vmatpush1.bf16.msra.mxu0 %v697
  %902 = vmatprep.mubr.bf16.mxu0 %v184
  %903 = vmatmul.mubr.bf16.gmra.mrb[0].mxu0 %v183
  %v904 = vpop.f32.mrb[0].mxu0
  %v905 = vadd.f32 %v864, %v904
  %v906 = vpop.f32.mrb[0].mxu0
  %v907 = vadd.f32 %v866, %v906
  %v908 = vpop.f32.mrb[0].mxu0
  %v909 = vpop.f32.mrb[0].mxu0
  %910 = vdwg.mxu0
  %911 = vmatprep.subr.bf16.mxu0 %v576
  %912 = vmatpush1.bf16.msra.mxu0 %v575
  %913 = vmatprep.subr.bf16.mxu0 %v580
  %914 = vmatpush1.bf16.msra.mxu0 %v579
  %915 = vmatprep.subr.bf16.mxu0 %v584
  %916 = vmatpush1.bf16.msra.mxu0 %v583
  %917 = vmatprep.subr.bf16.mxu0 %v588
  %918 = vmatpush1.bf16.msra.mxu0 %v587
  %919 = vmatprep.subr.bf16.mxu0 %v592
  %920 = vmatpush1.bf16.msra.mxu0 %v591
  %921 = vmatprep.subr.bf16.mxu0 %v596
  %922 = vmatpush1.bf16.msra.mxu0 %v595
  %923 = vmatprep.subr.bf16.mxu0 %v600
  %924 = vmatpush1.bf16.msra.mxu0 %v599
  %925 = vmatprep.subr.bf16.mxu0 %v604
  %926 = vmatpush1.bf16.msra.mxu0 %v603
  %927 = vmatprep.subr.bf16.mxu0 %v608
  %928 = vmatpush1.bf16.msra.mxu0 %v607
  %929 = vmatprep.subr.bf16.mxu0 %v612
  %930 = vmatpush1.bf16.msra.mxu0 %v611
  %931 = vmatprep.subr.bf16.mxu0 %v616
  %932 = vmatpush1.bf16.msra.mxu0 %v615
  %933 = vmatprep.subr.bf16.mxu0 %v620
  %934 = vmatpush1.bf16.msra.mxu0 %v619
  %935 = vmatprep.subr.bf16.mxu0 %v624
  %936 = vmatpush1.bf16.msra.mxu0 %v623
  %937 = vmatprep.subr.bf16.mxu0 %v628
  %938 = vmatpush1.bf16.msra.mxu0 %v627
  %939 = vmatprep.subr.bf16.mxu0 %v632
  %940 = vmatpush1.bf16.msra.mxu0 %v631
  %941 = vmatprep.subr.bf16.mxu0 %v636
  %942 = vmatpush1.bf16.msra.mxu0 %v635
  %943 = vmatprep.mubr.bf16.mxu0 %v182
  %944 = vmatmul.mubr.bf16.gmra.mrb[0].mxu0 %v181
  %v945 = vpop.f32.mrb[0].mxu0
  %v946 = vadd.f32 %v166, %v945
  %v947 = vpop.f32.mrb[0].mxu0
  %v948 = vadd.f32 %v170, %v947
  %v949 = vpop.f32.mrb[0].mxu0
  %v950 = vpop.f32.mrb[0].mxu0
  %951 = vdwg.mxu0
  %952 = vmatprep.subr.bf16.mxu0 %v640
  %953 = vmatpush1.bf16.msra.mxu0 %v639
  %954 = vmatprep.subr.bf16.mxu0 %v644
  %955 = vmatpush1.bf16.msra.mxu0 %v643
  %956 = vmatprep.subr.bf16.mxu0 %v648
  %957 = vmatpush1.bf16.msra.mxu0 %v647
  %958 = vmatprep.subr.bf16.mxu0 %v652
  %959 = vmatpush1.bf16.msra.mxu0 %v651
  %960 = vmatprep.subr.bf16.mxu0 %v656
  %961 = vmatpush1.bf16.msra.mxu0 %v655
  %962 = vmatprep.subr.bf16.mxu0 %v660
  %963 = vmatpush1.bf16.msra.mxu0 %v659
  %964 = vmatprep.subr.bf16.mxu0 %v664
  %965 = vmatpush1.bf16.msra.mxu0 %v663
  %966 = vmatprep.subr.bf16.mxu0 %v668
  %967 = vmatpush1.bf16.msra.mxu0 %v667
  %968 = vmatprep.subr.bf16.mxu0 %v672
  %969 = vmatpush1.bf16.msra.mxu0 %v671
  %970 = vmatprep.subr.bf16.mxu0 %v676
  %971 = vmatpush1.bf16.msra.mxu0 %v675
  %972 = vmatprep.subr.bf16.mxu0 %v680
  %973 = vmatpush1.bf16.msra.mxu0 %v679
  %974 = vmatprep.subr.bf16.mxu0 %v684
  %975 = vmatpush1.bf16.msra.mxu0 %v683
  %976 = vmatprep.subr.bf16.mxu0 %v688
  %977 = vmatpush1.bf16.msra.mxu0 %v687
  %978 = vmatprep.subr.bf16.mxu0 %v692
  %979 = vmatpush1.bf16.msra.mxu0 %v691
  %980 = vmatprep.subr.bf16.mxu0 %v696
  %981 = vmatpush1.bf16.msra.mxu0 %v695
  %982 = vmatprep.subr.bf16.mxu0 %v700
  %983 = vmatpush1.bf16.msra.mxu0 %v699
  %984 = vmatprep.mubr.bf16.mxu0 %v184
  %985 = vmatmul.mubr.bf16.gmra.mrb[0].mxu0 %v183
  %v986 = vpop.f32.mrb[0].mxu0
  %v987 = vadd.f32 %v946, %v986
  %v988 = vpop.f32.mrb[0].mxu0
  %v989 = vadd.f32 %v948, %v988
  %v990 = vpop.f32.mrb[0].mxu0
  %v991 = vpop.f32.mrb[0].mxu0
  %992 = vdwg.mxu0
  %v993 = vld [vmem:[%s3] sm:$0x77]
  %v994 = vld [vmem:[%s4] sm:$0xff]
  %v995 = vld [vmem:[%s4 + $0x8] sm:$0xff]
  %v996 = vld [vmem:[%s4 + $0x10] sm:$0xff]
  %v997 = vld [vmem:[%s4 + $0x18] sm:$0xff]
  %v998 = vld [vmem:[%s4 + $0x20] sm:$0xff]
  %v999 = vld [vmem:[%s4 + $0x28] sm:$0xff]
  %v1000 = vld [vmem:[%s4 + $0x30] sm:$0xff]
  %v1001 = vld [vmem:[%s4 + $0x38] sm:$0xff]
  %v1002 = vld [vmem:[%s4 + $0x40] sm:$0xff]
  %v1003 = vld [vmem:[%s4 + $0x48] sm:$0xff]
  %v1004 = vld [vmem:[%s4 + $0x50] sm:$0xff]
  %v1005 = vld [vmem:[%s4 + $0x58] sm:$0xff]
  %v1006 = vld [vmem:[%s4 + $0x60] sm:$0xff]
  %v1007 = vld [vmem:[%s4 + $0x68] sm:$0xff]
  %v1008 = vld [vmem:[%s4 + $0x70] sm:$0xff]
  %v1009 = vld [vmem:[%s4 + $0x78] sm:$0xff]
  %v1010 = vld [vmem:[%s4 + $0x80] sm:$0xff]
  %v1011 = vld [vmem:[%s4 + $0x88] sm:$0xff]
  %v1012 = vld [vmem:[%s4 + $0x90] sm:$0xff]
  %v1013 = vld [vmem:[%s4 + $0x98] sm:$0xff]
  %v1014 = vld [vmem:[%s4 + $0xa0] sm:$0xff]
  %v1015 = vld [vmem:[%s4 + $0xa8] sm:$0xff]
  %v1016 = vld [vmem:[%s4 + $0xb0] sm:$0xff]
  %v1017 = vld [vmem:[%s4 + $0xb8] sm:$0xff]
  %v1018 = vld [vmem:[%s4 + $0xc0] sm:$0xff]
  %v1019 = vld [vmem:[%s4 + $0xc8] sm:$0xff]
  %v1020 = vld [vmem:[%s4 + $0xd0] sm:$0xff]
  %v1021 = vld [vmem:[%s4 + $0xd8] sm:$0xff]
  %v1022 = vld [vmem:[%s4 + $0xe0] sm:$0xff]
  %v1023 = vld [vmem:[%s4 + $0xe8] sm:$0xff]
  %v1024 = vld [vmem:[%s4 + $0xf0] sm:$0xff]
  %v1025 = vld [vmem:[%s4 + $0xf8] sm:$0xff]
  %v1026 = vld [vmem:[%s4 + $0x100] sm:$0xff]
  %v1027 = vld [vmem:[%s4 + $0x108] sm:$0xff]
  %v1028 = vld [vmem:[%s4 + $0x110] sm:$0xff]
  %v1029 = vld [vmem:[%s4 + $0x118] sm:$0xff]
  %v1030 = vld [vmem:[%s4 + $0x120] sm:$0xff]
  %v1031 = vld [vmem:[%s4 + $0x128] sm:$0xff]
  %v1032 = vld [vmem:[%s4 + $0x130] sm:$0xff]
  %v1033 = vld [vmem:[%s4 + $0x138] sm:$0xff]
  %v1034 = vld [vmem:[%s4 + $0x140] sm:$0xff]
  %v1035 = vld [vmem:[%s4 + $0x148] sm:$0xff]
  %v1036 = vld [vmem:[%s4 + $0x150] sm:$0xff]
  %v1037 = vld [vmem:[%s4 + $0x158] sm:$0xff]
  %v1038 = vld [vmem:[%s4 + $0x160] sm:$0xff]
  %v1039 = vld [vmem:[%s4 + $0x168] sm:$0xff]
  %v1040 = vld [vmem:[%s4 + $0x170] sm:$0xff]
  %v1041 = vld [vmem:[%s4 + $0x178] sm:$0xff]
  %v1042 = vld [vmem:[%s4 + $0x180] sm:$0xff]
  %v1043 = vld [vmem:[%s4 + $0x188] sm:$0xff]
  %v1044 = vld [vmem:[%s4 + $0x190] sm:$0xff]
  %v1045 = vld [vmem:[%s4 + $0x198] sm:$0xff]
  %v1046 = vld [vmem:[%s4 + $0x1a0] sm:$0xff]
  %v1047 = vld [vmem:[%s4 + $0x1a8] sm:$0xff]
  %v1048 = vld [vmem:[%s4 + $0x1b0] sm:$0xff]
  %v1049 = vld [vmem:[%s4 + $0x1b8] sm:$0xff]
  %v1050 = vld [vmem:[%s4 + $0x1c0] sm:$0xff]
  %v1051 = vld [vmem:[%s4 + $0x1c8] sm:$0xff]
  %v1052 = vld [vmem:[%s4 + $0x1d0] sm:$0xff]
  %v1053 = vld [vmem:[%s4 + $0x1d8] sm:$0xff]
  %v1054 = vld [vmem:[%s4 + $0x1e0] sm:$0xff]
  %v1055 = vld [vmem:[%s4 + $0x1e8] sm:$0xff]
  %v1056 = vld [vmem:[%s4 + $0x1f0] sm:$0xff]
  %v1057 = vld [vmem:[%s4 + $0x1f8] sm:$0xff]
  %v1058 = vld [vmem:[%s5] sm:$0xf]
  %v1060 = vlaneseq
  %v1061 = vshrl.u32 %v1060, 7
  %v1062 = vsub.s32 0, %v1061
  %v1063 = vrot.slane %v1058, %v1062
  %v1064 = vlaneseq
  %v1065 = vshrl.u32 %v1064, 7
  %v1066 = vsub.s32 1, %v1065
  %v1067 = vrot.slane %v1058, %v1066
  %v1068 = vlaneseq
  %v1069 = vshrl.u32 %v1068, 7
  %v1070 = vsub.s32 2, %v1069
  %v1071 = vrot.slane %v1058, %v1070
  %v1072 = vlaneseq
  %v1073 = vshrl.u32 %v1072, 7
  %v1074 = vsub.s32 3, %v1073
  %v1075 = vrot.slane %v1058, %v1074
  %v1081 = vunpack.c.l.b16 %v993
  %v1082 = vunpack.c.h.b16 %v993
  %v1083 = vpack.c.b16 %v1081, %v1081
  %v1084 = vpack.c.b16 %v1082, %v1082
  %v1151 = vunpack.c.l.b16 %v994
  %v1152 = vunpack.c.h.b16 %v994
  %v1153 = vunpack.c.l.b16 %v995
  %v1154 = vunpack.c.h.b16 %v995
  %v1155 = vunpack.c.l.b16 %v996
  %v1156 = vunpack.c.h.b16 %v996
  %v1157 = vunpack.c.l.b16 %v997
  %v1158 = vunpack.c.h.b16 %v997
  %v1159 = vunpack.c.l.b16 %v998
  %v1160 = vunpack.c.h.b16 %v998
  %v1161 = vunpack.c.l.b16 %v999
  %v1162 = vunpack.c.h.b16 %v999
  %v1163 = vunpack.c.l.b16 %v1000
  %v1164 = vunpack.c.h.b16 %v1000
  %v1165 = vunpack.c.l.b16 %v1001
  %v1166 = vunpack.c.h.b16 %v1001
  %v1167 = vunpack.c.l.b16 %v1002
  %v1168 = vunpack.c.h.b16 %v1002
  %v1169 = vunpack.c.l.b16 %v1003
  %v1170 = vunpack.c.h.b16 %v1003
  %v1171 = vunpack.c.l.b16 %v1004
  %v1172 = vunpack.c.h.b16 %v1004
  %v1173 = vunpack.c.l.b16 %v1005
  %v1174 = vunpack.c.h.b16 %v1005
  %v1175 = vunpack.c.l.b16 %v1006
  %v1176 = vunpack.c.h.b16 %v1006
  %v1177 = vunpack.c.l.b16 %v1007
  %v1178 = vunpack.c.h.b16 %v1007
  %v1179 = vunpack.c.l.b16 %v1008
  %v1180 = vunpack.c.h.b16 %v1008
  %v1181 = vunpack.c.l.b16 %v1009
  %v1182 = vunpack.c.h.b16 %v1009
  %v1183 = vunpack.c.l.b16 %v1010
  %v1184 = vunpack.c.h.b16 %v1010
  %v1185 = vunpack.c.l.b16 %v1011
  %v1186 = vunpack.c.h.b16 %v1011
  %v1187 = vunpack.c.l.b16 %v1012
  %v1188 = vunpack.c.h.b16 %v1012
  %v1189 = vunpack.c.l.b16 %v1013
  %v1190 = vunpack.c.h.b16 %v1013
  %v1191 = vunpack.c.l.b16 %v1014
  %v1192 = vunpack.c.h.b16 %v1014
  %v1193 = vunpack.c.l.b16 %v1015
  %v1194 = vunpack.c.h.b16 %v1015
  %v1195 = vunpack.c.l.b16 %v1016
  %v1196 = vunpack.c.h.b16 %v1016
  %v1197 = vunpack.c.l.b16 %v1017
  %v1198 = vunpack.c.h.b16 %v1017
  %v1199 = vunpack.c.l.b16 %v1018
  %v1200 = vunpack.c.h.b16 %v1018
  %v1201 = vunpack.c.l.b16 %v1019
  %v1202 = vunpack.c.h.b16 %v1019
  %v1203 = vunpack.c.l.b16 %v1020
  %v1204 = vunpack.c.h.b16 %v1020
  %v1205 = vunpack.c.l.b16 %v1021
  %v1206 = vunpack.c.h.b16 %v1021
  %v1207 = vunpack.c.l.b16 %v1022
  %v1208 = vunpack.c.h.b16 %v1022
  %v1209 = vunpack.c.l.b16 %v1023
  %v1210 = vunpack.c.h.b16 %v1023
  %v1211 = vunpack.c.l.b16 %v1024
  %v1212 = vunpack.c.h.b16 %v1024
  %v1213 = vunpack.c.l.b16 %v1025
  %v1214 = vunpack.c.h.b16 %v1025
  %v1215 = vunpack.c.l.b16 %v1026
  %v1216 = vunpack.c.h.b16 %v1026
  %v1217 = vunpack.c.l.b16 %v1027
  %v1218 = vunpack.c.h.b16 %v1027
  %v1219 = vunpack.c.l.b16 %v1028
  %v1220 = vunpack.c.h.b16 %v1028
  %v1221 = vunpack.c.l.b16 %v1029
  %v1222 = vunpack.c.h.b16 %v1029
  %v1223 = vunpack.c.l.b16 %v1030
  %v1224 = vunpack.c.h.b16 %v1030
  %v1225 = vunpack.c.l.b16 %v1031
  %v1226 = vunpack.c.h.b16 %v1031
  %v1227 = vunpack.c.l.b16 %v1032
  %v1228 = vunpack.c.h.b16 %v1032
  %v1229 = vunpack.c.l.b16 %v1033
  %v1230 = vunpack.c.h.b16 %v1033
  %v1231 = vunpack.c.l.b16 %v1034
  %v1232 = vunpack.c.h.b16 %v1034
  %v1233 = vunpack.c.l.b16 %v1035
  %v1234 = vunpack.c.h.b16 %v1035
  %v1235 = vunpack.c.l.b16 %v1036
  %v1236 = vunpack.c.h.b16 %v1036
  %v1237 = vunpack.c.l.b16 %v1037
  %v1238 = vunpack.c.h.b16 %v1037
  %v1239 = vunpack.c.l.b16 %v1038
  %v1240 = vunpack.c.h.b16 %v1038
  %v1241 = vunpack.c.l.b16 %v1039
  %v1242 = vunpack.c.h.b16 %v1039
  %v1243 = vunpack.c.l.b16 %v1040
  %v1244 = vunpack.c.h.b16 %v1040
  %v1245 = vunpack.c.l.b16 %v1041
  %v1246 = vunpack.c.h.b16 %v1041
  %v1247 = vunpack.c.l.b16 %v1042
  %v1248 = vunpack.c.h.b16 %v1042
  %v1249 = vunpack.c.l.b16 %v1043
  %v1250 = vunpack.c.h.b16 %v1043
  %v1251 = vunpack.c.l.b16 %v1044
  %v1252 = vunpack.c.h.b16 %v1044
  %v1253 = vunpack.c.l.b16 %v1045
  %v1254 = vunpack.c.h.b16 %v1045
  %v1255 = vunpack.c.l.b16 %v1046
  %v1256 = vunpack.c.h.b16 %v1046
  %v1257 = vunpack.c.l.b16 %v1047
  %v1258 = vunpack.c.h.b16 %v1047
  %v1259 = vunpack.c.l.b16 %v1048
  %v1260 = vunpack.c.h.b16 %v1048
  %v1261 = vunpack.c.l.b16 %v1049
  %v1262 = vunpack.c.h.b16 %v1049
  %v1263 = vunpack.c.l.b16 %v1050
  %v1264 = vunpack.c.h.b16 %v1050
  %v1265 = vunpack.c.l.b16 %v1051
  %v1266 = vunpack.c.h.b16 %v1051
  %v1267 = vunpack.c.l.b16 %v1052
  %v1268 = vunpack.c.h.b16 %v1052
  %v1269 = vunpack.c.l.b16 %v1053
  %v1270 = vunpack.c.h.b16 %v1053
  %v1271 = vunpack.c.l.b16 %v1054
  %v1272 = vunpack.c.h.b16 %v1054
  %v1273 = vunpack.c.l.b16 %v1055
  %v1274 = vunpack.c.h.b16 %v1055
  %v1275 = vunpack.c.l.b16 %v1056
  %v1276 = vunpack.c.h.b16 %v1056
  %v1277 = vunpack.c.l.b16 %v1057
  %v1278 = vunpack.c.h.b16 %v1057
  %v1279 = vpack.c.b16 %v1155, %v1151
  %v1280 = vpack.c.b16 %v1156, %v1152
  %v1281 = vpack.c.b16 %v1157, %v1153
  %v1282 = vpack.c.b16 %v1158, %v1154
  %v1283 = vpack.c.b16 %v1163, %v1159
  %v1284 = vpack.c.b16 %v1164, %v1160
  %v1285 = vpack.c.b16 %v1165, %v1161
  %v1286 = vpack.c.b16 %v1166, %v1162
  %v1287 = vpack.c.b16 %v1171, %v1167
  %v1288 = vpack.c.b16 %v1172, %v1168
  %v1289 = vpack.c.b16 %v1173, %v1169
  %v1290 = vpack.c.b16 %v1174, %v1170
  %v1291 = vpack.c.b16 %v1179, %v1175
  %v1292 = vpack.c.b16 %v1180, %v1176
  %v1293 = vpack.c.b16 %v1181, %v1177
  %v1294 = vpack.c.b16 %v1182, %v1178
  %v1295 = vpack.c.b16 %v1187, %v1183
  %v1296 = vpack.c.b16 %v1188, %v1184
  %v1297 = vpack.c.b16 %v1189, %v1185
  %v1298 = vpack.c.b16 %v1190, %v1186
  %v1299 = vpack.c.b16 %v1195, %v1191
  %v1300 = vpack.c.b16 %v1196, %v1192
  %v1301 = vpack.c.b16 %v1197, %v1193
  %v1302 = vpack.c.b16 %v1198, %v1194
  %v1303 = vpack.c.b16 %v1203, %v1199
  %v1304 = vpack.c.b16 %v1204, %v1200
  %v1305 = vpack.c.b16 %v1205, %v1201
  %v1306 = vpack.c.b16 %v1206, %v1202
  %v1307 = vpack.c.b16 %v1211, %v1207
  %v1308 = vpack.c.b16 %v1212, %v1208
  %v1309 = vpack.c.b16 %v1213, %v1209
  %v1310 = vpack.c.b16 %v1214, %v1210
  %v1311 = vpack.c.b16 %v1219, %v1215
  %v1312 = vpack.c.b16 %v1220, %v1216
  %v1313 = vpack.c.b16 %v1221, %v1217
  %v1314 = vpack.c.b16 %v1222, %v1218
  %v1315 = vpack.c.b16 %v1227, %v1223
  %v1316 = vpack.c.b16 %v1228, %v1224
  %v1317 = vpack.c.b16 %v1229, %v1225
  %v1318 = vpack.c.b16 %v1230, %v1226
  %v1319 = vpack.c.b16 %v1235, %v1231
  %v1320 = vpack.c.b16 %v1236, %v1232
  %v1321 = vpack.c.b16 %v1237, %v1233
  %v1322 = vpack.c.b16 %v1238, %v1234
  %v1323 = vpack.c.b16 %v1243, %v1239
  %v1324 = vpack.c.b16 %v1244, %v1240
  %v1325 = vpack.c.b16 %v1245, %v1241
  %v1326 = vpack.c.b16 %v1246, %v1242
  %v1327 = vpack.c.b16 %v1251, %v1247
  %v1328 = vpack.c.b16 %v1252, %v1248
  %v1329 = vpack.c.b16 %v1253, %v1249
  %v1330 = vpack.c.b16 %v1254, %v1250
  %v1331 = vpack.c.b16 %v1259, %v1255
  %v1332 = vpack.c.b16 %v1260, %v1256
  %v1333 = vpack.c.b16 %v1261, %v1257
  %v1334 = vpack.c.b16 %v1262, %v1258
  %v1335 = vpack.c.b16 %v1267, %v1263
  %v1336 = vpack.c.b16 %v1268, %v1264
  %v1337 = vpack.c.b16 %v1269, %v1265
  %v1338 = vpack.c.b16 %v1270, %v1266
  %v1339 = vpack.c.b16 %v1275, %v1271
  %v1340 = vpack.c.b16 %v1276, %v1272
  %v1341 = vpack.c.b16 %v1277, %v1273
  %v1342 = vpack.c.b16 %v1278, %v1274
  %1407 = vmatprep.subr.bf16.mxu0 %v1280
  %1408 = vmatpush1.bf16.msra.mxu0 %v1279
  %1409 = vmatprep.subr.bf16.mxu0 %v1284
  %1410 = vmatpush1.bf16.msra.mxu0 %v1283
  %1411 = vmatprep.subr.bf16.mxu0 %v1288
  %1412 = vmatpush1.bf16.msra.mxu0 %v1287
  %1413 = vmatprep.subr.bf16.mxu0 %v1292
  %1414 = vmatpush1.bf16.msra.mxu0 %v1291
  %1415 = vmatprep.subr.bf16.mxu0 %v1296
  %1416 = vmatpush1.bf16.msra.mxu0 %v1295
  %1417 = vmatprep.subr.bf16.mxu0 %v1300
  %1418 = vmatpush1.bf16.msra.mxu0 %v1299
  %1419 = vmatprep.subr.bf16.mxu0 %v1304
  %1420 = vmatpush1.bf16.msra.mxu0 %v1303
  %1421 = vmatprep.subr.bf16.mxu0 %v1308
  %1422 = vmatpush1.bf16.msra.mxu0 %v1307
  %1423 = vmatprep.subr.bf16.mxu0 %v1312
  %1424 = vmatpush1.bf16.msra.mxu0 %v1311
  %1425 = vmatprep.subr.bf16.mxu0 %v1316
  %1426 = vmatpush1.bf16.msra.mxu0 %v1315
  %1427 = vmatprep.subr.bf16.mxu0 %v1320
  %1428 = vmatpush1.bf16.msra.mxu0 %v1319
  %1429 = vmatprep.subr.bf16.mxu0 %v1324
  %1430 = vmatpush1.bf16.msra.mxu0 %v1323
  %1431 = vmatprep.subr.bf16.mxu0 %v1328
  %1432 = vmatpush1.bf16.msra.mxu0 %v1327
  %1433 = vmatprep.subr.bf16.mxu0 %v1332
  %1434 = vmatpush1.bf16.msra.mxu0 %v1331
  %1435 = vmatprep.subr.bf16.mxu0 %v1336
  %1436 = vmatpush1.bf16.msra.mxu0 %v1335
  %1437 = vmatprep.subr.bf16.mxu0 %v1340
  %1438 = vmatpush1.bf16.msra.mxu0 %v1339
  %1439 = vmatprep.mubr.bf16.mxu0 %v1084
  %1440 = vmatmul.mubr.bf16.gmra.mrb[0].mxu0 %v1083
  %v1441 = vpop.f32.mrb[0].mxu0
  %v1442 = vadd.f32 %v1063, %v1441
  %v1443 = vpop.f32.mrb[0].mxu0
  %v1444 = vadd.f32 %v1067, %v1443
  %v1445 = vpop.f32.mrb[0].mxu0
  %v1446 = vpop.f32.mrb[0].mxu0
  %1447 = vdwg.mxu0
  %1448 = vmatprep.subr.bf16.mxu0 %v1282
  %1449 = vmatpush1.bf16.msra.mxu0 %v1281
  %1450 = vmatprep.subr.bf16.mxu0 %v1286
  %1451 = vmatpush1.bf16.msra.mxu0 %v1285
  %1452 = vmatprep.subr.bf16.mxu0 %v1290
  %1453 = vmatpush1.bf16.msra.mxu0 %v1289
  %1454 = vmatprep.subr.bf16.mxu0 %v1294
  %1455 = vmatpush1.bf16.msra.mxu0 %v1293
  %1456 = vmatprep.subr.bf16.mxu0 %v1298
  %1457 = vmatpush1.bf16.msra.mxu0 %v1297
  %1458 = vmatprep.subr.bf16.mxu0 %v1302
  %1459 = vmatpush1.bf16.msra.mxu0 %v1301
  %1460 = vmatprep.subr.bf16.mxu0 %v1306
  %1461 = vmatpush1.bf16.msra.mxu0 %v1305
  %1462 = vmatprep.subr.bf16.mxu0 %v1310
  %1463 = vmatpush1.bf16.msra.mxu0 %v1309
  %1464 = vmatprep.subr.bf16.mxu0 %v1314
  %1465 = vmatpush1.bf16.msra.mxu0 %v1313
  %1466 = vmatprep.subr.bf16.mxu0 %v1318
  %1467 = vmatpush1.bf16.msra.mxu0 %v1317
  %1468 = vmatprep.subr.bf16.mxu0 %v1322
  %1469 = vmatpush1.bf16.msra.mxu0 %v1321
  %1470 = vmatprep.subr.bf16.mxu0 %v1326
  %1471 = vmatpush1.bf16.msra.mxu0 %v1325
  %1472 = vmatprep.subr.bf16.mxu0 %v1330
  %1473 = vmatpush1.bf16.msra.mxu0 %v1329
  %1474 = vmatprep.subr.bf16.mxu0 %v1334
  %1475 = vmatpush1.bf16.msra.mxu0 %v1333
  %1476 = vmatprep.subr.bf16.mxu0 %v1338
  %1477 = vmatpush1.bf16.msra.mxu0 %v1337
  %1478 = vmatprep.subr.bf16.mxu0 %v1342
  %1479 = vmatpush1.bf16.msra.mxu0 %v1341
  %1480 = vmatprep.mubr.bf16.mxu0 %v1084
  %1481 = vmatmul.mubr.bf16.gmra.mrb[0].mxu0 %v1083
  %v1482 = vpop.f32.mrb[0].mxu0
  %v1483 = vadd.f32 %v1071, %v1482
  %v1484 = vpop.f32.mrb[0].mxu0
  %v1485 = vadd.f32 %v1075, %v1484
  %v1486 = vpop.f32.mrb[0].mxu0
  %v1487 = vpop.f32.mrb[0].mxu0
  %1488 = vdwg.mxu0
  %v1489 = vadd.f32 %v905, %v1442
  %v1490 = vadd.f32 %v907, %v1444
  %v1491 = vadd.f32 %v987, %v1483
  %v1492 = vadd.f32 %v989, %v1485
  %v1493 = vmax.f32 %v1489, 0.0
  %v1494 = vmax.f32 %v1490, 0.0
  %v1495 = vmax.f32 %v1491, 0.0
  %v1496 = vmax.f32 %v1492, 0.0
  %v1497 = vpack.c.bf16 %v1493, %v1493
  %v1498 = vpack.c.bf16 %v1494, %v1494
  %v1499 = vpack.c.bf16 %v1495, %v1495
  %v1500 = vpack.c.bf16 %v1496, %v1496
  %v1505 = vunpack.c.l.b16 %v1497
  %v1506 = vunpack.c.l.b16 %v1498
  %v1507 = vunpack.c.l.b16 %v1499
  %v1508 = vunpack.c.l.b16 %v1500
  %v1509 = vpack.c.b16 %v1506, %v1505
  %v1510 = vpack.c.b16 %v1508, %v1507
  %1513 = vst [vmem:[%s6] sm:$0x77] %v1509
  %1514 = vst [vmem:[%s6 + $0x8] sm:$0x77] %v1510
  // Predicated region
  $region26: #{_lambda_.32} parent=0 // pred_check
    _
  $region27: #{_lambda_.32} parent=0 // pred_check_branch
    %1516 = sbr.rel (0) target = $region29
  $region28: #{_lambda_.32} parent=0 // pred_region
    _
  $region29: #{_lambda_.32} parent=0 // pred_fallthru
    _
  // Predicated region
  $region30: #{_lambda_.32} parent=0 // pred_check
    _
  $region31: #{_lambda_.32} parent=0 // pred_check_branch
    %1518 = sbr.rel (0) target = $region33
  $region32: #{_lambda_.32} parent=0 // pred_region
    _
  $region33: #{_lambda_.32} parent=0 // pred_fallthru
    _

// kernel: _lambda_.35
$region0: #{_lambda_.35}
  #allocation0 [shape = 'u32[]', space=smem, size = 0x4, offset = 0x4, fixed_abs, tag = 'smem constant byte address 0x4 - core index']
  #allocation1 [shape = 'u32[144,128]{1,0:T(1,128)}', space=vmem, size = 0x12000, scoped, tag = 'internal scratch']
  %s0 = inlined_call_operand.vmem [shape: f32[2,3,512], index: 0, kind: input, shape index: {}]
  %s1 = inlined_call_operand.vmem [shape: f32[512,5], index: 1, kind: input, shape index: {}]
  %s2 = inlined_call_operand.vmem [shape: f32[1,5], index: 2, kind: input, shape index: {}]
  %s3 = inlined_call_operand.hbm [shape: f32[2,5], index: 3, kind: output, shape index: {}]
  %s4 = sld [smem:[#allocation0]]
  $region22: #{_lambda_.35} parent=0
    _
  %s6 = ssub.s32 1, %s4
  %s7 = scalar_select 0, %s6, %s4
  $region1: #{_lambda_.35} parent=0
    #allocation2 [shape = 'u8[1024]{0}', space=vmem, size = 0x400, scoped, tag = 'output window, operand 0, single buffered']
    #allocation3 [shape = 's32[1]{0}', space=sflag, size = 0x4, scoped, tag = 'scoped memory for _lambda_.35']
    %8 = vsyncpa [#allocation3], 0
    // Predicated region
    $region2: #{_lambda_.35} parent=1 // pred_check
      _
    $region3: #{_lambda_.35} parent=1 // pred_check_branch
      %10 = sbr.rel (0) target = $region5
    $region4: #{_lambda_.35} parent=1 // pred_region
      _
    $region5: #{_lambda_.35} parent=1 // pred_fallthru
      _
    // Predicated region
    $region6: #{_lambda_.35} parent=1 // pred_check
      _
    $region7: #{_lambda_.35} parent=1 // pred_check_branch
      %12 = sbr.rel (0) target = $region9
    $region8: #{_lambda_.35} parent=1 // pred_region
      _
    $region9: #{_lambda_.35} parent=1 // pred_fallthru
      _
    // Predicated region
    $region10: #{_lambda_.35} parent=1 // pred_check
      _
    $region11: #{_lambda_.35} parent=1 // pred_check_branch
      %14 = sbr.rel (0) target = $region13
    $region12: #{_lambda_.35} parent=1 // pred_region
      _
    $region13: #{_lambda_.35} parent=1 // pred_fallthru
      _
    %v15 = vld [vmem:[%s0] sm:$0x77]
    %v16 = vld [vmem:[%s0 + $0x8] sm:$0x77]
    %v17 = vld [vmem:[%s0 + $0x10] sm:$0x77]
    %v18 = vld [vmem:[%s0 + $0x18] sm:$0x77]
    %v23 = vcombine.high %v15, %v15
    %v24 = vcombine.high %v16, %v16
    %v25 = vcombine.high %v17, %v17
    %v26 = vcombine.high %v18, %v18
    %vm31 = vcmask 1042432
    %v32 = vsel %vm31, %v15, 0.0
    %v33 = vrot.slane %v32, 4
    %v34 = vadd.f32 %v32, %v33
    %v35 = vrot.slane %v34, 2
    %v36 = vadd.f32 %v34, %v35
    %v37 = vrot.slane %v36, 1
    %v38 = vadd.f32 %v36, %v37
    %v39 = vsel %vm31, %v23, 0.0
    %v40 = vrot.slane %v39, 4
    %v41 = vadd.f32 %v39, %v40
    %v42 = vrot.slane %v41, 2
    %v43 = vadd.f32 %v41, %v42
    %v44 = vrot.slane %v43, 1
    %v45 = vadd.f32 %v43, %v44
    %v46 = vsel %vm31, %v16, 0.0
    %v47 = vrot.slane %v46, 4
    %v48 = vadd.f32 %v46, %v47
    %v49 = vrot.slane %v48, 2
    %v50 = vadd.f32 %v48, %v49
    %v51 = vrot.slane %v50, 1
    %v52 = vadd.f32 %v50, %v51
    %v53 = vsel %vm31, %v24, 0.0
    %v54 = vrot.slane %v53, 4
    %v55 = vadd.f32 %v53, %v54
    %v56 = vrot.slane %v55, 2
    %v57 = vadd.f32 %v55, %v56
    %v58 = vrot.slane %v57, 1
    %v59 = vadd.f32 %v57, %v58
    %v60 = vsel %vm31, %v17, 0.0
    %v61 = vrot.slane %v60, 4
    %v62 = vadd.f32 %v60, %v61
    %v63 = vrot.slane %v62, 2
    %v64 = vadd.f32 %v62, %v63
    %v65 = vrot.slane %v64, 1
    %v66 = vadd.f32 %v64, %v65
    %v67 = vsel %vm31, %v25, 0.0
    %v68 = vrot.slane %v67, 4
    %v69 = vadd.f32 %v67, %v68
    %v70 = vrot.slane %v69, 2
    %v71 = vadd.f32 %v69, %v70
    %v72 = vrot.slane %v71, 1
    %v73 = vadd.f32 %v71, %v72
    %v74 = vsel %vm31, %v18, 0.0
    %v75 = vrot.slane %v74, 4
    %v76 = vadd.f32 %v74, %v75
    %v77 = vrot.slane %v76, 2
    %v78 = vadd.f32 %v76, %v77
    %v79 = vrot.slane %v78, 1
    %v80 = vadd.f32 %v78, %v79
    %v81 = vsel %vm31, %v26, 0.0
    %v82 = vrot.slane %v81, 4
    %v83 = vadd.f32 %v81, %v82
    %v84 = vrot.slane %v83, 2
    %v85 = vadd.f32 %v83, %v84
    %v86 = vrot.slane %v85, 1
    %v87 = vadd.f32 %v85, %v86
    %v88 = vrcp.pop 3.0
    %v89 = vmul.f32 %v38, %v88
    %v90 = vmul.f32 %v45, %v88
    %v91 = vmul.f32 %v52, %v88
    %v92 = vmul.f32 %v59, %v88
    %v93 = vmul.f32 %v66, %v88
    %v94 = vmul.f32 %v73, %v88
    %v95 = vmul.f32 %v80, %v88
    %v96 = vmul.f32 %v87, %v88
    %v97 = vld [vmem:[%s1] sm:$0xff]
    %v98 = vld [vmem:[%s1 + $0x8] sm:$0xff]
    %v99 = vld [vmem:[%s1 + $0x10] sm:$0xff]
    %v100 = vld [vmem:[%s1 + $0x18] sm:$0xff]
    %v101 = vld [vmem:[%s1 + $0x20] sm:$0xff]
    %v102 = vld [vmem:[%s1 + $0x28] sm:$0xff]
    %v103 = vld [vmem:[%s1 + $0x30] sm:$0xff]
    %v104 = vld [vmem:[%s1 + $0x38] sm:$0xff]
    %v105 = vld [vmem:[%s1 + $0x40] sm:$0xff]
    %v106 = vld [vmem:[%s1 + $0x48] sm:$0xff]
    %v107 = vld [vmem:[%s1 + $0x50] sm:$0xff]
    %v108 = vld [vmem:[%s1 + $0x58] sm:$0xff]
    %v109 = vld [vmem:[%s1 + $0x60] sm:$0xff]
    %v110 = vld [vmem:[%s1 + $0x68] sm:$0xff]
    %v111 = vld [vmem:[%s1 + $0x70] sm:$0xff]
    %v112 = vld [vmem:[%s1 + $0x78] sm:$0xff]
    %v113 = vld [vmem:[%s1 + $0x80] sm:$0xff]
    %v114 = vld [vmem:[%s1 + $0x88] sm:$0xff]
    %v115 = vld [vmem:[%s1 + $0x90] sm:$0xff]
    %v116 = vld [vmem:[%s1 + $0x98] sm:$0xff]
    %v117 = vld [vmem:[%s1 + $0xa0] sm:$0xff]
    %v118 = vld [vmem:[%s1 + $0xa8] sm:$0xff]
    %v119 = vld [vmem:[%s1 + $0xb0] sm:$0xff]
    %v120 = vld [vmem:[%s1 + $0xb8] sm:$0xff]
    %v121 = vld [vmem:[%s1 + $0xc0] sm:$0xff]
    %v122 = vld [vmem:[%s1 + $0xc8] sm:$0xff]
    %v123 = vld [vmem:[%s1 + $0xd0] sm:$0xff]
    %v124 = vld [vmem:[%s1 + $0xd8] sm:$0xff]
    %v125 = vld [vmem:[%s1 + $0xe0] sm:$0xff]
    %v126 = vld [vmem:[%s1 + $0xe8] sm:$0xff]
    %v127 = vld [vmem:[%s1 + $0xf0] sm:$0xff]
    %v128 = vld [vmem:[%s1 + $0xf8] sm:$0xff]
    %v129 = vld [vmem:[%s1 + $0x100] sm:$0xff]
    %v130 = vld [vmem:[%s1 + $0x108] sm:$0xff]
    %v131 = vld [vmem:[%s1 + $0x110] sm:$0xff]
    %v132 = vld [vmem:[%s1 + $0x118] sm:$0xff]
    %v133 = vld [vmem:[%s1 + $0x120] sm:$0xff]
    %v134 = vld [vmem:[%s1 + $0x128] sm:$0xff]
    %v135 = vld [vmem:[%s1 + $0x130] sm:$0xff]
    %v136 = vld [vmem:[%s1 + $0x138] sm:$0xff]
    %v137 = vld [vmem:[%s1 + $0x140] sm:$0xff]
    %v138 = vld [vmem:[%s1 + $0x148] sm:$0xff]
    %v139 = vld [vmem:[%s1 + $0x150] sm:$0xff]
    %v140 = vld [vmem:[%s1 + $0x158] sm:$0xff]
    %v141 = vld [vmem:[%s1 + $0x160] sm:$0xff]
    %v142 = vld [vmem:[%s1 + $0x168] sm:$0xff]
    %v143 = vld [vmem:[%s1 + $0x170] sm:$0xff]
    %v144 = vld [vmem:[%s1 + $0x178] sm:$0xff]
    %v145 = vld [vmem:[%s1 + $0x180] sm:$0xff]
    %v146 = vld [vmem:[%s1 + $0x188] sm:$0xff]
    %v147 = vld [vmem:[%s1 + $0x190] sm:$0xff]
    %v148 = vld [vmem:[%s1 + $0x198] sm:$0xff]
    %v149 = vld [vmem:[%s1 + $0x1a0] sm:$0xff]
    %v150 = vld [vmem:[%s1 + $0x1a8] sm:$0xff]
    %v151 = vld [vmem:[%s1 + $0x1b0] sm:$0xff]
    %v152 = vld [vmem:[%s1 + $0x1b8] sm:$0xff]
    %v153 = vld [vmem:[%s1 + $0x1c0] sm:$0xff]
    %v154 = vld [vmem:[%s1 + $0x1c8] sm:$0xff]
    %v155 = vld [vmem:[%s1 + $0x1d0] sm:$0xff]
    %v156 = vld [vmem:[%s1 + $0x1d8] sm:$0xff]
    %v157 = vld [vmem:[%s1 + $0x1e0] sm:$0xff]
    %v158 = vld [vmem:[%s1 + $0x1e8] sm:$0xff]
    %v159 = vld [vmem:[%s1 + $0x1f0] sm:$0xff]
    %v160 = vld [vmem:[%s1 + $0x1f8] sm:$0xff]
    %v161 = vld [vmem:[%s2] sm:$0x1]
    %v163 = vlaneseq
    %v164 = vshrl.u32 %v163, 7
    %v165 = vsub.s32 0, %v164
    %v166 = vrot.slane %v161, %v165
    %vm176 = vcmask 1041409
    %v177 = vsel %vm176, %v93, %v89
    %v178 = vsel %vm176, %v94, %v90
    %v179 = vsel %vm176, %v95, %v91
    %v180 = vsel %vm176, %v96, %v92
    %185 = vmatprep.subr.mxu0 0.0
    %186 = vmatpush1.msra.mxu0 %v97
    %187 = vmatprep.subr.mxu0 0.0
    %188 = vmatpush1.msra.mxu0 %v98
    %189 = vmatprep.subr.mxu0 0.0
    %190 = vmatpush1.msra.mxu0 %v99
    %191 = vmatprep.subr.mxu0 0.0
    %192 = vmatpush1.msra.mxu0 %v100
    %193 = vmatprep.subr.mxu0 0.0
    %194 = vmatpush1.msra.mxu0 %v101
    %195 = vmatprep.subr.mxu0 0.0
    %196 = vmatpush1.msra.mxu0 %v102
    %197 = vmatprep.subr.mxu0 0.0
    %198 = vmatpush1.msra.mxu0 %v103
    %199 = vmatprep.subr.mxu0 0.0
    %200 = vmatpush1.msra.mxu0 %v104
    %201 = vmatprep.subr.mxu0 0.0
    %202 = vmatpush1.msra.mxu0 %v105
    %203 = vmatprep.subr.mxu0 0.0
    %204 = vmatpush1.msra.mxu0 %v106
    %205 = vmatprep.subr.mxu0 0.0
    %206 = vmatpush1.msra.mxu0 %v107
    %207 = vmatprep.subr.mxu0 0.0
    %208 = vmatpush1.msra.mxu0 %v108
    %209 = vmatprep.subr.mxu0 0.0
    %210 = vmatpush1.msra.mxu0 %v109
    %211 = vmatprep.subr.mxu0 0.0
    %212 = vmatpush1.msra.mxu0 %v110
    %213 = vmatprep.subr.mxu0 0.0
    %214 = vmatpush1.msra.mxu0 %v111
    %215 = vmatprep.subr.mxu0 0.0
    %216 = vmatpush1.msra.mxu0 %v112
    %217 = vmatprep.subr.mxu0 0.0
    %218 = vmatpush1.msra.mxu0 %v113
    %219 = vmatprep.subr.mxu0 0.0
    %220 = vmatpush1.msra.mxu0 %v114
    %221 = vmatprep.subr.mxu0 0.0
    %222 = vmatpush1.msra.mxu0 %v115
    %223 = vmatprep.subr.mxu0 0.0
    %224 = vmatpush1.msra.mxu0 %v116
    %225 = vmatprep.subr.mxu0 0.0
    %226 = vmatpush1.msra.mxu0 %v117
    %227 = vmatprep.subr.mxu0 0.0
    %228 = vmatpush1.msra.mxu0 %v118
    %229 = vmatprep.subr.mxu0 0.0
    %230 = vmatpush1.msra.mxu0 %v119
    %231 = vmatprep.subr.mxu0 0.0
    %232 = vmatpush1.msra.mxu0 %v120
    %233 = vmatprep.subr.mxu0 0.0
    %234 = vmatpush1.msra.mxu0 %v121
    %235 = vmatprep.subr.mxu0 0.0
    %236 = vmatpush1.msra.mxu0 %v122
    %237 = vmatprep.subr.mxu0 0.0
    %238 = vmatpush1.msra.mxu0 %v123
    %239 = vmatprep.subr.mxu0 0.0
    %240 = vmatpush1.msra.mxu0 %v124
    %241 = vmatprep.subr.mxu0 0.0
    %242 = vmatpush1.msra.mxu0 %v125
    %243 = vmatprep.subr.mxu0 0.0
    %244 = vmatpush1.msra.mxu0 %v126
    %245 = vmatprep.subr.mxu0 0.0
    %246 = vmatpush1.msra.mxu0 %v127
    %247 = vmatprep.subr.mxu0 0.0
    %248 = vmatpush1.msra.mxu0 %v128
    %249 = vmatprep.mubr.f32.mxu0 %v178
    %250 = vmatmul.mubr.f32.gmra.mrb[0].mxu0 %v177
    %v251 = vpop.f32.mrb[0].mxu0
    %v252 = vadd.f32 %v166, %v251
    %v253 = vpop.f32.mrb[0].mxu0
    %254 = vdwg.mxu0
    %255 = vmatprep.subr.mxu0 0.0
    %256 = vmatpush1.msra.mxu0 %v129
    %257 = vmatprep.subr.mxu0 0.0
    %258 = vmatpush1.msra.mxu0 %v130
    %259 = vmatprep.subr.mxu0 0.0
    %260 = vmatpush1.msra.mxu0 %v131
    %261 = vmatprep.subr.mxu0 0.0
    %262 = vmatpush1.msra.mxu0 %v132
    %263 = vmatprep.subr.mxu0 0.0
    %264 = vmatpush1.msra.mxu0 %v133
    %265 = vmatprep.subr.mxu0 0.0
    %266 = vmatpush1.msra.mxu0 %v134
    %267 = vmatprep.subr.mxu0 0.0
    %268 = vmatpush1.msra.mxu0 %v135
    %269 = vmatprep.subr.mxu0 0.0
    %270 = vmatpush1.msra.mxu0 %v136
    %271 = vmatprep.subr.mxu0 0.0
    %272 = vmatpush1.msra.mxu0 %v137
    %273 = vmatprep.subr.mxu0 0.0
    %274 = vmatpush1.msra.mxu0 %v138
    %275 = vmatprep.subr.mxu0 0.0
    %276 = vmatpush1.msra.mxu0 %v139
    %277 = vmatprep.subr.mxu0 0.0
    %278 = vmatpush1.msra.mxu0 %v140
    %279 = vmatprep.subr.mxu0 0.0
    %280 = vmatpush1.msra.mxu0 %v141
    %281 = vmatprep.subr.mxu0 0.0
    %282 = vmatpush1.msra.mxu0 %v142
    %283 = vmatprep.subr.mxu0 0.0
    %284 = vmatpush1.msra.mxu0 %v143
    %285 = vmatprep.subr.mxu0 0.0
    %286 = vmatpush1.msra.mxu0 %v144
    %287 = vmatprep.subr.mxu0 0.0
    %288 = vmatpush1.msra.mxu0 %v145
    %289 = vmatprep.subr.mxu0 0.0
    %290 = vmatpush1.msra.mxu0 %v146
    %291 = vmatprep.subr.mxu0 0.0
    %292 = vmatpush1.msra.mxu0 %v147
    %293 = vmatprep.subr.mxu0 0.0
    %294 = vmatpush1.msra.mxu0 %v148
    %295 = vmatprep.subr.mxu0 0.0
    %296 = vmatpush1.msra.mxu0 %v149
    %297 = vmatprep.subr.mxu0 0.0
    %298 = vmatpush1.msra.mxu0 %v150
    %299 = vmatprep.subr.mxu0 0.0
    %300 = vmatpush1.msra.mxu0 %v151
    %301 = vmatprep.subr.mxu0 0.0
    %302 = vmatpush1.msra.mxu0 %v152
    %303 = vmatprep.subr.mxu0 0.0
    %304 = vmatpush1.msra.mxu0 %v153
    %305 = vmatprep.subr.mxu0 0.0
    %306 = vmatpush1.msra.mxu0 %v154
    %307 = vmatprep.subr.mxu0 0.0
    %308 = vmatpush1.msra.mxu0 %v155
    %309 = vmatprep.subr.mxu0 0.0
    %310 = vmatpush1.msra.mxu0 %v156
    %311 = vmatprep.subr.mxu0 0.0
    %312 = vmatpush1.msra.mxu0 %v157
    %313 = vmatprep.subr.mxu0 0.0
    %314 = vmatpush1.msra.mxu0 %v158
    %315 = vmatprep.subr.mxu0 0.0
    %316 = vmatpush1.msra.mxu0 %v159
    %317 = vmatprep.subr.mxu0 0.0
    %318 = vmatpush1.msra.mxu0 %v160
    %319 = vmatprep.mubr.f32.mxu0 %v180
    %320 = vmatmul.mubr.f32.gmra.mrb[0].mxu0 %v179
    %v321 = vpop.f32.mrb[0].mxu0
    %v322 = vadd.f32 %v252, %v321
    %v323 = vpop.f32.mrb[0].mxu0
    %324 = vdwg.mxu0
    %vm325 = vcmask 33792
    %326 = vst.msk [vmem:[#allocation2] sm:$0x3] %vm325, %v322
    // Predicated region
    $region14: #{_lambda_.35} parent=1 // pred_check
      _
    $region15: #{_lambda_.35} parent=1 // pred_check_branch
      %328 = sbr.rel (0) target = $region17
    $region16: #{_lambda_.35} parent=1 // pred_region
      %s330 = ssub.s32 32, 32
      %331 = vsyncadd [#allocation3], %s330
      %s333 = sshll.u32 [#allocation2], 4
      %s334 = int_to_ptr.vmem [resolvable:$true] %s333
      %336 = dma.vmem_to_hbm [thread:$0]  %s334, 32, %s3, [#allocation3]
    $region17: #{_lambda_.35} parent=1 // pred_fallthru
      _
    // Predicated region
    $region18: #{_lambda_.35} parent=1 // pred_check
      _
    $region19: #{_lambda_.35} parent=1 // pred_check_branch
      %338 = sbr.rel (0) target = $region21
    $region20: #{_lambda_.35} parent=1 // pred_region
      %339 = dma.done [#allocation3], 32
    $region21: #{_lambda_.35} parent=1 // pred_fallthru
      _
    %340 = vsyncpa [#allocation3], 1

</llo_original>
